<compile_context>
chip_gen: v6e
topology: v6e:2x2x1
jax: 0.10.0
libtpu: 0.0.40
codegen_flags: <defaults>
</compile_context>

<pallas_src>
import jax
import jax.numpy as jnp
from jax import lax
from jax.experimental import pallas as pl
from jax.experimental.pallas import tpu as pltpu

LEAKY_SLOPE = 0.1              # nn.LeakyReLU(0.1)
HIDDEN = 256                   # LSTMCell hidden size
SEQ_LEN = 28                   # state length 24 + 4 replicated action columns
CONV_OUT = 128                 # conv3 output channels
LSTM_IN = CONV_OUT * SEQ_LEN   # 3584, matches nn.LSTMCell(3584, 256)
KBLK = 1792                    # K-tile of the LSTM input-hidden matmul (3584 = 2*1792)


def _sigmoid(x):
    # sigma(x) = 0.5*(1 + tanh(x/2)): exact, overflow-safe, runs on the EUP.
    return 0.5 * (jnp.tanh(0.5 * x) + 1.0)


def critic_kernel(sa_ref, w1_ref, b1_ref, w2_ref, b2_ref, w3_ref, b3_ref,
                  wih_ref, whh_ref, blstm_ref, h0_ref, c0_ref, wl_ref, bl_ref,
                  q_ref, h_ref, c_ref,
                  acc_ref, x_scr):
    k = pl.program_id(0)
    nk = pl.num_programs(0)
    B, L, C = sa_ref.shape
    BL = B * L

    # ---------- step 0: conv stack (3-tap matmuls) + accumulator init ----------
    @pl.when(k == 0)
    def _():
        # Sequence-boundary masks shared by all conv layers (hoisted broadcasts).
        l_idx = lax.broadcasted_iota(jnp.int32, (BL, 1), 0) % L
        first_row = l_idx == 0          # tap l-1 must read the zero pad
        last_row = l_idx == L - 1       # tap l+1 must read the zero pad

        def conv_lrelu(x2, w_ref, b_ref):
            # x2: (B*L, Cin) f32; w_ref: (3, Cin, Cout) bf16; b_ref: (1, Cout) f32.
            cin = x2.shape[-1]
            zrow = jnp.zeros((1, cin), x2.dtype)
            prev = jnp.where(first_row, 0.0,
                             jnp.concatenate([zrow, x2[:-1]], axis=0))
            nxt = jnp.where(last_row, 0.0,
                            jnp.concatenate([x2[1:], zrow], axis=0))
            y = (jnp.dot(prev.astype(jnp.bfloat16), w_ref[0],
                         preferred_element_type=jnp.float32)
                 + jnp.dot(x2.astype(jnp.bfloat16), w_ref[1],
                           preferred_element_type=jnp.float32)
                 + jnp.dot(nxt.astype(jnp.bfloat16), w_ref[2],
                           preferred_element_type=jnp.float32)
                 + b_ref[...])
            return jnp.maximum(y, LEAKY_SLOPE * y)          # LeakyReLU(0.1)

        x = sa_ref[...].reshape(BL, C)                      # position-major rows
        x = conv_lrelu(x, w1_ref, b1_ref)                   # (B*L, 64)
        x = conv_lrelu(x, w2_ref, b2_ref)                   # (B*L, 64)
        x = conv_lrelu(x, w3_ref, b3_ref)                   # (B*L, 128)

        # Position-major flatten; w_ih rows were permuted to match at prep time,
        # so this is a contiguous lane-major merge (no transpose needed).
        x_flat = x.astype(jnp.bfloat16).reshape(B, L * CONV_OUT)
        for t in range(x_scr.shape[0]):                     # static unroll (KT == 2)
            x_scr[t] = x_flat[:, t * KBLK:(t + 1) * KBLK]

        # Init accumulator with the hidden-hidden contribution + fused biases.
        acc_ref[...] = (jnp.dot(h0_ref[...].astype(jnp.bfloat16), whh_ref[...],
                                preferred_element_type=jnp.float32)
                        + blstm_ref[...])

    # ---------- every step: stream one (KBLK, 4H) block of w_ih ----------
    acc_ref[...] += jnp.dot(x_scr[k], wih_ref[...],
                            preferred_element_type=jnp.float32)

    # ---------- last step: gates, cell update, critic head ----------
    @pl.when(k == nk - 1)
    def _():
        gates = acc_ref[...]                                # (B, 4H) f32
        i = _sigmoid(gates[:, 0 * HIDDEN:1 * HIDDEN])
        f = _sigmoid(gates[:, 1 * HIDDEN:2 * HIDDEN])
        g = jnp.tanh(gates[:, 2 * HIDDEN:3 * HIDDEN])
        o = _sigmoid(gates[:, 3 * HIDDEN:4 * HIDDEN])
        c_new = f * c0_ref[...] + i * g
        h_new = o * jnp.tanh(c_new)
        q_ref[...] = (jnp.dot(h_new, wl_ref[...],
                              preferred_element_type=jnp.float32) + bl_ref[...])
        h_ref[...] = h_new
        c_ref[...] = c_new


def prepare_params(params):
    """One-time repack of PyTorch-layout params into kernel layout.

    Call once at init (NOT per forward): hoists all transposes / permutations /
    bf16 casts off the per-call critical path.
    """
    def conv_pack(w):   # (Cout, Cin, 3) -> (3, Cin, Cout); tap 0=prev, 1=cur, 2=next
        return jnp.transpose(w, (2, 1, 0)).astype(jnp.bfloat16)

    # lstm_w_ih: (4H, 3584) with input index c*SEQ_LEN + l (channel-major view(B,-1)).
    # Permute to position-major rows (l*128 + c) and transpose -> (3584, 4H), so the
    # kernel's x.reshape(B, L*128) lines up with it directly.
    wih = jnp.transpose(
        params["lstm_w_ih"].reshape(4 * HIDDEN, CONV_OUT, SEQ_LEN), (2, 1, 0)
    ).reshape(LSTM_IN, 4 * HIDDEN)

    return dict(
        w1=conv_pack(params["conv1_w"]),
        b1=params["conv1_b"].reshape(1, -1).astype(jnp.float32),
        w2=conv_pack(params["conv2_w"]),
        b2=params["conv2_b"].reshape(1, -1).astype(jnp.float32),
        w3=conv_pack(params["conv3_w"]),
        b3=params["conv3_b"].reshape(1, -1).astype(jnp.float32),
        wih=wih.astype(jnp.bfloat16),
        whh=params["lstm_w_hh"].T.astype(jnp.bfloat16),
        b_lstm=(params["lstm_b_ih"] + params["lstm_b_hh"]).reshape(1, -1).astype(jnp.float32),
        wl=params["lin_w"].T.astype(jnp.float32),
        bl=params["lin_b"].reshape(1, -1).astype(jnp.float32),
    )


@jax.jit
def critic_forward(state, action, prep, hxc, cxc):
    """state: (B, num_inputs, 24) NCL, action: (B, num_inputs).  Returns (q, h', c')."""
    B, C, Ls = state.shape
    L = Ls + 4
    assert L == SEQ_LEN and (L * CONV_OUT) % KBLK == 0
    KT = (L * CONV_OUT) // KBLK

    # Glue identical to the PyTorch forward (fused by jit around the pallas_call).
    a = action[:, :, None]                                   # unsqueeze(2) -> (B, C, 1)
    a = jnp.stack([a, a, a, a], axis=2)[..., 0]              # stack + squeeze -> (B, C, 4)
    state_action = jnp.concatenate([state, a], axis=2)       # (B, C, 28)
    sa_nlc = jnp.transpose(state_action, (0, 2, 1)).astype(jnp.float32)  # (B, 28, C)

    def fixed(arr):
        nd = arr.ndim
        return pl.BlockSpec(arr.shape, lambda k, nd=nd: (0,) * nd)

    in_specs = [
        fixed(sa_nlc),
        fixed(prep["w1"]), fixed(prep["b1"]),
        fixed(prep["w2"]), fixed(prep["b2"]),
        fixed(prep["w3"]), fixed(prep["b3"]),
        pl.BlockSpec((KBLK, 4 * HIDDEN), lambda k: (k, 0)),   # streamed w_ih blocks
        fixed(prep["whh"]), fixed(prep["b_lstm"]),
        fixed(hxc), fixed(cxc),
        fixed(prep["wl"]), fixed(prep["bl"]),
    ]
    out_specs = [
        pl.BlockSpec((B, 1), lambda k: (0, 0)),
        pl.BlockSpec((B, HIDDEN), lambda k: (0, 0)),
        pl.BlockSpec((B, HIDDEN), lambda k: (0, 0)),
    ]
    out_shapes = (jax.ShapeDtypeStruct((B, 1), jnp.float32),
                  jax.ShapeDtypeStruct((B, HIDDEN), jnp.float32),
                  jax.ShapeDtypeStruct((B, HIDDEN), jnp.float32))
    scratch_shapes = [
        pltpu.VMEM((B, 4 * HIDDEN), jnp.float32),     # gate accumulator
        pltpu.VMEM((KT, B, KBLK), jnp.bfloat16),      # flattened conv features, K-chunked
    ]

    q, h_new, c_new = pl.pallas_call(
        critic_kernel,
        out_shape=out_shapes,
        grid_spec=pltpu.PrefetchScalarGridSpec(
            num_scalar_prefetch=0,
            grid=(KT,),
            in_specs=in_specs,
            out_specs=out_specs,
            scratch_shapes=scratch_shapes),
        compiler_params=pltpu.CompilerParams(
            dimension_semantics=("arbitrary",),
            vmem_limit_bytes=32 * 1024 * 1024),
    )(sa_nlc, prep["w1"], prep["b1"], prep["w2"], prep["b2"],
      prep["w3"], prep["b3"], prep["wih"], prep["whh"], prep["b_lstm"],
      hxc, cxc, prep["wl"], prep["bl"])
    return q, h_new, c_new


def init_params(key, num_inputs):
    # Deterministic synthetic init (shapes from the module __init__); biases of
    # the LSTMCell and critic_linear are zero-filled as in the reference.
    # TODO(synk): weights_init / norm_col_init / lrelu gain scaling from the repo
    # are not reproduced here (not part of the forward pass).
    ks = jax.random.split(key, 8)

    def rnd(k, shape, scale=0.1):
        return scale * jax.random.normal(k, shape, jnp.float32)

    return dict(
        conv1_w=rnd(ks[0], (64, num_inputs, 3)),
        conv1_b=rnd(ks[1], (64,)),
        conv2_w=rnd(ks[2], (64, 64, 3)),
        conv2_b=rnd(ks[3], (64,)),
        conv3_w=rnd(ks[4], (128, 64, 3)),
        conv3_b=rnd(ks[5], (128,)),
        lstm_w_ih=rnd(ks[6], (4 * HIDDEN, LSTM_IN), 0.02),
        lstm_w_hh=rnd(ks[7], (4 * HIDDEN, HIDDEN), 0.02),
        lstm_b_ih=jnp.zeros((4 * HIDDEN,), jnp.float32),   # .fill_(0)
        lstm_b_hh=jnp.zeros((4 * HIDDEN,), jnp.float32),   # .fill_(0)
        lin_w=rnd(jax.random.fold_in(key, 99), (1, HIDDEN)),
        lin_b=jnp.zeros((1,), jnp.float32),                # .fill_(0)
    )


def reference_forward(state, action, params, hxc, cxc):
    """Pure-f32 JAX mirror of the PyTorch forward, for tolerance checking."""
    B, C, Ls = state.shape
    L = Ls + 4
    a = action[:, :, None]
    a = jnp.stack([a, a, a, a], axis=2)[..., 0]
    x = jnp.concatenate([state, a], axis=2)                 # (B, C, 28)

    def conv1d_same(x, w, b):    # x: (B, Cin, L), w: (Cout, Cin, 3), padding=1
        xp = jnp.pad(x, ((0, 0), (0, 0), (1, 1)))
        y = sum(jnp.einsum('bcl,oc->bol', xp[:, :, t:t + L], w[:, :, t])
                for t in range(3))
        return y + b[None, :, None]

    def lrelu(v):
        return jnp.where(v >= 0, v, LEAKY_SLOPE * v)

    x = lrelu(conv1d_same(x, params["conv1_w"], params["conv1_b"]))
    x = lrelu(conv1d_same(x, params["conv2_w"], params["conv2_b"]))
    x = lrelu(conv1d_same(x, params["conv3_w"], params["conv3_b"]))
    x = x.reshape(B, -1)                                     # channel-major view(B, -1)
    gates = (x @ params["lstm_w_ih"].T + params["lstm_b_ih"]
             + hxc @ params["lstm_w_hh"].T + params["lstm_b_hh"])
    i, f, g, o = jnp.split(gates, 4, axis=1)
    i, f, o = jax.nn.sigmoid(i), jax.nn.sigmoid(f), jax.nn.sigmoid(o)
    g = jnp.tanh(g)
    c_new = f * cxc + i * g
    h_new = o * jnp.tanh(c_new)
    q = h_new @ params["lin_w"].T + params["lin_b"]
    return q, h_new, c_new


if __name__ == "__main__":
    B, C, L_STATE = 2, 4, 24   # state length 24 so that 24 + 4 = 28 -> 128*28 = 3584 LSTM input

    key = jax.random.PRNGKey(0)
    k_state, k_action, k_params = jax.random.split(key, 3)
    state = jax.random.normal(k_state, (B, C, L_STATE), jnp.float32)
    action = jax.random.normal(k_action, (B, C), jnp.float32)

    params = init_params(k_params, C)
    prep = prepare_params(params)          # one-time repack (kernel layout, bf16)
    jax.block_until_ready(prep)

    # self.hxc / self.cxc start as zeros(batch_size, 256)
    hxc = jnp.zeros((B, HIDDEN), jnp.float32)
    cxc = jnp.zeros((B, HIDDEN), jnp.float32)

    q, h_new, c_new = critic_forward(state, action, prep, hxc, cxc)
    jax.block_until_ready((q, h_new, c_new))

    assert q.shape == (B, 1)
    assert h_new.shape == (B, HIDDEN) and c_new.shape == (B, HIDDEN)
    assert bool(jnp.all(jnp.isfinite(q)))

    # Tolerance check against a pure-f32 reference (bf16 matmul weights in-kernel).
    q_ref, h_ref, c_ref = reference_forward(state, action, params, hxc, cxc)
    for got, ref in ((q, q_ref), (h_new, h_ref), (c_new, c_ref)):
        assert bool(jnp.allclose(got, ref, rtol=5e-2, atol=5e-2)), (got, ref)

    print("KERNEL_OK")
</pallas_src>

<mosaic_0001>
module attributes {stable_mosaic.version = 11 : i64} {
  func.func @critic_kernel(%arg0: i32, %arg1: memref<2x28x4xf32, #tpu.memory_space<vmem>>, %arg2: memref<3x4x64xbf16, #tpu.memory_space<vmem>>, %arg3: memref<1x64xf32, #tpu.memory_space<vmem>>, %arg4: memref<3x64x64xbf16, #tpu.memory_space<vmem>>, %arg5: memref<1x64xf32, #tpu.memory_space<vmem>>, %arg6: memref<3x64x128xbf16, #tpu.memory_space<vmem>>, %arg7: memref<1x128xf32, #tpu.memory_space<vmem>>, %arg8: memref<1792x1024xbf16, #tpu.memory_space<vmem>>, %arg9: memref<256x1024xbf16, #tpu.memory_space<vmem>>, %arg10: memref<1x1024xf32, #tpu.memory_space<vmem>>, %arg11: memref<2x256xf32, #tpu.memory_space<vmem>>, %arg12: memref<2x256xf32, #tpu.memory_space<vmem>>, %arg13: memref<256x1xf32, #tpu.memory_space<vmem>>, %arg14: memref<1x1xf32, #tpu.memory_space<vmem>>, %arg15: memref<2x1xf32, #tpu.memory_space<vmem>>, %arg16: memref<2x256xf32, #tpu.memory_space<vmem>>, %arg17: memref<2x256xf32, #tpu.memory_space<vmem>>, %arg18: memref<2x1024xf32, #tpu.memory_space<vmem>>, %arg19: memref<2x2x1792xbf16, #tpu.memory_space<vmem>>) attributes {dimension_semantics = [#tpu.dimension_semantics<arbitrary>], iteration_bounds = array<i64: 2>, scalar_prefetch = 0 : i64, scratch_operands = 2 : i64, tpu.core_type = #tpu.core_type<tc>, window_params = [{pipeline_mode = #tpu.pipeline_mode<synchronous>, transform_indices = @transform_0, window_bounds = array<i64: 2, 28, 4>}, {pipeline_mode = #tpu.pipeline_mode<synchronous>, transform_indices = @transform_1, window_bounds = array<i64: 3, 4, 64>}, {pipeline_mode = #tpu.pipeline_mode<synchronous>, transform_indices = @transform_2, window_bounds = array<i64: 1, 64>}, {pipeline_mode = #tpu.pipeline_mode<synchronous>, transform_indices = @transform_3, window_bounds = array<i64: 3, 64, 64>}, {pipeline_mode = #tpu.pipeline_mode<synchronous>, transform_indices = @transform_4, window_bounds = array<i64: 1, 64>}, {pipeline_mode = #tpu.pipeline_mode<synchronous>, transform_indices = @transform_5, window_bounds = array<i64: 3, 64, 128>}, {pipeline_mode = #tpu.pipeline_mode<synchronous>, transform_indices = @transform_6, window_bounds = array<i64: 1, 128>}, {transform_indices = @transform_7, window_bounds = array<i64: 1792, 1024>}, {pipeline_mode = #tpu.pipeline_mode<synchronous>, transform_indices = @transform_8, window_bounds = array<i64: 256, 1024>}, {pipeline_mode = #tpu.pipeline_mode<synchronous>, transform_indices = @transform_9, window_bounds = array<i64: 1, 1024>}, {pipeline_mode = #tpu.pipeline_mode<synchronous>, transform_indices = @transform_10, window_bounds = array<i64: 2, 256>}, {pipeline_mode = #tpu.pipeline_mode<synchronous>, transform_indices = @transform_11, window_bounds = array<i64: 2, 256>}, {pipeline_mode = #tpu.pipeline_mode<synchronous>, transform_indices = @transform_12, window_bounds = array<i64: 256, 1>}, {pipeline_mode = #tpu.pipeline_mode<synchronous>, transform_indices = @transform_13, window_bounds = array<i64: 1, 1>}, {pipeline_mode = #tpu.pipeline_mode<synchronous>, transform_indices = @transform_14, window_bounds = array<i64: 2, 1>}, {pipeline_mode = #tpu.pipeline_mode<synchronous>, transform_indices = @transform_15, window_bounds = array<i64: 2, 256>}, {pipeline_mode = #tpu.pipeline_mode<synchronous>, transform_indices = @transform_16, window_bounds = array<i64: 2, 256>}]} {
    %c0_i32 = arith.constant 0 : i32
    %0 = arith.cmpi eq, %arg0, %c0_i32 : i32
    %1 = arith.extui %0 : i1 to i32
    %c0_i32_0 = arith.constant 0 : i32
    %2 = arith.cmpi ne, %1, %c0_i32_0 : i32
    scf.if %2 {
      %14 = tpu.iota {dimensions = array<i32: 0>} : vector<56x1xi32>
      %c28_i32 = arith.constant 28 : i32
      %c0_i32_9 = arith.constant 0 : i32
      %15 = arith.cmpi eq, %c28_i32, %c0_i32_9 : i32
      %c1_i32_10 = arith.constant 1 : i32
      %16 = arith.select %15, %c1_i32_10, %c28_i32 : i32
      %17 = vector.broadcast %16 : i32 to vector<56x1xi32>
      %18 = arith.remsi %14, %17 : vector<56x1xi32>
      %c0_i32_11 = arith.constant 0 : i32
      %19 = vector.broadcast %c0_i32_11 : i32 to vector<56x1xi32>
      %20 = arith.cmpi ne, %18, %19 : vector<56x1xi32>
      %c0_i32_12 = arith.constant 0 : i32
      %21 = vector.broadcast %c0_i32_12 : i32 to vector<56x1xi32>
      %22 = arith.cmpi slt, %18, %21 : vector<56x1xi32>
      %c0_i32_13 = arith.constant 0 : i32
      %23 = arith.cmpi slt, %16, %c0_i32_13 : i32
      %24 = vector.broadcast %23 : i1 to vector<56x1xi1>
      %25 = vector.broadcast %24 : vector<56x1xi1> to vector<56x1xi1>
      %26 = arith.xori %22, %25 : vector<56x1xi1>
      %27 = arith.andi %26, %20 : vector<56x1xi1>
      %28 = vector.broadcast %16 : i32 to vector<56x1xi32>
      %29 = arith.addi %18, %28 : vector<56x1xi32>
      %30 = arith.select %27, %29, %18 : vector<56x1xi1>, vector<56x1xi32>
      %c0_i32_14 = arith.constant 0 : i32
      %31 = vector.broadcast %c0_i32_14 : i32 to vector<56x1xi32>
      %32 = arith.cmpi eq, %30, %31 : vector<56x1xi32>
      %c27_i32 = arith.constant 27 : i32
      %33 = vector.broadcast %c27_i32 : i32 to vector<56x1xi32>
      %34 = arith.cmpi eq, %30, %33 : vector<56x1xi32>
      %c0_15 = arith.constant 0 : index
      %c0_16 = arith.constant 0 : index
      %c0_17 = arith.constant 0 : index
      %35 = vector.load %arg1[%c0_15, %c0_16, %c0_17] : memref<2x28x4xf32, #tpu.memory_space<vmem>>, vector<2x28x4xf32>
      %36 = vector.shape_cast %35 : vector<2x28x4xf32> to vector<56x4xf32>
      %cst_18 = arith.constant 0.000000e+00 : f32
      %37 = vector.broadcast %cst_18 : f32 to vector<1x4xf32>
      %38 = vector.extract_strided_slice %36 {offsets = [0, 0], sizes = [55, 4], strides = [1, 1]} : vector<56x4xf32> to vector<55x4xf32>
      %39 = tpu.concatenate %37, %38 in 0 : vector<1x4xf32>, vector<55x4xf32> -> vector<56x4xf32>
      %cst_19 = arith.constant 0.000000e+00 : f32
      %40 = vector.shape_cast %32 : vector<56x1xi1> to vector<56x1xi1>
      %41 = vector.broadcast %40 : vector<56x1xi1> to vector<56x4xi1>
      %42 = vector.broadcast %cst_19 : f32 to vector<56x4xf32>
      %43 = arith.select %41, %42, %39 : vector<56x4xi1>, vector<56x4xf32>
      %44 = vector.extract_strided_slice %36 {offsets = [1, 0], sizes = [55, 4], strides = [1, 1]} : vector<56x4xf32> to vector<55x4xf32>
      %45 = tpu.concatenate %44, %37 in 0 : vector<55x4xf32>, vector<1x4xf32> -> vector<56x4xf32>
      %cst_20 = arith.constant 0.000000e+00 : f32
      %46 = vector.shape_cast %34 : vector<56x1xi1> to vector<56x1xi1>
      %47 = vector.broadcast %46 : vector<56x1xi1> to vector<56x4xi1>
      %48 = vector.broadcast %cst_20 : f32 to vector<56x4xf32>
      %49 = arith.select %47, %48, %45 : vector<56x4xi1>, vector<56x4xf32>
      %50 = arith.truncf %43 : vector<56x4xf32> to vector<56x4xbf16>
      %c0_21 = arith.constant 0 : index
      %c0_22 = arith.constant 0 : index
      %c0_23 = arith.constant 0 : index
      %51 = vector.load %arg2[%c0_21, %c0_22, %c0_23] : memref<3x4x64xbf16, #tpu.memory_space<vmem>>, vector<1x4x64xbf16>
      %52 = vector.shape_cast %51 : vector<1x4x64xbf16> to vector<4x64xbf16>
      %cst_24 = arith.constant dense<0.000000e+00> : vector<56x64xf32>
      %53 = tpu.matmul %50, %52, %cst_24 {dimension_numbers = #tpu.dot_dimension_numbers<[1], [0], [0], [1], [0, 0, 1, 1], [], []>} : vector<56x4xbf16>, vector<4x64xbf16>, vector<56x64xf32> -> vector<56x64xf32>
      %54 = arith.truncf %36 : vector<56x4xf32> to vector<56x4xbf16>
      %c1 = arith.constant 1 : index
      %c0_25 = arith.constant 0 : index
      %c0_26 = arith.constant 0 : index
      %55 = vector.load %arg2[%c1, %c0_25, %c0_26] : memref<3x4x64xbf16, #tpu.memory_space<vmem>>, vector<1x4x64xbf16>
      %56 = vector.shape_cast %55 : vector<1x4x64xbf16> to vector<4x64xbf16>
      %cst_27 = arith.constant dense<0.000000e+00> : vector<56x64xf32>
      %57 = tpu.matmul %54, %56, %cst_27 {dimension_numbers = #tpu.dot_dimension_numbers<[1], [0], [0], [1], [0, 0, 1, 1], [], []>} : vector<56x4xbf16>, vector<4x64xbf16>, vector<56x64xf32> -> vector<56x64xf32>
      %58 = arith.addf %53, %57 : vector<56x64xf32>
      %59 = arith.truncf %49 : vector<56x4xf32> to vector<56x4xbf16>
      %c2 = arith.constant 2 : index
      %c0_28 = arith.constant 0 : index
      %c0_29 = arith.constant 0 : index
      %60 = vector.load %arg2[%c2, %c0_28, %c0_29] : memref<3x4x64xbf16, #tpu.memory_space<vmem>>, vector<1x4x64xbf16>
      %61 = vector.shape_cast %60 : vector<1x4x64xbf16> to vector<4x64xbf16>
      %cst_30 = arith.constant dense<0.000000e+00> : vector<56x64xf32>
      %62 = tpu.matmul %59, %61, %cst_30 {dimension_numbers = #tpu.dot_dimension_numbers<[1], [0], [0], [1], [0, 0, 1, 1], [], []>} : vector<56x4xbf16>, vector<4x64xbf16>, vector<56x64xf32> -> vector<56x64xf32>
      %63 = arith.addf %58, %62 : vector<56x64xf32>
      %c0_31 = arith.constant 0 : index
      %c0_32 = arith.constant 0 : index
      %64 = vector.load %arg3[%c0_31, %c0_32] : memref<1x64xf32, #tpu.memory_space<vmem>>, vector<1x64xf32>
      %65 = vector.broadcast %64 : vector<1x64xf32> to vector<56x64xf32>
      %66 = arith.addf %63, %65 : vector<56x64xf32>
      %cst_33 = arith.constant 1.000000e-01 : f32
      %67 = vector.broadcast %cst_33 : f32 to vector<56x64xf32>
      %68 = arith.mulf %67, %66 : vector<56x64xf32>
      %69 = arith.maximumf %66, %68 : vector<56x64xf32>
      %cst_34 = arith.constant 0.000000e+00 : f32
      %70 = vector.broadcast %cst_34 : f32 to vector<1x64xf32>
      %71 = vector.extract_strided_slice %69 {offsets = [0, 0], sizes = [55, 64], strides = [1, 1]} : vector<56x64xf32> to vector<55x64xf32>
      %72 = tpu.concatenate %70, %71 in 0 : vector<1x64xf32>, vector<55x64xf32> -> vector<56x64xf32>
      %cst_35 = arith.constant 0.000000e+00 : f32
      %73 = vector.shape_cast %32 : vector<56x1xi1> to vector<56x1xi1>
      %74 = vector.broadcast %73 : vector<56x1xi1> to vector<56x64xi1>
      %75 = vector.broadcast %cst_35 : f32 to vector<56x64xf32>
      %76 = arith.select %74, %75, %72 : vector<56x64xi1>, vector<56x64xf32>
      %77 = vector.extract_strided_slice %69 {offsets = [1, 0], sizes = [55, 64], strides = [1, 1]} : vector<56x64xf32> to vector<55x64xf32>
      %78 = tpu.concatenate %77, %70 in 0 : vector<55x64xf32>, vector<1x64xf32> -> vector<56x64xf32>
      %cst_36 = arith.constant 0.000000e+00 : f32
      %79 = vector.shape_cast %34 : vector<56x1xi1> to vector<56x1xi1>
      %80 = vector.broadcast %79 : vector<56x1xi1> to vector<56x64xi1>
      %81 = vector.broadcast %cst_36 : f32 to vector<56x64xf32>
      %82 = arith.select %80, %81, %78 : vector<56x64xi1>, vector<56x64xf32>
      %83 = arith.truncf %76 : vector<56x64xf32> to vector<56x64xbf16>
      %c0_37 = arith.constant 0 : index
      %c0_38 = arith.constant 0 : index
      %c0_39 = arith.constant 0 : index
      %84 = vector.load %arg4[%c0_37, %c0_38, %c0_39] : memref<3x64x64xbf16, #tpu.memory_space<vmem>>, vector<1x64x64xbf16>
      %85 = vector.shape_cast %84 : vector<1x64x64xbf16> to vector<64x64xbf16>
      %cst_40 = arith.constant dense<0.000000e+00> : vector<56x64xf32>
      %86 = tpu.matmul %83, %85, %cst_40 {dimension_numbers = #tpu.dot_dimension_numbers<[1], [0], [0], [1], [0, 0, 1, 1], [], []>} : vector<56x64xbf16>, vector<64x64xbf16>, vector<56x64xf32> -> vector<56x64xf32>
      %87 = arith.truncf %69 : vector<56x64xf32> to vector<56x64xbf16>
      %c1_41 = arith.constant 1 : index
      %c0_42 = arith.constant 0 : index
      %c0_43 = arith.constant 0 : index
      %88 = vector.load %arg4[%c1_41, %c0_42, %c0_43] : memref<3x64x64xbf16, #tpu.memory_space<vmem>>, vector<1x64x64xbf16>
      %89 = vector.shape_cast %88 : vector<1x64x64xbf16> to vector<64x64xbf16>
      %cst_44 = arith.constant dense<0.000000e+00> : vector<56x64xf32>
      %90 = tpu.matmul %87, %89, %cst_44 {dimension_numbers = #tpu.dot_dimension_numbers<[1], [0], [0], [1], [0, 0, 1, 1], [], []>} : vector<56x64xbf16>, vector<64x64xbf16>, vector<56x64xf32> -> vector<56x64xf32>
      %91 = arith.addf %86, %90 : vector<56x64xf32>
      %92 = arith.truncf %82 : vector<56x64xf32> to vector<56x64xbf16>
      %c2_45 = arith.constant 2 : index
      %c0_46 = arith.constant 0 : index
      %c0_47 = arith.constant 0 : index
      %93 = vector.load %arg4[%c2_45, %c0_46, %c0_47] : memref<3x64x64xbf16, #tpu.memory_space<vmem>>, vector<1x64x64xbf16>
      %94 = vector.shape_cast %93 : vector<1x64x64xbf16> to vector<64x64xbf16>
      %cst_48 = arith.constant dense<0.000000e+00> : vector<56x64xf32>
      %95 = tpu.matmul %92, %94, %cst_48 {dimension_numbers = #tpu.dot_dimension_numbers<[1], [0], [0], [1], [0, 0, 1, 1], [], []>} : vector<56x64xbf16>, vector<64x64xbf16>, vector<56x64xf32> -> vector<56x64xf32>
      %96 = arith.addf %91, %95 : vector<56x64xf32>
      %c0_49 = arith.constant 0 : index
      %c0_50 = arith.constant 0 : index
      %97 = vector.load %arg5[%c0_49, %c0_50] : memref<1x64xf32, #tpu.memory_space<vmem>>, vector<1x64xf32>
      %98 = vector.broadcast %97 : vector<1x64xf32> to vector<56x64xf32>
      %99 = arith.addf %96, %98 : vector<56x64xf32>
      %cst_51 = arith.constant 1.000000e-01 : f32
      %100 = vector.broadcast %cst_51 : f32 to vector<56x64xf32>
      %101 = arith.mulf %100, %99 : vector<56x64xf32>
      %102 = arith.maximumf %99, %101 : vector<56x64xf32>
      %cst_52 = arith.constant 0.000000e+00 : f32
      %103 = vector.broadcast %cst_52 : f32 to vector<1x64xf32>
      %104 = vector.extract_strided_slice %102 {offsets = [0, 0], sizes = [55, 64], strides = [1, 1]} : vector<56x64xf32> to vector<55x64xf32>
      %105 = tpu.concatenate %103, %104 in 0 : vector<1x64xf32>, vector<55x64xf32> -> vector<56x64xf32>
      %cst_53 = arith.constant 0.000000e+00 : f32
      %106 = vector.shape_cast %32 : vector<56x1xi1> to vector<56x1xi1>
      %107 = vector.broadcast %106 : vector<56x1xi1> to vector<56x64xi1>
      %108 = vector.broadcast %cst_53 : f32 to vector<56x64xf32>
      %109 = arith.select %107, %108, %105 : vector<56x64xi1>, vector<56x64xf32>
      %110 = vector.extract_strided_slice %102 {offsets = [1, 0], sizes = [55, 64], strides = [1, 1]} : vector<56x64xf32> to vector<55x64xf32>
      %111 = tpu.concatenate %110, %103 in 0 : vector<55x64xf32>, vector<1x64xf32> -> vector<56x64xf32>
      %cst_54 = arith.constant 0.000000e+00 : f32
      %112 = vector.shape_cast %34 : vector<56x1xi1> to vector<56x1xi1>
      %113 = vector.broadcast %112 : vector<56x1xi1> to vector<56x64xi1>
      %114 = vector.broadcast %cst_54 : f32 to vector<56x64xf32>
      %115 = arith.select %113, %114, %111 : vector<56x64xi1>, vector<56x64xf32>
      %116 = arith.truncf %109 : vector<56x64xf32> to vector<56x64xbf16>
      %c0_55 = arith.constant 0 : index
      %c0_56 = arith.constant 0 : index
      %c0_57 = arith.constant 0 : index
      %117 = vector.load %arg6[%c0_55, %c0_56, %c0_57] : memref<3x64x128xbf16, #tpu.memory_space<vmem>>, vector<1x64x128xbf16>
      %118 = vector.shape_cast %117 : vector<1x64x128xbf16> to vector<64x128xbf16>
      %cst_58 = arith.constant dense<0.000000e+00> : vector<56x128xf32>
      %119 = tpu.matmul %116, %118, %cst_58 {dimension_numbers = #tpu.dot_dimension_numbers<[1], [0], [0], [1], [0, 0, 1, 1], [], []>} : vector<56x64xbf16>, vector<64x128xbf16>, vector<56x128xf32> -> vector<56x128xf32>
      %120 = arith.truncf %102 : vector<56x64xf32> to vector<56x64xbf16>
      %c1_59 = arith.constant 1 : index
      %c0_60 = arith.constant 0 : index
      %c0_61 = arith.constant 0 : index
      %121 = vector.load %arg6[%c1_59, %c0_60, %c0_61] : memref<3x64x128xbf16, #tpu.memory_space<vmem>>, vector<1x64x128xbf16>
      %122 = vector.shape_cast %121 : vector<1x64x128xbf16> to vector<64x128xbf16>
      %cst_62 = arith.constant dense<0.000000e+00> : vector<56x128xf32>
      %123 = tpu.matmul %120, %122, %cst_62 {dimension_numbers = #tpu.dot_dimension_numbers<[1], [0], [0], [1], [0, 0, 1, 1], [], []>} : vector<56x64xbf16>, vector<64x128xbf16>, vector<56x128xf32> -> vector<56x128xf32>
      %124 = arith.addf %119, %123 : vector<56x128xf32>
      %125 = arith.truncf %115 : vector<56x64xf32> to vector<56x64xbf16>
      %c2_63 = arith.constant 2 : index
      %c0_64 = arith.constant 0 : index
      %c0_65 = arith.constant 0 : index
      %126 = vector.load %arg6[%c2_63, %c0_64, %c0_65] : memref<3x64x128xbf16, #tpu.memory_space<vmem>>, vector<1x64x128xbf16>
      %127 = vector.shape_cast %126 : vector<1x64x128xbf16> to vector<64x128xbf16>
      %cst_66 = arith.constant dense<0.000000e+00> : vector<56x128xf32>
      %128 = tpu.matmul %125, %127, %cst_66 {dimension_numbers = #tpu.dot_dimension_numbers<[1], [0], [0], [1], [0, 0, 1, 1], [], []>} : vector<56x64xbf16>, vector<64x128xbf16>, vector<56x128xf32> -> vector<56x128xf32>
      %129 = arith.addf %124, %128 : vector<56x128xf32>
      %c0_67 = arith.constant 0 : index
      %c0_68 = arith.constant 0 : index
      %130 = vector.load %arg7[%c0_67, %c0_68] : memref<1x128xf32, #tpu.memory_space<vmem>>, vector<1x128xf32>
      %131 = vector.broadcast %130 : vector<1x128xf32> to vector<56x128xf32>
      %132 = arith.addf %129, %131 : vector<56x128xf32>
      %cst_69 = arith.constant 1.000000e-01 : f32
      %133 = vector.broadcast %cst_69 : f32 to vector<56x128xf32>
      %134 = arith.mulf %133, %132 : vector<56x128xf32>
      %135 = arith.maximumf %132, %134 : vector<56x128xf32>
      %136 = arith.truncf %135 : vector<56x128xf32> to vector<56x128xbf16>
      %137 = vector.shape_cast %136 : vector<56x128xbf16> to vector<2x3584xbf16>
      %138 = vector.extract_strided_slice %137 {offsets = [0, 0], sizes = [2, 1792], strides = [1, 1]} : vector<2x3584xbf16> to vector<2x1792xbf16>
      %c0_70 = arith.constant 0 : index
      %c0_71 = arith.constant 0 : index
      %c0_72 = arith.constant 0 : index
      %139 = vector.load %arg19[%c0_70, %c0_71, %c0_72] : memref<2x2x1792xbf16, #tpu.memory_space<vmem>>, vector<1x2x1792xbf16>
      %140 = vector.shape_cast %139 : vector<1x2x1792xbf16> to vector<2x1792xbf16>
      %141 = vector.shape_cast %138 : vector<2x1792xbf16> to vector<1x2x1792xbf16>
      tpu.vector_store %arg19[%c0_70, %c0_71, %c0_72], %141 {strides = array<i32>} : memref<2x2x1792xbf16, #tpu.memory_space<vmem>>, vector<1x2x1792xbf16>,
      %142 = vector.extract_strided_slice %137 {offsets = [0, 1792], sizes = [2, 1792], strides = [1, 1]} : vector<2x3584xbf16> to vector<2x1792xbf16>
      %c1_73 = arith.constant 1 : index
      %c0_74 = arith.constant 0 : index
      %c0_75 = arith.constant 0 : index
      %143 = vector.load %arg19[%c1_73, %c0_74, %c0_75] : memref<2x2x1792xbf16, #tpu.memory_space<vmem>>, vector<1x2x1792xbf16>
      %144 = vector.shape_cast %143 : vector<1x2x1792xbf16> to vector<2x1792xbf16>
      %145 = vector.shape_cast %142 : vector<2x1792xbf16> to vector<1x2x1792xbf16>
      tpu.vector_store %arg19[%c1_73, %c0_74, %c0_75], %145 {strides = array<i32>} : memref<2x2x1792xbf16, #tpu.memory_space<vmem>>, vector<1x2x1792xbf16>,
      %c0_76 = arith.constant 0 : index
      %c0_77 = arith.constant 0 : index
      %146 = vector.load %arg11[%c0_76, %c0_77] : memref<2x256xf32, #tpu.memory_space<vmem>>, vector<2x256xf32>
      %147 = arith.truncf %146 : vector<2x256xf32> to vector<2x256xbf16>
      %c0_78 = arith.constant 0 : index
      %c0_79 = arith.constant 0 : index
      %148 = vector.load %arg9[%c0_78, %c0_79] : memref<256x1024xbf16, #tpu.memory_space<vmem>>, vector<256x1024xbf16>
      %cst_80 = arith.constant dense<0.000000e+00> : vector<2x1024xf32>
      %149 = tpu.matmul %147, %148, %cst_80 {dimension_numbers = #tpu.dot_dimension_numbers<[1], [0], [0], [1], [0, 0, 1, 1], [], []>} : vector<2x256xbf16>, vector<256x1024xbf16>, vector<2x1024xf32> -> vector<2x1024xf32>
      %c0_81 = arith.constant 0 : index
      %c0_82 = arith.constant 0 : index
      %150 = vector.load %arg10[%c0_81, %c0_82] : memref<1x1024xf32, #tpu.memory_space<vmem>>, vector<1x1024xf32>
      %151 = vector.broadcast %150 : vector<1x1024xf32> to vector<2x1024xf32>
      %152 = arith.addf %149, %151 : vector<2x1024xf32>
      %c0_83 = arith.constant 0 : index
      %c0_84 = arith.constant 0 : index
      %153 = vector.load %arg18[%c0_83, %c0_84] : memref<2x1024xf32, #tpu.memory_space<vmem>>, vector<2x1024xf32>
      tpu.vector_store %arg18[%c0_83, %c0_84], %152 {strides = array<i32>} : memref<2x1024xf32, #tpu.memory_space<vmem>>, vector<2x1024xf32>,
    } else {
    }
    %c0 = arith.constant 0 : index
    %c0_1 = arith.constant 0 : index
    %3 = vector.load %arg18[%c0, %c0_1] : memref<2x1024xf32, #tpu.memory_space<vmem>>, vector<2x1024xf32>
    %4 = arith.index_cast %arg0 : i32 to index
    %c0_2 = arith.constant 0 : index
    %c0_3 = arith.constant 0 : index
    %5 = vector.load %arg19[%4, %c0_2, %c0_3] : memref<2x2x1792xbf16, #tpu.memory_space<vmem>>, vector<1x2x1792xbf16>
    %6 = vector.shape_cast %5 : vector<1x2x1792xbf16> to vector<2x1792xbf16>
    %c0_4 = arith.constant 0 : index
    %c0_5 = arith.constant 0 : index
    %7 = vector.load %arg8[%c0_4, %c0_5] : memref<1792x1024xbf16, #tpu.memory_space<vmem>>, vector<1792x1024xbf16>
    %cst = arith.constant dense<0.000000e+00> : vector<2x1024xf32>
    %8 = tpu.matmul %6, %7, %cst {dimension_numbers = #tpu.dot_dimension_numbers<[1], [0], [0], [1], [0, 0, 1, 1], [], []>} : vector<2x1792xbf16>, vector<1792x1024xbf16>, vector<2x1024xf32> -> vector<2x1024xf32>
    %9 = arith.addf %3, %8 : vector<2x1024xf32>
    %c0_6 = arith.constant 0 : index
    %c0_7 = arith.constant 0 : index
    %10 = vector.load %arg18[%c0_6, %c0_7] : memref<2x1024xf32, #tpu.memory_space<vmem>>, vector<2x1024xf32>
    tpu.vector_store %arg18[%c0_6, %c0_7], %9 {strides = array<i32>} : memref<2x1024xf32, #tpu.memory_space<vmem>>, vector<2x1024xf32>,
    %c1_i32 = arith.constant 1 : i32
    %11 = arith.cmpi eq, %arg0, %c1_i32 : i32
    %12 = arith.extui %11 : i1 to i32
    %c0_i32_8 = arith.constant 0 : i32
    %13 = arith.cmpi ne, %12, %c0_i32_8 : i32
    scf.if %13 {
      %c0_9 = arith.constant 0 : index
      %c0_10 = arith.constant 0 : index
      %14 = vector.load %arg18[%c0_9, %c0_10] : memref<2x1024xf32, #tpu.memory_space<vmem>>, vector<2x1024xf32>
      %15 = vector.extract_strided_slice %14 {offsets = [0, 0], sizes = [2, 256], strides = [1, 1]} : vector<2x1024xf32> to vector<2x256xf32>
      %cst_11 = arith.constant 5.000000e-01 : f32
      %16 = vector.broadcast %cst_11 : f32 to vector<2x256xf32>
      %17 = arith.mulf %16, %15 : vector<2x256xf32>
      %18 = math.tanh %17 : vector<2x256xf32>
      %cst_12 = arith.constant 1.000000e+00 : f32
      %19 = vector.broadcast %cst_12 : f32 to vector<2x256xf32>
      %20 = arith.addf %18, %19 : vector<2x256xf32>
      %cst_13 = arith.constant 5.000000e-01 : f32
      %21 = vector.broadcast %cst_13 : f32 to vector<2x256xf32>
      %22 = arith.mulf %21, %20 : vector<2x256xf32>
      %23 = vector.extract_strided_slice %14 {offsets = [0, 256], sizes = [2, 256], strides = [1, 1]} : vector<2x1024xf32> to vector<2x256xf32>
      %cst_14 = arith.constant 5.000000e-01 : f32
      %24 = vector.broadcast %cst_14 : f32 to vector<2x256xf32>
      %25 = arith.mulf %24, %23 : vector<2x256xf32>
      %26 = math.tanh %25 : vector<2x256xf32>
      %cst_15 = arith.constant 1.000000e+00 : f32
      %27 = vector.broadcast %cst_15 : f32 to vector<2x256xf32>
      %28 = arith.addf %26, %27 : vector<2x256xf32>
      %cst_16 = arith.constant 5.000000e-01 : f32
      %29 = vector.broadcast %cst_16 : f32 to vector<2x256xf32>
      %30 = arith.mulf %29, %28 : vector<2x256xf32>
      %31 = vector.extract_strided_slice %14 {offsets = [0, 512], sizes = [2, 256], strides = [1, 1]} : vector<2x1024xf32> to vector<2x256xf32>
      %32 = math.tanh %31 : vector<2x256xf32>
      %33 = vector.extract_strided_slice %14 {offsets = [0, 768], sizes = [2, 256], strides = [1, 1]} : vector<2x1024xf32> to vector<2x256xf32>
      %cst_17 = arith.constant 5.000000e-01 : f32
      %34 = vector.broadcast %cst_17 : f32 to vector<2x256xf32>
      %35 = arith.mulf %34, %33 : vector<2x256xf32>
      %36 = math.tanh %35 : vector<2x256xf32>
      %cst_18 = arith.constant 1.000000e+00 : f32
      %37 = vector.broadcast %cst_18 : f32 to vector<2x256xf32>
      %38 = arith.addf %36, %37 : vector<2x256xf32>
      %cst_19 = arith.constant 5.000000e-01 : f32
      %39 = vector.broadcast %cst_19 : f32 to vector<2x256xf32>
      %40 = arith.mulf %39, %38 : vector<2x256xf32>
      %c0_20 = arith.constant 0 : index
      %c0_21 = arith.constant 0 : index
      %41 = vector.load %arg12[%c0_20, %c0_21] : memref<2x256xf32, #tpu.memory_space<vmem>>, vector<2x256xf32>
      %42 = arith.mulf %30, %41 : vector<2x256xf32>
      %43 = arith.mulf %22, %32 : vector<2x256xf32>
      %44 = arith.addf %42, %43 : vector<2x256xf32>
      %45 = math.tanh %44 : vector<2x256xf32>
      %46 = arith.mulf %40, %45 : vector<2x256xf32>
      %c0_22 = arith.constant 0 : index
      %c0_23 = arith.constant 0 : index
      %47 = vector.load %arg13[%c0_22, %c0_23] : memref<256x1xf32, #tpu.memory_space<vmem>>, vector<256x1xf32>
      %cst_24 = arith.constant dense<0.000000e+00> : vector<2x1xf32>
      %48 = tpu.matmul %46, %47, %cst_24 {dimension_numbers = #tpu.dot_dimension_numbers<[1], [0], [0], [1], [0, 0, 1, 1], [], []>} : vector<2x256xf32>, vector<256x1xf32>, vector<2x1xf32> -> vector<2x1xf32>
      %c0_25 = arith.constant 0 : index
      %c0_26 = arith.constant 0 : index
      %49 = vector.load %arg14[%c0_25, %c0_26] : memref<1x1xf32, #tpu.memory_space<vmem>>, vector<1x1xf32>
      %50 = vector.broadcast %49 : vector<1x1xf32> to vector<2x1xf32>
      %51 = arith.addf %48, %50 : vector<2x1xf32>
      %c0_27 = arith.constant 0 : index
      %c0_28 = arith.constant 0 : index
      %52 = vector.load %arg15[%c0_27, %c0_28] : memref<2x1xf32, #tpu.memory_space<vmem>>, vector<2x1xf32>
      tpu.vector_store %arg15[%c0_27, %c0_28], %51 {strides = array<i32>} : memref<2x1xf32, #tpu.memory_space<vmem>>, vector<2x1xf32>,
      %c0_29 = arith.constant 0 : index
      %c0_30 = arith.constant 0 : index
      %53 = vector.load %arg16[%c0_29, %c0_30] : memref<2x256xf32, #tpu.memory_space<vmem>>, vector<2x256xf32>
      tpu.vector_store %arg16[%c0_29, %c0_30], %46 {strides = array<i32>} : memref<2x256xf32, #tpu.memory_space<vmem>>, vector<2x256xf32>,
      %c0_31 = arith.constant 0 : index
      %c0_32 = arith.constant 0 : index
      %54 = vector.load %arg17[%c0_31, %c0_32] : memref<2x256xf32, #tpu.memory_space<vmem>>, vector<2x256xf32>
      tpu.vector_store %arg17[%c0_31, %c0_32], %44 {strides = array<i32>} : memref<2x256xf32, #tpu.memory_space<vmem>>, vector<2x256xf32>,
    } else {
    }
    return
  }
  func.func @transform_0(%arg0: i32) -> (i32, i32, i32) {
    %c0_i32 = arith.constant 0 : i32
    %c0_i32_0 = arith.constant 0 : i32
    %c0_i32_1 = arith.constant 0 : i32
    %c0_i32_2 = arith.constant 0 : i32
    return %c0_i32, %c0_i32_0, %c0_i32_1 : i32, i32, i32
  }
  func.func @transform_1(%arg0: i32) -> (i32, i32, i32) {
    %c0_i32 = arith.constant 0 : i32
    %c0_i32_0 = arith.constant 0 : i32
    %c0_i32_1 = arith.constant 0 : i32
    %c0_i32_2 = arith.constant 0 : i32
    return %c0_i32, %c0_i32_0, %c0_i32_1 : i32, i32, i32
  }
  func.func @transform_2(%arg0: i32) -> (i32, i32) {
    %c0_i32 = arith.constant 0 : i32
    %c0_i32_0 = arith.constant 0 : i32
    %c0_i32_1 = arith.constant 0 : i32
    return %c0_i32, %c0_i32_0 : i32, i32
  }
  func.func @transform_3(%arg0: i32) -> (i32, i32, i32) {
    %c0_i32 = arith.constant 0 : i32
    %c0_i32_0 = arith.constant 0 : i32
    %c0_i32_1 = arith.constant 0 : i32
    %c0_i32_2 = arith.constant 0 : i32
    return %c0_i32, %c0_i32_0, %c0_i32_1 : i32, i32, i32
  }
  func.func @transform_4(%arg0: i32) -> (i32, i32) {
    %c0_i32 = arith.constant 0 : i32
    %c0_i32_0 = arith.constant 0 : i32
    %c0_i32_1 = arith.constant 0 : i32
    return %c0_i32, %c0_i32_0 : i32, i32
  }
  func.func @transform_5(%arg0: i32) -> (i32, i32, i32) {
    %c0_i32 = arith.constant 0 : i32
    %c0_i32_0 = arith.constant 0 : i32
    %c0_i32_1 = arith.constant 0 : i32
    %c0_i32_2 = arith.constant 0 : i32
    return %c0_i32, %c0_i32_0, %c0_i32_1 : i32, i32, i32
  }
  func.func @transform_6(%arg0: i32) -> (i32, i32) {
    %c0_i32 = arith.constant 0 : i32
    %c0_i32_0 = arith.constant 0 : i32
    %c0_i32_1 = arith.constant 0 : i32
    return %c0_i32, %c0_i32_0 : i32, i32
  }
  func.func @transform_7(%arg0: i32) -> (i32, i32) {
    %c0_i32 = arith.constant 0 : i32
    %c0_i32_0 = arith.constant 0 : i32
    return %arg0, %c0_i32 : i32, i32
  }
  func.func @transform_8(%arg0: i32) -> (i32, i32) {
    %c0_i32 = arith.constant 0 : i32
    %c0_i32_0 = arith.constant 0 : i32
    %c0_i32_1 = arith.constant 0 : i32
    return %c0_i32, %c0_i32_0 : i32, i32
  }
  func.func @transform_9(%arg0: i32) -> (i32, i32) {
    %c0_i32 = arith.constant 0 : i32
    %c0_i32_0 = arith.constant 0 : i32
    %c0_i32_1 = arith.constant 0 : i32
    return %c0_i32, %c0_i32_0 : i32, i32
  }
  func.func @transform_10(%arg0: i32) -> (i32, i32) {
    %c0_i32 = arith.constant 0 : i32
    %c0_i32_0 = arith.constant 0 : i32
    %c0_i32_1 = arith.constant 0 : i32
    return %c0_i32, %c0_i32_0 : i32, i32
  }
  func.func @transform_11(%arg0: i32) -> (i32, i32) {
    %c0_i32 = arith.constant 0 : i32
    %c0_i32_0 = arith.constant 0 : i32
    %c0_i32_1 = arith.constant 0 : i32
    return %c0_i32, %c0_i32_0 : i32, i32
  }
  func.func @transform_12(%arg0: i32) -> (i32, i32) {
    %c0_i32 = arith.constant 0 : i32
    %c0_i32_0 = arith.constant 0 : i32
    %c0_i32_1 = arith.constant 0 : i32
    return %c0_i32, %c0_i32_0 : i32, i32
  }
  func.func @transform_13(%arg0: i32) -> (i32, i32) {
    %c0_i32 = arith.constant 0 : i32
    %c0_i32_0 = arith.constant 0 : i32
    %c0_i32_1 = arith.constant 0 : i32
    return %c0_i32, %c0_i32_0 : i32, i32
  }
  func.func @transform_14(%arg0: i32) -> (i32, i32) {
    %c0_i32 = arith.constant 0 : i32
    %c0_i32_0 = arith.constant 0 : i32
    %c0_i32_1 = arith.constant 0 : i32
    return %c0_i32, %c0_i32_0 : i32, i32
  }
  func.func @transform_15(%arg0: i32) -> (i32, i32) {
    %c0_i32 = arith.constant 0 : i32
    %c0_i32_0 = arith.constant 0 : i32
    %c0_i32_1 = arith.constant 0 : i32
    return %c0_i32, %c0_i32_0 : i32, i32
  }
  func.func @transform_16(%arg0: i32) -> (i32, i32) {
    %c0_i32 = arith.constant 0 : i32
    %c0_i32_0 = arith.constant 0 : i32
    %c0_i32_1 = arith.constant 0 : i32
    return %c0_i32, %c0_i32_0 : i32, i32
  }
}

</mosaic_0001>

<llo_original>
// kernel: critic_forward.1
$region0: #{critic_forward.1}
  #allocation0 [shape = 'u32[]', space=smem, size = 0x4, offset = 0x4, fixed_abs, tag = 'smem constant byte address 0x4 - core index']
  #allocation1 [shape = 'u32[144,128]{1,0:T(1,128)}', space=vmem, size = 0x12000, scoped, tag = 'internal scratch']
  #allocation2 [shape = 'f32[2,1024]{1,0:T(2,128)}', space=vmem, size = 0x2000, scoped, tag = 'scratch operand']
  #allocation3 [shape = 'bf16[2,2,1792]{2,1,0:T(2,128)(2,1)}', space=vmem, size = 0x3800, scoped, tag = 'scratch operand']
  #allocation4 [shape = 'f32[1,1]{1,0:T(1,128)S(1)}', space=vmem, size = 0x200, scoped, tag = 'scoped memory for critic_forward.1']
  %s0 = inlined_call_operand.vmem [shape: f32[2,28,4], index: 0, kind: input, shape index: {}]
  %s1 = inlined_call_operand.hbm [shape: bf16[3,4,64], index: 1, kind: input, shape index: {}]
  %s2 = inlined_call_operand.hbm [shape: f32[1,64], index: 2, kind: input, shape index: {}]
  %s3 = inlined_call_operand.hbm [shape: bf16[3,64,64], index: 3, kind: input, shape index: {}]
  %s4 = inlined_call_operand.hbm [shape: f32[1,64], index: 4, kind: input, shape index: {}]
  %s5 = inlined_call_operand.hbm [shape: bf16[3,64,128], index: 5, kind: input, shape index: {}]
  %s6 = inlined_call_operand.hbm [shape: f32[1,128], index: 6, kind: input, shape index: {}]
  %s7 = inlined_call_operand.hbm [shape: bf16[3584,1024], index: 7, kind: input, shape index: {}]
  %s8 = inlined_call_operand.hbm [shape: bf16[256,1024], index: 8, kind: input, shape index: {}]
  %s9 = inlined_call_operand.hbm [shape: f32[1,1024], index: 9, kind: input, shape index: {}]
  %s10 = inlined_call_operand.hbm [shape: f32[2,256], index: 10, kind: input, shape index: {}]
  %s11 = inlined_call_operand.hbm [shape: f32[2,256], index: 11, kind: input, shape index: {}]
  %s12 = inlined_call_operand.vmem [shape: f32[256,1], index: 12, kind: input, shape index: {}]
  %s13 = inlined_call_operand.<no memory space> [shape: f32[1,1], index: 13, kind: input, shape index: {}]
  %s14 = inlined_call_operand.vmem [shape: f32[2,1], index: 14, kind: output, shape index: {0}]
  %s15 = inlined_call_operand.hbm [shape: f32[2,256], index: 15, kind: output, shape index: {1}]
  %s16 = inlined_call_operand.hbm [shape: f32[2,256], index: 16, kind: output, shape index: {2}]
  %17 = xla_tuple %s14, %s15, %s16
  %s18 = sld [smem:[#allocation0]]
  $region157: #{critic_forward.1} parent=0
    _
  %s20 = ssub.s32 1, %s18
  %s21 = scalar_select 0, %s20, %s18
  %v22 = vstv %s13
  %23 = vst [vmem:[#allocation4] sm:$0x1] %v22
  $region1: #{critic_forward.1} parent=0
    #allocation5 [shape = 'u8[3072]{0}', space=vmem, size = 0xc00, scoped, tag = 'input window, operand 1, single buffered']
    #allocation6 [shape = 's32[2]{0}', space=sflag, size = 0x8, scoped, tag = 'scoped memory for critic_forward.1']
    #allocation7 [shape = 's32[2]{0}', space=sflag, size = 0x8, scoped, tag = 'scoped memory for critic_forward.1']
    #allocation8 [shape = 'u8[512]{0}', space=vmem, size = 0x400, scoped, tag = 'input window, operand 2, single buffered']
    #allocation9 [shape = 's32[1]{0}', space=sflag, size = 0x4, scoped, tag = 'scoped memory for critic_forward.1']
    #allocation10 [shape = 'u8[49152]{0}', space=vmem, size = 0xc000, scoped, tag = 'input window, operand 3, single buffered']
    #allocation11 [shape = 'u8[512]{0}', space=vmem, size = 0x400, scoped, tag = 'input window, operand 4, single buffered']
    #allocation12 [shape = 's32[1]{0}', space=sflag, size = 0x4, scoped, tag = 'scoped memory for critic_forward.1']
    #allocation13 [shape = 'u8[49152]{0}', space=vmem, size = 0xc000, scoped, tag = 'input window, operand 5, single buffered']
    #allocation14 [shape = 'u8[512]{0}', space=vmem, size = 0x400, scoped, tag = 'input window, operand 6, single buffered']
    #allocation15 [shape = 's32[1]{0}', space=sflag, size = 0x4, scoped, tag = 'scoped memory for critic_forward.1']
    #allocation16 [shape = 'u8[7340032]{0}', space=vmem, size = 0x700000, scoped, tag = 'input window, operand 7']
    #allocation17 [shape = 'u8[524288]{0}', space=vmem, size = 0x80000, scoped, tag = 'input window, operand 8, single buffered']
    #allocation18 [shape = 'u8[4096]{0}', space=vmem, size = 0x1000, scoped, tag = 'input window, operand 9, single buffered']
    #allocation19 [shape = 'u8[2048]{0}', space=vmem, size = 0x800, scoped, tag = 'input window, operand 10, single buffered']
    #allocation20 [shape = 'u8[2048]{0}', space=vmem, size = 0x800, scoped, tag = 'input window, operand 11, single buffered']
    #allocation21 [shape = 's32[1]{0}', space=sflag, size = 0x4, scoped, tag = 'scoped memory for critic_forward.1']
    #allocation22 [shape = 'u8[2048]{0}', space=vmem, size = 0x800, scoped, tag = 'output window, operand 1, single buffered']
    #allocation23 [shape = 'u8[2048]{0}', space=vmem, size = 0x800, scoped, tag = 'output window, operand 2, single buffered']
    #allocation24 [shape = 's32[1]{0}', space=sflag, size = 0x4, scoped, tag = 'scoped memory for critic_forward.1']
    %24 = vsyncpa [#allocation6], 0
    %25 = vsyncpa [#allocation9], 0
    %26 = vsyncpa [#allocation12], 0
    %27 = vsyncpa [#allocation15], 0
    %28 = vsyncpa [#allocation21], 0
    %29 = vsyncpa [#allocation7], 0
    %30 = vsyncpa [#allocation24], 0
    loop: start=0, step=1, limit=4
    $region2: #{critic_forward.1} parent=1 // loop_pre_header
      _
    $region3: #{critic_forward.1} parent=1 // loop_header
      %s32 = sphi 0, %s36
      %p33 = scmp.ge.s32.totalorder %s32, 4
      %s40 = sphi 0, %s40
      %s42 = sphi 0, %s40
      %s43 = sphi 0, %s42
      %s57 = sphi 0, %s43
      %s61 = sphi 0, %s61
      %s63 = sphi 0, %s61
      %s64 = sphi 0, %s63
      %s78 = sphi 0, %s64
      %s82 = sphi 0, %s82
      %s84 = sphi 0, %s82
      %s85 = sphi 0, %s84
      %s99 = sphi 0, %s85
      %s103 = sphi 0, %s103
      %s105 = sphi 0, %s103
      %s106 = sphi 0, %s105
      %s120 = sphi 0, %s106
      %s124 = sphi 0, %s124
      %s126 = sphi 0, %s124
      %s127 = sphi 0, %s126
      %s141 = sphi 0, %s127
      %s145 = sphi 0, %s145
      %s147 = sphi 0, %s145
      %s148 = sphi 0, %s147
      %s162 = sphi 0, %s148
      %s166 = sphi 0, %s166
      %s168 = sphi 0, %s166
      %s169 = sphi 0, %s168
      %s183 = sphi 0, %s169
      %s189 = sphi 0, %s191
      %s192 = sphi 0, %s189
      %s193 = sphi 0, %s192
      %s209 = sphi 0, %s193
      %s213 = sphi 0, %s213
      %s215 = sphi 0, %s213
      %s216 = sphi 0, %s215
      %s230 = sphi 0, %s216
      %s234 = sphi 0, %s234
      %s236 = sphi 0, %s234
      %s237 = sphi 0, %s236
      %s251 = sphi 0, %s237
      %s255 = sphi 0, %s255
      %s257 = sphi 0, %s255
      %s258 = sphi 0, %s257
      %s272 = sphi 0, %s258
      %s276 = sphi 0, %s276
      %s278 = sphi 0, %s276
      %s279 = sphi 0, %s278
      %s293 = sphi 0, %s279
      %s297 = sphi 0, %s297
      %s299 = sphi 0, %s297
      %s300 = sphi 0, %s299
      %s314 = sphi 0, %s300
      %s318 = sphi 0, %s318
      %s320 = sphi 0, %s318
      %s321 = sphi 0, %s320
      %s335 = sphi 0, %s321
      %s339 = sphi 0, %s339
      %s341 = sphi 0, %s339
      %s342 = sphi 0, %s341
      %s356 = sphi 0, %s342
      %s360 = sphi 0, %s360
      %s362 = sphi 0, %s360
      %s363 = sphi 0, %s362
      %s377 = sphi 0, %s363
      %s381 = sphi 0, %s381
      %s383 = sphi 0, %s381
      %s384 = sphi 0, %s383
      %s398 = sphi 0, %s384
    $region4: #{critic_forward.1} parent=1 // loop_header_branch
      %35 = sbr.rel (%p33) target = $region8
    $region5: #{critic_forward.1} parent=1 // loop_body
      %s37 = ssub.s32 %s32, 1
      %s38 = ssub.s32 %s32, 2
      %s39 = sadd.s32 %s32, 1
      %s41 = sadd.s32 %s40, 1
      %p44 = scmp.eq.s32.totalorder %s32, 1
      %p45 = scmp.ne.s32.totalorder %s40, %s42
      %p46 = scmp.eq.s32.totalorder %s32, 0
      %p47 = por %p45, %p46
      %p48 = scmp.ne.s32.totalorder %s40, %s42
      %p49 = scmp.eq.s32.totalorder %s37, 1
      %p50 = por %p48, %p49
      %p51 = scmp.ne.s32.totalorder %s42, %s43
      %p52 = scmp.eq.s32.totalorder %s37, 0
      %p53 = por %p51, %p52
      %p54 = scmp.ne.s32.totalorder %s42, %s43
      %p55 = scmp.eq.s32.totalorder %s38, 1
      %p56 = por %p54, %p55
      %p58 = scmp.ne.s32.totalorder %s43, %s57
      %p59 = scmp.eq.s32.totalorder %s38, 0
      %p60 = por %p58, %p59
      %s62 = sadd.s32 %s61, 1
      %p65 = scmp.eq.s32.totalorder %s32, 1
      %p66 = scmp.ne.s32.totalorder %s61, %s63
      %p67 = scmp.eq.s32.totalorder %s32, 0
      %p68 = por %p66, %p67
      %p69 = scmp.ne.s32.totalorder %s61, %s63
      %p70 = scmp.eq.s32.totalorder %s37, 1
      %p71 = por %p69, %p70
      %p72 = scmp.ne.s32.totalorder %s63, %s64
      %p73 = scmp.eq.s32.totalorder %s37, 0
      %p74 = por %p72, %p73
      %p75 = scmp.ne.s32.totalorder %s63, %s64
      %p76 = scmp.eq.s32.totalorder %s38, 1
      %p77 = por %p75, %p76
      %p79 = scmp.ne.s32.totalorder %s64, %s78
      %p80 = scmp.eq.s32.totalorder %s38, 0
      %p81 = por %p79, %p80
      %s83 = sadd.s32 %s82, 1
      %p86 = scmp.eq.s32.totalorder %s32, 1
      %p87 = scmp.ne.s32.totalorder %s82, %s84
      %p88 = scmp.eq.s32.totalorder %s32, 0
      %p89 = por %p87, %p88
      %p90 = scmp.ne.s32.totalorder %s82, %s84
      %p91 = scmp.eq.s32.totalorder %s37, 1
      %p92 = por %p90, %p91
      %p93 = scmp.ne.s32.totalorder %s84, %s85
      %p94 = scmp.eq.s32.totalorder %s37, 0
      %p95 = por %p93, %p94
      %p96 = scmp.ne.s32.totalorder %s84, %s85
      %p97 = scmp.eq.s32.totalorder %s38, 1
      %p98 = por %p96, %p97
      %p100 = scmp.ne.s32.totalorder %s85, %s99
      %p101 = scmp.eq.s32.totalorder %s38, 0
      %p102 = por %p100, %p101
      %s104 = sadd.s32 %s103, 1
      %p107 = scmp.eq.s32.totalorder %s32, 1
      %p108 = scmp.ne.s32.totalorder %s103, %s105
      %p109 = scmp.eq.s32.totalorder %s32, 0
      %p110 = por %p108, %p109
      %p111 = scmp.ne.s32.totalorder %s103, %s105
      %p112 = scmp.eq.s32.totalorder %s37, 1
      %p113 = por %p111, %p112
      %p114 = scmp.ne.s32.totalorder %s105, %s106
      %p115 = scmp.eq.s32.totalorder %s37, 0
      %p116 = por %p114, %p115
      %p117 = scmp.ne.s32.totalorder %s105, %s106
      %p118 = scmp.eq.s32.totalorder %s38, 1
      %p119 = por %p117, %p118
      %p121 = scmp.ne.s32.totalorder %s106, %s120
      %p122 = scmp.eq.s32.totalorder %s38, 0
      %p123 = por %p121, %p122
      %s125 = sadd.s32 %s124, 1
      %p128 = scmp.eq.s32.totalorder %s32, 1
      %p129 = scmp.ne.s32.totalorder %s124, %s126
      %p130 = scmp.eq.s32.totalorder %s32, 0
      %p131 = por %p129, %p130
      %p132 = scmp.ne.s32.totalorder %s124, %s126
      %p133 = scmp.eq.s32.totalorder %s37, 1
      %p134 = por %p132, %p133
      %p135 = scmp.ne.s32.totalorder %s126, %s127
      %p136 = scmp.eq.s32.totalorder %s37, 0
      %p137 = por %p135, %p136
      %p138 = scmp.ne.s32.totalorder %s126, %s127
      %p139 = scmp.eq.s32.totalorder %s38, 1
      %p140 = por %p138, %p139
      %p142 = scmp.ne.s32.totalorder %s127, %s141
      %p143 = scmp.eq.s32.totalorder %s38, 0
      %p144 = por %p142, %p143
      %s146 = sadd.s32 %s145, 1
      %p149 = scmp.eq.s32.totalorder %s32, 1
      %p150 = scmp.ne.s32.totalorder %s145, %s147
      %p151 = scmp.eq.s32.totalorder %s32, 0
      %p152 = por %p150, %p151
      %p153 = scmp.ne.s32.totalorder %s145, %s147
      %p154 = scmp.eq.s32.totalorder %s37, 1
      %p155 = por %p153, %p154
      %p156 = scmp.ne.s32.totalorder %s147, %s148
      %p157 = scmp.eq.s32.totalorder %s37, 0
      %p158 = por %p156, %p157
      %p159 = scmp.ne.s32.totalorder %s147, %s148
      %p160 = scmp.eq.s32.totalorder %s38, 1
      %p161 = por %p159, %p160
      %p163 = scmp.ne.s32.totalorder %s148, %s162
      %p164 = scmp.eq.s32.totalorder %s38, 0
      %p165 = por %p163, %p164
      %s167 = sadd.s32 %s166, 1
      %p170 = scmp.eq.s32.totalorder %s32, 1
      %p171 = scmp.ne.s32.totalorder %s166, %s168
      %p172 = scmp.eq.s32.totalorder %s32, 0
      %p173 = por %p171, %p172
      %p174 = scmp.ne.s32.totalorder %s166, %s168
      %p175 = scmp.eq.s32.totalorder %s37, 1
      %p176 = por %p174, %p175
      %p177 = scmp.ne.s32.totalorder %s168, %s169
      %p178 = scmp.eq.s32.totalorder %s37, 0
      %p179 = por %p177, %p178
      %p180 = scmp.ne.s32.totalorder %s168, %s169
      %p181 = scmp.eq.s32.totalorder %s38, 1
      %p182 = por %p180, %p181
      %p184 = scmp.ne.s32.totalorder %s169, %s183
      %p185 = scmp.eq.s32.totalorder %s38, 0
      %p186 = por %p184, %p185
      %s187 = ssub.s32 %s32, %s39
      %p188 = scmp.eq.s32.totalorder %s187, 0
      %s190 = sadd.s32 %s189, 1
      %s191 = scalar_select %p188, %s189, %s190
      %p194 = pneg %p188
      %p195 = scmp.eq.s32.totalorder %s32, 1
      %p196 = por %p194, %p195
      %p197 = scmp.ne.s32.totalorder %s189, %s192
      %p198 = scmp.eq.s32.totalorder %s32, 0
      %p199 = por %p197, %p198
      %p200 = scmp.ne.s32.totalorder %s189, %s192
      %p201 = scmp.eq.s32.totalorder %s37, 1
      %p202 = por %p200, %p201
      %p203 = scmp.ne.s32.totalorder %s192, %s193
      %p204 = scmp.eq.s32.totalorder %s37, 0
      %p205 = por %p203, %p204
      %p206 = scmp.ne.s32.totalorder %s192, %s193
      %p207 = scmp.eq.s32.totalorder %s38, 1
      %p208 = por %p206, %p207
      %p210 = scmp.ne.s32.totalorder %s193, %s209
      %p211 = scmp.eq.s32.totalorder %s38, 0
      %p212 = por %p210, %p211
      %s214 = sadd.s32 %s213, 1
      %p217 = scmp.eq.s32.totalorder %s32, 1
      %p218 = scmp.ne.s32.totalorder %s213, %s215
      %p219 = scmp.eq.s32.totalorder %s32, 0
      %p220 = por %p218, %p219
      %p221 = scmp.ne.s32.totalorder %s213, %s215
      %p222 = scmp.eq.s32.totalorder %s37, 1
      %p223 = por %p221, %p222
      %p224 = scmp.ne.s32.totalorder %s215, %s216
      %p225 = scmp.eq.s32.totalorder %s37, 0
      %p226 = por %p224, %p225
      %p227 = scmp.ne.s32.totalorder %s215, %s216
      %p228 = scmp.eq.s32.totalorder %s38, 1
      %p229 = por %p227, %p228
      %p231 = scmp.ne.s32.totalorder %s216, %s230
      %p232 = scmp.eq.s32.totalorder %s38, 0
      %p233 = por %p231, %p232
      %s235 = sadd.s32 %s234, 1
      %p238 = scmp.eq.s32.totalorder %s32, 1
      %p239 = scmp.ne.s32.totalorder %s234, %s236
      %p240 = scmp.eq.s32.totalorder %s32, 0
      %p241 = por %p239, %p240
      %p242 = scmp.ne.s32.totalorder %s234, %s236
      %p243 = scmp.eq.s32.totalorder %s37, 1
      %p244 = por %p242, %p243
      %p245 = scmp.ne.s32.totalorder %s236, %s237
      %p246 = scmp.eq.s32.totalorder %s37, 0
      %p247 = por %p245, %p246
      %p248 = scmp.ne.s32.totalorder %s236, %s237
      %p249 = scmp.eq.s32.totalorder %s38, 1
      %p250 = por %p248, %p249
      %p252 = scmp.ne.s32.totalorder %s237, %s251
      %p253 = scmp.eq.s32.totalorder %s38, 0
      %p254 = por %p252, %p253
      %s256 = sadd.s32 %s255, 1
      %p259 = scmp.eq.s32.totalorder %s32, 1
      %p260 = scmp.ne.s32.totalorder %s255, %s257
      %p261 = scmp.eq.s32.totalorder %s32, 0
      %p262 = por %p260, %p261
      %p263 = scmp.ne.s32.totalorder %s255, %s257
      %p264 = scmp.eq.s32.totalorder %s37, 1
      %p265 = por %p263, %p264
      %p266 = scmp.ne.s32.totalorder %s257, %s258
      %p267 = scmp.eq.s32.totalorder %s37, 0
      %p268 = por %p266, %p267
      %p269 = scmp.ne.s32.totalorder %s257, %s258
      %p270 = scmp.eq.s32.totalorder %s38, 1
      %p271 = por %p269, %p270
      %p273 = scmp.ne.s32.totalorder %s258, %s272
      %p274 = scmp.eq.s32.totalorder %s38, 0
      %p275 = por %p273, %p274
      %s277 = sadd.s32 %s276, 1
      %p280 = scmp.eq.s32.totalorder %s32, 1
      %p281 = scmp.ne.s32.totalorder %s276, %s278
      %p282 = scmp.eq.s32.totalorder %s32, 0
      %p283 = por %p281, %p282
      %p284 = scmp.ne.s32.totalorder %s276, %s278
      %p285 = scmp.eq.s32.totalorder %s37, 1
      %p286 = por %p284, %p285
      %p287 = scmp.ne.s32.totalorder %s278, %s279
      %p288 = scmp.eq.s32.totalorder %s37, 0
      %p289 = por %p287, %p288
      %p290 = scmp.ne.s32.totalorder %s278, %s279
      %p291 = scmp.eq.s32.totalorder %s38, 1
      %p292 = por %p290, %p291
      %p294 = scmp.ne.s32.totalorder %s279, %s293
      %p295 = scmp.eq.s32.totalorder %s38, 0
      %p296 = por %p294, %p295
      %s298 = sadd.s32 %s297, 1
      %p301 = scmp.eq.s32.totalorder %s32, 1
      %p302 = scmp.ne.s32.totalorder %s297, %s299
      %p303 = scmp.eq.s32.totalorder %s32, 0
      %p304 = por %p302, %p303
      %p305 = scmp.ne.s32.totalorder %s297, %s299
      %p306 = scmp.eq.s32.totalorder %s37, 1
      %p307 = por %p305, %p306
      %p308 = scmp.ne.s32.totalorder %s299, %s300
      %p309 = scmp.eq.s32.totalorder %s37, 0
      %p310 = por %p308, %p309
      %p311 = scmp.ne.s32.totalorder %s299, %s300
      %p312 = scmp.eq.s32.totalorder %s38, 1
      %p313 = por %p311, %p312
      %p315 = scmp.ne.s32.totalorder %s300, %s314
      %p316 = scmp.eq.s32.totalorder %s38, 0
      %p317 = por %p315, %p316
      %s319 = sadd.s32 %s318, 1
      %p322 = scmp.eq.s32.totalorder %s32, 1
      %p323 = scmp.ne.s32.totalorder %s318, %s320
      %p324 = scmp.eq.s32.totalorder %s32, 0
      %p325 = por %p323, %p324
      %p326 = scmp.ne.s32.totalorder %s318, %s320
      %p327 = scmp.eq.s32.totalorder %s37, 1
      %p328 = por %p326, %p327
      %p329 = scmp.ne.s32.totalorder %s320, %s321
      %p330 = scmp.eq.s32.totalorder %s37, 0
      %p331 = por %p329, %p330
      %p332 = scmp.ne.s32.totalorder %s320, %s321
      %p333 = scmp.eq.s32.totalorder %s38, 1
      %p334 = por %p332, %p333
      %p336 = scmp.ne.s32.totalorder %s321, %s335
      %p337 = scmp.eq.s32.totalorder %s38, 0
      %p338 = por %p336, %p337
      %s340 = sadd.s32 %s339, 1
      %p343 = scmp.eq.s32.totalorder %s32, 1
      %p344 = scmp.ne.s32.totalorder %s339, %s341
      %p345 = scmp.eq.s32.totalorder %s32, 0
      %p346 = por %p344, %p345
      %p347 = scmp.ne.s32.totalorder %s339, %s341
      %p348 = scmp.eq.s32.totalorder %s37, 1
      %p349 = por %p347, %p348
      %p350 = scmp.ne.s32.totalorder %s341, %s342
      %p351 = scmp.eq.s32.totalorder %s37, 0
      %p352 = por %p350, %p351
      %p353 = scmp.ne.s32.totalorder %s341, %s342
      %p354 = scmp.eq.s32.totalorder %s38, 1
      %p355 = por %p353, %p354
      %p357 = scmp.ne.s32.totalorder %s342, %s356
      %p358 = scmp.eq.s32.totalorder %s38, 0
      %p359 = por %p357, %p358
      %s361 = sadd.s32 %s360, 1
      %p364 = scmp.eq.s32.totalorder %s32, 1
      %p365 = scmp.ne.s32.totalorder %s360, %s362
      %p366 = scmp.eq.s32.totalorder %s32, 0
      %p367 = por %p365, %p366
      %p368 = scmp.ne.s32.totalorder %s360, %s362
      %p369 = scmp.eq.s32.totalorder %s37, 1
      %p370 = por %p368, %p369
      %p371 = scmp.ne.s32.totalorder %s362, %s363
      %p372 = scmp.eq.s32.totalorder %s37, 0
      %p373 = por %p371, %p372
      %p374 = scmp.ne.s32.totalorder %s362, %s363
      %p375 = scmp.eq.s32.totalorder %s38, 1
      %p376 = por %p374, %p375
      %p378 = scmp.ne.s32.totalorder %s363, %s377
      %p379 = scmp.eq.s32.totalorder %s38, 0
      %p380 = por %p378, %p379
      %s382 = sadd.s32 %s381, 1
      %p385 = scmp.eq.s32.totalorder %s32, 1
      %p386 = scmp.ne.s32.totalorder %s381, %s383
      %p387 = scmp.eq.s32.totalorder %s32, 0
      %p388 = por %p386, %p387
      %p389 = scmp.ne.s32.totalorder %s381, %s383
      %p390 = scmp.eq.s32.totalorder %s37, 1
      %p391 = por %p389, %p390
      %p392 = scmp.ne.s32.totalorder %s383, %s384
      %p393 = scmp.eq.s32.totalorder %s37, 0
      %p394 = por %p392, %p393
      %p395 = scmp.ne.s32.totalorder %s383, %s384
      %p396 = scmp.eq.s32.totalorder %s38, 1
      %p397 = por %p395, %p396
      %p399 = scmp.ne.s32.totalorder %s384, %s398
      %p400 = scmp.eq.s32.totalorder %s38, 0
      %p401 = por %p399, %p400
      %p402 = scmp.le.s32.totalorder 1, %s32
      %p403 = scmp.lt.s32.totalorder %s32, 3
      %p404 = pnand %p402, %p403
      %p405 = pneg %p404
      // Predicated region
      $region9: #{critic_forward.1} parent=5 // pred_check
        _
      $region10: #{critic_forward.1} parent=5 // pred_check_branch
        %407 = sbr.rel (%p404) target = $region12
      $region11: #{critic_forward.1} parent=5 // pred_region
        %s408 = ssub.s32 %s32, 1
        // Predicated region
        $region13: #{critic_forward.1} parent=11 // pred_check
          %p409 = pneg %p53
        $region14: #{critic_forward.1} parent=11 // pred_check_branch
          %411 = sbr.rel (%p409) target = $region16
        $region15: #{critic_forward.1} parent=11 // pred_region
          _
        $region16: #{critic_forward.1} parent=11 // pred_fallthru
          _
        // Predicated region
        $region17: #{critic_forward.1} parent=11 // pred_check
          %p412 = pneg %p74
        $region18: #{critic_forward.1} parent=11 // pred_check_branch
          %414 = sbr.rel (%p412) target = $region20
        $region19: #{critic_forward.1} parent=11 // pred_region
          %s416 = ssub.s32 96, 96
          %417 = vsyncadd [#allocation6], %s416
          %s418 = sshll.u32 [#allocation5], 4
          %s419 = int_to_ptr.vmem [resolvable:$true] %s418
          %424 = dma.hbm_to_vmem [thread:$0]  %s1, 96, %s419, [#allocation6], 32, 32, 2
        $region20: #{critic_forward.1} parent=11 // pred_fallthru
          _
        // Predicated region
        $region21: #{critic_forward.1} parent=11 // pred_check
          %p425 = pneg %p95
        $region22: #{critic_forward.1} parent=11 // pred_check_branch
          %427 = sbr.rel (%p425) target = $region24
        $region23: #{critic_forward.1} parent=11 // pred_region
          %s429 = ssub.s32 16, 16
          %430 = vsyncadd [#allocation9], %s429
          %s432 = sshll.u32 [#allocation8], 4
          %s433 = int_to_ptr.vmem [resolvable:$true] %s432
          %435 = dma.hbm_to_vmem [thread:$0]  %s2, 16, %s433, [#allocation9]
        $region24: #{critic_forward.1} parent=11 // pred_fallthru
          _
        // Predicated region
        $region25: #{critic_forward.1} parent=11 // pred_check
          %p436 = pneg %p116
        $region26: #{critic_forward.1} parent=11 // pred_check_branch
          %438 = sbr.rel (%p436) target = $region28
        $region27: #{critic_forward.1} parent=11 // pred_region
          %s440 = ssub.s32 1536, 1536
          %441 = vsyncadd [#allocation9], %s440
          %s442 = sshll.u32 [#allocation10], 4
          %s443 = int_to_ptr.vmem [resolvable:$true] %s442
          %448 = dma.hbm_to_vmem [thread:$0]  %s3, 1536, %s443, [#allocation9], 64, 64, 4
        $region28: #{critic_forward.1} parent=11 // pred_fallthru
          _
        // Predicated region
        $region29: #{critic_forward.1} parent=11 // pred_check
          %p449 = pneg %p137
        $region30: #{critic_forward.1} parent=11 // pred_check_branch
          %451 = sbr.rel (%p449) target = $region32
        $region31: #{critic_forward.1} parent=11 // pred_region
          %s453 = ssub.s32 16, 16
          %454 = vsyncadd [#allocation12], %s453
          %s456 = sshll.u32 [#allocation11], 4
          %s457 = int_to_ptr.vmem [resolvable:$true] %s456
          %459 = dma.hbm_to_vmem [thread:$0]  %s4, 16, %s457, [#allocation12]
        $region32: #{critic_forward.1} parent=11 // pred_fallthru
          _
        // Predicated region
        $region33: #{critic_forward.1} parent=11 // pred_check
          %p460 = pneg %p158
        $region34: #{critic_forward.1} parent=11 // pred_check_branch
          %462 = sbr.rel (%p460) target = $region36
        $region35: #{critic_forward.1} parent=11 // pred_region
          %s464 = ssub.s32 1536, 1536
          %465 = vsyncadd [#allocation12], %s464
          %s466 = sshll.u32 [#allocation13], 4
          %s467 = int_to_ptr.vmem [resolvable:$true] %s466
          %472 = dma.hbm_to_vmem [thread:$0]  %s5, 1536, %s467, [#allocation12], 64, 64, 4
        $region36: #{critic_forward.1} parent=11 // pred_fallthru
          _
        // Predicated region
        $region37: #{critic_forward.1} parent=11 // pred_check
          %p473 = pneg %p179
        $region38: #{critic_forward.1} parent=11 // pred_check_branch
          %475 = sbr.rel (%p473) target = $region40
        $region39: #{critic_forward.1} parent=11 // pred_region
          %s477 = ssub.s32 16, 16
          %478 = vsyncadd [#allocation15], %s477
          %s480 = sshll.u32 [#allocation14], 4
          %s481 = int_to_ptr.vmem [resolvable:$true] %s480
          %483 = dma.hbm_to_vmem [thread:$0]  %s6, 16, %s481, [#allocation15]
        $region40: #{critic_forward.1} parent=11 // pred_fallthru
          _
        // Predicated region
        $region41: #{critic_forward.1} parent=11 // pred_check
          %p484 = pneg %p226
        $region42: #{critic_forward.1} parent=11 // pred_check_branch
          %486 = sbr.rel (%p484) target = $region44
        $region43: #{critic_forward.1} parent=11 // pred_region
          %s488 = ssub.s32 16384, 16384
          %489 = vsyncadd [#allocation9], %s488
          %s490 = sshll.u32 [#allocation17], 4
          %s491 = int_to_ptr.vmem [resolvable:$true] %s490
          %496 = dma.hbm_to_vmem [thread:$0]  %s8, 16384, %s491, [#allocation9], 512, 512, 32
        $region44: #{critic_forward.1} parent=11 // pred_fallthru
          _
        // Predicated region
        $region45: #{critic_forward.1} parent=11 // pred_check
          %p497 = pneg %p247
        $region46: #{critic_forward.1} parent=11 // pred_check_branch
          %499 = sbr.rel (%p497) target = $region48
        $region47: #{critic_forward.1} parent=11 // pred_region
          %s501 = ssub.s32 128, 128
          %502 = vsyncadd [#allocation12], %s501
          %s504 = sshll.u32 [#allocation18], 4
          %s505 = int_to_ptr.vmem [resolvable:$true] %s504
          %507 = dma.hbm_to_vmem [thread:$0]  %s9, 128, %s505, [#allocation12]
        $region48: #{critic_forward.1} parent=11 // pred_fallthru
          _
        // Predicated region
        $region49: #{critic_forward.1} parent=11 // pred_check
          %p508 = pneg %p268
        $region50: #{critic_forward.1} parent=11 // pred_check_branch
          %510 = sbr.rel (%p508) target = $region52
        $region51: #{critic_forward.1} parent=11 // pred_region
          %s512 = ssub.s32 64, 64
          %513 = vsyncadd [#allocation15], %s512
          %s515 = sshll.u32 [#allocation19], 4
          %s516 = int_to_ptr.vmem [resolvable:$true] %s515
          %518 = dma.hbm_to_vmem [thread:$0]  %s10, 64, %s516, [#allocation15]
        $region52: #{critic_forward.1} parent=11 // pred_fallthru
          _
        // Predicated region
        $region53: #{critic_forward.1} parent=11 // pred_check
          %p519 = pneg %p289
        $region54: #{critic_forward.1} parent=11 // pred_check_branch
          %521 = sbr.rel (%p519) target = $region56
        $region55: #{critic_forward.1} parent=11 // pred_region
          %s523 = ssub.s32 64, 64
          %524 = vsyncadd [#allocation21], %s523
          %s526 = sshll.u32 [#allocation20], 4
          %s527 = int_to_ptr.vmem [resolvable:$true] %s526
          %529 = dma.hbm_to_vmem [thread:$0]  %s11, 64, %s527, [#allocation21]
        $region56: #{critic_forward.1} parent=11 // pred_fallthru
          _
        // Predicated region
        $region57: #{critic_forward.1} parent=11 // pred_check
          %p530 = pneg %p310
        $region58: #{critic_forward.1} parent=11 // pred_check_branch
          %532 = sbr.rel (%p530) target = $region60
        $region59: #{critic_forward.1} parent=11 // pred_region
          _
        $region60: #{critic_forward.1} parent=11 // pred_fallthru
          _
        // Predicated region
        $region61: #{critic_forward.1} parent=11 // pred_check
          %p533 = pneg %p331
        $region62: #{critic_forward.1} parent=11 // pred_check_branch
          %535 = sbr.rel (%p533) target = $region64
        $region63: #{critic_forward.1} parent=11 // pred_region
          _
        $region64: #{critic_forward.1} parent=11 // pred_fallthru
          _
      $region12: #{critic_forward.1} parent=5 // pred_fallthru
        _
      %p536 = scmp.lt.s32.totalorder %s32, 2
      // Predicated region
      $region65: #{critic_forward.1} parent=5 // pred_check
        %p537 = pneg %p536
      $region66: #{critic_forward.1} parent=5 // pred_check_branch
        %539 = sbr.rel (%p537) target = $region68
      $region67: #{critic_forward.1} parent=5 // pred_region
        // Predicated region
        $region69: #{critic_forward.1} parent=67 // pred_check
          %p540 = pneg %p199
        $region70: #{critic_forward.1} parent=67 // pred_check_branch
          %542 = sbr.rel (%p540) target = $region72
        $region71: #{critic_forward.1} parent=67 // pred_region
          %s543 = sand.u32 %s32, 1
          %s544 = scalar_lea.sflag [#allocation6], %s543
          %s545 = sand.u32 %s189, 1
          %s546 = smul.addr %s545, 7168
          %s547 = scalar_lea.vmem [#allocation16], %s546
          %s548 = smul.u32 224, %s32
          %s550 = ssub.s32 114688, 114688
          %551 = vsyncadd %s544, %s550
          %s552 = smul.addr %s548, 8
          %s553 = smul.addr %s552, 64
          %s554 = scalar_lea.hbm %s7, %s553
          %s555 = sshll.u32 %s547, 4
          %s556 = int_to_ptr.vmem [resolvable:$true] %s555
          %561 = dma.hbm_to_vmem [thread:$0]  %s554, 114688, %s556, %s544, 512, 512, 32
        $region72: #{critic_forward.1} parent=67 // pred_fallthru
          _
      $region68: #{critic_forward.1} parent=5 // pred_fallthru
        _
      %p562 = scmp.le.s32.totalorder 1, %s32
      %p563 = scmp.lt.s32.totalorder %s32, 3
      %p564 = pnand %p562, %p563
      %p565 = pneg %p564
      // Predicated region
      $region73: #{critic_forward.1} parent=5 // pred_check
        _
      $region74: #{critic_forward.1} parent=5 // pred_check_branch
        %567 = sbr.rel (%p564) target = $region76
      $region75: #{critic_forward.1} parent=5 // pred_region
        %s568 = ssub.s32 %s32, 1
        // Predicated region
        $region77: #{critic_forward.1} parent=75 // pred_check
          %p569 = pneg %p74
        $region78: #{critic_forward.1} parent=75 // pred_check_branch
          %571 = sbr.rel (%p569) target = $region80
        $region79: #{critic_forward.1} parent=75 // pred_region
          %572 = dma.done [#allocation6], 96
        $region80: #{critic_forward.1} parent=75 // pred_fallthru
          _
        // Predicated region
        $region81: #{critic_forward.1} parent=75 // pred_check
          %p573 = pneg %p95
        $region82: #{critic_forward.1} parent=75 // pred_check_branch
          %575 = sbr.rel (%p573) target = $region84
        $region83: #{critic_forward.1} parent=75 // pred_region
          %576 = dma.done [#allocation9], 16
        $region84: #{critic_forward.1} parent=75 // pred_fallthru
          _
        // Predicated region
        $region85: #{critic_forward.1} parent=75 // pred_check
          %p577 = pneg %p116
        $region86: #{critic_forward.1} parent=75 // pred_check_branch
          %579 = sbr.rel (%p577) target = $region88
        $region87: #{critic_forward.1} parent=75 // pred_region
          %580 = dma.done [#allocation9], 1536
        $region88: #{critic_forward.1} parent=75 // pred_fallthru
          _
        // Predicated region
        $region89: #{critic_forward.1} parent=75 // pred_check
          %p581 = pneg %p137
        $region90: #{critic_forward.1} parent=75 // pred_check_branch
          %583 = sbr.rel (%p581) target = $region92
        $region91: #{critic_forward.1} parent=75 // pred_region
          %584 = dma.done [#allocation12], 16
        $region92: #{critic_forward.1} parent=75 // pred_fallthru
          _
        // Predicated region
        $region93: #{critic_forward.1} parent=75 // pred_check
          %p585 = pneg %p158
        $region94: #{critic_forward.1} parent=75 // pred_check_branch
          %587 = sbr.rel (%p585) target = $region96
        $region95: #{critic_forward.1} parent=75 // pred_region
          %588 = dma.done [#allocation12], 1536
        $region96: #{critic_forward.1} parent=75 // pred_fallthru
          _
        // Predicated region
        $region97: #{critic_forward.1} parent=75 // pred_check
          %p589 = pneg %p179
        $region98: #{critic_forward.1} parent=75 // pred_check_branch
          %591 = sbr.rel (%p589) target = $region100
        $region99: #{critic_forward.1} parent=75 // pred_region
          %592 = dma.done [#allocation15], 16
        $region100: #{critic_forward.1} parent=75 // pred_fallthru
          _
        %s593 = sand.u32 %s37, 1
        %s594 = scalar_lea.sflag [#allocation6], %s593
        %s595 = sand.u32 %s192, 1
        %s596 = smul.addr %s595, 7168
        %s597 = scalar_lea.vmem [#allocation16], %s596
        // Predicated region
        $region101: #{critic_forward.1} parent=75 // pred_check
          %p598 = pneg %p205
        $region102: #{critic_forward.1} parent=75 // pred_check_branch
          %600 = sbr.rel (%p598) target = $region104
        $region103: #{critic_forward.1} parent=75 // pred_region
          %601 = dma.done %s594, 114688
        $region104: #{critic_forward.1} parent=75 // pred_fallthru
          _
        // Predicated region
        $region105: #{critic_forward.1} parent=75 // pred_check
          %p602 = pneg %p226
        $region106: #{critic_forward.1} parent=75 // pred_check_branch
          %604 = sbr.rel (%p602) target = $region108
        $region107: #{critic_forward.1} parent=75 // pred_region
          %605 = dma.done [#allocation9], 16384
        $region108: #{critic_forward.1} parent=75 // pred_fallthru
          _
        // Predicated region
        $region109: #{critic_forward.1} parent=75 // pred_check
          %p606 = pneg %p247
        $region110: #{critic_forward.1} parent=75 // pred_check_branch
          %608 = sbr.rel (%p606) target = $region112
        $region111: #{critic_forward.1} parent=75 // pred_region
          %609 = dma.done [#allocation12], 128
        $region112: #{critic_forward.1} parent=75 // pred_fallthru
          _
        // Predicated region
        $region113: #{critic_forward.1} parent=75 // pred_check
          %p610 = pneg %p268
        $region114: #{critic_forward.1} parent=75 // pred_check_branch
          %612 = sbr.rel (%p610) target = $region116
        $region115: #{critic_forward.1} parent=75 // pred_region
          %613 = dma.done [#allocation15], 64
        $region116: #{critic_forward.1} parent=75 // pred_fallthru
          _
        // Predicated region
        $region117: #{critic_forward.1} parent=75 // pred_check
          %p614 = pneg %p289
        $region118: #{critic_forward.1} parent=75 // pred_check_branch
          %616 = sbr.rel (%p614) target = $region120
        $region119: #{critic_forward.1} parent=75 // pred_region
          %617 = dma.done [#allocation21], 64
        $region120: #{critic_forward.1} parent=75 // pred_fallthru
          _
        %p618 = pneg %p53
        %p619 = pneg %p50
        %p620 = pneg %p74
        %p621 = pneg %p71
        %p622 = pneg %p95
        %p623 = pneg %p92
        %p624 = pneg %p116
        %p625 = pneg %p113
        %p626 = pneg %p137
        %p627 = pneg %p134
        %p628 = pneg %p158
        %p629 = pneg %p155
        %p630 = pneg %p179
        %p631 = pneg %p176
        %s632 = sand.u32 %s37, 1
        %s633 = scalar_lea.sflag [#allocation6], %s632
        %s634 = sand.u32 %s192, 1
        %s635 = smul.addr %s634, 7168
        %s636 = scalar_lea.vmem [#allocation16], %s635
        %p637 = pneg %p205
        %p638 = pneg %p202
        %p639 = pneg %p226
        %p640 = pneg %p223
        %p641 = pneg %p247
        %p642 = pneg %p244
        %p643 = pneg %p268
        %p644 = pneg %p265
        %p645 = pneg %p289
        %p646 = pneg %p286
        %p647 = pneg %p310
        %p648 = pneg %p307
        %p649 = pneg %p331
        %p650 = pneg %p328
        %p651 = pneg %p352
        %p652 = pneg %p349
        %p653 = pneg %p373
        %p654 = pneg %p370
        %p655 = pneg %p394
        %p656 = pneg %p391
        %s657 = smul.u32 224, %s37
        %p659 = scmp.eq.s32.totalorder %s37, 0
        // Predicated region
        $region121: #{critic_forward.1} parent=75 // pred_check
          %p660 = pneg %p659
        $region122: #{critic_forward.1} parent=75 // pred_check_branch
          %662 = sbr.rel (%p660) target = $region124
        $region123: #{critic_forward.1} parent=75 // pred_region
          %v663 = vlaneseq
          %v664 = vshrl.u32 %v663, 7
          %v665 = vadd.s32 %v664, 8
          %v666 = vadd.s32 %v664, 16
          %v667 = vadd.s32 %v664, 24
          %v668 = vadd.s32 %v664, 32
          %v669 = vadd.s32 %v664, 40
          %v670 = vadd.s32 %v664, 48
          %vm671 = vcmp.lt.s32.totalorder %v664, 0
          %v672 = vsub.s32 0, %v664
          %v673 = vsel %vm671, %v672, %v664
          %v674 = vmul.u32.u64.compose %v673, 2454267026
          %v675 = vextract.low.u32 %v674
          %v676 = vextract.high.u32 %v674
          %vm677 = vc.u32 %v675, 2454267026
          %v678 = vsel %vm677, 1, 0
          %v679 = vadd.s32 %v676, %v678
          %v680 = vshrl.u32 %v679, 4
          %v681 = vmul.u32 %v680, 28
          %v682 = vsub.s32 %v673, %v681
          %v683 = vsub.s32 0, %v682
          %v684 = vsel %vm671, %v683, %v682
          %vm685 = vcmp.lt.s32.totalorder %v665, 0
          %v686 = vsub.s32 0, %v665
          %v687 = vsel %vm685, %v686, %v665
          %v688 = vmul.u32.u64.compose %v687, 2454267026
          %v689 = vextract.low.u32 %v688
          %v690 = vextract.high.u32 %v688
          %vm691 = vc.u32 %v689, 2454267026
          %v692 = vsel %vm691, 1, 0
          %v693 = vadd.s32 %v690, %v692
          %v694 = vshrl.u32 %v693, 4
          %v695 = vmul.u32 %v694, 28
          %v696 = vsub.s32 %v687, %v695
          %v697 = vsub.s32 0, %v696
          %v698 = vsel %vm685, %v697, %v696
          %vm699 = vcmp.lt.s32.totalorder %v666, 0
          %v700 = vsub.s32 0, %v666
          %v701 = vsel %vm699, %v700, %v666
          %v702 = vmul.u32.u64.compose %v701, 2454267026
          %v703 = vextract.low.u32 %v702
          %v704 = vextract.high.u32 %v702
          %vm705 = vc.u32 %v703, 2454267026
          %v706 = vsel %vm705, 1, 0
          %v707 = vadd.s32 %v704, %v706
          %v708 = vshrl.u32 %v707, 4
          %v709 = vmul.u32 %v708, 28
          %v710 = vsub.s32 %v701, %v709
          %v711 = vsub.s32 0, %v710
          %v712 = vsel %vm699, %v711, %v710
          %vm713 = vcmp.lt.s32.totalorder %v667, 0
          %v714 = vsub.s32 0, %v667
          %v715 = vsel %vm713, %v714, %v667
          %v716 = vmul.u32.u64.compose %v715, 2454267026
          %v717 = vextract.low.u32 %v716
          %v718 = vextract.high.u32 %v716
          %vm719 = vc.u32 %v717, 2454267026
          %v720 = vsel %vm719, 1, 0
          %v721 = vadd.s32 %v718, %v720
          %v722 = vshrl.u32 %v721, 4
          %v723 = vmul.u32 %v722, 28
          %v724 = vsub.s32 %v715, %v723
          %v725 = vsub.s32 0, %v724
          %v726 = vsel %vm713, %v725, %v724
          %vm727 = vcmp.lt.s32.totalorder %v668, 0
          %v728 = vsub.s32 0, %v668
          %v729 = vsel %vm727, %v728, %v668
          %v730 = vmul.u32.u64.compose %v729, 2454267026
          %v731 = vextract.low.u32 %v730
          %v732 = vextract.high.u32 %v730
          %vm733 = vc.u32 %v731, 2454267026
          %v734 = vsel %vm733, 1, 0
          %v735 = vadd.s32 %v732, %v734
          %v736 = vshrl.u32 %v735, 4
          %v737 = vmul.u32 %v736, 28
          %v738 = vsub.s32 %v729, %v737
          %v739 = vsub.s32 0, %v738
          %v740 = vsel %vm727, %v739, %v738
          %vm741 = vcmp.lt.s32.totalorder %v669, 0
          %v742 = vsub.s32 0, %v669
          %v743 = vsel %vm741, %v742, %v669
          %v744 = vmul.u32.u64.compose %v743, 2454267026
          %v745 = vextract.low.u32 %v744
          %v746 = vextract.high.u32 %v744
          %vm747 = vc.u32 %v745, 2454267026
          %v748 = vsel %vm747, 1, 0
          %v749 = vadd.s32 %v746, %v748
          %v750 = vshrl.u32 %v749, 4
          %v751 = vmul.u32 %v750, 28
          %v752 = vsub.s32 %v743, %v751
          %v753 = vsub.s32 0, %v752
          %v754 = vsel %vm741, %v753, %v752
          %vm755 = vcmp.lt.s32.totalorder %v670, 0
          %v756 = vsub.s32 0, %v670
          %v757 = vsel %vm755, %v756, %v670
          %v758 = vmul.u32.u64.compose %v757, 2454267026
          %v759 = vextract.low.u32 %v758
          %v760 = vextract.high.u32 %v758
          %vm761 = vc.u32 %v759, 2454267026
          %v762 = vsel %vm761, 1, 0
          %v763 = vadd.s32 %v760, %v762
          %v764 = vshrl.u32 %v763, 4
          %v765 = vmul.u32 %v764, 28
          %v766 = vsub.s32 %v757, %v765
          %v767 = vsub.s32 0, %v766
          %v768 = vsel %vm755, %v767, %v766
          %vm769 = vcmp.ne.s32.totalorder %v684, 0
          %vm770 = vcmp.ne.s32.totalorder %v698, 0
          %vm771 = vcmp.ne.s32.totalorder %v712, 0
          %vm772 = vcmp.ne.s32.totalorder %v726, 0
          %vm773 = vcmp.ne.s32.totalorder %v740, 0
          %vm774 = vcmp.ne.s32.totalorder %v754, 0
          %vm775 = vcmp.ne.s32.totalorder %v768, 0
          %vm776 = vcmp.lt.s32.totalorder %v684, 0
          %vm777 = vcmp.lt.s32.totalorder %v698, 0
          %vm778 = vcmp.lt.s32.totalorder %v712, 0
          %vm779 = vcmp.lt.s32.totalorder %v726, 0
          %vm780 = vcmp.lt.s32.totalorder %v740, 0
          %vm781 = vcmp.lt.s32.totalorder %v754, 0
          %vm782 = vcmp.lt.s32.totalorder %v768, 0
          %vm783 = vmand %vm776, %vm769
          %vm784 = vmand %vm777, %vm770
          %vm785 = vmand %vm778, %vm771
          %vm786 = vmand %vm779, %vm772
          %vm787 = vmand %vm780, %vm773
          %vm788 = vmand %vm781, %vm774
          %vm789 = vmand %vm782, %vm775
          %v790 = vadd.s32 %v684, 28
          %v791 = vadd.s32 %v698, 28
          %v792 = vadd.s32 %v712, 28
          %v793 = vadd.s32 %v726, 28
          %v794 = vadd.s32 %v740, 28
          %v795 = vadd.s32 %v754, 28
          %v796 = vadd.s32 %v768, 28
          %v797 = vsel %vm783, %v790, %v684
          %v798 = vsel %vm784, %v791, %v698
          %v799 = vsel %vm785, %v792, %v712
          %v800 = vsel %vm786, %v793, %v726
          %v801 = vsel %vm787, %v794, %v740
          %v802 = vsel %vm788, %v795, %v754
          %v803 = vsel %vm789, %v796, %v768
          %vm804 = vcmp.eq.s32.totalorder %v797, 0
          %vm805 = vcmp.eq.s32.totalorder %v798, 0
          %vm806 = vcmp.eq.s32.totalorder %v799, 0
          %vm807 = vcmp.eq.s32.totalorder %v800, 0
          %vm808 = vcmp.eq.s32.totalorder %v801, 0
          %vm809 = vcmp.eq.s32.totalorder %v802, 0
          %vm810 = vcmp.eq.s32.totalorder %v803, 0
          %vm811 = vcmp.eq.s32.totalorder %v797, 27
          %vm812 = vcmp.eq.s32.totalorder %v798, 27
          %vm813 = vcmp.eq.s32.totalorder %v799, 27
          %vm814 = vcmp.eq.s32.totalorder %v800, 27
          %vm815 = vcmp.eq.s32.totalorder %v801, 27
          %vm816 = vcmp.eq.s32.totalorder %v802, 27
          %vm817 = vcmp.eq.s32.totalorder %v803, 27
          %v818 = vld [vmem:[%s0] sm:$0xff]
          %v819 = vld [vmem:[%s0 + $0x8] sm:$0xff]
          %v820 = vld [vmem:[%s0 + $0x10] sm:$0xff]
          %v821 = vld [vmem:[%s0 + $0x18] sm:$0xf]
          %v822 = vld [vmem:[%s0 + $0x20] sm:$0xff]
          %v823 = vld [vmem:[%s0 + $0x28] sm:$0xff]
          %v824 = vld [vmem:[%s0 + $0x30] sm:$0xff]
          %v825 = vld [vmem:[%s0 + $0x38] sm:$0xf]
          %v834 = vcombine.high %v818, %v818
          %v835 = vcombine.high %v819, %v819
          %v836 = vcombine.high %v820, %v820
          %v837 = vcombine.high %v822, %v822
          %v838 = vcombine.high %v823, %v823
          %v839 = vcombine.high %v824, %v824
          %v840 = vcombine.low %v818, %v834
          %v841 = vcombine.low %v819, %v835
          %v842 = vcombine.low %v820, %v836
          %v843 = vcombine.low %v821, %v822
          %v844 = vcombine.low %v837, %v823
          %v845 = vcombine.low %v838, %v824
          %v846 = vcombine.low %v839, %v825
          %vm847 = vcmask 1040384
          %v848 = vrot.slane %v840, 7
          %v849 = vrot.slane %v841, 7
          %v850 = vsel %vm847, %v848, %v849
          %v851 = vrot.slane %v842, 7
          %v852 = vsel %vm847, %v849, %v851
          %v853 = vrot.slane %v843, 7
          %v854 = vsel %vm847, %v851, %v853
          %v855 = vrot.slane %v844, 7
          %v856 = vsel %vm847, %v853, %v855
          %v857 = vrot.slane %v845, 7
          %v858 = vsel %vm847, %v855, %v857
          %v859 = vrot.slane %v846, 7
          %v860 = vsel %vm847, %v857, %v859
          %v868 = vsel %vm847, 0.0, %v848
          %v869 = vsel %vm804, 1, 0
          %v870 = vsel %vm805, 1, 0
          %v871 = vsel %vm806, 1, 0
          %v872 = vsel %vm807, 1, 0
          %v873 = vsel %vm808, 1, 0
          %v874 = vsel %vm809, 1, 0
          %v875 = vsel %vm810, 1, 0
          %vm876 = vcmp.eq.s32.totalorder %v869, 1
          %vm877 = vcmp.eq.s32.totalorder %v870, 1
          %vm878 = vcmp.eq.s32.totalorder %v871, 1
          %vm879 = vcmp.eq.s32.totalorder %v872, 1
          %vm880 = vcmp.eq.s32.totalorder %v873, 1
          %vm881 = vcmp.eq.s32.totalorder %v874, 1
          %vm882 = vcmp.eq.s32.totalorder %v875, 1
          %v883 = vsel %vm876, 0.0, %v868
          %v884 = vsel %vm877, 0.0, %v850
          %v885 = vsel %vm878, 0.0, %v852
          %v886 = vsel %vm879, 0.0, %v854
          %v887 = vsel %vm880, 0.0, %v856
          %v888 = vsel %vm881, 0.0, %v858
          %v889 = vsel %vm882, 0.0, %v860
          %vm890 = vcmask 1046528
          %v891 = vrot.slane %v840, 1
          %v892 = vrot.slane %v841, 1
          %v893 = vsel %vm890, %v891, %v892
          %v894 = vrot.slane %v842, 1
          %v895 = vsel %vm890, %v892, %v894
          %v896 = vrot.slane %v843, 1
          %v897 = vsel %vm890, %v894, %v896
          %v898 = vrot.slane %v844, 1
          %v899 = vsel %vm890, %v896, %v898
          %v900 = vrot.slane %v845, 1
          %v901 = vsel %vm890, %v898, %v900
          %v902 = vrot.slane %v846, 1
          %v903 = vsel %vm890, %v900, %v902
          %v911 = vsel %vm890, %v902, 0.0
          %v912 = vsel %vm811, 1, 0
          %v913 = vsel %vm812, 1, 0
          %v914 = vsel %vm813, 1, 0
          %v915 = vsel %vm814, 1, 0
          %v916 = vsel %vm815, 1, 0
          %v917 = vsel %vm816, 1, 0
          %v918 = vsel %vm817, 1, 0
          %vm919 = vcmp.eq.s32.totalorder %v912, 1
          %vm920 = vcmp.eq.s32.totalorder %v913, 1
          %vm921 = vcmp.eq.s32.totalorder %v914, 1
          %vm922 = vcmp.eq.s32.totalorder %v915, 1
          %vm923 = vcmp.eq.s32.totalorder %v916, 1
          %vm924 = vcmp.eq.s32.totalorder %v917, 1
          %vm925 = vcmp.eq.s32.totalorder %v918, 1
          %v926 = vsel %vm919, 0.0, %v893
          %v927 = vsel %vm920, 0.0, %v895
          %v928 = vsel %vm921, 0.0, %v897
          %v929 = vsel %vm922, 0.0, %v899
          %v930 = vsel %vm923, 0.0, %v901
          %v931 = vsel %vm924, 0.0, %v903
          %v932 = vsel %vm925, 0.0, %v911
          %v933 = vpack.c.bf16 %v884, %v883
          %v934 = vpack.c.bf16 %v886, %v885
          %v935 = vpack.c.bf16 %v888, %v887
          %v936 = vpack.c.bf16 %v889, %v889
          %v937 = vld [vmem:[#allocation5] sm:$0x3]
          %v945 = vpack.c.bf16 %v841, %v840
          %v946 = vpack.c.bf16 %v843, %v842
          %v947 = vpack.c.bf16 %v845, %v844
          %v948 = vpack.c.bf16 %v846, %v846
          %s949 = scalar_lea.vmem [#allocation5], 2
          %v950 = vld [vmem:[%s949] sm:$0x3]
          %vm951 = vcmask 31744
          %v953 = vsel %vm951, %v945, 0
          %v956 = vsel %vm951, %v946, 0
          %v959 = vsel %vm951, %v947, 0
          %v962 = vsel %vm951, %v948, 0
          %vm964 = vcmask 1041408
          %v966 = vsel %vm964, %v950, 0
          %968 = vmatprep.subr.bf16.mxu0 0
          %969 = vmatpush1.bf16.msra.mxu0 0
          %970 = vmatprep.subr.bf16.mxu0 0
          %971 = vmatpush1.bf16.msra.mxu0 0
          %972 = vmatprep.subr.bf16.mxu0 0
          %973 = vmatpush1.bf16.msra.mxu0 0
          %974 = vmatprep.subr.bf16.mxu0 0
          %975 = vmatpush1.bf16.msra.mxu0 0
          %976 = vmatprep.subr.bf16.mxu0 0
          %977 = vmatpush1.bf16.msra.mxu0 0
          %978 = vmatprep.subr.bf16.mxu0 0
          %979 = vmatpush1.bf16.msra.mxu0 0
          %980 = vmatprep.subr.bf16.mxu0 0
          %981 = vmatpush1.bf16.msra.mxu0 0
          %982 = vmatprep.subr.bf16.mxu0 0
          %983 = vmatpush1.bf16.msra.mxu0 %v966
          %984 = vmatprep.subr.bf16.mxu0 0
          %985 = vmatpush2.bf16.msra.mxu0 0
          %986 = vmatprep.subr.bf16.mxu0 0
          %987 = vmatpush2.bf16.msra.mxu0 0
          %988 = vmatprep.subr.bf16.mxu0 0
          %989 = vmatpush2.bf16.msra.mxu0 0
          %990 = vmatprep.subr.bf16.mxu0 0
          %991 = vmatpush2.bf16.msra.mxu0 0
          %992 = vmatprep.subr.bf16.mxu0 0
          %993 = vmatpush2.bf16.msra.mxu0 0
          %994 = vmatprep.subr.bf16.mxu0 0
          %995 = vmatpush2.bf16.msra.mxu0 0
          %996 = vmatprep.subr.bf16.mxu0 0
          %997 = vmatpush2.bf16.msra.mxu0 0
          %998 = vmatprep.subr.bf16.mxu0 0
          %999 = vmatpush2.bf16.msra.mxu0 0
          %1000 = vmatprep.mubr.bf16.mxu0 0
          %1001 = vmatmul.mubr.bf16.gmra.mxu0 %v953
          %v1002 = vpop.f32.mrf.mxu0
          %v1003 = vadd.f32 0.0, %v1002
          %v1004 = vpop.f32.mrf.mxu0
          %v1005 = vpop.f32.mrf.mxu0
          %v1006 = vadd.f32 0.0, %v1005
          %v1007 = vpop.f32.mrf.mxu0
          %1008 = vmatprep.mubr.bf16.mxu0 0
          %1009 = vmatmul.mubr.bf16.gmra.mxu0 %v956
          %v1010 = vpop.f32.mrf.mxu0
          %v1011 = vadd.f32 0.0, %v1010
          %v1012 = vpop.f32.mrf.mxu0
          %v1013 = vpop.f32.mrf.mxu0
          %v1014 = vadd.f32 0.0, %v1013
          %v1015 = vpop.f32.mrf.mxu0
          %1016 = vmatprep.mubr.bf16.mxu0 0
          %1017 = vmatmul.mubr.bf16.gmra.mxu0 %v959
          %v1018 = vpop.f32.mrf.mxu0
          %v1019 = vadd.f32 0.0, %v1018
          %v1020 = vpop.f32.mrf.mxu0
          %v1021 = vpop.f32.mrf.mxu0
          %v1022 = vadd.f32 0.0, %v1021
          %v1023 = vpop.f32.mrf.mxu0
          %1024 = vmatprep.mubr.bf16.mxu0 0
          %1025 = vmatmul.mubr.bf16.gmra.mxu0 %v962
          %v1026 = vpop.f32.mrf.mxu0
          %v1027 = vadd.f32 0.0, %v1026
          %v1028 = vpop.f32.mrf.mxu0
          %v1029 = vpop.f32.mrf.mxu0
          %v1030 = vpop.f32.mrf.mxu0
          %1031 = vdwg.mxu0
          %v1033 = vsel %vm951, %v933, 0
          %v1036 = vsel %vm951, %v934, 0
          %v1039 = vsel %vm951, %v935, 0
          %v1042 = vsel %vm951, %v936, 0
          %v1045 = vsel %vm964, %v937, 0
          %1047 = vmatprep.subr.bf16.mxu0 0
          %1048 = vmatpush1.bf16.msra.mxu0 0
          %1049 = vmatprep.subr.bf16.mxu0 0
          %1050 = vmatpush1.bf16.msra.mxu0 0
          %1051 = vmatprep.subr.bf16.mxu0 0
          %1052 = vmatpush1.bf16.msra.mxu0 0
          %1053 = vmatprep.subr.bf16.mxu0 0
          %1054 = vmatpush1.bf16.msra.mxu0 0
          %1055 = vmatprep.subr.bf16.mxu0 0
          %1056 = vmatpush1.bf16.msra.mxu0 0
          %1057 = vmatprep.subr.bf16.mxu0 0
          %1058 = vmatpush1.bf16.msra.mxu0 0
          %1059 = vmatprep.subr.bf16.mxu0 0
          %1060 = vmatpush1.bf16.msra.mxu0 0
          %1061 = vmatprep.subr.bf16.mxu0 0
          %1062 = vmatpush1.bf16.msra.mxu0 %v1045
          %1063 = vmatprep.subr.bf16.mxu0 0
          %1064 = vmatpush2.bf16.msra.mxu0 0
          %1065 = vmatprep.subr.bf16.mxu0 0
          %1066 = vmatpush2.bf16.msra.mxu0 0
          %1067 = vmatprep.subr.bf16.mxu0 0
          %1068 = vmatpush2.bf16.msra.mxu0 0
          %1069 = vmatprep.subr.bf16.mxu0 0
          %1070 = vmatpush2.bf16.msra.mxu0 0
          %1071 = vmatprep.subr.bf16.mxu0 0
          %1072 = vmatpush2.bf16.msra.mxu0 0
          %1073 = vmatprep.subr.bf16.mxu0 0
          %1074 = vmatpush2.bf16.msra.mxu0 0
          %1075 = vmatprep.subr.bf16.mxu0 0
          %1076 = vmatpush2.bf16.msra.mxu0 0
          %1077 = vmatprep.subr.bf16.mxu0 0
          %1078 = vmatpush2.bf16.msra.mxu0 0
          %1079 = vmatprep.mubr.bf16.mxu0 0
          %1080 = vmatmul.mubr.bf16.gmra.mxu0 %v1033
          %v1081 = vpop.f32.mrf.mxu0
          %v1082 = vadd.f32 %v1003, %v1081
          %v1083 = vpop.f32.mrf.mxu0
          %v1084 = vpop.f32.mrf.mxu0
          %v1085 = vadd.f32 %v1006, %v1084
          %v1086 = vpop.f32.mrf.mxu0
          %1087 = vmatprep.mubr.bf16.mxu0 0
          %1088 = vmatmul.mubr.bf16.gmra.mxu0 %v1036
          %v1089 = vpop.f32.mrf.mxu0
          %v1090 = vadd.f32 %v1011, %v1089
          %v1091 = vpop.f32.mrf.mxu0
          %v1092 = vpop.f32.mrf.mxu0
          %v1093 = vadd.f32 %v1014, %v1092
          %v1094 = vpop.f32.mrf.mxu0
          %1095 = vmatprep.mubr.bf16.mxu0 0
          %1096 = vmatmul.mubr.bf16.gmra.mxu0 %v1039
          %v1097 = vpop.f32.mrf.mxu0
          %v1098 = vadd.f32 %v1019, %v1097
          %v1099 = vpop.f32.mrf.mxu0
          %v1100 = vpop.f32.mrf.mxu0
          %v1101 = vadd.f32 %v1022, %v1100
          %v1102 = vpop.f32.mrf.mxu0
          %1103 = vmatprep.mubr.bf16.mxu0 0
          %1104 = vmatmul.mubr.bf16.gmra.mxu0 %v1042
          %v1105 = vpop.f32.mrf.mxu0
          %v1106 = vadd.f32 %v1027, %v1105
          %v1107 = vpop.f32.mrf.mxu0
          %v1108 = vpop.f32.mrf.mxu0
          %v1109 = vpop.f32.mrf.mxu0
          %1110 = vdwg.mxu0
          %v1111 = vpack.c.bf16 %v927, %v926
          %v1112 = vpack.c.bf16 %v929, %v928
          %v1113 = vpack.c.bf16 %v931, %v930
          %v1114 = vpack.c.bf16 %v932, %v932
          %s1115 = scalar_lea.vmem [#allocation5], 4
          %v1116 = vld [vmem:[%s1115] sm:$0x3]
          %v1118 = vsel %vm951, %v1111, 0
          %v1121 = vsel %vm951, %v1112, 0
          %v1124 = vsel %vm951, %v1113, 0
          %v1127 = vsel %vm951, %v1114, 0
          %v1130 = vsel %vm964, %v1116, 0
          %1132 = vmatprep.subr.bf16.mxu0 0
          %1133 = vmatpush1.bf16.msra.mxu0 0
          %1134 = vmatprep.subr.bf16.mxu0 0
          %1135 = vmatpush1.bf16.msra.mxu0 0
          %1136 = vmatprep.subr.bf16.mxu0 0
          %1137 = vmatpush1.bf16.msra.mxu0 0
          %1138 = vmatprep.subr.bf16.mxu0 0
          %1139 = vmatpush1.bf16.msra.mxu0 0
          %1140 = vmatprep.subr.bf16.mxu0 0
          %1141 = vmatpush1.bf16.msra.mxu0 0
          %1142 = vmatprep.subr.bf16.mxu0 0
          %1143 = vmatpush1.bf16.msra.mxu0 0
          %1144 = vmatprep.subr.bf16.mxu0 0
          %1145 = vmatpush1.bf16.msra.mxu0 0
          %1146 = vmatprep.subr.bf16.mxu0 0
          %1147 = vmatpush1.bf16.msra.mxu0 %v1130
          %1148 = vmatprep.subr.bf16.mxu0 0
          %1149 = vmatpush2.bf16.msra.mxu0 0
          %1150 = vmatprep.subr.bf16.mxu0 0
          %1151 = vmatpush2.bf16.msra.mxu0 0
          %1152 = vmatprep.subr.bf16.mxu0 0
          %1153 = vmatpush2.bf16.msra.mxu0 0
          %1154 = vmatprep.subr.bf16.mxu0 0
          %1155 = vmatpush2.bf16.msra.mxu0 0
          %1156 = vmatprep.subr.bf16.mxu0 0
          %1157 = vmatpush2.bf16.msra.mxu0 0
          %1158 = vmatprep.subr.bf16.mxu0 0
          %1159 = vmatpush2.bf16.msra.mxu0 0
          %1160 = vmatprep.subr.bf16.mxu0 0
          %1161 = vmatpush2.bf16.msra.mxu0 0
          %1162 = vmatprep.subr.bf16.mxu0 0
          %1163 = vmatpush2.bf16.msra.mxu0 0
          %1164 = vmatprep.mubr.bf16.mxu0 0
          %1165 = vmatmul.mubr.bf16.gmra.mxu0 %v1118
          %v1166 = vpop.f32.mrf.mxu0
          %v1167 = vadd.f32 0.0, %v1166
          %v1168 = vpop.f32.mrf.mxu0
          %v1169 = vpop.f32.mrf.mxu0
          %v1170 = vadd.f32 0.0, %v1169
          %v1171 = vpop.f32.mrf.mxu0
          %1172 = vmatprep.mubr.bf16.mxu0 0
          %1173 = vmatmul.mubr.bf16.gmra.mxu0 %v1121
          %v1174 = vpop.f32.mrf.mxu0
          %v1175 = vadd.f32 0.0, %v1174
          %v1176 = vpop.f32.mrf.mxu0
          %v1177 = vpop.f32.mrf.mxu0
          %v1178 = vadd.f32 0.0, %v1177
          %v1179 = vpop.f32.mrf.mxu0
          %1180 = vmatprep.mubr.bf16.mxu0 0
          %1181 = vmatmul.mubr.bf16.gmra.mxu0 %v1124
          %v1182 = vpop.f32.mrf.mxu0
          %v1183 = vadd.f32 0.0, %v1182
          %v1184 = vpop.f32.mrf.mxu0
          %v1185 = vpop.f32.mrf.mxu0
          %v1186 = vadd.f32 0.0, %v1185
          %v1187 = vpop.f32.mrf.mxu0
          %1188 = vmatprep.mubr.bf16.mxu0 0
          %1189 = vmatmul.mubr.bf16.gmra.mxu0 %v1127
          %v1190 = vpop.f32.mrf.mxu0
          %v1191 = vadd.f32 0.0, %v1190
          %v1192 = vpop.f32.mrf.mxu0
          %v1193 = vpop.f32.mrf.mxu0
          %v1194 = vpop.f32.mrf.mxu0
          %1195 = vdwg.mxu0
          %v1196 = vadd.f32 %v1082, %v1167
          %v1197 = vadd.f32 %v1085, %v1170
          %v1198 = vadd.f32 %v1090, %v1175
          %v1199 = vadd.f32 %v1093, %v1178
          %v1200 = vadd.f32 %v1098, %v1183
          %v1201 = vadd.f32 %v1101, %v1186
          %v1202 = vadd.f32 %v1106, %v1191
          %v1203 = vld [vmem:[#allocation8] sm:$0x1]
          %v1205 = vlaneseq
          %v1206 = vshrl.u32 %v1205, 7
          %v1207 = vsub.s32 0, %v1206
          %v1208 = vrot.slane %v1203, %v1207
          %v1210 = vadd.f32 %v1196, %v1208
          %v1211 = vadd.f32 %v1197, %v1208
          %v1212 = vadd.f32 %v1198, %v1208
          %v1213 = vadd.f32 %v1199, %v1208
          %v1214 = vadd.f32 %v1200, %v1208
          %v1215 = vadd.f32 %v1201, %v1208
          %v1216 = vadd.f32 %v1202, %v1208
          %v1217 = vmul.f32 %v1210, 0.1
          %v1218 = vmul.f32 %v1211, 0.1
          %v1219 = vmul.f32 %v1212, 0.1
          %v1220 = vmul.f32 %v1213, 0.1
          %v1221 = vmul.f32 %v1214, 0.1
          %v1222 = vmul.f32 %v1215, 0.1
          %v1223 = vmul.f32 %v1216, 0.1
          %v1224 = vmax.f32 %v1210, %v1217
          %v1225 = vmax.f32 %v1211, %v1218
          %v1226 = vmax.f32 %v1212, %v1219
          %v1227 = vmax.f32 %v1213, %v1220
          %v1228 = vmax.f32 %v1214, %v1221
          %v1229 = vmax.f32 %v1215, %v1222
          %v1230 = vmax.f32 %v1216, %v1223
          %v1238 = vrot.slane %v1224, 7
          %v1239 = vrot.slane %v1225, 7
          %v1240 = vsel %vm847, %v1238, %v1239
          %v1241 = vrot.slane %v1226, 7
          %v1242 = vsel %vm847, %v1239, %v1241
          %v1243 = vrot.slane %v1227, 7
          %v1244 = vsel %vm847, %v1241, %v1243
          %v1245 = vrot.slane %v1228, 7
          %v1246 = vsel %vm847, %v1243, %v1245
          %v1247 = vrot.slane %v1229, 7
          %v1248 = vsel %vm847, %v1245, %v1247
          %v1249 = vrot.slane %v1230, 7
          %v1250 = vsel %vm847, %v1247, %v1249
          %v1258 = vsel %vm847, 0.0, %v1238
          %v1259 = vsel %vm876, 0.0, %v1258
          %v1260 = vsel %vm877, 0.0, %v1240
          %v1261 = vsel %vm878, 0.0, %v1242
          %v1262 = vsel %vm879, 0.0, %v1244
          %v1263 = vsel %vm880, 0.0, %v1246
          %v1264 = vsel %vm881, 0.0, %v1248
          %v1265 = vsel %vm882, 0.0, %v1250
          %v1266 = vrot.slane %v1224, 1
          %v1267 = vrot.slane %v1225, 1
          %v1268 = vsel %vm890, %v1266, %v1267
          %v1269 = vrot.slane %v1226, 1
          %v1270 = vsel %vm890, %v1267, %v1269
          %v1271 = vrot.slane %v1227, 1
          %v1272 = vsel %vm890, %v1269, %v1271
          %v1273 = vrot.slane %v1228, 1
          %v1274 = vsel %vm890, %v1271, %v1273
          %v1275 = vrot.slane %v1229, 1
          %v1276 = vsel %vm890, %v1273, %v1275
          %v1277 = vrot.slane %v1230, 1
          %v1278 = vsel %vm890, %v1275, %v1277
          %v1286 = vsel %vm890, %v1277, 0.0
          %v1287 = vsel %vm919, 0.0, %v1268
          %v1288 = vsel %vm920, 0.0, %v1270
          %v1289 = vsel %vm921, 0.0, %v1272
          %v1290 = vsel %vm922, 0.0, %v1274
          %v1291 = vsel %vm923, 0.0, %v1276
          %v1292 = vsel %vm924, 0.0, %v1278
          %v1293 = vsel %vm925, 0.0, %v1286
          %v1294 = vpack.c.bf16 %v1260, %v1259
          %v1295 = vpack.c.bf16 %v1262, %v1261
          %v1296 = vpack.c.bf16 %v1264, %v1263
          %v1297 = vpack.c.bf16 %v1265, %v1265
          %v1298 = vld [vmem:[#allocation10] sm:$0xf]
          %v1299 = vld [vmem:[#allocation10 + $0x4] sm:$0xf]
          %v1300 = vld [vmem:[#allocation10 + $0x8] sm:$0xf]
          %v1301 = vld [vmem:[#allocation10 + $0xc] sm:$0xf]
          %v1302 = vld [vmem:[#allocation10 + $0x10] sm:$0xf]
          %v1303 = vld [vmem:[#allocation10 + $0x14] sm:$0xf]
          %v1304 = vld [vmem:[#allocation10 + $0x18] sm:$0xf]
          %v1305 = vld [vmem:[#allocation10 + $0x1c] sm:$0xf]
          %v1306 = vpack.c.bf16 %v1225, %v1224
          %v1307 = vpack.c.bf16 %v1227, %v1226
          %v1308 = vpack.c.bf16 %v1229, %v1228
          %v1309 = vpack.c.bf16 %v1230, %v1230
          %s1310 = scalar_lea.vmem [#allocation10], 32
          %v1311 = vld [vmem:[%s1310] sm:$0xf]
          %v1312 = vld [vmem:[%s1310 + $0x4] sm:$0xf]
          %v1313 = vld [vmem:[%s1310 + $0x8] sm:$0xf]
          %v1314 = vld [vmem:[%s1310 + $0xc] sm:$0xf]
          %v1315 = vld [vmem:[%s1310 + $0x10] sm:$0xf]
          %v1316 = vld [vmem:[%s1310 + $0x14] sm:$0xf]
          %v1317 = vld [vmem:[%s1310 + $0x18] sm:$0xf]
          %v1318 = vld [vmem:[%s1310 + $0x1c] sm:$0xf]
          %v1327 = vunpack.c.l.b16 %v1311
          %v1328 = vunpack.c.l.b16 %v1312
          %v1329 = vunpack.c.l.b16 %v1313
          %v1330 = vunpack.c.l.b16 %v1314
          %v1331 = vunpack.c.l.b16 %v1315
          %v1332 = vunpack.c.l.b16 %v1316
          %v1333 = vunpack.c.l.b16 %v1317
          %v1334 = vunpack.c.l.b16 %v1318
          %v1335 = vpack.c.b16 %v1328, %v1327
          %v1336 = vpack.c.b16 %v1330, %v1329
          %v1337 = vpack.c.b16 %v1332, %v1331
          %v1338 = vpack.c.b16 %v1334, %v1333
          %vm1343 = vcmask 523264
          %v1345 = vsel %vm1343, %v1306, 0
          %v1348 = vsel %vm1343, %v1307, 0
          %v1351 = vsel %vm1343, %v1308, 0
          %v1354 = vsel %vm1343, %v1309, 0
          %1356 = vmatprep.subr.bf16.mxu0 0
          %1357 = vmatpush1.bf16.msra.mxu0 0
          %1358 = vmatprep.subr.bf16.mxu0 0
          %1359 = vmatpush1.bf16.msra.mxu0 0
          %1360 = vmatprep.subr.bf16.mxu0 0
          %1361 = vmatpush1.bf16.msra.mxu0 0
          %1362 = vmatprep.subr.bf16.mxu0 0
          %1363 = vmatpush1.bf16.msra.mxu0 0
          %1364 = vmatprep.subr.bf16.mxu0 0
          %1365 = vmatpush1.bf16.msra.mxu0 %v1338
          %1366 = vmatprep.subr.bf16.mxu0 0
          %1367 = vmatpush1.bf16.msra.mxu0 %v1337
          %1368 = vmatprep.subr.bf16.mxu0 0
          %1369 = vmatpush1.bf16.msra.mxu0 %v1336
          %1370 = vmatprep.subr.bf16.mxu0 0
          %1371 = vmatpush1.bf16.msra.mxu0 %v1335
          %1372 = vmatprep.subr.bf16.mxu0 0
          %1373 = vmatpush2.bf16.msra.mxu0 0
          %1374 = vmatprep.subr.bf16.mxu0 0
          %1375 = vmatpush2.bf16.msra.mxu0 0
          %1376 = vmatprep.subr.bf16.mxu0 0
          %1377 = vmatpush2.bf16.msra.mxu0 0
          %1378 = vmatprep.subr.bf16.mxu0 0
          %1379 = vmatpush2.bf16.msra.mxu0 0
          %1380 = vmatprep.subr.bf16.mxu0 0
          %1381 = vmatpush2.bf16.msra.mxu0 0
          %1382 = vmatprep.subr.bf16.mxu0 0
          %1383 = vmatpush2.bf16.msra.mxu0 0
          %1384 = vmatprep.subr.bf16.mxu0 0
          %1385 = vmatpush2.bf16.msra.mxu0 0
          %1386 = vmatprep.subr.bf16.mxu0 0
          %1387 = vmatpush2.bf16.msra.mxu0 0
          %1388 = vmatprep.mubr.bf16.mxu0 0
          %1389 = vmatmul.mubr.bf16.gmra.mxu0 %v1345
          %v1390 = vpop.f32.mrf.mxu0
          %v1391 = vadd.f32 0.0, %v1390
          %v1392 = vpop.f32.mrf.mxu0
          %v1393 = vpop.f32.mrf.mxu0
          %v1394 = vadd.f32 0.0, %v1393
          %v1395 = vpop.f32.mrf.mxu0
          %1396 = vmatprep.mubr.bf16.mxu0 0
          %1397 = vmatmul.mubr.bf16.gmra.mxu0 %v1348
          %v1398 = vpop.f32.mrf.mxu0
          %v1399 = vadd.f32 0.0, %v1398
          %v1400 = vpop.f32.mrf.mxu0
          %v1401 = vpop.f32.mrf.mxu0
          %v1402 = vadd.f32 0.0, %v1401
          %v1403 = vpop.f32.mrf.mxu0
          %1404 = vmatprep.mubr.bf16.mxu0 0
          %1405 = vmatmul.mubr.bf16.gmra.mxu0 %v1351
          %v1406 = vpop.f32.mrf.mxu0
          %v1407 = vadd.f32 0.0, %v1406
          %v1408 = vpop.f32.mrf.mxu0
          %v1409 = vpop.f32.mrf.mxu0
          %v1410 = vadd.f32 0.0, %v1409
          %v1411 = vpop.f32.mrf.mxu0
          %1412 = vmatprep.mubr.bf16.mxu0 0
          %1413 = vmatmul.mubr.bf16.gmra.mxu0 %v1354
          %v1414 = vpop.f32.mrf.mxu0
          %v1415 = vadd.f32 0.0, %v1414
          %v1416 = vpop.f32.mrf.mxu0
          %v1417 = vpop.f32.mrf.mxu0
          %v1418 = vpop.f32.mrf.mxu0
          %1419 = vdwg.mxu0
          %v1428 = vunpack.c.l.b16 %v1298
          %v1429 = vunpack.c.l.b16 %v1299
          %v1430 = vunpack.c.l.b16 %v1300
          %v1431 = vunpack.c.l.b16 %v1301
          %v1432 = vunpack.c.l.b16 %v1302
          %v1433 = vunpack.c.l.b16 %v1303
          %v1434 = vunpack.c.l.b16 %v1304
          %v1435 = vunpack.c.l.b16 %v1305
          %v1436 = vpack.c.b16 %v1429, %v1428
          %v1437 = vpack.c.b16 %v1431, %v1430
          %v1438 = vpack.c.b16 %v1433, %v1432
          %v1439 = vpack.c.b16 %v1435, %v1434
          %v1445 = vsel %vm1343, %v1294, 0
          %v1448 = vsel %vm1343, %v1295, 0
          %v1451 = vsel %vm1343, %v1296, 0
          %v1454 = vsel %vm1343, %v1297, 0
          %1456 = vmatprep.subr.bf16.mxu0 0
          %1457 = vmatpush1.bf16.msra.mxu0 0
          %1458 = vmatprep.subr.bf16.mxu0 0
          %1459 = vmatpush1.bf16.msra.mxu0 0
          %1460 = vmatprep.subr.bf16.mxu0 0
          %1461 = vmatpush1.bf16.msra.mxu0 0
          %1462 = vmatprep.subr.bf16.mxu0 0
          %1463 = vmatpush1.bf16.msra.mxu0 0
          %1464 = vmatprep.subr.bf16.mxu0 0
          %1465 = vmatpush1.bf16.msra.mxu0 %v1439
          %1466 = vmatprep.subr.bf16.mxu0 0
          %1467 = vmatpush1.bf16.msra.mxu0 %v1438
          %1468 = vmatprep.subr.bf16.mxu0 0
          %1469 = vmatpush1.bf16.msra.mxu0 %v1437
          %1470 = vmatprep.subr.bf16.mxu0 0
          %1471 = vmatpush1.bf16.msra.mxu0 %v1436
          %1472 = vmatprep.subr.bf16.mxu0 0
          %1473 = vmatpush2.bf16.msra.mxu0 0
          %1474 = vmatprep.subr.bf16.mxu0 0
          %1475 = vmatpush2.bf16.msra.mxu0 0
          %1476 = vmatprep.subr.bf16.mxu0 0
          %1477 = vmatpush2.bf16.msra.mxu0 0
          %1478 = vmatprep.subr.bf16.mxu0 0
          %1479 = vmatpush2.bf16.msra.mxu0 0
          %1480 = vmatprep.subr.bf16.mxu0 0
          %1481 = vmatpush2.bf16.msra.mxu0 0
          %1482 = vmatprep.subr.bf16.mxu0 0
          %1483 = vmatpush2.bf16.msra.mxu0 0
          %1484 = vmatprep.subr.bf16.mxu0 0
          %1485 = vmatpush2.bf16.msra.mxu0 0
          %1486 = vmatprep.subr.bf16.mxu0 0
          %1487 = vmatpush2.bf16.msra.mxu0 0
          %1488 = vmatprep.mubr.bf16.mxu0 0
          %1489 = vmatmul.mubr.bf16.gmra.mxu0 %v1445
          %v1490 = vpop.f32.mrf.mxu0
          %v1491 = vadd.f32 %v1391, %v1490
          %v1492 = vpop.f32.mrf.mxu0
          %v1493 = vpop.f32.mrf.mxu0
          %v1494 = vadd.f32 %v1394, %v1493
          %v1495 = vpop.f32.mrf.mxu0
          %1496 = vmatprep.mubr.bf16.mxu0 0
          %1497 = vmatmul.mubr.bf16.gmra.mxu0 %v1448
          %v1498 = vpop.f32.mrf.mxu0
          %v1499 = vadd.f32 %v1399, %v1498
          %v1500 = vpop.f32.mrf.mxu0
          %v1501 = vpop.f32.mrf.mxu0
          %v1502 = vadd.f32 %v1402, %v1501
          %v1503 = vpop.f32.mrf.mxu0
          %1504 = vmatprep.mubr.bf16.mxu0 0
          %1505 = vmatmul.mubr.bf16.gmra.mxu0 %v1451
          %v1506 = vpop.f32.mrf.mxu0
          %v1507 = vadd.f32 %v1407, %v1506
          %v1508 = vpop.f32.mrf.mxu0
          %v1509 = vpop.f32.mrf.mxu0
          %v1510 = vadd.f32 %v1410, %v1509
          %v1511 = vpop.f32.mrf.mxu0
          %1512 = vmatprep.mubr.bf16.mxu0 0
          %1513 = vmatmul.mubr.bf16.gmra.mxu0 %v1454
          %v1514 = vpop.f32.mrf.mxu0
          %v1515 = vadd.f32 %v1415, %v1514
          %v1516 = vpop.f32.mrf.mxu0
          %v1517 = vpop.f32.mrf.mxu0
          %v1518 = vpop.f32.mrf.mxu0
          %1519 = vdwg.mxu0
          %v1520 = vpack.c.bf16 %v1288, %v1287
          %v1521 = vpack.c.bf16 %v1290, %v1289
          %v1522 = vpack.c.bf16 %v1292, %v1291
          %v1523 = vpack.c.bf16 %v1293, %v1293
          %s1524 = scalar_lea.vmem [#allocation10], 64
          %v1525 = vld [vmem:[%s1524] sm:$0xf]
          %v1526 = vld [vmem:[%s1524 + $0x4] sm:$0xf]
          %v1527 = vld [vmem:[%s1524 + $0x8] sm:$0xf]
          %v1528 = vld [vmem:[%s1524 + $0xc] sm:$0xf]
          %v1529 = vld [vmem:[%s1524 + $0x10] sm:$0xf]
          %v1530 = vld [vmem:[%s1524 + $0x14] sm:$0xf]
          %v1531 = vld [vmem:[%s1524 + $0x18] sm:$0xf]
          %v1532 = vld [vmem:[%s1524 + $0x1c] sm:$0xf]
          %v1541 = vunpack.c.l.b16 %v1525
          %v1542 = vunpack.c.l.b16 %v1526
          %v1543 = vunpack.c.l.b16 %v1527
          %v1544 = vunpack.c.l.b16 %v1528
          %v1545 = vunpack.c.l.b16 %v1529
          %v1546 = vunpack.c.l.b16 %v1530
          %v1547 = vunpack.c.l.b16 %v1531
          %v1548 = vunpack.c.l.b16 %v1532
          %v1549 = vpack.c.b16 %v1542, %v1541
          %v1550 = vpack.c.b16 %v1544, %v1543
          %v1551 = vpack.c.b16 %v1546, %v1545
          %v1552 = vpack.c.b16 %v1548, %v1547
          %v1558 = vsel %vm1343, %v1520, 0
          %v1561 = vsel %vm1343, %v1521, 0
          %v1564 = vsel %vm1343, %v1522, 0
          %v1567 = vsel %vm1343, %v1523, 0
          %1569 = vmatprep.subr.bf16.mxu0 0
          %1570 = vmatpush1.bf16.msra.mxu0 0
          %1571 = vmatprep.subr.bf16.mxu0 0
          %1572 = vmatpush1.bf16.msra.mxu0 0
          %1573 = vmatprep.subr.bf16.mxu0 0
          %1574 = vmatpush1.bf16.msra.mxu0 0
          %1575 = vmatprep.subr.bf16.mxu0 0
          %1576 = vmatpush1.bf16.msra.mxu0 0
          %1577 = vmatprep.subr.bf16.mxu0 0
          %1578 = vmatpush1.bf16.msra.mxu0 %v1552
          %1579 = vmatprep.subr.bf16.mxu0 0
          %1580 = vmatpush1.bf16.msra.mxu0 %v1551
          %1581 = vmatprep.subr.bf16.mxu0 0
          %1582 = vmatpush1.bf16.msra.mxu0 %v1550
          %1583 = vmatprep.subr.bf16.mxu0 0
          %1584 = vmatpush1.bf16.msra.mxu0 %v1549
          %1585 = vmatprep.subr.bf16.mxu0 0
          %1586 = vmatpush2.bf16.msra.mxu0 0
          %1587 = vmatprep.subr.bf16.mxu0 0
          %1588 = vmatpush2.bf16.msra.mxu0 0
          %1589 = vmatprep.subr.bf16.mxu0 0
          %1590 = vmatpush2.bf16.msra.mxu0 0
          %1591 = vmatprep.subr.bf16.mxu0 0
          %1592 = vmatpush2.bf16.msra.mxu0 0
          %1593 = vmatprep.subr.bf16.mxu0 0
          %1594 = vmatpush2.bf16.msra.mxu0 0
          %1595 = vmatprep.subr.bf16.mxu0 0
          %1596 = vmatpush2.bf16.msra.mxu0 0
          %1597 = vmatprep.subr.bf16.mxu0 0
          %1598 = vmatpush2.bf16.msra.mxu0 0
          %1599 = vmatprep.subr.bf16.mxu0 0
          %1600 = vmatpush2.bf16.msra.mxu0 0
          %1601 = vmatprep.mubr.bf16.mxu0 0
          %1602 = vmatmul.mubr.bf16.gmra.mxu0 %v1558
          %v1603 = vpop.f32.mrf.mxu0
          %v1604 = vadd.f32 0.0, %v1603
          %v1605 = vpop.f32.mrf.mxu0
          %v1606 = vpop.f32.mrf.mxu0
          %v1607 = vadd.f32 0.0, %v1606
          %v1608 = vpop.f32.mrf.mxu0
          %1609 = vmatprep.mubr.bf16.mxu0 0
          %1610 = vmatmul.mubr.bf16.gmra.mxu0 %v1561
          %v1611 = vpop.f32.mrf.mxu0
          %v1612 = vadd.f32 0.0, %v1611
          %v1613 = vpop.f32.mrf.mxu0
          %v1614 = vpop.f32.mrf.mxu0
          %v1615 = vadd.f32 0.0, %v1614
          %v1616 = vpop.f32.mrf.mxu0
          %1617 = vmatprep.mubr.bf16.mxu0 0
          %1618 = vmatmul.mubr.bf16.gmra.mxu0 %v1564
          %v1619 = vpop.f32.mrf.mxu0
          %v1620 = vadd.f32 0.0, %v1619
          %v1621 = vpop.f32.mrf.mxu0
          %v1622 = vpop.f32.mrf.mxu0
          %v1623 = vadd.f32 0.0, %v1622
          %v1624 = vpop.f32.mrf.mxu0
          %1625 = vmatprep.mubr.bf16.mxu0 0
          %1626 = vmatmul.mubr.bf16.gmra.mxu0 %v1567
          %v1627 = vpop.f32.mrf.mxu0
          %v1628 = vadd.f32 0.0, %v1627
          %v1629 = vpop.f32.mrf.mxu0
          %v1630 = vpop.f32.mrf.mxu0
          %v1631 = vpop.f32.mrf.mxu0
          %1632 = vdwg.mxu0
          %v1633 = vadd.f32 %v1491, %v1604
          %v1634 = vadd.f32 %v1494, %v1607
          %v1635 = vadd.f32 %v1499, %v1612
          %v1636 = vadd.f32 %v1502, %v1615
          %v1637 = vadd.f32 %v1507, %v1620
          %v1638 = vadd.f32 %v1510, %v1623
          %v1639 = vadd.f32 %v1515, %v1628
          %v1640 = vld [vmem:[#allocation11] sm:$0x1]
          %v1642 = vlaneseq
          %v1643 = vshrl.u32 %v1642, 7
          %v1644 = vsub.s32 0, %v1643
          %v1645 = vrot.slane %v1640, %v1644
          %v1647 = vadd.f32 %v1633, %v1645
          %v1648 = vadd.f32 %v1634, %v1645
          %v1649 = vadd.f32 %v1635, %v1645
          %v1650 = vadd.f32 %v1636, %v1645
          %v1651 = vadd.f32 %v1637, %v1645
          %v1652 = vadd.f32 %v1638, %v1645
          %v1653 = vadd.f32 %v1639, %v1645
          %v1654 = vmul.f32 %v1647, 0.1
          %v1655 = vmul.f32 %v1648, 0.1
          %v1656 = vmul.f32 %v1649, 0.1
          %v1657 = vmul.f32 %v1650, 0.1
          %v1658 = vmul.f32 %v1651, 0.1
          %v1659 = vmul.f32 %v1652, 0.1
          %v1660 = vmul.f32 %v1653, 0.1
          %v1661 = vmax.f32 %v1647, %v1654
          %v1662 = vmax.f32 %v1648, %v1655
          %v1663 = vmax.f32 %v1649, %v1656
          %v1664 = vmax.f32 %v1650, %v1657
          %v1665 = vmax.f32 %v1651, %v1658
          %v1666 = vmax.f32 %v1652, %v1659
          %v1667 = vmax.f32 %v1653, %v1660
          %v1675 = vrot.slane %v1661, 7
          %v1676 = vrot.slane %v1662, 7
          %v1677 = vsel %vm847, %v1675, %v1676
          %v1678 = vrot.slane %v1663, 7
          %v1679 = vsel %vm847, %v1676, %v1678
          %v1680 = vrot.slane %v1664, 7
          %v1681 = vsel %vm847, %v1678, %v1680
          %v1682 = vrot.slane %v1665, 7
          %v1683 = vsel %vm847, %v1680, %v1682
          %v1684 = vrot.slane %v1666, 7
          %v1685 = vsel %vm847, %v1682, %v1684
          %v1686 = vrot.slane %v1667, 7
          %v1687 = vsel %vm847, %v1684, %v1686
          %v1695 = vsel %vm847, 0.0, %v1675
          %v1696 = vsel %vm876, 0.0, %v1695
          %v1697 = vsel %vm877, 0.0, %v1677
          %v1698 = vsel %vm878, 0.0, %v1679
          %v1699 = vsel %vm879, 0.0, %v1681
          %v1700 = vsel %vm880, 0.0, %v1683
          %v1701 = vsel %vm881, 0.0, %v1685
          %v1702 = vsel %vm882, 0.0, %v1687
          %v1703 = vrot.slane %v1661, 1
          %v1704 = vrot.slane %v1662, 1
          %v1705 = vsel %vm890, %v1703, %v1704
          %v1706 = vrot.slane %v1663, 1
          %v1707 = vsel %vm890, %v1704, %v1706
          %v1708 = vrot.slane %v1664, 1
          %v1709 = vsel %vm890, %v1706, %v1708
          %v1710 = vrot.slane %v1665, 1
          %v1711 = vsel %vm890, %v1708, %v1710
          %v1712 = vrot.slane %v1666, 1
          %v1713 = vsel %vm890, %v1710, %v1712
          %v1714 = vrot.slane %v1667, 1
          %v1715 = vsel %vm890, %v1712, %v1714
          %v1723 = vsel %vm890, %v1714, 0.0
          %v1724 = vsel %vm919, 0.0, %v1705
          %v1725 = vsel %vm920, 0.0, %v1707
          %v1726 = vsel %vm921, 0.0, %v1709
          %v1727 = vsel %vm922, 0.0, %v1711
          %v1728 = vsel %vm923, 0.0, %v1713
          %v1729 = vsel %vm924, 0.0, %v1715
          %v1730 = vsel %vm925, 0.0, %v1723
          %v1731 = vpack.c.bf16 %v1697, %v1696
          %v1732 = vpack.c.bf16 %v1699, %v1698
          %v1733 = vpack.c.bf16 %v1701, %v1700
          %v1734 = vpack.c.bf16 %v1702, %v1702
          %v1735 = vld [vmem:[#allocation13] sm:$0xf]
          %v1736 = vld [vmem:[#allocation13 + $0x4] sm:$0xf]
          %v1737 = vld [vmem:[#allocation13 + $0x8] sm:$0xf]
          %v1738 = vld [vmem:[#allocation13 + $0xc] sm:$0xf]
          %v1739 = vld [vmem:[#allocation13 + $0x10] sm:$0xf]
          %v1740 = vld [vmem:[#allocation13 + $0x14] sm:$0xf]
          %v1741 = vld [vmem:[#allocation13 + $0x18] sm:$0xf]
          %v1742 = vld [vmem:[#allocation13 + $0x1c] sm:$0xf]
          %v1743 = vpack.c.bf16 %v1662, %v1661
          %v1744 = vpack.c.bf16 %v1664, %v1663
          %v1745 = vpack.c.bf16 %v1666, %v1665
          %v1746 = vpack.c.bf16 %v1667, %v1667
          %s1747 = scalar_lea.vmem [#allocation13], 32
          %v1748 = vld [vmem:[%s1747] sm:$0xf]
          %v1749 = vld [vmem:[%s1747 + $0x4] sm:$0xf]
          %v1750 = vld [vmem:[%s1747 + $0x8] sm:$0xf]
          %v1751 = vld [vmem:[%s1747 + $0xc] sm:$0xf]
          %v1752 = vld [vmem:[%s1747 + $0x10] sm:$0xf]
          %v1753 = vld [vmem:[%s1747 + $0x14] sm:$0xf]
          %v1754 = vld [vmem:[%s1747 + $0x18] sm:$0xf]
          %v1755 = vld [vmem:[%s1747 + $0x1c] sm:$0xf]
          %v1764 = vunpack.c.l.b16 %v1748
          %v1765 = vunpack.c.l.b16 %v1749
          %v1766 = vunpack.c.l.b16 %v1750
          %v1767 = vunpack.c.l.b16 %v1751
          %v1768 = vunpack.c.l.b16 %v1752
          %v1769 = vunpack.c.l.b16 %v1753
          %v1770 = vunpack.c.l.b16 %v1754
          %v1771 = vunpack.c.l.b16 %v1755
          %v1772 = vpack.c.b16 %v1765, %v1764
          %v1773 = vpack.c.b16 %v1767, %v1766
          %v1774 = vpack.c.b16 %v1769, %v1768
          %v1775 = vpack.c.b16 %v1771, %v1770
          %v1781 = vsel %vm1343, %v1743, 0
          %v1784 = vsel %vm1343, %v1744, 0
          %v1787 = vsel %vm1343, %v1745, 0
          %v1790 = vsel %vm1343, %v1746, 0
          %1792 = vmatprep.subr.bf16.mxu0 0
          %1793 = vmatpush1.bf16.msra.mxu0 0
          %1794 = vmatprep.subr.bf16.mxu0 0
          %1795 = vmatpush1.bf16.msra.mxu0 0
          %1796 = vmatprep.subr.bf16.mxu0 0
          %1797 = vmatpush1.bf16.msra.mxu0 0
          %1798 = vmatprep.subr.bf16.mxu0 0
          %1799 = vmatpush1.bf16.msra.mxu0 0
          %1800 = vmatprep.subr.bf16.mxu0 0
          %1801 = vmatpush1.bf16.msra.mxu0 %v1775
          %1802 = vmatprep.subr.bf16.mxu0 0
          %1803 = vmatpush1.bf16.msra.mxu0 %v1774
          %1804 = vmatprep.subr.bf16.mxu0 0
          %1805 = vmatpush1.bf16.msra.mxu0 %v1773
          %1806 = vmatprep.subr.bf16.mxu0 0
          %1807 = vmatpush1.bf16.msra.mxu0 %v1772
          %1808 = vmatprep.subr.bf16.mxu0 0
          %1809 = vmatpush2.bf16.msra.mxu0 0
          %1810 = vmatprep.subr.bf16.mxu0 0
          %1811 = vmatpush2.bf16.msra.mxu0 0
          %1812 = vmatprep.subr.bf16.mxu0 0
          %1813 = vmatpush2.bf16.msra.mxu0 0
          %1814 = vmatprep.subr.bf16.mxu0 0
          %1815 = vmatpush2.bf16.msra.mxu0 0
          %1816 = vmatprep.subr.bf16.mxu0 0
          %1817 = vmatpush2.bf16.msra.mxu0 0
          %1818 = vmatprep.subr.bf16.mxu0 0
          %1819 = vmatpush2.bf16.msra.mxu0 0
          %1820 = vmatprep.subr.bf16.mxu0 0
          %1821 = vmatpush2.bf16.msra.mxu0 0
          %1822 = vmatprep.subr.bf16.mxu0 0
          %1823 = vmatpush2.bf16.msra.mxu0 0
          %1824 = vmatprep.mubr.bf16.mxu0 0
          %1825 = vmatmul.mubr.bf16.gmra.mxu0 %v1781
          %v1826 = vpop.f32.mrf.mxu0
          %v1827 = vadd.f32 0.0, %v1826
          %v1828 = vpop.f32.mrf.mxu0
          %v1829 = vpop.f32.mrf.mxu0
          %v1830 = vadd.f32 0.0, %v1829
          %v1831 = vpop.f32.mrf.mxu0
          %1832 = vmatprep.mubr.bf16.mxu0 0
          %1833 = vmatmul.mubr.bf16.gmra.mxu0 %v1784
          %v1834 = vpop.f32.mrf.mxu0
          %v1835 = vadd.f32 0.0, %v1834
          %v1836 = vpop.f32.mrf.mxu0
          %v1837 = vpop.f32.mrf.mxu0
          %v1838 = vadd.f32 0.0, %v1837
          %v1839 = vpop.f32.mrf.mxu0
          %1840 = vmatprep.mubr.bf16.mxu0 0
          %1841 = vmatmul.mubr.bf16.gmra.mxu0 %v1787
          %v1842 = vpop.f32.mrf.mxu0
          %v1843 = vadd.f32 0.0, %v1842
          %v1844 = vpop.f32.mrf.mxu0
          %v1845 = vpop.f32.mrf.mxu0
          %v1846 = vadd.f32 0.0, %v1845
          %v1847 = vpop.f32.mrf.mxu0
          %1848 = vmatprep.mubr.bf16.mxu0 0
          %1849 = vmatmul.mubr.bf16.gmra.mxu0 %v1790
          %v1850 = vpop.f32.mrf.mxu0
          %v1851 = vadd.f32 0.0, %v1850
          %v1852 = vpop.f32.mrf.mxu0
          %v1853 = vpop.f32.mrf.mxu0
          %v1854 = vpop.f32.mrf.mxu0
          %1855 = vdwg.mxu0
          %v1864 = vunpack.c.l.b16 %v1735
          %v1865 = vunpack.c.l.b16 %v1736
          %v1866 = vunpack.c.l.b16 %v1737
          %v1867 = vunpack.c.l.b16 %v1738
          %v1868 = vunpack.c.l.b16 %v1739
          %v1869 = vunpack.c.l.b16 %v1740
          %v1870 = vunpack.c.l.b16 %v1741
          %v1871 = vunpack.c.l.b16 %v1742
          %v1872 = vpack.c.b16 %v1865, %v1864
          %v1873 = vpack.c.b16 %v1867, %v1866
          %v1874 = vpack.c.b16 %v1869, %v1868
          %v1875 = vpack.c.b16 %v1871, %v1870
          %v1881 = vsel %vm1343, %v1731, 0
          %v1884 = vsel %vm1343, %v1732, 0
          %v1887 = vsel %vm1343, %v1733, 0
          %v1890 = vsel %vm1343, %v1734, 0
          %1892 = vmatprep.subr.bf16.mxu0 0
          %1893 = vmatpush1.bf16.msra.mxu0 0
          %1894 = vmatprep.subr.bf16.mxu0 0
          %1895 = vmatpush1.bf16.msra.mxu0 0
          %1896 = vmatprep.subr.bf16.mxu0 0
          %1897 = vmatpush1.bf16.msra.mxu0 0
          %1898 = vmatprep.subr.bf16.mxu0 0
          %1899 = vmatpush1.bf16.msra.mxu0 0
          %1900 = vmatprep.subr.bf16.mxu0 0
          %1901 = vmatpush1.bf16.msra.mxu0 %v1875
          %1902 = vmatprep.subr.bf16.mxu0 0
          %1903 = vmatpush1.bf16.msra.mxu0 %v1874
          %1904 = vmatprep.subr.bf16.mxu0 0
          %1905 = vmatpush1.bf16.msra.mxu0 %v1873
          %1906 = vmatprep.subr.bf16.mxu0 0
          %1907 = vmatpush1.bf16.msra.mxu0 %v1872
          %1908 = vmatprep.subr.bf16.mxu0 0
          %1909 = vmatpush2.bf16.msra.mxu0 0
          %1910 = vmatprep.subr.bf16.mxu0 0
          %1911 = vmatpush2.bf16.msra.mxu0 0
          %1912 = vmatprep.subr.bf16.mxu0 0
          %1913 = vmatpush2.bf16.msra.mxu0 0
          %1914 = vmatprep.subr.bf16.mxu0 0
          %1915 = vmatpush2.bf16.msra.mxu0 0
          %1916 = vmatprep.subr.bf16.mxu0 0
          %1917 = vmatpush2.bf16.msra.mxu0 0
          %1918 = vmatprep.subr.bf16.mxu0 0
          %1919 = vmatpush2.bf16.msra.mxu0 0
          %1920 = vmatprep.subr.bf16.mxu0 0
          %1921 = vmatpush2.bf16.msra.mxu0 0
          %1922 = vmatprep.subr.bf16.mxu0 0
          %1923 = vmatpush2.bf16.msra.mxu0 0
          %1924 = vmatprep.mubr.bf16.mxu0 0
          %1925 = vmatmul.mubr.bf16.gmra.mxu0 %v1881
          %v1926 = vpop.f32.mrf.mxu0
          %v1927 = vadd.f32 %v1827, %v1926
          %v1928 = vpop.f32.mrf.mxu0
          %v1929 = vpop.f32.mrf.mxu0
          %v1930 = vadd.f32 %v1830, %v1929
          %v1931 = vpop.f32.mrf.mxu0
          %1932 = vmatprep.mubr.bf16.mxu0 0
          %1933 = vmatmul.mubr.bf16.gmra.mxu0 %v1884
          %v1934 = vpop.f32.mrf.mxu0
          %v1935 = vadd.f32 %v1835, %v1934
          %v1936 = vpop.f32.mrf.mxu0
          %v1937 = vpop.f32.mrf.mxu0
          %v1938 = vadd.f32 %v1838, %v1937
          %v1939 = vpop.f32.mrf.mxu0
          %1940 = vmatprep.mubr.bf16.mxu0 0
          %1941 = vmatmul.mubr.bf16.gmra.mxu0 %v1887
          %v1942 = vpop.f32.mrf.mxu0
          %v1943 = vadd.f32 %v1843, %v1942
          %v1944 = vpop.f32.mrf.mxu0
          %v1945 = vpop.f32.mrf.mxu0
          %v1946 = vadd.f32 %v1846, %v1945
          %v1947 = vpop.f32.mrf.mxu0
          %1948 = vmatprep.mubr.bf16.mxu0 0
          %1949 = vmatmul.mubr.bf16.gmra.mxu0 %v1890
          %v1950 = vpop.f32.mrf.mxu0
          %v1951 = vadd.f32 %v1851, %v1950
          %v1952 = vpop.f32.mrf.mxu0
          %v1953 = vpop.f32.mrf.mxu0
          %v1954 = vpop.f32.mrf.mxu0
          %1955 = vdwg.mxu0
          %v1956 = vpack.c.bf16 %v1725, %v1724
          %v1957 = vpack.c.bf16 %v1727, %v1726
          %v1958 = vpack.c.bf16 %v1729, %v1728
          %v1959 = vpack.c.bf16 %v1730, %v1730
          %s1960 = scalar_lea.vmem [#allocation13], 64
          %v1961 = vld [vmem:[%s1960] sm:$0xf]
          %v1962 = vld [vmem:[%s1960 + $0x4] sm:$0xf]
          %v1963 = vld [vmem:[%s1960 + $0x8] sm:$0xf]
          %v1964 = vld [vmem:[%s1960 + $0xc] sm:$0xf]
          %v1965 = vld [vmem:[%s1960 + $0x10] sm:$0xf]
          %v1966 = vld [vmem:[%s1960 + $0x14] sm:$0xf]
          %v1967 = vld [vmem:[%s1960 + $0x18] sm:$0xf]
          %v1968 = vld [vmem:[%s1960 + $0x1c] sm:$0xf]
          %v1977 = vunpack.c.l.b16 %v1961
          %v1978 = vunpack.c.l.b16 %v1962
          %v1979 = vunpack.c.l.b16 %v1963
          %v1980 = vunpack.c.l.b16 %v1964
          %v1981 = vunpack.c.l.b16 %v1965
          %v1982 = vunpack.c.l.b16 %v1966
          %v1983 = vunpack.c.l.b16 %v1967
          %v1984 = vunpack.c.l.b16 %v1968
          %v1985 = vpack.c.b16 %v1978, %v1977
          %v1986 = vpack.c.b16 %v1980, %v1979
          %v1987 = vpack.c.b16 %v1982, %v1981
          %v1988 = vpack.c.b16 %v1984, %v1983
          %v1994 = vsel %vm1343, %v1956, 0
          %v1997 = vsel %vm1343, %v1957, 0
          %v2000 = vsel %vm1343, %v1958, 0
          %v2003 = vsel %vm1343, %v1959, 0
          %2005 = vmatprep.subr.bf16.mxu0 0
          %2006 = vmatpush1.bf16.msra.mxu0 0
          %2007 = vmatprep.subr.bf16.mxu0 0
          %2008 = vmatpush1.bf16.msra.mxu0 0
          %2009 = vmatprep.subr.bf16.mxu0 0
          %2010 = vmatpush1.bf16.msra.mxu0 0
          %2011 = vmatprep.subr.bf16.mxu0 0
          %2012 = vmatpush1.bf16.msra.mxu0 0
          %2013 = vmatprep.subr.bf16.mxu0 0
          %2014 = vmatpush1.bf16.msra.mxu0 %v1988
          %2015 = vmatprep.subr.bf16.mxu0 0
          %2016 = vmatpush1.bf16.msra.mxu0 %v1987
          %2017 = vmatprep.subr.bf16.mxu0 0
          %2018 = vmatpush1.bf16.msra.mxu0 %v1986
          %2019 = vmatprep.subr.bf16.mxu0 0
          %2020 = vmatpush1.bf16.msra.mxu0 %v1985
          %2021 = vmatprep.subr.bf16.mxu0 0
          %2022 = vmatpush2.bf16.msra.mxu0 0
          %2023 = vmatprep.subr.bf16.mxu0 0
          %2024 = vmatpush2.bf16.msra.mxu0 0
          %2025 = vmatprep.subr.bf16.mxu0 0
          %2026 = vmatpush2.bf16.msra.mxu0 0
          %2027 = vmatprep.subr.bf16.mxu0 0
          %2028 = vmatpush2.bf16.msra.mxu0 0
          %2029 = vmatprep.subr.bf16.mxu0 0
          %2030 = vmatpush2.bf16.msra.mxu0 0
          %2031 = vmatprep.subr.bf16.mxu0 0
          %2032 = vmatpush2.bf16.msra.mxu0 0
          %2033 = vmatprep.subr.bf16.mxu0 0
          %2034 = vmatpush2.bf16.msra.mxu0 0
          %2035 = vmatprep.subr.bf16.mxu0 0
          %2036 = vmatpush2.bf16.msra.mxu0 0
          %2037 = vmatprep.mubr.bf16.mxu0 0
          %2038 = vmatmul.mubr.bf16.gmra.mxu0 %v1994
          %v2039 = vpop.f32.mrf.mxu0
          %v2040 = vadd.f32 0.0, %v2039
          %v2041 = vpop.f32.mrf.mxu0
          %v2042 = vpop.f32.mrf.mxu0
          %v2043 = vadd.f32 0.0, %v2042
          %v2044 = vpop.f32.mrf.mxu0
          %2045 = vmatprep.mubr.bf16.mxu0 0
          %2046 = vmatmul.mubr.bf16.gmra.mxu0 %v1997
          %v2047 = vpop.f32.mrf.mxu0
          %v2048 = vadd.f32 0.0, %v2047
          %v2049 = vpop.f32.mrf.mxu0
          %v2050 = vpop.f32.mrf.mxu0
          %v2051 = vadd.f32 0.0, %v2050
          %v2052 = vpop.f32.mrf.mxu0
          %2053 = vmatprep.mubr.bf16.mxu0 0
          %2054 = vmatmul.mubr.bf16.gmra.mxu0 %v2000
          %v2055 = vpop.f32.mrf.mxu0
          %v2056 = vadd.f32 0.0, %v2055
          %v2057 = vpop.f32.mrf.mxu0
          %v2058 = vpop.f32.mrf.mxu0
          %v2059 = vadd.f32 0.0, %v2058
          %v2060 = vpop.f32.mrf.mxu0
          %2061 = vmatprep.mubr.bf16.mxu0 0
          %2062 = vmatmul.mubr.bf16.gmra.mxu0 %v2003
          %v2063 = vpop.f32.mrf.mxu0
          %v2064 = vadd.f32 0.0, %v2063
          %v2065 = vpop.f32.mrf.mxu0
          %v2066 = vpop.f32.mrf.mxu0
          %v2067 = vpop.f32.mrf.mxu0
          %2068 = vdwg.mxu0
          %v2069 = vadd.f32 %v1927, %v2040
          %v2070 = vadd.f32 %v1930, %v2043
          %v2071 = vadd.f32 %v1935, %v2048
          %v2072 = vadd.f32 %v1938, %v2051
          %v2073 = vadd.f32 %v1943, %v2056
          %v2074 = vadd.f32 %v1946, %v2059
          %v2075 = vadd.f32 %v1951, %v2064
          %v2076 = vld [vmem:[#allocation14] sm:$0x1]
          %v2078 = vlaneseq
          %v2079 = vshrl.u32 %v2078, 7
          %v2080 = vsub.s32 0, %v2079
          %v2081 = vrot.slane %v2076, %v2080
          %v2083 = vadd.f32 %v2069, %v2081
          %v2084 = vadd.f32 %v2070, %v2081
          %v2085 = vadd.f32 %v2071, %v2081
          %v2086 = vadd.f32 %v2072, %v2081
          %v2087 = vadd.f32 %v2073, %v2081
          %v2088 = vadd.f32 %v2074, %v2081
          %v2089 = vadd.f32 %v2075, %v2081
          %v2090 = vmul.f32 %v2083, 0.1
          %v2091 = vmul.f32 %v2084, 0.1
          %v2092 = vmul.f32 %v2085, 0.1
          %v2093 = vmul.f32 %v2086, 0.1
          %v2094 = vmul.f32 %v2087, 0.1
          %v2095 = vmul.f32 %v2088, 0.1
          %v2096 = vmul.f32 %v2089, 0.1
          %v2097 = vmax.f32 %v2083, %v2090
          %v2098 = vmax.f32 %v2084, %v2091
          %v2099 = vmax.f32 %v2085, %v2092
          %v2100 = vmax.f32 %v2086, %v2093
          %v2101 = vmax.f32 %v2087, %v2094
          %v2102 = vmax.f32 %v2088, %v2095
          %v2103 = vmax.f32 %v2089, %v2096
          %v2104 = vpack.c.bf16 %v2098, %v2097
          %v2105 = vpack.c.bf16 %v2100, %v2099
          %v2106 = vpack.c.bf16 %v2102, %v2101
          %v2107 = vpack.c.bf16 %v2103, %v2103
          %vm2108 = vsmask.f32 256
          %v2109 = vsel %vm2108, %v2104, 0
          %v2110 = vrot.slane %v2105, 6
          %v2112 = vshll.u32 %v2110, 16
          %vm2114 = vsmask.f32 770
          %v2115 = vsel %vm2114, %v2112, %v2109
          %v2117 = vshrl.u32 %v2104, 16
          %v2119 = vsel %vm2108, %v2117, 0
          %v2120 = vsel %vm2114, %v2110, %v2119
          %v2121 = vrot.slane %v2104, 1
          %v2122 = vsel %vm2108, %v2121, 0
          %v2123 = vrot.slane %v2105, 7
          %v2125 = vshll.u32 %v2123, 16
          %v2127 = vsel %vm2114, %v2125, %v2122
          %v2129 = vshrl.u32 %v2121, 16
          %v2131 = vsel %vm2108, %v2129, 0
          %v2132 = vsel %vm2114, %v2123, %v2131
          %v2133 = vrot.slane %v2104, 2
          %v2134 = vsel %vm2108, %v2133, 0
          %v2136 = vshll.u32 %v2106, 16
          %v2138 = vsel %vm2114, %v2136, %v2134
          %v2140 = vshrl.u32 %v2133, 16
          %v2142 = vsel %vm2108, %v2140, 0
          %v2143 = vsel %vm2114, %v2106, %v2142
          %v2144 = vrot.slane %v2104, 3
          %v2145 = vsel %vm2108, %v2144, 0
          %v2146 = vrot.slane %v2106, 1
          %v2148 = vshll.u32 %v2146, 16
          %v2150 = vsel %vm2114, %v2148, %v2145
          %v2152 = vshrl.u32 %v2144, 16
          %v2154 = vsel %vm2108, %v2152, 0
          %v2155 = vsel %vm2114, %v2146, %v2154
          %v2156 = vrot.slane %v2104, 4
          %v2157 = vsel %vm2108, %v2156, 0
          %v2158 = vrot.slane %v2106, 2
          %v2160 = vshll.u32 %v2158, 16
          %v2162 = vsel %vm2114, %v2160, %v2157
          %v2164 = vshrl.u32 %v2156, 16
          %v2166 = vsel %vm2108, %v2164, 0
          %v2167 = vsel %vm2114, %v2158, %v2166
          %v2168 = vrot.slane %v2104, 5
          %v2169 = vsel %vm2108, %v2168, 0
          %v2170 = vrot.slane %v2106, 3
          %v2172 = vshll.u32 %v2170, 16
          %v2174 = vsel %vm2114, %v2172, %v2169
          %v2176 = vshrl.u32 %v2168, 16
          %v2178 = vsel %vm2108, %v2176, 0
          %v2179 = vsel %vm2114, %v2170, %v2178
          %v2180 = vrot.slane %v2104, 6
          %v2181 = vsel %vm2108, %v2180, 0
          %v2182 = vrot.slane %v2106, 4
          %v2184 = vshll.u32 %v2182, 16
          %v2186 = vsel %vm2114, %v2184, %v2181
          %v2188 = vshrl.u32 %v2180, 16
          %v2190 = vsel %vm2108, %v2188, 0
          %v2191 = vsel %vm2114, %v2182, %v2190
          %v2192 = vrot.slane %v2104, 7
          %v2193 = vsel %vm2108, %v2192, 0
          %v2194 = vrot.slane %v2106, 5
          %v2196 = vshll.u32 %v2194, 16
          %v2198 = vsel %vm2114, %v2196, %v2193
          %v2200 = vshrl.u32 %v2192, 16
          %v2202 = vsel %vm2108, %v2200, 0
          %v2203 = vsel %vm2114, %v2194, %v2202
          %v2204 = vsel %vm2108, %v2105, 0
          %v2205 = vrot.slane %v2106, 6
          %v2207 = vshll.u32 %v2205, 16
          %v2209 = vsel %vm2114, %v2207, %v2204
          %v2211 = vshrl.u32 %v2105, 16
          %v2213 = vsel %vm2108, %v2211, 0
          %v2214 = vsel %vm2114, %v2205, %v2213
          %v2215 = vrot.slane %v2105, 1
          %v2216 = vsel %vm2108, %v2215, 0
          %v2217 = vrot.slane %v2106, 7
          %v2219 = vshll.u32 %v2217, 16
          %v2221 = vsel %vm2114, %v2219, %v2216
          %v2223 = vshrl.u32 %v2215, 16
          %v2225 = vsel %vm2108, %v2223, 0
          %v2226 = vsel %vm2114, %v2217, %v2225
          %v2227 = vrot.slane %v2105, 2
          %v2228 = vsel %vm2108, %v2227, 0
          %v2230 = vshll.u32 %v2107, 16
          %v2232 = vsel %vm2114, %v2230, %v2228
          %v2234 = vshrl.u32 %v2227, 16
          %v2236 = vsel %vm2108, %v2234, 0
          %v2237 = vsel %vm2114, %v2107, %v2236
          %v2238 = vrot.slane %v2105, 3
          %v2239 = vsel %vm2108, %v2238, 0
          %v2240 = vrot.slane %v2107, 1
          %v2242 = vshll.u32 %v2240, 16
          %v2244 = vsel %vm2114, %v2242, %v2239
          %v2246 = vshrl.u32 %v2238, 16
          %v2248 = vsel %vm2108, %v2246, 0
          %v2249 = vsel %vm2114, %v2240, %v2248
          %v2250 = vrot.slane %v2105, 4
          %v2251 = vsel %vm2108, %v2250, 0
          %v2252 = vrot.slane %v2107, 2
          %v2254 = vshll.u32 %v2252, 16
          %v2256 = vsel %vm2114, %v2254, %v2251
          %v2258 = vshrl.u32 %v2250, 16
          %v2260 = vsel %vm2108, %v2258, 0
          %v2261 = vsel %vm2114, %v2252, %v2260
          %v2262 = vrot.slane %v2105, 5
          %v2263 = vsel %vm2108, %v2262, 0
          %v2264 = vrot.slane %v2107, 3
          %v2266 = vshll.u32 %v2264, 16
          %v2268 = vsel %vm2114, %v2266, %v2263
          %v2270 = vshrl.u32 %v2262, 16
          %v2272 = vsel %vm2108, %v2270, 0
          %v2273 = vsel %vm2114, %v2264, %v2272
          %v2288 = vcombine.low %v2115, %v2120
          %v2289 = vcombine.low %v2127, %v2132
          %v2290 = vcombine.low %v2138, %v2143
          %v2291 = vcombine.low %v2150, %v2155
          %v2293 = vunpack.c.l.s4 1966171168
          %v2294 = vunpack.c.0.s8 %v2293
          %v2295 = vlaneseq
          %v2296 = vshrl.u32 %v2295, 7
          %v2297 = vsub.s32 %v2294, %v2296
          %v2298 = vrot.slane %v2288, %v2297
          %v2300 = vunpack.c.l.s4 1966171168
          %v2301 = vunpack.c.0.s8 %v2300
          %v2302 = vlaneseq
          %v2303 = vshrl.u32 %v2302, 7
          %v2304 = vsub.s32 %v2301, %v2303
          %v2305 = vrot.slane %v2289, %v2304
          %v2307 = vunpack.c.l.s4 1966171168
          %v2308 = vunpack.c.0.s8 %v2307
          %v2309 = vlaneseq
          %v2310 = vshrl.u32 %v2309, 7
          %v2311 = vsub.s32 %v2308, %v2310
          %v2312 = vrot.slane %v2290, %v2311
          %v2314 = vunpack.c.l.s4 1966171168
          %v2315 = vunpack.c.0.s8 %v2314
          %v2316 = vlaneseq
          %v2317 = vshrl.u32 %v2316, 7
          %v2318 = vsub.s32 %v2315, %v2317
          %v2319 = vrot.slane %v2291, %v2318
          %v2320 = vcombine.low %v2298, %v2305
          %v2321 = vcombine.low %v2312, %v2319
          %v2323 = vunpack.c.l.s4 1966171168
          %v2324 = vunpack.c.0.s8 %v2323
          %v2325 = vlaneseq
          %v2326 = vshrl.u32 %v2325, 7
          %v2327 = vsub.s32 %v2324, %v2326
          %v2328 = vrot.slane %v2320, %v2327
          %v2330 = vunpack.c.l.s4 1966171168
          %v2331 = vunpack.c.0.s8 %v2330
          %v2332 = vlaneseq
          %v2333 = vshrl.u32 %v2332, 7
          %v2334 = vsub.s32 %v2331, %v2333
          %v2335 = vrot.slane %v2321, %v2334
          %v2336 = vcombine.low %v2328, %v2335
          %v2337 = vcombine.low %v2162, %v2167
          %v2338 = vcombine.low %v2174, %v2179
          %v2339 = vcombine.low %v2186, %v2191
          %v2341 = vunpack.c.l.s4 1966171168
          %v2342 = vunpack.c.0.s8 %v2341
          %v2343 = vlaneseq
          %v2344 = vshrl.u32 %v2343, 7
          %v2345 = vsub.s32 %v2342, %v2344
          %v2346 = vrot.slane %v2337, %v2345
          %v2348 = vunpack.c.l.s4 1966171168
          %v2349 = vunpack.c.0.s8 %v2348
          %v2350 = vlaneseq
          %v2351 = vshrl.u32 %v2350, 7
          %v2352 = vsub.s32 %v2349, %v2351
          %v2353 = vrot.slane %v2338, %v2352
          %v2355 = vunpack.c.l.s4 1966171168
          %v2356 = vunpack.c.0.s8 %v2355
          %v2357 = vlaneseq
          %v2358 = vshrl.u32 %v2357, 7
          %v2359 = vsub.s32 %v2356, %v2358
          %v2360 = vrot.slane %v2339, %v2359
          %v2361 = vcombine.low %v2346, %v2353
          %v2363 = vunpack.c.l.s4 1966171168
          %v2364 = vunpack.c.0.s8 %v2363
          %v2365 = vlaneseq
          %v2366 = vshrl.u32 %v2365, 7
          %v2367 = vsub.s32 %v2364, %v2366
          %v2368 = vrot.slane %v2361, %v2367
          %v2370 = vunpack.c.l.s4 1966171168
          %v2371 = vunpack.c.0.s8 %v2370
          %v2372 = vlaneseq
          %v2373 = vshrl.u32 %v2372, 7
          %v2374 = vsub.s32 %v2371, %v2373
          %v2375 = vrot.slane %v2360, %v2374
          %v2376 = vcombine.low %v2368, %v2375
          %2379 = vst [vmem:[#allocation3] sm:$0xff] %v2336
          %2380 = vst [vmem:[#allocation3 + $0x8] sm:$0x3f] %v2376
          %v2395 = vcombine.low %v2198, %v2203
          %v2396 = vcombine.low %v2209, %v2214
          %v2397 = vcombine.low %v2221, %v2226
          %v2398 = vcombine.low %v2232, %v2237
          %v2400 = vunpack.c.l.s4 1966171168
          %v2401 = vunpack.c.0.s8 %v2400
          %v2402 = vlaneseq
          %v2403 = vshrl.u32 %v2402, 7
          %v2404 = vsub.s32 %v2401, %v2403
          %v2405 = vrot.slane %v2395, %v2404
          %v2407 = vunpack.c.l.s4 1966171168
          %v2408 = vunpack.c.0.s8 %v2407
          %v2409 = vlaneseq
          %v2410 = vshrl.u32 %v2409, 7
          %v2411 = vsub.s32 %v2408, %v2410
          %v2412 = vrot.slane %v2396, %v2411
          %v2414 = vunpack.c.l.s4 1966171168
          %v2415 = vunpack.c.0.s8 %v2414
          %v2416 = vlaneseq
          %v2417 = vshrl.u32 %v2416, 7
          %v2418 = vsub.s32 %v2415, %v2417
          %v2419 = vrot.slane %v2397, %v2418
          %v2421 = vunpack.c.l.s4 1966171168
          %v2422 = vunpack.c.0.s8 %v2421
          %v2423 = vlaneseq
          %v2424 = vshrl.u32 %v2423, 7
          %v2425 = vsub.s32 %v2422, %v2424
          %v2426 = vrot.slane %v2398, %v2425
          %v2427 = vcombine.low %v2405, %v2412
          %v2428 = vcombine.low %v2419, %v2426
          %v2430 = vunpack.c.l.s4 1966171168
          %v2431 = vunpack.c.0.s8 %v2430
          %v2432 = vlaneseq
          %v2433 = vshrl.u32 %v2432, 7
          %v2434 = vsub.s32 %v2431, %v2433
          %v2435 = vrot.slane %v2427, %v2434
          %v2437 = vunpack.c.l.s4 1966171168
          %v2438 = vunpack.c.0.s8 %v2437
          %v2439 = vlaneseq
          %v2440 = vshrl.u32 %v2439, 7
          %v2441 = vsub.s32 %v2438, %v2440
          %v2442 = vrot.slane %v2428, %v2441
          %v2443 = vcombine.low %v2435, %v2442
          %v2444 = vcombine.low %v2244, %v2249
          %v2445 = vcombine.low %v2256, %v2261
          %v2446 = vcombine.low %v2268, %v2273
          %v2448 = vunpack.c.l.s4 1966171168
          %v2449 = vunpack.c.0.s8 %v2448
          %v2450 = vlaneseq
          %v2451 = vshrl.u32 %v2450, 7
          %v2452 = vsub.s32 %v2449, %v2451
          %v2453 = vrot.slane %v2444, %v2452
          %v2455 = vunpack.c.l.s4 1966171168
          %v2456 = vunpack.c.0.s8 %v2455
          %v2457 = vlaneseq
          %v2458 = vshrl.u32 %v2457, 7
          %v2459 = vsub.s32 %v2456, %v2458
          %v2460 = vrot.slane %v2445, %v2459
          %v2462 = vunpack.c.l.s4 1966171168
          %v2463 = vunpack.c.0.s8 %v2462
          %v2464 = vlaneseq
          %v2465 = vshrl.u32 %v2464, 7
          %v2466 = vsub.s32 %v2463, %v2465
          %v2467 = vrot.slane %v2446, %v2466
          %v2468 = vcombine.low %v2453, %v2460
          %v2470 = vunpack.c.l.s4 1966171168
          %v2471 = vunpack.c.0.s8 %v2470
          %v2472 = vlaneseq
          %v2473 = vshrl.u32 %v2472, 7
          %v2474 = vsub.s32 %v2471, %v2473
          %v2475 = vrot.slane %v2468, %v2474
          %v2477 = vunpack.c.l.s4 1966171168
          %v2478 = vunpack.c.0.s8 %v2477
          %v2479 = vlaneseq
          %v2480 = vshrl.u32 %v2479, 7
          %v2481 = vsub.s32 %v2478, %v2480
          %v2482 = vrot.slane %v2467, %v2481
          %v2483 = vcombine.low %v2475, %v2482
          %s2486 = scalar_lea.vmem [#allocation3], 14
          %2487 = vst [vmem:[%s2486] sm:$0xff] %v2443
          %2488 = vst [vmem:[%s2486 + $0x8] sm:$0x3f] %v2483
          %v2489 = vld [vmem:[#allocation19] sm:$0xf]
          %v2492 = vunpack.c.l.s4 1983009808
          %v2493 = vunpack.c.0.s8 %v2492
          %v2494 = vlaneseq
          %v2495 = vshrl.u32 %v2494, 7
          %v2496 = vsub.s32 %v2493, %v2495
          %v2497 = vrot.slane %v2489, %v2496
          %v2498 = vcombine.high %v2497, %v2497
          %v2501 = vpack.c.bf16 %v2497, %v2497
          %v2502 = vpack.c.bf16 %v2498, %v2498
          %v2503 = vld [vmem:[#allocation17] sm:$0xff]
          %v2504 = vld [vmem:[#allocation17 + $0x8] sm:$0xff]
          %v2505 = vld [vmem:[#allocation17 + $0x10] sm:$0xff]
          %v2506 = vld [vmem:[#allocation17 + $0x18] sm:$0xff]
          %v2507 = vld [vmem:[#allocation17 + $0x20] sm:$0xff]
          %v2508 = vld [vmem:[#allocation17 + $0x28] sm:$0xff]
          %v2509 = vld [vmem:[#allocation17 + $0x30] sm:$0xff]
          %v2510 = vld [vmem:[#allocation17 + $0x38] sm:$0xff]
          %v2511 = vld [vmem:[#allocation17 + $0x40] sm:$0xff]
          %v2512 = vld [vmem:[#allocation17 + $0x48] sm:$0xff]
          %v2513 = vld [vmem:[#allocation17 + $0x50] sm:$0xff]
          %v2514 = vld [vmem:[#allocation17 + $0x58] sm:$0xff]
          %v2515 = vld [vmem:[#allocation17 + $0x60] sm:$0xff]
          %v2516 = vld [vmem:[#allocation17 + $0x68] sm:$0xff]
          %v2517 = vld [vmem:[#allocation17 + $0x70] sm:$0xff]
          %v2518 = vld [vmem:[#allocation17 + $0x78] sm:$0xff]
          %v2519 = vld [vmem:[#allocation17 + $0x80] sm:$0xff]
          %v2520 = vld [vmem:[#allocation17 + $0x88] sm:$0xff]
          %v2521 = vld [vmem:[#allocation17 + $0x90] sm:$0xff]
          %v2522 = vld [vmem:[#allocation17 + $0x98] sm:$0xff]
          %v2523 = vld [vmem:[#allocation17 + $0xa0] sm:$0xff]
          %v2524 = vld [vmem:[#allocation17 + $0xa8] sm:$0xff]
          %v2525 = vld [vmem:[#allocation17 + $0xb0] sm:$0xff]
          %v2526 = vld [vmem:[#allocation17 + $0xb8] sm:$0xff]
          %v2527 = vld [vmem:[#allocation17 + $0xc0] sm:$0xff]
          %v2528 = vld [vmem:[#allocation17 + $0xc8] sm:$0xff]
          %v2529 = vld [vmem:[#allocation17 + $0xd0] sm:$0xff]
          %v2530 = vld [vmem:[#allocation17 + $0xd8] sm:$0xff]
          %v2531 = vld [vmem:[#allocation17 + $0xe0] sm:$0xff]
          %v2532 = vld [vmem:[#allocation17 + $0xe8] sm:$0xff]
          %v2533 = vld [vmem:[#allocation17 + $0xf0] sm:$0xff]
          %v2534 = vld [vmem:[#allocation17 + $0xf8] sm:$0xff]
          %v2535 = vld [vmem:[#allocation17 + $0x100] sm:$0xff]
          %v2536 = vld [vmem:[#allocation17 + $0x108] sm:$0xff]
          %v2537 = vld [vmem:[#allocation17 + $0x110] sm:$0xff]
          %v2538 = vld [vmem:[#allocation17 + $0x118] sm:$0xff]
          %v2539 = vld [vmem:[#allocation17 + $0x120] sm:$0xff]
          %v2540 = vld [vmem:[#allocation17 + $0x128] sm:$0xff]
          %v2541 = vld [vmem:[#allocation17 + $0x130] sm:$0xff]
          %v2542 = vld [vmem:[#allocation17 + $0x138] sm:$0xff]
          %v2543 = vld [vmem:[#allocation17 + $0x140] sm:$0xff]
          %v2544 = vld [vmem:[#allocation17 + $0x148] sm:$0xff]
          %v2545 = vld [vmem:[#allocation17 + $0x150] sm:$0xff]
          %v2546 = vld [vmem:[#allocation17 + $0x158] sm:$0xff]
          %v2547 = vld [vmem:[#allocation17 + $0x160] sm:$0xff]
          %v2548 = vld [vmem:[#allocation17 + $0x168] sm:$0xff]
          %v2549 = vld [vmem:[#allocation17 + $0x170] sm:$0xff]
          %v2550 = vld [vmem:[#allocation17 + $0x178] sm:$0xff]
          %v2551 = vld [vmem:[#allocation17 + $0x180] sm:$0xff]
          %v2552 = vld [vmem:[#allocation17 + $0x188] sm:$0xff]
          %v2553 = vld [vmem:[#allocation17 + $0x190] sm:$0xff]
          %v2554 = vld [vmem:[#allocation17 + $0x198] sm:$0xff]
          %v2555 = vld [vmem:[#allocation17 + $0x1a0] sm:$0xff]
          %v2556 = vld [vmem:[#allocation17 + $0x1a8] sm:$0xff]
          %v2557 = vld [vmem:[#allocation17 + $0x1b0] sm:$0xff]
          %v2558 = vld [vmem:[#allocation17 + $0x1b8] sm:$0xff]
          %v2559 = vld [vmem:[#allocation17 + $0x1c0] sm:$0xff]
          %v2560 = vld [vmem:[#allocation17 + $0x1c8] sm:$0xff]
          %v2561 = vld [vmem:[#allocation17 + $0x1d0] sm:$0xff]
          %v2562 = vld [vmem:[#allocation17 + $0x1d8] sm:$0xff]
          %v2563 = vld [vmem:[#allocation17 + $0x1e0] sm:$0xff]
          %v2564 = vld [vmem:[#allocation17 + $0x1e8] sm:$0xff]
          %v2565 = vld [vmem:[#allocation17 + $0x1f0] sm:$0xff]
          %v2566 = vld [vmem:[#allocation17 + $0x1f8] sm:$0xff]
          %v2567 = vld [vmem:[#allocation17 + $0x200] sm:$0xff]
          %v2568 = vld [vmem:[#allocation17 + $0x208] sm:$0xff]
          %v2569 = vld [vmem:[#allocation17 + $0x210] sm:$0xff]
          %v2570 = vld [vmem:[#allocation17 + $0x218] sm:$0xff]
          %v2571 = vld [vmem:[#allocation17 + $0x220] sm:$0xff]
          %v2572 = vld [vmem:[#allocation17 + $0x228] sm:$0xff]
          %v2573 = vld [vmem:[#allocation17 + $0x230] sm:$0xff]
          %v2574 = vld [vmem:[#allocation17 + $0x238] sm:$0xff]
          %v2575 = vld [vmem:[#allocation17 + $0x240] sm:$0xff]
          %v2576 = vld [vmem:[#allocation17 + $0x248] sm:$0xff]
          %v2577 = vld [vmem:[#allocation17 + $0x250] sm:$0xff]
          %v2578 = vld [vmem:[#allocation17 + $0x258] sm:$0xff]
          %v2579 = vld [vmem:[#allocation17 + $0x260] sm:$0xff]
          %v2580 = vld [vmem:[#allocation17 + $0x268] sm:$0xff]
          %v2581 = vld [vmem:[#allocation17 + $0x270] sm:$0xff]
          %v2582 = vld [vmem:[#allocation17 + $0x278] sm:$0xff]
          %v2583 = vld [vmem:[#allocation17 + $0x280] sm:$0xff]
          %v2584 = vld [vmem:[#allocation17 + $0x288] sm:$0xff]
          %v2585 = vld [vmem:[#allocation17 + $0x290] sm:$0xff]
          %v2586 = vld [vmem:[#allocation17 + $0x298] sm:$0xff]
          %v2587 = vld [vmem:[#allocation17 + $0x2a0] sm:$0xff]
          %v2588 = vld [vmem:[#allocation17 + $0x2a8] sm:$0xff]
          %v2589 = vld [vmem:[#allocation17 + $0x2b0] sm:$0xff]
          %v2590 = vld [vmem:[#allocation17 + $0x2b8] sm:$0xff]
          %v2591 = vld [vmem:[#allocation17 + $0x2c0] sm:$0xff]
          %v2592 = vld [vmem:[#allocation17 + $0x2c8] sm:$0xff]
          %v2593 = vld [vmem:[#allocation17 + $0x2d0] sm:$0xff]
          %v2594 = vld [vmem:[#allocation17 + $0x2d8] sm:$0xff]
          %v2595 = vld [vmem:[#allocation17 + $0x2e0] sm:$0xff]
          %v2596 = vld [vmem:[#allocation17 + $0x2e8] sm:$0xff]
          %v2597 = vld [vmem:[#allocation17 + $0x2f0] sm:$0xff]
          %v2598 = vld [vmem:[#allocation17 + $0x2f8] sm:$0xff]
          %v2599 = vld [vmem:[#allocation17 + $0x300] sm:$0xff]
          %v2600 = vld [vmem:[#allocation17 + $0x308] sm:$0xff]
          %v2601 = vld [vmem:[#allocation17 + $0x310] sm:$0xff]
          %v2602 = vld [vmem:[#allocation17 + $0x318] sm:$0xff]
          %v2603 = vld [vmem:[#allocation17 + $0x320] sm:$0xff]
          %v2604 = vld [vmem:[#allocation17 + $0x328] sm:$0xff]
          %v2605 = vld [vmem:[#allocation17 + $0x330] sm:$0xff]
          %v2606 = vld [vmem:[#allocation17 + $0x338] sm:$0xff]
          %v2607 = vld [vmem:[#allocation17 + $0x340] sm:$0xff]
          %v2608 = vld [vmem:[#allocation17 + $0x348] sm:$0xff]
          %v2609 = vld [vmem:[#allocation17 + $0x350] sm:$0xff]
          %v2610 = vld [vmem:[#allocation17 + $0x358] sm:$0xff]
          %v2611 = vld [vmem:[#allocation17 + $0x360] sm:$0xff]
          %v2612 = vld [vmem:[#allocation17 + $0x368] sm:$0xff]
          %v2613 = vld [vmem:[#allocation17 + $0x370] sm:$0xff]
          %v2614 = vld [vmem:[#allocation17 + $0x378] sm:$0xff]
          %v2615 = vld [vmem:[#allocation17 + $0x380] sm:$0xff]
          %v2616 = vld [vmem:[#allocation17 + $0x388] sm:$0xff]
          %v2617 = vld [vmem:[#allocation17 + $0x390] sm:$0xff]
          %v2618 = vld [vmem:[#allocation17 + $0x398] sm:$0xff]
          %v2619 = vld [vmem:[#allocation17 + $0x3a0] sm:$0xff]
          %v2620 = vld [vmem:[#allocation17 + $0x3a8] sm:$0xff]
          %v2621 = vld [vmem:[#allocation17 + $0x3b0] sm:$0xff]
          %v2622 = vld [vmem:[#allocation17 + $0x3b8] sm:$0xff]
          %v2623 = vld [vmem:[#allocation17 + $0x3c0] sm:$0xff]
          %v2624 = vld [vmem:[#allocation17 + $0x3c8] sm:$0xff]
          %v2625 = vld [vmem:[#allocation17 + $0x3d0] sm:$0xff]
          %v2626 = vld [vmem:[#allocation17 + $0x3d8] sm:$0xff]
          %v2627 = vld [vmem:[#allocation17 + $0x3e0] sm:$0xff]
          %v2628 = vld [vmem:[#allocation17 + $0x3e8] sm:$0xff]
          %v2629 = vld [vmem:[#allocation17 + $0x3f0] sm:$0xff]
          %v2630 = vld [vmem:[#allocation17 + $0x3f8] sm:$0xff]
          %v2631 = vld [vmem:[#allocation18] sm:$0xff]
          %v2633 = vlaneseq
          %v2634 = vshrl.u32 %v2633, 7
          %v2635 = vsub.s32 0, %v2634
          %v2636 = vrot.slane %v2631, %v2635
          %v2637 = vlaneseq
          %v2638 = vshrl.u32 %v2637, 7
          %v2639 = vsub.s32 1, %v2638
          %v2640 = vrot.slane %v2631, %v2639
          %v2641 = vlaneseq
          %v2642 = vshrl.u32 %v2641, 7
          %v2643 = vsub.s32 2, %v2642
          %v2644 = vrot.slane %v2631, %v2643
          %v2645 = vlaneseq
          %v2646 = vshrl.u32 %v2645, 7
          %v2647 = vsub.s32 3, %v2646
          %v2648 = vrot.slane %v2631, %v2647
          %v2649 = vlaneseq
          %v2650 = vshrl.u32 %v2649, 7
          %v2651 = vsub.s32 4, %v2650
          %v2652 = vrot.slane %v2631, %v2651
          %v2653 = vlaneseq
          %v2654 = vshrl.u32 %v2653, 7
          %v2655 = vsub.s32 5, %v2654
          %v2656 = vrot.slane %v2631, %v2655
          %v2657 = vlaneseq
          %v2658 = vshrl.u32 %v2657, 7
          %v2659 = vsub.s32 6, %v2658
          %v2660 = vrot.slane %v2631, %v2659
          %v2661 = vlaneseq
          %v2662 = vshrl.u32 %v2661, 7
          %v2663 = vsub.s32 7, %v2662
          %v2664 = vrot.slane %v2631, %v2663
          %v2801 = vunpack.c.l.b16 %v2503
          %v2802 = vunpack.c.h.b16 %v2503
          %v2803 = vunpack.c.l.b16 %v2504
          %v2804 = vunpack.c.h.b16 %v2504
          %v2805 = vunpack.c.l.b16 %v2505
          %v2806 = vunpack.c.h.b16 %v2505
          %v2807 = vunpack.c.l.b16 %v2506
          %v2808 = vunpack.c.h.b16 %v2506
          %v2809 = vunpack.c.l.b16 %v2507
          %v2810 = vunpack.c.h.b16 %v2507
          %v2811 = vunpack.c.l.b16 %v2508
          %v2812 = vunpack.c.h.b16 %v2508
          %v2813 = vunpack.c.l.b16 %v2509
          %v2814 = vunpack.c.h.b16 %v2509
          %v2815 = vunpack.c.l.b16 %v2510
          %v2816 = vunpack.c.h.b16 %v2510
          %v2817 = vunpack.c.l.b16 %v2511
          %v2818 = vunpack.c.h.b16 %v2511
          %v2819 = vunpack.c.l.b16 %v2512
          %v2820 = vunpack.c.h.b16 %v2512
          %v2821 = vunpack.c.l.b16 %v2513
          %v2822 = vunpack.c.h.b16 %v2513
          %v2823 = vunpack.c.l.b16 %v2514
          %v2824 = vunpack.c.h.b16 %v2514
          %v2825 = vunpack.c.l.b16 %v2515
          %v2826 = vunpack.c.h.b16 %v2515
          %v2827 = vunpack.c.l.b16 %v2516
          %v2828 = vunpack.c.h.b16 %v2516
          %v2829 = vunpack.c.l.b16 %v2517
          %v2830 = vunpack.c.h.b16 %v2517
          %v2831 = vunpack.c.l.b16 %v2518
          %v2832 = vunpack.c.h.b16 %v2518
          %v2833 = vunpack.c.l.b16 %v2519
          %v2834 = vunpack.c.h.b16 %v2519
          %v2835 = vunpack.c.l.b16 %v2520
          %v2836 = vunpack.c.h.b16 %v2520
          %v2837 = vunpack.c.l.b16 %v2521
          %v2838 = vunpack.c.h.b16 %v2521
          %v2839 = vunpack.c.l.b16 %v2522
          %v2840 = vunpack.c.h.b16 %v2522
          %v2841 = vunpack.c.l.b16 %v2523
          %v2842 = vunpack.c.h.b16 %v2523
          %v2843 = vunpack.c.l.b16 %v2524
          %v2844 = vunpack.c.h.b16 %v2524
          %v2845 = vunpack.c.l.b16 %v2525
          %v2846 = vunpack.c.h.b16 %v2525
          %v2847 = vunpack.c.l.b16 %v2526
          %v2848 = vunpack.c.h.b16 %v2526
          %v2849 = vunpack.c.l.b16 %v2527
          %v2850 = vunpack.c.h.b16 %v2527
          %v2851 = vunpack.c.l.b16 %v2528
          %v2852 = vunpack.c.h.b16 %v2528
          %v2853 = vunpack.c.l.b16 %v2529
          %v2854 = vunpack.c.h.b16 %v2529
          %v2855 = vunpack.c.l.b16 %v2530
          %v2856 = vunpack.c.h.b16 %v2530
          %v2857 = vunpack.c.l.b16 %v2531
          %v2858 = vunpack.c.h.b16 %v2531
          %v2859 = vunpack.c.l.b16 %v2532
          %v2860 = vunpack.c.h.b16 %v2532
          %v2861 = vunpack.c.l.b16 %v2533
          %v2862 = vunpack.c.h.b16 %v2533
          %v2863 = vunpack.c.l.b16 %v2534
          %v2864 = vunpack.c.h.b16 %v2534
          %v2865 = vunpack.c.l.b16 %v2535
          %v2866 = vunpack.c.h.b16 %v2535
          %v2867 = vunpack.c.l.b16 %v2536
          %v2868 = vunpack.c.h.b16 %v2536
          %v2869 = vunpack.c.l.b16 %v2537
          %v2870 = vunpack.c.h.b16 %v2537
          %v2871 = vunpack.c.l.b16 %v2538
          %v2872 = vunpack.c.h.b16 %v2538
          %v2873 = vunpack.c.l.b16 %v2539
          %v2874 = vunpack.c.h.b16 %v2539
          %v2875 = vunpack.c.l.b16 %v2540
          %v2876 = vunpack.c.h.b16 %v2540
          %v2877 = vunpack.c.l.b16 %v2541
          %v2878 = vunpack.c.h.b16 %v2541
          %v2879 = vunpack.c.l.b16 %v2542
          %v2880 = vunpack.c.h.b16 %v2542
          %v2881 = vunpack.c.l.b16 %v2543
          %v2882 = vunpack.c.h.b16 %v2543
          %v2883 = vunpack.c.l.b16 %v2544
          %v2884 = vunpack.c.h.b16 %v2544
          %v2885 = vunpack.c.l.b16 %v2545
          %v2886 = vunpack.c.h.b16 %v2545
          %v2887 = vunpack.c.l.b16 %v2546
          %v2888 = vunpack.c.h.b16 %v2546
          %v2889 = vunpack.c.l.b16 %v2547
          %v2890 = vunpack.c.h.b16 %v2547
          %v2891 = vunpack.c.l.b16 %v2548
          %v2892 = vunpack.c.h.b16 %v2548
          %v2893 = vunpack.c.l.b16 %v2549
          %v2894 = vunpack.c.h.b16 %v2549
          %v2895 = vunpack.c.l.b16 %v2550
          %v2896 = vunpack.c.h.b16 %v2550
          %v2897 = vunpack.c.l.b16 %v2551
          %v2898 = vunpack.c.h.b16 %v2551
          %v2899 = vunpack.c.l.b16 %v2552
          %v2900 = vunpack.c.h.b16 %v2552
          %v2901 = vunpack.c.l.b16 %v2553
          %v2902 = vunpack.c.h.b16 %v2553
          %v2903 = vunpack.c.l.b16 %v2554
          %v2904 = vunpack.c.h.b16 %v2554
          %v2905 = vunpack.c.l.b16 %v2555
          %v2906 = vunpack.c.h.b16 %v2555
          %v2907 = vunpack.c.l.b16 %v2556
          %v2908 = vunpack.c.h.b16 %v2556
          %v2909 = vunpack.c.l.b16 %v2557
          %v2910 = vunpack.c.h.b16 %v2557
          %v2911 = vunpack.c.l.b16 %v2558
          %v2912 = vunpack.c.h.b16 %v2558
          %v2913 = vunpack.c.l.b16 %v2559
          %v2914 = vunpack.c.h.b16 %v2559
          %v2915 = vunpack.c.l.b16 %v2560
          %v2916 = vunpack.c.h.b16 %v2560
          %v2917 = vunpack.c.l.b16 %v2561
          %v2918 = vunpack.c.h.b16 %v2561
          %v2919 = vunpack.c.l.b16 %v2562
          %v2920 = vunpack.c.h.b16 %v2562
          %v2921 = vunpack.c.l.b16 %v2563
          %v2922 = vunpack.c.h.b16 %v2563
          %v2923 = vunpack.c.l.b16 %v2564
          %v2924 = vunpack.c.h.b16 %v2564
          %v2925 = vunpack.c.l.b16 %v2565
          %v2926 = vunpack.c.h.b16 %v2565
          %v2927 = vunpack.c.l.b16 %v2566
          %v2928 = vunpack.c.h.b16 %v2566
          %v2929 = vunpack.c.l.b16 %v2567
          %v2930 = vunpack.c.h.b16 %v2567
          %v2931 = vunpack.c.l.b16 %v2568
          %v2932 = vunpack.c.h.b16 %v2568
          %v2933 = vunpack.c.l.b16 %v2569
          %v2934 = vunpack.c.h.b16 %v2569
          %v2935 = vunpack.c.l.b16 %v2570
          %v2936 = vunpack.c.h.b16 %v2570
          %v2937 = vunpack.c.l.b16 %v2571
          %v2938 = vunpack.c.h.b16 %v2571
          %v2939 = vunpack.c.l.b16 %v2572
          %v2940 = vunpack.c.h.b16 %v2572
          %v2941 = vunpack.c.l.b16 %v2573
          %v2942 = vunpack.c.h.b16 %v2573
          %v2943 = vunpack.c.l.b16 %v2574
          %v2944 = vunpack.c.h.b16 %v2574
          %v2945 = vunpack.c.l.b16 %v2575
          %v2946 = vunpack.c.h.b16 %v2575
          %v2947 = vunpack.c.l.b16 %v2576
          %v2948 = vunpack.c.h.b16 %v2576
          %v2949 = vunpack.c.l.b16 %v2577
          %v2950 = vunpack.c.h.b16 %v2577
          %v2951 = vunpack.c.l.b16 %v2578
          %v2952 = vunpack.c.h.b16 %v2578
          %v2953 = vunpack.c.l.b16 %v2579
          %v2954 = vunpack.c.h.b16 %v2579
          %v2955 = vunpack.c.l.b16 %v2580
          %v2956 = vunpack.c.h.b16 %v2580
          %v2957 = vunpack.c.l.b16 %v2581
          %v2958 = vunpack.c.h.b16 %v2581
          %v2959 = vunpack.c.l.b16 %v2582
          %v2960 = vunpack.c.h.b16 %v2582
          %v2961 = vunpack.c.l.b16 %v2583
          %v2962 = vunpack.c.h.b16 %v2583
          %v2963 = vunpack.c.l.b16 %v2584
          %v2964 = vunpack.c.h.b16 %v2584
          %v2965 = vunpack.c.l.b16 %v2585
          %v2966 = vunpack.c.h.b16 %v2585
          %v2967 = vunpack.c.l.b16 %v2586
          %v2968 = vunpack.c.h.b16 %v2586
          %v2969 = vunpack.c.l.b16 %v2587
          %v2970 = vunpack.c.h.b16 %v2587
          %v2971 = vunpack.c.l.b16 %v2588
          %v2972 = vunpack.c.h.b16 %v2588
          %v2973 = vunpack.c.l.b16 %v2589
          %v2974 = vunpack.c.h.b16 %v2589
          %v2975 = vunpack.c.l.b16 %v2590
          %v2976 = vunpack.c.h.b16 %v2590
          %v2977 = vunpack.c.l.b16 %v2591
          %v2978 = vunpack.c.h.b16 %v2591
          %v2979 = vunpack.c.l.b16 %v2592
          %v2980 = vunpack.c.h.b16 %v2592
          %v2981 = vunpack.c.l.b16 %v2593
          %v2982 = vunpack.c.h.b16 %v2593
          %v2983 = vunpack.c.l.b16 %v2594
          %v2984 = vunpack.c.h.b16 %v2594
          %v2985 = vunpack.c.l.b16 %v2595
          %v2986 = vunpack.c.h.b16 %v2595
          %v2987 = vunpack.c.l.b16 %v2596
          %v2988 = vunpack.c.h.b16 %v2596
          %v2989 = vunpack.c.l.b16 %v2597
          %v2990 = vunpack.c.h.b16 %v2597
          %v2991 = vunpack.c.l.b16 %v2598
          %v2992 = vunpack.c.h.b16 %v2598
          %v2993 = vunpack.c.l.b16 %v2599
          %v2994 = vunpack.c.h.b16 %v2599
          %v2995 = vunpack.c.l.b16 %v2600
          %v2996 = vunpack.c.h.b16 %v2600
          %v2997 = vunpack.c.l.b16 %v2601
          %v2998 = vunpack.c.h.b16 %v2601
          %v2999 = vunpack.c.l.b16 %v2602
          %v3000 = vunpack.c.h.b16 %v2602
          %v3001 = vunpack.c.l.b16 %v2603
          %v3002 = vunpack.c.h.b16 %v2603
          %v3003 = vunpack.c.l.b16 %v2604
          %v3004 = vunpack.c.h.b16 %v2604
          %v3005 = vunpack.c.l.b16 %v2605
          %v3006 = vunpack.c.h.b16 %v2605
          %v3007 = vunpack.c.l.b16 %v2606
          %v3008 = vunpack.c.h.b16 %v2606
          %v3009 = vunpack.c.l.b16 %v2607
          %v3010 = vunpack.c.h.b16 %v2607
          %v3011 = vunpack.c.l.b16 %v2608
          %v3012 = vunpack.c.h.b16 %v2608
          %v3013 = vunpack.c.l.b16 %v2609
          %v3014 = vunpack.c.h.b16 %v2609
          %v3015 = vunpack.c.l.b16 %v2610
          %v3016 = vunpack.c.h.b16 %v2610
          %v3017 = vunpack.c.l.b16 %v2611
          %v3018 = vunpack.c.h.b16 %v2611
          %v3019 = vunpack.c.l.b16 %v2612
          %v3020 = vunpack.c.h.b16 %v2612
          %v3021 = vunpack.c.l.b16 %v2613
          %v3022 = vunpack.c.h.b16 %v2613
          %v3023 = vunpack.c.l.b16 %v2614
          %v3024 = vunpack.c.h.b16 %v2614
          %v3025 = vunpack.c.l.b16 %v2615
          %v3026 = vunpack.c.h.b16 %v2615
          %v3027 = vunpack.c.l.b16 %v2616
          %v3028 = vunpack.c.h.b16 %v2616
          %v3029 = vunpack.c.l.b16 %v2617
          %v3030 = vunpack.c.h.b16 %v2617
          %v3031 = vunpack.c.l.b16 %v2618
          %v3032 = vunpack.c.h.b16 %v2618
          %v3033 = vunpack.c.l.b16 %v2619
          %v3034 = vunpack.c.h.b16 %v2619
          %v3035 = vunpack.c.l.b16 %v2620
          %v3036 = vunpack.c.h.b16 %v2620
          %v3037 = vunpack.c.l.b16 %v2621
          %v3038 = vunpack.c.h.b16 %v2621
          %v3039 = vunpack.c.l.b16 %v2622
          %v3040 = vunpack.c.h.b16 %v2622
          %v3041 = vunpack.c.l.b16 %v2623
          %v3042 = vunpack.c.h.b16 %v2623
          %v3043 = vunpack.c.l.b16 %v2624
          %v3044 = vunpack.c.h.b16 %v2624
          %v3045 = vunpack.c.l.b16 %v2625
          %v3046 = vunpack.c.h.b16 %v2625
          %v3047 = vunpack.c.l.b16 %v2626
          %v3048 = vunpack.c.h.b16 %v2626
          %v3049 = vunpack.c.l.b16 %v2627
          %v3050 = vunpack.c.h.b16 %v2627
          %v3051 = vunpack.c.l.b16 %v2628
          %v3052 = vunpack.c.h.b16 %v2628
          %v3053 = vunpack.c.l.b16 %v2629
          %v3054 = vunpack.c.h.b16 %v2629
          %v3055 = vunpack.c.l.b16 %v2630
          %v3056 = vunpack.c.h.b16 %v2630
          %v3057 = vpack.c.b16 %v2809, %v2801
          %v3058 = vpack.c.b16 %v2810, %v2802
          %v3059 = vpack.c.b16 %v2811, %v2803
          %v3060 = vpack.c.b16 %v2812, %v2804
          %v3061 = vpack.c.b16 %v2813, %v2805
          %v3062 = vpack.c.b16 %v2814, %v2806
          %v3063 = vpack.c.b16 %v2815, %v2807
          %v3064 = vpack.c.b16 %v2816, %v2808
          %v3065 = vpack.c.b16 %v2825, %v2817
          %v3066 = vpack.c.b16 %v2826, %v2818
          %v3067 = vpack.c.b16 %v2827, %v2819
          %v3068 = vpack.c.b16 %v2828, %v2820
          %v3069 = vpack.c.b16 %v2829, %v2821
          %v3070 = vpack.c.b16 %v2830, %v2822
          %v3071 = vpack.c.b16 %v2831, %v2823
          %v3072 = vpack.c.b16 %v2832, %v2824
          %v3073 = vpack.c.b16 %v2841, %v2833
          %v3074 = vpack.c.b16 %v2842, %v2834
          %v3075 = vpack.c.b16 %v2843, %v2835
          %v3076 = vpack.c.b16 %v2844, %v2836
          %v3077 = vpack.c.b16 %v2845, %v2837
          %v3078 = vpack.c.b16 %v2846, %v2838
          %v3079 = vpack.c.b16 %v2847, %v2839
          %v3080 = vpack.c.b16 %v2848, %v2840
          %v3081 = vpack.c.b16 %v2857, %v2849
          %v3082 = vpack.c.b16 %v2858, %v2850
          %v3083 = vpack.c.b16 %v2859, %v2851
          %v3084 = vpack.c.b16 %v2860, %v2852
          %v3085 = vpack.c.b16 %v2861, %v2853
          %v3086 = vpack.c.b16 %v2862, %v2854
          %v3087 = vpack.c.b16 %v2863, %v2855
          %v3088 = vpack.c.b16 %v2864, %v2856
          %v3089 = vpack.c.b16 %v2873, %v2865
          %v3090 = vpack.c.b16 %v2874, %v2866
          %v3091 = vpack.c.b16 %v2875, %v2867
          %v3092 = vpack.c.b16 %v2876, %v2868
          %v3093 = vpack.c.b16 %v2877, %v2869
          %v3094 = vpack.c.b16 %v2878, %v2870
          %v3095 = vpack.c.b16 %v2879, %v2871
          %v3096 = vpack.c.b16 %v2880, %v2872
          %v3097 = vpack.c.b16 %v2889, %v2881
          %v3098 = vpack.c.b16 %v2890, %v2882
          %v3099 = vpack.c.b16 %v2891, %v2883
          %v3100 = vpack.c.b16 %v2892, %v2884
          %v3101 = vpack.c.b16 %v2893, %v2885
          %v3102 = vpack.c.b16 %v2894, %v2886
          %v3103 = vpack.c.b16 %v2895, %v2887
          %v3104 = vpack.c.b16 %v2896, %v2888
          %v3105 = vpack.c.b16 %v2905, %v2897
          %v3106 = vpack.c.b16 %v2906, %v2898
          %v3107 = vpack.c.b16 %v2907, %v2899
          %v3108 = vpack.c.b16 %v2908, %v2900
          %v3109 = vpack.c.b16 %v2909, %v2901
          %v3110 = vpack.c.b16 %v2910, %v2902
          %v3111 = vpack.c.b16 %v2911, %v2903
          %v3112 = vpack.c.b16 %v2912, %v2904
          %v3113 = vpack.c.b16 %v2921, %v2913
          %v3114 = vpack.c.b16 %v2922, %v2914
          %v3115 = vpack.c.b16 %v2923, %v2915
          %v3116 = vpack.c.b16 %v2924, %v2916
          %v3117 = vpack.c.b16 %v2925, %v2917
          %v3118 = vpack.c.b16 %v2926, %v2918
          %v3119 = vpack.c.b16 %v2927, %v2919
          %v3120 = vpack.c.b16 %v2928, %v2920
          %v3121 = vpack.c.b16 %v2937, %v2929
          %v3122 = vpack.c.b16 %v2938, %v2930
          %v3123 = vpack.c.b16 %v2939, %v2931
          %v3124 = vpack.c.b16 %v2940, %v2932
          %v3125 = vpack.c.b16 %v2941, %v2933
          %v3126 = vpack.c.b16 %v2942, %v2934
          %v3127 = vpack.c.b16 %v2943, %v2935
          %v3128 = vpack.c.b16 %v2944, %v2936
          %v3129 = vpack.c.b16 %v2953, %v2945
          %v3130 = vpack.c.b16 %v2954, %v2946
          %v3131 = vpack.c.b16 %v2955, %v2947
          %v3132 = vpack.c.b16 %v2956, %v2948
          %v3133 = vpack.c.b16 %v2957, %v2949
          %v3134 = vpack.c.b16 %v2958, %v2950
          %v3135 = vpack.c.b16 %v2959, %v2951
          %v3136 = vpack.c.b16 %v2960, %v2952
          %v3137 = vpack.c.b16 %v2969, %v2961
          %v3138 = vpack.c.b16 %v2970, %v2962
          %v3139 = vpack.c.b16 %v2971, %v2963
          %v3140 = vpack.c.b16 %v2972, %v2964
          %v3141 = vpack.c.b16 %v2973, %v2965
          %v3142 = vpack.c.b16 %v2974, %v2966
          %v3143 = vpack.c.b16 %v2975, %v2967
          %v3144 = vpack.c.b16 %v2976, %v2968
          %v3145 = vpack.c.b16 %v2985, %v2977
          %v3146 = vpack.c.b16 %v2986, %v2978
          %v3147 = vpack.c.b16 %v2987, %v2979
          %v3148 = vpack.c.b16 %v2988, %v2980
          %v3149 = vpack.c.b16 %v2989, %v2981
          %v3150 = vpack.c.b16 %v2990, %v2982
          %v3151 = vpack.c.b16 %v2991, %v2983
          %v3152 = vpack.c.b16 %v2992, %v2984
          %v3153 = vpack.c.b16 %v3001, %v2993
          %v3154 = vpack.c.b16 %v3002, %v2994
          %v3155 = vpack.c.b16 %v3003, %v2995
          %v3156 = vpack.c.b16 %v3004, %v2996
          %v3157 = vpack.c.b16 %v3005, %v2997
          %v3158 = vpack.c.b16 %v3006, %v2998
          %v3159 = vpack.c.b16 %v3007, %v2999
          %v3160 = vpack.c.b16 %v3008, %v3000
          %v3161 = vpack.c.b16 %v3017, %v3009
          %v3162 = vpack.c.b16 %v3018, %v3010
          %v3163 = vpack.c.b16 %v3019, %v3011
          %v3164 = vpack.c.b16 %v3020, %v3012
          %v3165 = vpack.c.b16 %v3021, %v3013
          %v3166 = vpack.c.b16 %v3022, %v3014
          %v3167 = vpack.c.b16 %v3023, %v3015
          %v3168 = vpack.c.b16 %v3024, %v3016
          %v3169 = vpack.c.b16 %v3033, %v3025
          %v3170 = vpack.c.b16 %v3034, %v3026
          %v3171 = vpack.c.b16 %v3035, %v3027
          %v3172 = vpack.c.b16 %v3036, %v3028
          %v3173 = vpack.c.b16 %v3037, %v3029
          %v3174 = vpack.c.b16 %v3038, %v3030
          %v3175 = vpack.c.b16 %v3039, %v3031
          %v3176 = vpack.c.b16 %v3040, %v3032
          %v3177 = vpack.c.b16 %v3049, %v3041
          %v3178 = vpack.c.b16 %v3050, %v3042
          %v3179 = vpack.c.b16 %v3051, %v3043
          %v3180 = vpack.c.b16 %v3052, %v3044
          %v3181 = vpack.c.b16 %v3053, %v3045
          %v3182 = vpack.c.b16 %v3054, %v3046
          %v3183 = vpack.c.b16 %v3055, %v3047
          %v3184 = vpack.c.b16 %v3056, %v3048
          %3313 = vmatprep.subr.bf16.mxu0 %v3114
          %3314 = vmatpush1.bf16.msra.mxu0 %v3113
          %3315 = vmatprep.subr.bf16.mxu0 %v3106
          %3316 = vmatpush1.bf16.msra.mxu0 %v3105
          %3317 = vmatprep.subr.bf16.mxu0 %v3098
          %3318 = vmatpush1.bf16.msra.mxu0 %v3097
          %3319 = vmatprep.subr.bf16.mxu0 %v3090
          %3320 = vmatpush1.bf16.msra.mxu0 %v3089
          %3321 = vmatprep.subr.bf16.mxu0 %v3082
          %3322 = vmatpush1.bf16.msra.mxu0 %v3081
          %3323 = vmatprep.subr.bf16.mxu0 %v3074
          %3324 = vmatpush1.bf16.msra.mxu0 %v3073
          %3325 = vmatprep.subr.bf16.mxu0 %v3066
          %3326 = vmatpush1.bf16.msra.mxu0 %v3065
          %3327 = vmatprep.subr.bf16.mxu0 %v3058
          %3328 = vmatpush1.bf16.msra.mxu0 %v3057
          %3329 = vmatprep.subr.bf16.mxu0 %v3178
          %3330 = vmatpush2.bf16.msra.mxu0 %v3177
          %3331 = vmatprep.subr.bf16.mxu0 %v3170
          %3332 = vmatpush2.bf16.msra.mxu0 %v3169
          %3333 = vmatprep.subr.bf16.mxu0 %v3162
          %3334 = vmatpush2.bf16.msra.mxu0 %v3161
          %3335 = vmatprep.subr.bf16.mxu0 %v3154
          %3336 = vmatpush2.bf16.msra.mxu0 %v3153
          %3337 = vmatprep.subr.bf16.mxu0 %v3146
          %3338 = vmatpush2.bf16.msra.mxu0 %v3145
          %3339 = vmatprep.subr.bf16.mxu0 %v3138
          %3340 = vmatpush2.bf16.msra.mxu0 %v3137
          %3341 = vmatprep.subr.bf16.mxu0 %v3130
          %3342 = vmatpush2.bf16.msra.mxu0 %v3129
          %3343 = vmatprep.subr.bf16.mxu0 %v3122
          %3344 = vmatpush2.bf16.msra.mxu0 %v3121
          %3345 = vmatprep.mubr.bf16.mxu0 %v2502
          %3346 = vmatmul.mubr.bf16.gmra.mxu0 %v2501
          %v3347 = vpop.f32.mrf.mxu0
          %v3348 = vadd.f32 %v2636, %v3347
          %v3349 = vpop.f32.mrf.mxu0
          %v3350 = vadd.f32 %v2640, %v3349
          %v3351 = vpop.f32.mrf.mxu0
          %v3352 = vpop.f32.mrf.mxu0
          %3353 = vdwg.mxu0
          %3354 = vmatprep.subr.bf16.mxu0 %v3116
          %3355 = vmatpush1.bf16.msra.mxu0 %v3115
          %3356 = vmatprep.subr.bf16.mxu0 %v3108
          %3357 = vmatpush1.bf16.msra.mxu0 %v3107
          %3358 = vmatprep.subr.bf16.mxu0 %v3100
          %3359 = vmatpush1.bf16.msra.mxu0 %v3099
          %3360 = vmatprep.subr.bf16.mxu0 %v3092
          %3361 = vmatpush1.bf16.msra.mxu0 %v3091
          %3362 = vmatprep.subr.bf16.mxu0 %v3084
          %3363 = vmatpush1.bf16.msra.mxu0 %v3083
          %3364 = vmatprep.subr.bf16.mxu0 %v3076
          %3365 = vmatpush1.bf16.msra.mxu0 %v3075
          %3366 = vmatprep.subr.bf16.mxu0 %v3068
          %3367 = vmatpush1.bf16.msra.mxu0 %v3067
          %3368 = vmatprep.subr.bf16.mxu0 %v3060
          %3369 = vmatpush1.bf16.msra.mxu0 %v3059
          %3370 = vmatprep.subr.bf16.mxu0 %v3180
          %3371 = vmatpush2.bf16.msra.mxu0 %v3179
          %3372 = vmatprep.subr.bf16.mxu0 %v3172
          %3373 = vmatpush2.bf16.msra.mxu0 %v3171
          %3374 = vmatprep.subr.bf16.mxu0 %v3164
          %3375 = vmatpush2.bf16.msra.mxu0 %v3163
          %3376 = vmatprep.subr.bf16.mxu0 %v3156
          %3377 = vmatpush2.bf16.msra.mxu0 %v3155
          %3378 = vmatprep.subr.bf16.mxu0 %v3148
          %3379 = vmatpush2.bf16.msra.mxu0 %v3147
          %3380 = vmatprep.subr.bf16.mxu0 %v3140
          %3381 = vmatpush2.bf16.msra.mxu0 %v3139
          %3382 = vmatprep.subr.bf16.mxu0 %v3132
          %3383 = vmatpush2.bf16.msra.mxu0 %v3131
          %3384 = vmatprep.subr.bf16.mxu0 %v3124
          %3385 = vmatpush2.bf16.msra.mxu0 %v3123
          %3386 = vmatprep.mubr.bf16.mxu0 %v2502
          %3387 = vmatmul.mubr.bf16.gmra.mxu0 %v2501
          %v3388 = vpop.f32.mrf.mxu0
          %v3389 = vadd.f32 %v2644, %v3388
          %v3390 = vpop.f32.mrf.mxu0
          %v3391 = vadd.f32 %v2648, %v3390
          %v3392 = vpop.f32.mrf.mxu0
          %v3393 = vpop.f32.mrf.mxu0
          %3394 = vdwg.mxu0
          %3395 = vmatprep.subr.bf16.mxu0 %v3118
          %3396 = vmatpush1.bf16.msra.mxu0 %v3117
          %3397 = vmatprep.subr.bf16.mxu0 %v3110
          %3398 = vmatpush1.bf16.msra.mxu0 %v3109
          %3399 = vmatprep.subr.bf16.mxu0 %v3102
          %3400 = vmatpush1.bf16.msra.mxu0 %v3101
          %3401 = vmatprep.subr.bf16.mxu0 %v3094
          %3402 = vmatpush1.bf16.msra.mxu0 %v3093
          %3403 = vmatprep.subr.bf16.mxu0 %v3086
          %3404 = vmatpush1.bf16.msra.mxu0 %v3085
          %3405 = vmatprep.subr.bf16.mxu0 %v3078
          %3406 = vmatpush1.bf16.msra.mxu0 %v3077
          %3407 = vmatprep.subr.bf16.mxu0 %v3070
          %3408 = vmatpush1.bf16.msra.mxu0 %v3069
          %3409 = vmatprep.subr.bf16.mxu0 %v3062
          %3410 = vmatpush1.bf16.msra.mxu0 %v3061
          %3411 = vmatprep.subr.bf16.mxu0 %v3182
          %3412 = vmatpush2.bf16.msra.mxu0 %v3181
          %3413 = vmatprep.subr.bf16.mxu0 %v3174
          %3414 = vmatpush2.bf16.msra.mxu0 %v3173
          %3415 = vmatprep.subr.bf16.mxu0 %v3166
          %3416 = vmatpush2.bf16.msra.mxu0 %v3165
          %3417 = vmatprep.subr.bf16.mxu0 %v3158
          %3418 = vmatpush2.bf16.msra.mxu0 %v3157
          %3419 = vmatprep.subr.bf16.mxu0 %v3150
          %3420 = vmatpush2.bf16.msra.mxu0 %v3149
          %3421 = vmatprep.subr.bf16.mxu0 %v3142
          %3422 = vmatpush2.bf16.msra.mxu0 %v3141
          %3423 = vmatprep.subr.bf16.mxu0 %v3134
          %3424 = vmatpush2.bf16.msra.mxu0 %v3133
          %3425 = vmatprep.subr.bf16.mxu0 %v3126
          %3426 = vmatpush2.bf16.msra.mxu0 %v3125
          %3427 = vmatprep.mubr.bf16.mxu0 %v2502
          %3428 = vmatmul.mubr.bf16.gmra.mxu0 %v2501
          %v3429 = vpop.f32.mrf.mxu0
          %v3430 = vadd.f32 %v2652, %v3429
          %v3431 = vpop.f32.mrf.mxu0
          %v3432 = vadd.f32 %v2656, %v3431
          %v3433 = vpop.f32.mrf.mxu0
          %v3434 = vpop.f32.mrf.mxu0
          %3435 = vdwg.mxu0
          %3436 = vmatprep.subr.bf16.mxu0 %v3120
          %3437 = vmatpush1.bf16.msra.mxu0 %v3119
          %3438 = vmatprep.subr.bf16.mxu0 %v3112
          %3439 = vmatpush1.bf16.msra.mxu0 %v3111
          %3440 = vmatprep.subr.bf16.mxu0 %v3104
          %3441 = vmatpush1.bf16.msra.mxu0 %v3103
          %3442 = vmatprep.subr.bf16.mxu0 %v3096
          %3443 = vmatpush1.bf16.msra.mxu0 %v3095
          %3444 = vmatprep.subr.bf16.mxu0 %v3088
          %3445 = vmatpush1.bf16.msra.mxu0 %v3087
          %3446 = vmatprep.subr.bf16.mxu0 %v3080
          %3447 = vmatpush1.bf16.msra.mxu0 %v3079
          %3448 = vmatprep.subr.bf16.mxu0 %v3072
          %3449 = vmatpush1.bf16.msra.mxu0 %v3071
          %3450 = vmatprep.subr.bf16.mxu0 %v3064
          %3451 = vmatpush1.bf16.msra.mxu0 %v3063
          %3452 = vmatprep.subr.bf16.mxu0 %v3184
          %3453 = vmatpush2.bf16.msra.mxu0 %v3183
          %3454 = vmatprep.subr.bf16.mxu0 %v3176
          %3455 = vmatpush2.bf16.msra.mxu0 %v3175
          %3456 = vmatprep.subr.bf16.mxu0 %v3168
          %3457 = vmatpush2.bf16.msra.mxu0 %v3167
          %3458 = vmatprep.subr.bf16.mxu0 %v3160
          %3459 = vmatpush2.bf16.msra.mxu0 %v3159
          %3460 = vmatprep.subr.bf16.mxu0 %v3152
          %3461 = vmatpush2.bf16.msra.mxu0 %v3151
          %3462 = vmatprep.subr.bf16.mxu0 %v3144
          %3463 = vmatpush2.bf16.msra.mxu0 %v3143
          %3464 = vmatprep.subr.bf16.mxu0 %v3136
          %3465 = vmatpush2.bf16.msra.mxu0 %v3135
          %3466 = vmatprep.subr.bf16.mxu0 %v3128
          %3467 = vmatpush2.bf16.msra.mxu0 %v3127
          %3468 = vmatprep.mubr.bf16.mxu0 %v2502
          %3469 = vmatmul.mubr.bf16.gmra.mxu0 %v2501
          %v3470 = vpop.f32.mrf.mxu0
          %v3471 = vadd.f32 %v2660, %v3470
          %v3472 = vpop.f32.mrf.mxu0
          %v3473 = vadd.f32 %v2664, %v3472
          %v3474 = vpop.f32.mrf.mxu0
          %v3475 = vpop.f32.mrf.mxu0
          %3476 = vdwg.mxu0
          %v3485 = vcombine.low %v3348, %v3350
          %v3486 = vcombine.low %v3389, %v3391
          %v3488 = vunpack.c.l.s4 1983009808
          %v3489 = vunpack.c.0.s8 %v3488
          %v3490 = vlaneseq
          %v3491 = vshrl.u32 %v3490, 7
          %v3492 = vsub.s32 %v3489, %v3491
          %v3493 = vrot.slane %v3485, %v3492
          %v3495 = vunpack.c.l.s4 1983009808
          %v3496 = vunpack.c.0.s8 %v3495
          %v3497 = vlaneseq
          %v3498 = vshrl.u32 %v3497, 7
          %v3499 = vsub.s32 %v3496, %v3498
          %v3500 = vrot.slane %v3486, %v3499
          %v3501 = vcombine.low %v3493, %v3500
          %v3502 = vcombine.low %v3430, %v3432
          %v3503 = vcombine.low %v3471, %v3473
          %v3505 = vunpack.c.l.s4 1983009808
          %v3506 = vunpack.c.0.s8 %v3505
          %v3507 = vlaneseq
          %v3508 = vshrl.u32 %v3507, 7
          %v3509 = vsub.s32 %v3506, %v3508
          %v3510 = vrot.slane %v3502, %v3509
          %v3512 = vunpack.c.l.s4 1983009808
          %v3513 = vunpack.c.0.s8 %v3512
          %v3514 = vlaneseq
          %v3515 = vshrl.u32 %v3514, 7
          %v3516 = vsub.s32 %v3513, %v3515
          %v3517 = vrot.slane %v3503, %v3516
          %v3518 = vcombine.low %v3510, %v3517
          %3521 = vst [vmem:[#allocation2] sm:$0xff] %v3501
          %3522 = vst [vmem:[#allocation2 + $0x8] sm:$0xff] %v3518
        $region124: #{critic_forward.1} parent=75 // pred_fallthru
          _
        %v3523 = vld [vmem:[#allocation2] sm:$0xff]
        %v3524 = vld [vmem:[#allocation2 + $0x8] sm:$0xff]
        %s3525 = smul.u32 %s37, 14
        %s3526 = scalar_lea.vmem [#allocation3], %s3525
        %v3527 = vld [vmem:[%s3526] sm:$0xff]
        %v3528 = vld [vmem:[%s3526 + $0x8] sm:$0x3f]
        %v3529 = vld [vmem:[%s597] sm:$0xff]
        %v3530 = vld [vmem:[%s597 + $0x8] sm:$0xff]
        %v3531 = vld [vmem:[%s597 + $0x10] sm:$0xff]
        %v3532 = vld [vmem:[%s597 + $0x18] sm:$0xff]
        %v3533 = vld [vmem:[%s597 + $0x20] sm:$0xff]
        %v3534 = vld [vmem:[%s597 + $0x28] sm:$0xff]
        %v3535 = vld [vmem:[%s597 + $0x30] sm:$0xff]
        %v3536 = vld [vmem:[%s597 + $0x38] sm:$0xff]
        %v3537 = vld [vmem:[%s597 + $0x40] sm:$0xff]
        %v3538 = vld [vmem:[%s597 + $0x48] sm:$0xff]
        %v3539 = vld [vmem:[%s597 + $0x50] sm:$0xff]
        %v3540 = vld [vmem:[%s597 + $0x58] sm:$0xff]
        %v3541 = vld [vmem:[%s597 + $0x60] sm:$0xff]
        %v3542 = vld [vmem:[%s597 + $0x68] sm:$0xff]
        %v3543 = vld [vmem:[%s597 + $0x70] sm:$0xff]
        %v3544 = vld [vmem:[%s597 + $0x78] sm:$0xff]
        %v3545 = vld [vmem:[%s597 + $0x80] sm:$0xff]
        %v3546 = vld [vmem:[%s597 + $0x88] sm:$0xff]
        %v3547 = vld [vmem:[%s597 + $0x90] sm:$0xff]
        %v3548 = vld [vmem:[%s597 + $0x98] sm:$0xff]
        %v3549 = vld [vmem:[%s597 + $0xa0] sm:$0xff]
        %v3550 = vld [vmem:[%s597 + $0xa8] sm:$0xff]
        %v3551 = vld [vmem:[%s597 + $0xb0] sm:$0xff]
        %v3552 = vld [vmem:[%s597 + $0xb8] sm:$0xff]
        %v3553 = vld [vmem:[%s597 + $0xc0] sm:$0xff]
        %v3554 = vld [vmem:[%s597 + $0xc8] sm:$0xff]
        %v3555 = vld [vmem:[%s597 + $0xd0] sm:$0xff]
        %v3556 = vld [vmem:[%s597 + $0xd8] sm:$0xff]
        %v3557 = vld [vmem:[%s597 + $0xe0] sm:$0xff]
        %v3558 = vld [vmem:[%s597 + $0xe8] sm:$0xff]
        %v3559 = vld [vmem:[%s597 + $0xf0] sm:$0xff]
        %v3560 = vld [vmem:[%s597 + $0xf8] sm:$0xff]
        %v3561 = vld [vmem:[%s597 + $0x100] sm:$0xff]
        %v3562 = vld [vmem:[%s597 + $0x108] sm:$0xff]
        %v3563 = vld [vmem:[%s597 + $0x110] sm:$0xff]
        %v3564 = vld [vmem:[%s597 + $0x118] sm:$0xff]
        %v3565 = vld [vmem:[%s597 + $0x120] sm:$0xff]
        %v3566 = vld [vmem:[%s597 + $0x128] sm:$0xff]
        %v3567 = vld [vmem:[%s597 + $0x130] sm:$0xff]
        %v3568 = vld [vmem:[%s597 + $0x138] sm:$0xff]
        %v3569 = vld [vmem:[%s597 + $0x140] sm:$0xff]
        %v3570 = vld [vmem:[%s597 + $0x148] sm:$0xff]
        %v3571 = vld [vmem:[%s597 + $0x150] sm:$0xff]
        %v3572 = vld [vmem:[%s597 + $0x158] sm:$0xff]
        %v3573 = vld [vmem:[%s597 + $0x160] sm:$0xff]
        %v3574 = vld [vmem:[%s597 + $0x168] sm:$0xff]
        %v3575 = vld [vmem:[%s597 + $0x170] sm:$0xff]
        %v3576 = vld [vmem:[%s597 + $0x178] sm:$0xff]
        %v3577 = vld [vmem:[%s597 + $0x180] sm:$0xff]
        %v3578 = vld [vmem:[%s597 + $0x188] sm:$0xff]
        %v3579 = vld [vmem:[%s597 + $0x190] sm:$0xff]
        %v3580 = vld [vmem:[%s597 + $0x198] sm:$0xff]
        %v3581 = vld [vmem:[%s597 + $0x1a0] sm:$0xff]
        %v3582 = vld [vmem:[%s597 + $0x1a8] sm:$0xff]
        %v3583 = vld [vmem:[%s597 + $0x1b0] sm:$0xff]
        %v3584 = vld [vmem:[%s597 + $0x1b8] sm:$0xff]
        %v3585 = vld [vmem:[%s597 + $0x1c0] sm:$0xff]
        %v3586 = vld [vmem:[%s597 + $0x1c8] sm:$0xff]
        %v3587 = vld [vmem:[%s597 + $0x1d0] sm:$0xff]
        %v3588 = vld [vmem:[%s597 + $0x1d8] sm:$0xff]
        %v3589 = vld [vmem:[%s597 + $0x1e0] sm:$0xff]
        %v3590 = vld [vmem:[%s597 + $0x1e8] sm:$0xff]
        %v3591 = vld [vmem:[%s597 + $0x1f0] sm:$0xff]
        %v3592 = vld [vmem:[%s597 + $0x1f8] sm:$0xff]
        %v3593 = vld [vmem:[%s597 + $0x200] sm:$0xff]
        %v3594 = vld [vmem:[%s597 + $0x208] sm:$0xff]
        %v3595 = vld [vmem:[%s597 + $0x210] sm:$0xff]
        %v3596 = vld [vmem:[%s597 + $0x218] sm:$0xff]
        %v3597 = vld [vmem:[%s597 + $0x220] sm:$0xff]
        %v3598 = vld [vmem:[%s597 + $0x228] sm:$0xff]
        %v3599 = vld [vmem:[%s597 + $0x230] sm:$0xff]
        %v3600 = vld [vmem:[%s597 + $0x238] sm:$0xff]
        %v3601 = vld [vmem:[%s597 + $0x240] sm:$0xff]
        %v3602 = vld [vmem:[%s597 + $0x248] sm:$0xff]
        %v3603 = vld [vmem:[%s597 + $0x250] sm:$0xff]
        %v3604 = vld [vmem:[%s597 + $0x258] sm:$0xff]
        %v3605 = vld [vmem:[%s597 + $0x260] sm:$0xff]
        %v3606 = vld [vmem:[%s597 + $0x268] sm:$0xff]
        %v3607 = vld [vmem:[%s597 + $0x270] sm:$0xff]
        %v3608 = vld [vmem:[%s597 + $0x278] sm:$0xff]
        %v3609 = vld [vmem:[%s597 + $0x280] sm:$0xff]
        %v3610 = vld [vmem:[%s597 + $0x288] sm:$0xff]
        %v3611 = vld [vmem:[%s597 + $0x290] sm:$0xff]
        %v3612 = vld [vmem:[%s597 + $0x298] sm:$0xff]
        %v3613 = vld [vmem:[%s597 + $0x2a0] sm:$0xff]
        %v3614 = vld [vmem:[%s597 + $0x2a8] sm:$0xff]
        %v3615 = vld [vmem:[%s597 + $0x2b0] sm:$0xff]
        %v3616 = vld [vmem:[%s597 + $0x2b8] sm:$0xff]
        %v3617 = vld [vmem:[%s597 + $0x2c0] sm:$0xff]
        %v3618 = vld [vmem:[%s597 + $0x2c8] sm:$0xff]
        %v3619 = vld [vmem:[%s597 + $0x2d0] sm:$0xff]
        %v3620 = vld [vmem:[%s597 + $0x2d8] sm:$0xff]
        %v3621 = vld [vmem:[%s597 + $0x2e0] sm:$0xff]
        %v3622 = vld [vmem:[%s597 + $0x2e8] sm:$0xff]
        %v3623 = vld [vmem:[%s597 + $0x2f0] sm:$0xff]
        %v3624 = vld [vmem:[%s597 + $0x2f8] sm:$0xff]
        %v3625 = vld [vmem:[%s597 + $0x300] sm:$0xff]
        %v3626 = vld [vmem:[%s597 + $0x308] sm:$0xff]
        %v3627 = vld [vmem:[%s597 + $0x310] sm:$0xff]
        %v3628 = vld [vmem:[%s597 + $0x318] sm:$0xff]
        %v3629 = vld [vmem:[%s597 + $0x320] sm:$0xff]
        %v3630 = vld [vmem:[%s597 + $0x328] sm:$0xff]
        %v3631 = vld [vmem:[%s597 + $0x330] sm:$0xff]
        %v3632 = vld [vmem:[%s597 + $0x338] sm:$0xff]
        %v3633 = vld [vmem:[%s597 + $0x340] sm:$0xff]
        %v3634 = vld [vmem:[%s597 + $0x348] sm:$0xff]
        %v3635 = vld [vmem:[%s597 + $0x350] sm:$0xff]
        %v3636 = vld [vmem:[%s597 + $0x358] sm:$0xff]
        %v3637 = vld [vmem:[%s597 + $0x360] sm:$0xff]
        %v3638 = vld [vmem:[%s597 + $0x368] sm:$0xff]
        %v3639 = vld [vmem:[%s597 + $0x370] sm:$0xff]
        %v3640 = vld [vmem:[%s597 + $0x378] sm:$0xff]
        %v3641 = vld [vmem:[%s597 + $0x380] sm:$0xff]
        %v3642 = vld [vmem:[%s597 + $0x388] sm:$0xff]
        %v3643 = vld [vmem:[%s597 + $0x390] sm:$0xff]
        %v3644 = vld [vmem:[%s597 + $0x398] sm:$0xff]
        %v3645 = vld [vmem:[%s597 + $0x3a0] sm:$0xff]
        %v3646 = vld [vmem:[%s597 + $0x3a8] sm:$0xff]
        %v3647 = vld [vmem:[%s597 + $0x3b0] sm:$0xff]
        %v3648 = vld [vmem:[%s597 + $0x3b8] sm:$0xff]
        %v3649 = vld [vmem:[%s597 + $0x3c0] sm:$0xff]
        %v3650 = vld [vmem:[%s597 + $0x3c8] sm:$0xff]
        %v3651 = vld [vmem:[%s597 + $0x3d0] sm:$0xff]
        %v3652 = vld [vmem:[%s597 + $0x3d8] sm:$0xff]
        %v3653 = vld [vmem:[%s597 + $0x3e0] sm:$0xff]
        %v3654 = vld [vmem:[%s597 + $0x3e8] sm:$0xff]
        %v3655 = vld [vmem:[%s597 + $0x3f0] sm:$0xff]
        %v3656 = vld [vmem:[%s597 + $0x3f8] sm:$0xff]
        %v3657 = vld [vmem:[%s597 + $0x400] sm:$0xff]
        %v3658 = vld [vmem:[%s597 + $0x408] sm:$0xff]
        %v3659 = vld [vmem:[%s597 + $0x410] sm:$0xff]
        %v3660 = vld [vmem:[%s597 + $0x418] sm:$0xff]
        %v3661 = vld [vmem:[%s597 + $0x420] sm:$0xff]
        %v3662 = vld [vmem:[%s597 + $0x428] sm:$0xff]
        %v3663 = vld [vmem:[%s597 + $0x430] sm:$0xff]
        %v3664 = vld [vmem:[%s597 + $0x438] sm:$0xff]
        %v3665 = vld [vmem:[%s597 + $0x440] sm:$0xff]
        %v3666 = vld [vmem:[%s597 + $0x448] sm:$0xff]
        %v3667 = vld [vmem:[%s597 + $0x450] sm:$0xff]
        %v3668 = vld [vmem:[%s597 + $0x458] sm:$0xff]
        %v3669 = vld [vmem:[%s597 + $0x460] sm:$0xff]
        %v3670 = vld [vmem:[%s597 + $0x468] sm:$0xff]
        %v3671 = vld [vmem:[%s597 + $0x470] sm:$0xff]
        %v3672 = vld [vmem:[%s597 + $0x478] sm:$0xff]
        %v3673 = vld [vmem:[%s597 + $0x480] sm:$0xff]
        %v3674 = vld [vmem:[%s597 + $0x488] sm:$0xff]
        %v3675 = vld [vmem:[%s597 + $0x490] sm:$0xff]
        %v3676 = vld [vmem:[%s597 + $0x498] sm:$0xff]
        %v3677 = vld [vmem:[%s597 + $0x4a0] sm:$0xff]
        %v3678 = vld [vmem:[%s597 + $0x4a8] sm:$0xff]
        %v3679 = vld [vmem:[%s597 + $0x4b0] sm:$0xff]
        %v3680 = vld [vmem:[%s597 + $0x4b8] sm:$0xff]
        %v3681 = vld [vmem:[%s597 + $0x4c0] sm:$0xff]
        %v3682 = vld [vmem:[%s597 + $0x4c8] sm:$0xff]
        %v3683 = vld [vmem:[%s597 + $0x4d0] sm:$0xff]
        %v3684 = vld [vmem:[%s597 + $0x4d8] sm:$0xff]
        %v3685 = vld [vmem:[%s597 + $0x4e0] sm:$0xff]
        %v3686 = vld [vmem:[%s597 + $0x4e8] sm:$0xff]
        %v3687 = vld [vmem:[%s597 + $0x4f0] sm:$0xff]
        %v3688 = vld [vmem:[%s597 + $0x4f8] sm:$0xff]
        %v3689 = vld [vmem:[%s597 + $0x500] sm:$0xff]
        %v3690 = vld [vmem:[%s597 + $0x508] sm:$0xff]
        %v3691 = vld [vmem:[%s597 + $0x510] sm:$0xff]
        %v3692 = vld [vmem:[%s597 + $0x518] sm:$0xff]
        %v3693 = vld [vmem:[%s597 + $0x520] sm:$0xff]
        %v3694 = vld [vmem:[%s597 + $0x528] sm:$0xff]
        %v3695 = vld [vmem:[%s597 + $0x530] sm:$0xff]
        %v3696 = vld [vmem:[%s597 + $0x538] sm:$0xff]
        %v3697 = vld [vmem:[%s597 + $0x540] sm:$0xff]
        %v3698 = vld [vmem:[%s597 + $0x548] sm:$0xff]
        %v3699 = vld [vmem:[%s597 + $0x550] sm:$0xff]
        %v3700 = vld [vmem:[%s597 + $0x558] sm:$0xff]
        %v3701 = vld [vmem:[%s597 + $0x560] sm:$0xff]
        %v3702 = vld [vmem:[%s597 + $0x568] sm:$0xff]
        %v3703 = vld [vmem:[%s597 + $0x570] sm:$0xff]
        %v3704 = vld [vmem:[%s597 + $0x578] sm:$0xff]
        %v3705 = vld [vmem:[%s597 + $0x580] sm:$0xff]
        %v3706 = vld [vmem:[%s597 + $0x588] sm:$0xff]
        %v3707 = vld [vmem:[%s597 + $0x590] sm:$0xff]
        %v3708 = vld [vmem:[%s597 + $0x598] sm:$0xff]
        %v3709 = vld [vmem:[%s597 + $0x5a0] sm:$0xff]
        %v3710 = vld [vmem:[%s597 + $0x5a8] sm:$0xff]
        %v3711 = vld [vmem:[%s597 + $0x5b0] sm:$0xff]
        %v3712 = vld [vmem:[%s597 + $0x5b8] sm:$0xff]
        %v3713 = vld [vmem:[%s597 + $0x5c0] sm:$0xff]
        %v3714 = vld [vmem:[%s597 + $0x5c8] sm:$0xff]
        %v3715 = vld [vmem:[%s597 + $0x5d0] sm:$0xff]
        %v3716 = vld [vmem:[%s597 + $0x5d8] sm:$0xff]
        %v3717 = vld [vmem:[%s597 + $0x5e0] sm:$0xff]
        %v3718 = vld [vmem:[%s597 + $0x5e8] sm:$0xff]
        %v3719 = vld [vmem:[%s597 + $0x5f0] sm:$0xff]
        %v3720 = vld [vmem:[%s597 + $0x5f8] sm:$0xff]
        %v3721 = vld [vmem:[%s597 + $0x600] sm:$0xff]
        %v3722 = vld [vmem:[%s597 + $0x608] sm:$0xff]
        %v3723 = vld [vmem:[%s597 + $0x610] sm:$0xff]
        %v3724 = vld [vmem:[%s597 + $0x618] sm:$0xff]
        %v3725 = vld [vmem:[%s597 + $0x620] sm:$0xff]
        %v3726 = vld [vmem:[%s597 + $0x628] sm:$0xff]
        %v3727 = vld [vmem:[%s597 + $0x630] sm:$0xff]
        %v3728 = vld [vmem:[%s597 + $0x638] sm:$0xff]
        %v3729 = vld [vmem:[%s597 + $0x640] sm:$0xff]
        %v3730 = vld [vmem:[%s597 + $0x648] sm:$0xff]
        %v3731 = vld [vmem:[%s597 + $0x650] sm:$0xff]
        %v3732 = vld [vmem:[%s597 + $0x658] sm:$0xff]
        %v3733 = vld [vmem:[%s597 + $0x660] sm:$0xff]
        %v3734 = vld [vmem:[%s597 + $0x668] sm:$0xff]
        %v3735 = vld [vmem:[%s597 + $0x670] sm:$0xff]
        %v3736 = vld [vmem:[%s597 + $0x678] sm:$0xff]
        %v3737 = vld [vmem:[%s597 + $0x680] sm:$0xff]
        %v3738 = vld [vmem:[%s597 + $0x688] sm:$0xff]
        %v3739 = vld [vmem:[%s597 + $0x690] sm:$0xff]
        %v3740 = vld [vmem:[%s597 + $0x698] sm:$0xff]
        %v3741 = vld [vmem:[%s597 + $0x6a0] sm:$0xff]
        %v3742 = vld [vmem:[%s597 + $0x6a8] sm:$0xff]
        %v3743 = vld [vmem:[%s597 + $0x6b0] sm:$0xff]
        %v3744 = vld [vmem:[%s597 + $0x6b8] sm:$0xff]
        %v3745 = vld [vmem:[%s597 + $0x6c0] sm:$0xff]
        %v3746 = vld [vmem:[%s597 + $0x6c8] sm:$0xff]
        %v3747 = vld [vmem:[%s597 + $0x6d0] sm:$0xff]
        %v3748 = vld [vmem:[%s597 + $0x6d8] sm:$0xff]
        %v3749 = vld [vmem:[%s597 + $0x6e0] sm:$0xff]
        %v3750 = vld [vmem:[%s597 + $0x6e8] sm:$0xff]
        %v3751 = vld [vmem:[%s597 + $0x6f0] sm:$0xff]
        %v3752 = vld [vmem:[%s597 + $0x6f8] sm:$0xff]
        %v3753 = vld [vmem:[%s597 + $0x700] sm:$0xff]
        %v3754 = vld [vmem:[%s597 + $0x708] sm:$0xff]
        %v3755 = vld [vmem:[%s597 + $0x710] sm:$0xff]
        %v3756 = vld [vmem:[%s597 + $0x718] sm:$0xff]
        %v3757 = vld [vmem:[%s597 + $0x720] sm:$0xff]
        %v3758 = vld [vmem:[%s597 + $0x728] sm:$0xff]
        %v3759 = vld [vmem:[%s597 + $0x730] sm:$0xff]
        %v3760 = vld [vmem:[%s597 + $0x738] sm:$0xff]
        %v3761 = vld [vmem:[%s597 + $0x740] sm:$0xff]
        %v3762 = vld [vmem:[%s597 + $0x748] sm:$0xff]
        %v3763 = vld [vmem:[%s597 + $0x750] sm:$0xff]
        %v3764 = vld [vmem:[%s597 + $0x758] sm:$0xff]
        %v3765 = vld [vmem:[%s597 + $0x760] sm:$0xff]
        %v3766 = vld [vmem:[%s597 + $0x768] sm:$0xff]
        %v3767 = vld [vmem:[%s597 + $0x770] sm:$0xff]
        %v3768 = vld [vmem:[%s597 + $0x778] sm:$0xff]
        %v3769 = vld [vmem:[%s597 + $0x780] sm:$0xff]
        %v3770 = vld [vmem:[%s597 + $0x788] sm:$0xff]
        %v3771 = vld [vmem:[%s597 + $0x790] sm:$0xff]
        %v3772 = vld [vmem:[%s597 + $0x798] sm:$0xff]
        %v3773 = vld [vmem:[%s597 + $0x7a0] sm:$0xff]
        %v3774 = vld [vmem:[%s597 + $0x7a8] sm:$0xff]
        %v3775 = vld [vmem:[%s597 + $0x7b0] sm:$0xff]
        %v3776 = vld [vmem:[%s597 + $0x7b8] sm:$0xff]
        %v3777 = vld [vmem:[%s597 + $0x7c0] sm:$0xff]
        %v3778 = vld [vmem:[%s597 + $0x7c8] sm:$0xff]
        %v3779 = vld [vmem:[%s597 + $0x7d0] sm:$0xff]
        %v3780 = vld [vmem:[%s597 + $0x7d8] sm:$0xff]
        %v3781 = vld [vmem:[%s597 + $0x7e0] sm:$0xff]
        %v3782 = vld [vmem:[%s597 + $0x7e8] sm:$0xff]
        %v3783 = vld [vmem:[%s597 + $0x7f0] sm:$0xff]
        %v3784 = vld [vmem:[%s597 + $0x7f8] sm:$0xff]
        %v3785 = vld [vmem:[%s597 + $0x800] sm:$0xff]
        %v3786 = vld [vmem:[%s597 + $0x808] sm:$0xff]
        %v3787 = vld [vmem:[%s597 + $0x810] sm:$0xff]
        %v3788 = vld [vmem:[%s597 + $0x818] sm:$0xff]
        %v3789 = vld [vmem:[%s597 + $0x820] sm:$0xff]
        %v3790 = vld [vmem:[%s597 + $0x828] sm:$0xff]
        %v3791 = vld [vmem:[%s597 + $0x830] sm:$0xff]
        %v3792 = vld [vmem:[%s597 + $0x838] sm:$0xff]
        %v3793 = vld [vmem:[%s597 + $0x840] sm:$0xff]
        %v3794 = vld [vmem:[%s597 + $0x848] sm:$0xff]
        %v3795 = vld [vmem:[%s597 + $0x850] sm:$0xff]
        %v3796 = vld [vmem:[%s597 + $0x858] sm:$0xff]
        %v3797 = vld [vmem:[%s597 + $0x860] sm:$0xff]
        %v3798 = vld [vmem:[%s597 + $0x868] sm:$0xff]
        %v3799 = vld [vmem:[%s597 + $0x870] sm:$0xff]
        %v3800 = vld [vmem:[%s597 + $0x878] sm:$0xff]
        %v3801 = vld [vmem:[%s597 + $0x880] sm:$0xff]
        %v3802 = vld [vmem:[%s597 + $0x888] sm:$0xff]
        %v3803 = vld [vmem:[%s597 + $0x890] sm:$0xff]
        %v3804 = vld [vmem:[%s597 + $0x898] sm:$0xff]
        %v3805 = vld [vmem:[%s597 + $0x8a0] sm:$0xff]
        %v3806 = vld [vmem:[%s597 + $0x8a8] sm:$0xff]
        %v3807 = vld [vmem:[%s597 + $0x8b0] sm:$0xff]
        %v3808 = vld [vmem:[%s597 + $0x8b8] sm:$0xff]
        %v3809 = vld [vmem:[%s597 + $0x8c0] sm:$0xff]
        %v3810 = vld [vmem:[%s597 + $0x8c8] sm:$0xff]
        %v3811 = vld [vmem:[%s597 + $0x8d0] sm:$0xff]
        %v3812 = vld [vmem:[%s597 + $0x8d8] sm:$0xff]
        %v3813 = vld [vmem:[%s597 + $0x8e0] sm:$0xff]
        %v3814 = vld [vmem:[%s597 + $0x8e8] sm:$0xff]
        %v3815 = vld [vmem:[%s597 + $0x8f0] sm:$0xff]
        %v3816 = vld [vmem:[%s597 + $0x8f8] sm:$0xff]
        %v3817 = vld [vmem:[%s597 + $0x900] sm:$0xff]
        %v3818 = vld [vmem:[%s597 + $0x908] sm:$0xff]
        %v3819 = vld [vmem:[%s597 + $0x910] sm:$0xff]
        %v3820 = vld [vmem:[%s597 + $0x918] sm:$0xff]
        %v3821 = vld [vmem:[%s597 + $0x920] sm:$0xff]
        %v3822 = vld [vmem:[%s597 + $0x928] sm:$0xff]
        %v3823 = vld [vmem:[%s597 + $0x930] sm:$0xff]
        %v3824 = vld [vmem:[%s597 + $0x938] sm:$0xff]
        %v3825 = vld [vmem:[%s597 + $0x940] sm:$0xff]
        %v3826 = vld [vmem:[%s597 + $0x948] sm:$0xff]
        %v3827 = vld [vmem:[%s597 + $0x950] sm:$0xff]
        %v3828 = vld [vmem:[%s597 + $0x958] sm:$0xff]
        %v3829 = vld [vmem:[%s597 + $0x960] sm:$0xff]
        %v3830 = vld [vmem:[%s597 + $0x968] sm:$0xff]
        %v3831 = vld [vmem:[%s597 + $0x970] sm:$0xff]
        %v3832 = vld [vmem:[%s597 + $0x978] sm:$0xff]
        %v3833 = vld [vmem:[%s597 + $0x980] sm:$0xff]
        %v3834 = vld [vmem:[%s597 + $0x988] sm:$0xff]
        %v3835 = vld [vmem:[%s597 + $0x990] sm:$0xff]
        %v3836 = vld [vmem:[%s597 + $0x998] sm:$0xff]
        %v3837 = vld [vmem:[%s597 + $0x9a0] sm:$0xff]
        %v3838 = vld [vmem:[%s597 + $0x9a8] sm:$0xff]
        %v3839 = vld [vmem:[%s597 + $0x9b0] sm:$0xff]
        %v3840 = vld [vmem:[%s597 + $0x9b8] sm:$0xff]
        %v3841 = vld [vmem:[%s597 + $0x9c0] sm:$0xff]
        %v3842 = vld [vmem:[%s597 + $0x9c8] sm:$0xff]
        %v3843 = vld [vmem:[%s597 + $0x9d0] sm:$0xff]
        %v3844 = vld [vmem:[%s597 + $0x9d8] sm:$0xff]
        %v3845 = vld [vmem:[%s597 + $0x9e0] sm:$0xff]
        %v3846 = vld [vmem:[%s597 + $0x9e8] sm:$0xff]
        %v3847 = vld [vmem:[%s597 + $0x9f0] sm:$0xff]
        %v3848 = vld [vmem:[%s597 + $0x9f8] sm:$0xff]
        %v3849 = vld [vmem:[%s597 + $0xa00] sm:$0xff]
        %v3850 = vld [vmem:[%s597 + $0xa08] sm:$0xff]
        %v3851 = vld [vmem:[%s597 + $0xa10] sm:$0xff]
        %v3852 = vld [vmem:[%s597 + $0xa18] sm:$0xff]
        %v3853 = vld [vmem:[%s597 + $0xa20] sm:$0xff]
        %v3854 = vld [vmem:[%s597 + $0xa28] sm:$0xff]
        %v3855 = vld [vmem:[%s597 + $0xa30] sm:$0xff]
        %v3856 = vld [vmem:[%s597 + $0xa38] sm:$0xff]
        %v3857 = vld [vmem:[%s597 + $0xa40] sm:$0xff]
        %v3858 = vld [vmem:[%s597 + $0xa48] sm:$0xff]
        %v3859 = vld [vmem:[%s597 + $0xa50] sm:$0xff]
        %v3860 = vld [vmem:[%s597 + $0xa58] sm:$0xff]
        %v3861 = vld [vmem:[%s597 + $0xa60] sm:$0xff]
        %v3862 = vld [vmem:[%s597 + $0xa68] sm:$0xff]
        %v3863 = vld [vmem:[%s597 + $0xa70] sm:$0xff]
        %v3864 = vld [vmem:[%s597 + $0xa78] sm:$0xff]
        %v3865 = vld [vmem:[%s597 + $0xa80] sm:$0xff]
        %v3866 = vld [vmem:[%s597 + $0xa88] sm:$0xff]
        %v3867 = vld [vmem:[%s597 + $0xa90] sm:$0xff]
        %v3868 = vld [vmem:[%s597 + $0xa98] sm:$0xff]
        %v3869 = vld [vmem:[%s597 + $0xaa0] sm:$0xff]
        %v3870 = vld [vmem:[%s597 + $0xaa8] sm:$0xff]
        %v3871 = vld [vmem:[%s597 + $0xab0] sm:$0xff]
        %v3872 = vld [vmem:[%s597 + $0xab8] sm:$0xff]
        %v3873 = vld [vmem:[%s597 + $0xac0] sm:$0xff]
        %v3874 = vld [vmem:[%s597 + $0xac8] sm:$0xff]
        %v3875 = vld [vmem:[%s597 + $0xad0] sm:$0xff]
        %v3876 = vld [vmem:[%s597 + $0xad8] sm:$0xff]
        %v3877 = vld [vmem:[%s597 + $0xae0] sm:$0xff]
        %v3878 = vld [vmem:[%s597 + $0xae8] sm:$0xff]
        %v3879 = vld [vmem:[%s597 + $0xaf0] sm:$0xff]
        %v3880 = vld [vmem:[%s597 + $0xaf8] sm:$0xff]
        %v3881 = vld [vmem:[%s597 + $0xb00] sm:$0xff]
        %v3882 = vld [vmem:[%s597 + $0xb08] sm:$0xff]
        %v3883 = vld [vmem:[%s597 + $0xb10] sm:$0xff]
        %v3884 = vld [vmem:[%s597 + $0xb18] sm:$0xff]
        %v3885 = vld [vmem:[%s597 + $0xb20] sm:$0xff]
        %v3886 = vld [vmem:[%s597 + $0xb28] sm:$0xff]
        %v3887 = vld [vmem:[%s597 + $0xb30] sm:$0xff]
        %v3888 = vld [vmem:[%s597 + $0xb38] sm:$0xff]
        %v3889 = vld [vmem:[%s597 + $0xb40] sm:$0xff]
        %v3890 = vld [vmem:[%s597 + $0xb48] sm:$0xff]
        %v3891 = vld [vmem:[%s597 + $0xb50] sm:$0xff]
        %v3892 = vld [vmem:[%s597 + $0xb58] sm:$0xff]
        %v3893 = vld [vmem:[%s597 + $0xb60] sm:$0xff]
        %v3894 = vld [vmem:[%s597 + $0xb68] sm:$0xff]
        %v3895 = vld [vmem:[%s597 + $0xb70] sm:$0xff]
        %v3896 = vld [vmem:[%s597 + $0xb78] sm:$0xff]
        %v3897 = vld [vmem:[%s597 + $0xb80] sm:$0xff]
        %v3898 = vld [vmem:[%s597 + $0xb88] sm:$0xff]
        %v3899 = vld [vmem:[%s597 + $0xb90] sm:$0xff]
        %v3900 = vld [vmem:[%s597 + $0xb98] sm:$0xff]
        %v3901 = vld [vmem:[%s597 + $0xba0] sm:$0xff]
        %v3902 = vld [vmem:[%s597 + $0xba8] sm:$0xff]
        %v3903 = vld [vmem:[%s597 + $0xbb0] sm:$0xff]
        %v3904 = vld [vmem:[%s597 + $0xbb8] sm:$0xff]
        %v3905 = vld [vmem:[%s597 + $0xbc0] sm:$0xff]
        %v3906 = vld [vmem:[%s597 + $0xbc8] sm:$0xff]
        %v3907 = vld [vmem:[%s597 + $0xbd0] sm:$0xff]
        %v3908 = vld [vmem:[%s597 + $0xbd8] sm:$0xff]
        %v3909 = vld [vmem:[%s597 + $0xbe0] sm:$0xff]
        %v3910 = vld [vmem:[%s597 + $0xbe8] sm:$0xff]
        %v3911 = vld [vmem:[%s597 + $0xbf0] sm:$0xff]
        %v3912 = vld [vmem:[%s597 + $0xbf8] sm:$0xff]
        %v3913 = vld [vmem:[%s597 + $0xc00] sm:$0xff]
        %v3914 = vld [vmem:[%s597 + $0xc08] sm:$0xff]
        %v3915 = vld [vmem:[%s597 + $0xc10] sm:$0xff]
        %v3916 = vld [vmem:[%s597 + $0xc18] sm:$0xff]
        %v3917 = vld [vmem:[%s597 + $0xc20] sm:$0xff]
        %v3918 = vld [vmem:[%s597 + $0xc28] sm:$0xff]
        %v3919 = vld [vmem:[%s597 + $0xc30] sm:$0xff]
        %v3920 = vld [vmem:[%s597 + $0xc38] sm:$0xff]
        %v3921 = vld [vmem:[%s597 + $0xc40] sm:$0xff]
        %v3922 = vld [vmem:[%s597 + $0xc48] sm:$0xff]
        %v3923 = vld [vmem:[%s597 + $0xc50] sm:$0xff]
        %v3924 = vld [vmem:[%s597 + $0xc58] sm:$0xff]
        %v3925 = vld [vmem:[%s597 + $0xc60] sm:$0xff]
        %v3926 = vld [vmem:[%s597 + $0xc68] sm:$0xff]
        %v3927 = vld [vmem:[%s597 + $0xc70] sm:$0xff]
        %v3928 = vld [vmem:[%s597 + $0xc78] sm:$0xff]
        %v3929 = vld [vmem:[%s597 + $0xc80] sm:$0xff]
        %v3930 = vld [vmem:[%s597 + $0xc88] sm:$0xff]
        %v3931 = vld [vmem:[%s597 + $0xc90] sm:$0xff]
        %v3932 = vld [vmem:[%s597 + $0xc98] sm:$0xff]
        %v3933 = vld [vmem:[%s597 + $0xca0] sm:$0xff]
        %v3934 = vld [vmem:[%s597 + $0xca8] sm:$0xff]
        %v3935 = vld [vmem:[%s597 + $0xcb0] sm:$0xff]
        %v3936 = vld [vmem:[%s597 + $0xcb8] sm:$0xff]
        %v3937 = vld [vmem:[%s597 + $0xcc0] sm:$0xff]
        %v3938 = vld [vmem:[%s597 + $0xcc8] sm:$0xff]
        %v3939 = vld [vmem:[%s597 + $0xcd0] sm:$0xff]
        %v3940 = vld [vmem:[%s597 + $0xcd8] sm:$0xff]
        %v3941 = vld [vmem:[%s597 + $0xce0] sm:$0xff]
        %v3942 = vld [vmem:[%s597 + $0xce8] sm:$0xff]
        %v3943 = vld [vmem:[%s597 + $0xcf0] sm:$0xff]
        %v3944 = vld [vmem:[%s597 + $0xcf8] sm:$0xff]
        %v3945 = vld [vmem:[%s597 + $0xd00] sm:$0xff]
        %v3946 = vld [vmem:[%s597 + $0xd08] sm:$0xff]
        %v3947 = vld [vmem:[%s597 + $0xd10] sm:$0xff]
        %v3948 = vld [vmem:[%s597 + $0xd18] sm:$0xff]
        %v3949 = vld [vmem:[%s597 + $0xd20] sm:$0xff]
        %v3950 = vld [vmem:[%s597 + $0xd28] sm:$0xff]
        %v3951 = vld [vmem:[%s597 + $0xd30] sm:$0xff]
        %v3952 = vld [vmem:[%s597 + $0xd38] sm:$0xff]
        %v3953 = vld [vmem:[%s597 + $0xd40] sm:$0xff]
        %v3954 = vld [vmem:[%s597 + $0xd48] sm:$0xff]
        %v3955 = vld [vmem:[%s597 + $0xd50] sm:$0xff]
        %v3956 = vld [vmem:[%s597 + $0xd58] sm:$0xff]
        %v3957 = vld [vmem:[%s597 + $0xd60] sm:$0xff]
        %v3958 = vld [vmem:[%s597 + $0xd68] sm:$0xff]
        %v3959 = vld [vmem:[%s597 + $0xd70] sm:$0xff]
        %v3960 = vld [vmem:[%s597 + $0xd78] sm:$0xff]
        %v3961 = vld [vmem:[%s597 + $0xd80] sm:$0xff]
        %v3962 = vld [vmem:[%s597 + $0xd88] sm:$0xff]
        %v3963 = vld [vmem:[%s597 + $0xd90] sm:$0xff]
        %v3964 = vld [vmem:[%s597 + $0xd98] sm:$0xff]
        %v3965 = vld [vmem:[%s597 + $0xda0] sm:$0xff]
        %v3966 = vld [vmem:[%s597 + $0xda8] sm:$0xff]
        %v3967 = vld [vmem:[%s597 + $0xdb0] sm:$0xff]
        %v3968 = vld [vmem:[%s597 + $0xdb8] sm:$0xff]
        %v3969 = vld [vmem:[%s597 + $0xdc0] sm:$0xff]
        %v3970 = vld [vmem:[%s597 + $0xdc8] sm:$0xff]
        %v3971 = vld [vmem:[%s597 + $0xdd0] sm:$0xff]
        %v3972 = vld [vmem:[%s597 + $0xdd8] sm:$0xff]
        %v3973 = vld [vmem:[%s597 + $0xde0] sm:$0xff]
        %v3974 = vld [vmem:[%s597 + $0xde8] sm:$0xff]
        %v3975 = vld [vmem:[%s597 + $0xdf0] sm:$0xff]
        %v3976 = vld [vmem:[%s597 + $0xdf8] sm:$0xff]
        %v3977 = vld [vmem:[%s597 + $0xe00] sm:$0xff]
        %v3978 = vld [vmem:[%s597 + $0xe08] sm:$0xff]
        %v3979 = vld [vmem:[%s597 + $0xe10] sm:$0xff]
        %v3980 = vld [vmem:[%s597 + $0xe18] sm:$0xff]
        %v3981 = vld [vmem:[%s597 + $0xe20] sm:$0xff]
        %v3982 = vld [vmem:[%s597 + $0xe28] sm:$0xff]
        %v3983 = vld [vmem:[%s597 + $0xe30] sm:$0xff]
        %v3984 = vld [vmem:[%s597 + $0xe38] sm:$0xff]
        %v3985 = vld [vmem:[%s597 + $0xe40] sm:$0xff]
        %v3986 = vld [vmem:[%s597 + $0xe48] sm:$0xff]
        %v3987 = vld [vmem:[%s597 + $0xe50] sm:$0xff]
        %v3988 = vld [vmem:[%s597 + $0xe58] sm:$0xff]
        %v3989 = vld [vmem:[%s597 + $0xe60] sm:$0xff]
        %v3990 = vld [vmem:[%s597 + $0xe68] sm:$0xff]
        %v3991 = vld [vmem:[%s597 + $0xe70] sm:$0xff]
        %v3992 = vld [vmem:[%s597 + $0xe78] sm:$0xff]
        %v3993 = vld [vmem:[%s597 + $0xe80] sm:$0xff]
        %v3994 = vld [vmem:[%s597 + $0xe88] sm:$0xff]
        %v3995 = vld [vmem:[%s597 + $0xe90] sm:$0xff]
        %v3996 = vld [vmem:[%s597 + $0xe98] sm:$0xff]
        %v3997 = vld [vmem:[%s597 + $0xea0] sm:$0xff]
        %v3998 = vld [vmem:[%s597 + $0xea8] sm:$0xff]
        %v3999 = vld [vmem:[%s597 + $0xeb0] sm:$0xff]
        %v4000 = vld [vmem:[%s597 + $0xeb8] sm:$0xff]
        %v4001 = vld [vmem:[%s597 + $0xec0] sm:$0xff]
        %v4002 = vld [vmem:[%s597 + $0xec8] sm:$0xff]
        %v4003 = vld [vmem:[%s597 + $0xed0] sm:$0xff]
        %v4004 = vld [vmem:[%s597 + $0xed8] sm:$0xff]
        %v4005 = vld [vmem:[%s597 + $0xee0] sm:$0xff]
        %v4006 = vld [vmem:[%s597 + $0xee8] sm:$0xff]
        %v4007 = vld [vmem:[%s597 + $0xef0] sm:$0xff]
        %v4008 = vld [vmem:[%s597 + $0xef8] sm:$0xff]
        %v4009 = vld [vmem:[%s597 + $0xf00] sm:$0xff]
        %v4010 = vld [vmem:[%s597 + $0xf08] sm:$0xff]
        %v4011 = vld [vmem:[%s597 + $0xf10] sm:$0xff]
        %v4012 = vld [vmem:[%s597 + $0xf18] sm:$0xff]
        %v4013 = vld [vmem:[%s597 + $0xf20] sm:$0xff]
        %v4014 = vld [vmem:[%s597 + $0xf28] sm:$0xff]
        %v4015 = vld [vmem:[%s597 + $0xf30] sm:$0xff]
        %v4016 = vld [vmem:[%s597 + $0xf38] sm:$0xff]
        %v4017 = vld [vmem:[%s597 + $0xf40] sm:$0xff]
        %v4018 = vld [vmem:[%s597 + $0xf48] sm:$0xff]
        %v4019 = vld [vmem:[%s597 + $0xf50] sm:$0xff]
        %v4020 = vld [vmem:[%s597 + $0xf58] sm:$0xff]
        %v4021 = vld [vmem:[%s597 + $0xf60] sm:$0xff]
        %v4022 = vld [vmem:[%s597 + $0xf68] sm:$0xff]
        %v4023 = vld [vmem:[%s597 + $0xf70] sm:$0xff]
        %v4024 = vld [vmem:[%s597 + $0xf78] sm:$0xff]
        %v4025 = vld [vmem:[%s597 + $0xf80] sm:$0xff]
        %v4026 = vld [vmem:[%s597 + $0xf88] sm:$0xff]
        %v4027 = vld [vmem:[%s597 + $0xf90] sm:$0xff]
        %v4028 = vld [vmem:[%s597 + $0xf98] sm:$0xff]
        %v4029 = vld [vmem:[%s597 + $0xfa0] sm:$0xff]
        %v4030 = vld [vmem:[%s597 + $0xfa8] sm:$0xff]
        %v4031 = vld [vmem:[%s597 + $0xfb0] sm:$0xff]
        %v4032 = vld [vmem:[%s597 + $0xfb8] sm:$0xff]
        %v4033 = vld [vmem:[%s597 + $0xfc0] sm:$0xff]
        %v4034 = vld [vmem:[%s597 + $0xfc8] sm:$0xff]
        %v4035 = vld [vmem:[%s597 + $0xfd0] sm:$0xff]
        %v4036 = vld [vmem:[%s597 + $0xfd8] sm:$0xff]
        %v4037 = vld [vmem:[%s597 + $0xfe0] sm:$0xff]
        %v4038 = vld [vmem:[%s597 + $0xfe8] sm:$0xff]
        %v4039 = vld [vmem:[%s597 + $0xff0] sm:$0xff]
        %v4040 = vld [vmem:[%s597 + $0xff8] sm:$0xff]
        %v4041 = vld [vmem:[%s597 + $0x1000] sm:$0xff]
        %v4042 = vld [vmem:[%s597 + $0x1008] sm:$0xff]
        %v4043 = vld [vmem:[%s597 + $0x1010] sm:$0xff]
        %v4044 = vld [vmem:[%s597 + $0x1018] sm:$0xff]
        %v4045 = vld [vmem:[%s597 + $0x1020] sm:$0xff]
        %v4046 = vld [vmem:[%s597 + $0x1028] sm:$0xff]
        %v4047 = vld [vmem:[%s597 + $0x1030] sm:$0xff]
        %v4048 = vld [vmem:[%s597 + $0x1038] sm:$0xff]
        %v4049 = vld [vmem:[%s597 + $0x1040] sm:$0xff]
        %v4050 = vld [vmem:[%s597 + $0x1048] sm:$0xff]
        %v4051 = vld [vmem:[%s597 + $0x1050] sm:$0xff]
        %v4052 = vld [vmem:[%s597 + $0x1058] sm:$0xff]
        %v4053 = vld [vmem:[%s597 + $0x1060] sm:$0xff]
        %v4054 = vld [vmem:[%s597 + $0x1068] sm:$0xff]
        %v4055 = vld [vmem:[%s597 + $0x1070] sm:$0xff]
        %v4056 = vld [vmem:[%s597 + $0x1078] sm:$0xff]
        %v4057 = vld [vmem:[%s597 + $0x1080] sm:$0xff]
        %v4058 = vld [vmem:[%s597 + $0x1088] sm:$0xff]
        %v4059 = vld [vmem:[%s597 + $0x1090] sm:$0xff]
        %v4060 = vld [vmem:[%s597 + $0x1098] sm:$0xff]
        %v4061 = vld [vmem:[%s597 + $0x10a0] sm:$0xff]
        %v4062 = vld [vmem:[%s597 + $0x10a8] sm:$0xff]
        %v4063 = vld [vmem:[%s597 + $0x10b0] sm:$0xff]
        %v4064 = vld [vmem:[%s597 + $0x10b8] sm:$0xff]
        %v4065 = vld [vmem:[%s597 + $0x10c0] sm:$0xff]
        %v4066 = vld [vmem:[%s597 + $0x10c8] sm:$0xff]
        %v4067 = vld [vmem:[%s597 + $0x10d0] sm:$0xff]
        %v4068 = vld [vmem:[%s597 + $0x10d8] sm:$0xff]
        %v4069 = vld [vmem:[%s597 + $0x10e0] sm:$0xff]
        %v4070 = vld [vmem:[%s597 + $0x10e8] sm:$0xff]
        %v4071 = vld [vmem:[%s597 + $0x10f0] sm:$0xff]
        %v4072 = vld [vmem:[%s597 + $0x10f8] sm:$0xff]
        %v4073 = vld [vmem:[%s597 + $0x1100] sm:$0xff]
        %v4074 = vld [vmem:[%s597 + $0x1108] sm:$0xff]
        %v4075 = vld [vmem:[%s597 + $0x1110] sm:$0xff]
        %v4076 = vld [vmem:[%s597 + $0x1118] sm:$0xff]
        %v4077 = vld [vmem:[%s597 + $0x1120] sm:$0xff]
        %v4078 = vld [vmem:[%s597 + $0x1128] sm:$0xff]
        %v4079 = vld [vmem:[%s597 + $0x1130] sm:$0xff]
        %v4080 = vld [vmem:[%s597 + $0x1138] sm:$0xff]
        %v4081 = vld [vmem:[%s597 + $0x1140] sm:$0xff]
        %v4082 = vld [vmem:[%s597 + $0x1148] sm:$0xff]
        %v4083 = vld [vmem:[%s597 + $0x1150] sm:$0xff]
        %v4084 = vld [vmem:[%s597 + $0x1158] sm:$0xff]
        %v4085 = vld [vmem:[%s597 + $0x1160] sm:$0xff]
        %v4086 = vld [vmem:[%s597 + $0x1168] sm:$0xff]
        %v4087 = vld [vmem:[%s597 + $0x1170] sm:$0xff]
        %v4088 = vld [vmem:[%s597 + $0x1178] sm:$0xff]
        %v4089 = vld [vmem:[%s597 + $0x1180] sm:$0xff]
        %v4090 = vld [vmem:[%s597 + $0x1188] sm:$0xff]
        %v4091 = vld [vmem:[%s597 + $0x1190] sm:$0xff]
        %v4092 = vld [vmem:[%s597 + $0x1198] sm:$0xff]
        %v4093 = vld [vmem:[%s597 + $0x11a0] sm:$0xff]
        %v4094 = vld [vmem:[%s597 + $0x11a8] sm:$0xff]
        %v4095 = vld [vmem:[%s597 + $0x11b0] sm:$0xff]
        %v4096 = vld [vmem:[%s597 + $0x11b8] sm:$0xff]
        %v4097 = vld [vmem:[%s597 + $0x11c0] sm:$0xff]
        %v4098 = vld [vmem:[%s597 + $0x11c8] sm:$0xff]
        %v4099 = vld [vmem:[%s597 + $0x11d0] sm:$0xff]
        %v4100 = vld [vmem:[%s597 + $0x11d8] sm:$0xff]
        %v4101 = vld [vmem:[%s597 + $0x11e0] sm:$0xff]
        %v4102 = vld [vmem:[%s597 + $0x11e8] sm:$0xff]
        %v4103 = vld [vmem:[%s597 + $0x11f0] sm:$0xff]
        %v4104 = vld [vmem:[%s597 + $0x11f8] sm:$0xff]
        %v4105 = vld [vmem:[%s597 + $0x1200] sm:$0xff]
        %v4106 = vld [vmem:[%s597 + $0x1208] sm:$0xff]
        %v4107 = vld [vmem:[%s597 + $0x1210] sm:$0xff]
        %v4108 = vld [vmem:[%s597 + $0x1218] sm:$0xff]
        %v4109 = vld [vmem:[%s597 + $0x1220] sm:$0xff]
        %v4110 = vld [vmem:[%s597 + $0x1228] sm:$0xff]
        %v4111 = vld [vmem:[%s597 + $0x1230] sm:$0xff]
        %v4112 = vld [vmem:[%s597 + $0x1238] sm:$0xff]
        %v4113 = vld [vmem:[%s597 + $0x1240] sm:$0xff]
        %v4114 = vld [vmem:[%s597 + $0x1248] sm:$0xff]
        %v4115 = vld [vmem:[%s597 + $0x1250] sm:$0xff]
        %v4116 = vld [vmem:[%s597 + $0x1258] sm:$0xff]
        %v4117 = vld [vmem:[%s597 + $0x1260] sm:$0xff]
        %v4118 = vld [vmem:[%s597 + $0x1268] sm:$0xff]
        %v4119 = vld [vmem:[%s597 + $0x1270] sm:$0xff]
        %v4120 = vld [vmem:[%s597 + $0x1278] sm:$0xff]
        %v4121 = vld [vmem:[%s597 + $0x1280] sm:$0xff]
        %v4122 = vld [vmem:[%s597 + $0x1288] sm:$0xff]
        %v4123 = vld [vmem:[%s597 + $0x1290] sm:$0xff]
        %v4124 = vld [vmem:[%s597 + $0x1298] sm:$0xff]
        %v4125 = vld [vmem:[%s597 + $0x12a0] sm:$0xff]
        %v4126 = vld [vmem:[%s597 + $0x12a8] sm:$0xff]
        %v4127 = vld [vmem:[%s597 + $0x12b0] sm:$0xff]
        %v4128 = vld [vmem:[%s597 + $0x12b8] sm:$0xff]
        %v4129 = vld [vmem:[%s597 + $0x12c0] sm:$0xff]
        %v4130 = vld [vmem:[%s597 + $0x12c8] sm:$0xff]
        %v4131 = vld [vmem:[%s597 + $0x12d0] sm:$0xff]
        %v4132 = vld [vmem:[%s597 + $0x12d8] sm:$0xff]
        %v4133 = vld [vmem:[%s597 + $0x12e0] sm:$0xff]
        %v4134 = vld [vmem:[%s597 + $0x12e8] sm:$0xff]
        %v4135 = vld [vmem:[%s597 + $0x12f0] sm:$0xff]
        %v4136 = vld [vmem:[%s597 + $0x12f8] sm:$0xff]
        %v4137 = vld [vmem:[%s597 + $0x1300] sm:$0xff]
        %v4138 = vld [vmem:[%s597 + $0x1308] sm:$0xff]
        %v4139 = vld [vmem:[%s597 + $0x1310] sm:$0xff]
        %v4140 = vld [vmem:[%s597 + $0x1318] sm:$0xff]
        %v4141 = vld [vmem:[%s597 + $0x1320] sm:$0xff]
        %v4142 = vld [vmem:[%s597 + $0x1328] sm:$0xff]
        %v4143 = vld [vmem:[%s597 + $0x1330] sm:$0xff]
        %v4144 = vld [vmem:[%s597 + $0x1338] sm:$0xff]
        %v4145 = vld [vmem:[%s597 + $0x1340] sm:$0xff]
        %v4146 = vld [vmem:[%s597 + $0x1348] sm:$0xff]
        %v4147 = vld [vmem:[%s597 + $0x1350] sm:$0xff]
        %v4148 = vld [vmem:[%s597 + $0x1358] sm:$0xff]
        %v4149 = vld [vmem:[%s597 + $0x1360] sm:$0xff]
        %v4150 = vld [vmem:[%s597 + $0x1368] sm:$0xff]
        %v4151 = vld [vmem:[%s597 + $0x1370] sm:$0xff]
        %v4152 = vld [vmem:[%s597 + $0x1378] sm:$0xff]
        %v4153 = vld [vmem:[%s597 + $0x1380] sm:$0xff]
        %v4154 = vld [vmem:[%s597 + $0x1388] sm:$0xff]
        %v4155 = vld [vmem:[%s597 + $0x1390] sm:$0xff]
        %v4156 = vld [vmem:[%s597 + $0x1398] sm:$0xff]
        %v4157 = vld [vmem:[%s597 + $0x13a0] sm:$0xff]
        %v4158 = vld [vmem:[%s597 + $0x13a8] sm:$0xff]
        %v4159 = vld [vmem:[%s597 + $0x13b0] sm:$0xff]
        %v4160 = vld [vmem:[%s597 + $0x13b8] sm:$0xff]
        %v4161 = vld [vmem:[%s597 + $0x13c0] sm:$0xff]
        %v4162 = vld [vmem:[%s597 + $0x13c8] sm:$0xff]
        %v4163 = vld [vmem:[%s597 + $0x13d0] sm:$0xff]
        %v4164 = vld [vmem:[%s597 + $0x13d8] sm:$0xff]
        %v4165 = vld [vmem:[%s597 + $0x13e0] sm:$0xff]
        %v4166 = vld [vmem:[%s597 + $0x13e8] sm:$0xff]
        %v4167 = vld [vmem:[%s597 + $0x13f0] sm:$0xff]
        %v4168 = vld [vmem:[%s597 + $0x13f8] sm:$0xff]
        %v4169 = vld [vmem:[%s597 + $0x1400] sm:$0xff]
        %v4170 = vld [vmem:[%s597 + $0x1408] sm:$0xff]
        %v4171 = vld [vmem:[%s597 + $0x1410] sm:$0xff]
        %v4172 = vld [vmem:[%s597 + $0x1418] sm:$0xff]
        %v4173 = vld [vmem:[%s597 + $0x1420] sm:$0xff]
        %v4174 = vld [vmem:[%s597 + $0x1428] sm:$0xff]
        %v4175 = vld [vmem:[%s597 + $0x1430] sm:$0xff]
        %v4176 = vld [vmem:[%s597 + $0x1438] sm:$0xff]
        %v4177 = vld [vmem:[%s597 + $0x1440] sm:$0xff]
        %v4178 = vld [vmem:[%s597 + $0x1448] sm:$0xff]
        %v4179 = vld [vmem:[%s597 + $0x1450] sm:$0xff]
        %v4180 = vld [vmem:[%s597 + $0x1458] sm:$0xff]
        %v4181 = vld [vmem:[%s597 + $0x1460] sm:$0xff]
        %v4182 = vld [vmem:[%s597 + $0x1468] sm:$0xff]
        %v4183 = vld [vmem:[%s597 + $0x1470] sm:$0xff]
        %v4184 = vld [vmem:[%s597 + $0x1478] sm:$0xff]
        %v4185 = vld [vmem:[%s597 + $0x1480] sm:$0xff]
        %v4186 = vld [vmem:[%s597 + $0x1488] sm:$0xff]
        %v4187 = vld [vmem:[%s597 + $0x1490] sm:$0xff]
        %v4188 = vld [vmem:[%s597 + $0x1498] sm:$0xff]
        %v4189 = vld [vmem:[%s597 + $0x14a0] sm:$0xff]
        %v4190 = vld [vmem:[%s597 + $0x14a8] sm:$0xff]
        %v4191 = vld [vmem:[%s597 + $0x14b0] sm:$0xff]
        %v4192 = vld [vmem:[%s597 + $0x14b8] sm:$0xff]
        %v4193 = vld [vmem:[%s597 + $0x14c0] sm:$0xff]
        %v4194 = vld [vmem:[%s597 + $0x14c8] sm:$0xff]
        %v4195 = vld [vmem:[%s597 + $0x14d0] sm:$0xff]
        %v4196 = vld [vmem:[%s597 + $0x14d8] sm:$0xff]
        %v4197 = vld [vmem:[%s597 + $0x14e0] sm:$0xff]
        %v4198 = vld [vmem:[%s597 + $0x14e8] sm:$0xff]
        %v4199 = vld [vmem:[%s597 + $0x14f0] sm:$0xff]
        %v4200 = vld [vmem:[%s597 + $0x14f8] sm:$0xff]
        %v4201 = vld [vmem:[%s597 + $0x1500] sm:$0xff]
        %v4202 = vld [vmem:[%s597 + $0x1508] sm:$0xff]
        %v4203 = vld [vmem:[%s597 + $0x1510] sm:$0xff]
        %v4204 = vld [vmem:[%s597 + $0x1518] sm:$0xff]
        %v4205 = vld [vmem:[%s597 + $0x1520] sm:$0xff]
        %v4206 = vld [vmem:[%s597 + $0x1528] sm:$0xff]
        %v4207 = vld [vmem:[%s597 + $0x1530] sm:$0xff]
        %v4208 = vld [vmem:[%s597 + $0x1538] sm:$0xff]
        %v4209 = vld [vmem:[%s597 + $0x1540] sm:$0xff]
        %v4210 = vld [vmem:[%s597 + $0x1548] sm:$0xff]
        %v4211 = vld [vmem:[%s597 + $0x1550] sm:$0xff]
        %v4212 = vld [vmem:[%s597 + $0x1558] sm:$0xff]
        %v4213 = vld [vmem:[%s597 + $0x1560] sm:$0xff]
        %v4214 = vld [vmem:[%s597 + $0x1568] sm:$0xff]
        %v4215 = vld [vmem:[%s597 + $0x1570] sm:$0xff]
        %v4216 = vld [vmem:[%s597 + $0x1578] sm:$0xff]
        %v4217 = vld [vmem:[%s597 + $0x1580] sm:$0xff]
        %v4218 = vld [vmem:[%s597 + $0x1588] sm:$0xff]
        %v4219 = vld [vmem:[%s597 + $0x1590] sm:$0xff]
        %v4220 = vld [vmem:[%s597 + $0x1598] sm:$0xff]
        %v4221 = vld [vmem:[%s597 + $0x15a0] sm:$0xff]
        %v4222 = vld [vmem:[%s597 + $0x15a8] sm:$0xff]
        %v4223 = vld [vmem:[%s597 + $0x15b0] sm:$0xff]
        %v4224 = vld [vmem:[%s597 + $0x15b8] sm:$0xff]
        %v4225 = vld [vmem:[%s597 + $0x15c0] sm:$0xff]
        %v4226 = vld [vmem:[%s597 + $0x15c8] sm:$0xff]
        %v4227 = vld [vmem:[%s597 + $0x15d0] sm:$0xff]
        %v4228 = vld [vmem:[%s597 + $0x15d8] sm:$0xff]
        %v4229 = vld [vmem:[%s597 + $0x15e0] sm:$0xff]
        %v4230 = vld [vmem:[%s597 + $0x15e8] sm:$0xff]
        %v4231 = vld [vmem:[%s597 + $0x15f0] sm:$0xff]
        %v4232 = vld [vmem:[%s597 + $0x15f8] sm:$0xff]
        %v4233 = vld [vmem:[%s597 + $0x1600] sm:$0xff]
        %v4234 = vld [vmem:[%s597 + $0x1608] sm:$0xff]
        %v4235 = vld [vmem:[%s597 + $0x1610] sm:$0xff]
        %v4236 = vld [vmem:[%s597 + $0x1618] sm:$0xff]
        %v4237 = vld [vmem:[%s597 + $0x1620] sm:$0xff]
        %v4238 = vld [vmem:[%s597 + $0x1628] sm:$0xff]
        %v4239 = vld [vmem:[%s597 + $0x1630] sm:$0xff]
        %v4240 = vld [vmem:[%s597 + $0x1638] sm:$0xff]
        %v4241 = vld [vmem:[%s597 + $0x1640] sm:$0xff]
        %v4242 = vld [vmem:[%s597 + $0x1648] sm:$0xff]
        %v4243 = vld [vmem:[%s597 + $0x1650] sm:$0xff]
        %v4244 = vld [vmem:[%s597 + $0x1658] sm:$0xff]
        %v4245 = vld [vmem:[%s597 + $0x1660] sm:$0xff]
        %v4246 = vld [vmem:[%s597 + $0x1668] sm:$0xff]
        %v4247 = vld [vmem:[%s597 + $0x1670] sm:$0xff]
        %v4248 = vld [vmem:[%s597 + $0x1678] sm:$0xff]
        %v4249 = vld [vmem:[%s597 + $0x1680] sm:$0xff]
        %v4250 = vld [vmem:[%s597 + $0x1688] sm:$0xff]
        %v4251 = vld [vmem:[%s597 + $0x1690] sm:$0xff]
        %v4252 = vld [vmem:[%s597 + $0x1698] sm:$0xff]
        %v4253 = vld [vmem:[%s597 + $0x16a0] sm:$0xff]
        %v4254 = vld [vmem:[%s597 + $0x16a8] sm:$0xff]
        %v4255 = vld [vmem:[%s597 + $0x16b0] sm:$0xff]
        %v4256 = vld [vmem:[%s597 + $0x16b8] sm:$0xff]
        %v4257 = vld [vmem:[%s597 + $0x16c0] sm:$0xff]
        %v4258 = vld [vmem:[%s597 + $0x16c8] sm:$0xff]
        %v4259 = vld [vmem:[%s597 + $0x16d0] sm:$0xff]
        %v4260 = vld [vmem:[%s597 + $0x16d8] sm:$0xff]
        %v4261 = vld [vmem:[%s597 + $0x16e0] sm:$0xff]
        %v4262 = vld [vmem:[%s597 + $0x16e8] sm:$0xff]
        %v4263 = vld [vmem:[%s597 + $0x16f0] sm:$0xff]
        %v4264 = vld [vmem:[%s597 + $0x16f8] sm:$0xff]
        %v4265 = vld [vmem:[%s597 + $0x1700] sm:$0xff]
        %v4266 = vld [vmem:[%s597 + $0x1708] sm:$0xff]
        %v4267 = vld [vmem:[%s597 + $0x1710] sm:$0xff]
        %v4268 = vld [vmem:[%s597 + $0x1718] sm:$0xff]
        %v4269 = vld [vmem:[%s597 + $0x1720] sm:$0xff]
        %v4270 = vld [vmem:[%s597 + $0x1728] sm:$0xff]
        %v4271 = vld [vmem:[%s597 + $0x1730] sm:$0xff]
        %v4272 = vld [vmem:[%s597 + $0x1738] sm:$0xff]
        %v4273 = vld [vmem:[%s597 + $0x1740] sm:$0xff]
        %v4274 = vld [vmem:[%s597 + $0x1748] sm:$0xff]
        %v4275 = vld [vmem:[%s597 + $0x1750] sm:$0xff]
        %v4276 = vld [vmem:[%s597 + $0x1758] sm:$0xff]
        %v4277 = vld [vmem:[%s597 + $0x1760] sm:$0xff]
        %v4278 = vld [vmem:[%s597 + $0x1768] sm:$0xff]
        %v4279 = vld [vmem:[%s597 + $0x1770] sm:$0xff]
        %v4280 = vld [vmem:[%s597 + $0x1778] sm:$0xff]
        %v4281 = vld [vmem:[%s597 + $0x1780] sm:$0xff]
        %v4282 = vld [vmem:[%s597 + $0x1788] sm:$0xff]
        %v4283 = vld [vmem:[%s597 + $0x1790] sm:$0xff]
        %v4284 = vld [vmem:[%s597 + $0x1798] sm:$0xff]
        %v4285 = vld [vmem:[%s597 + $0x17a0] sm:$0xff]
        %v4286 = vld [vmem:[%s597 + $0x17a8] sm:$0xff]
        %v4287 = vld [vmem:[%s597 + $0x17b0] sm:$0xff]
        %v4288 = vld [vmem:[%s597 + $0x17b8] sm:$0xff]
        %v4289 = vld [vmem:[%s597 + $0x17c0] sm:$0xff]
        %v4290 = vld [vmem:[%s597 + $0x17c8] sm:$0xff]
        %v4291 = vld [vmem:[%s597 + $0x17d0] sm:$0xff]
        %v4292 = vld [vmem:[%s597 + $0x17d8] sm:$0xff]
        %v4293 = vld [vmem:[%s597 + $0x17e0] sm:$0xff]
        %v4294 = vld [vmem:[%s597 + $0x17e8] sm:$0xff]
        %v4295 = vld [vmem:[%s597 + $0x17f0] sm:$0xff]
        %v4296 = vld [vmem:[%s597 + $0x17f8] sm:$0xff]
        %v4297 = vld [vmem:[%s597 + $0x1800] sm:$0xff]
        %v4298 = vld [vmem:[%s597 + $0x1808] sm:$0xff]
        %v4299 = vld [vmem:[%s597 + $0x1810] sm:$0xff]
        %v4300 = vld [vmem:[%s597 + $0x1818] sm:$0xff]
        %v4301 = vld [vmem:[%s597 + $0x1820] sm:$0xff]
        %v4302 = vld [vmem:[%s597 + $0x1828] sm:$0xff]
        %v4303 = vld [vmem:[%s597 + $0x1830] sm:$0xff]
        %v4304 = vld [vmem:[%s597 + $0x1838] sm:$0xff]
        %v4305 = vld [vmem:[%s597 + $0x1840] sm:$0xff]
        %v4306 = vld [vmem:[%s597 + $0x1848] sm:$0xff]
        %v4307 = vld [vmem:[%s597 + $0x1850] sm:$0xff]
        %v4308 = vld [vmem:[%s597 + $0x1858] sm:$0xff]
        %v4309 = vld [vmem:[%s597 + $0x1860] sm:$0xff]
        %v4310 = vld [vmem:[%s597 + $0x1868] sm:$0xff]
        %v4311 = vld [vmem:[%s597 + $0x1870] sm:$0xff]
        %v4312 = vld [vmem:[%s597 + $0x1878] sm:$0xff]
        %v4313 = vld [vmem:[%s597 + $0x1880] sm:$0xff]
        %v4314 = vld [vmem:[%s597 + $0x1888] sm:$0xff]
        %v4315 = vld [vmem:[%s597 + $0x1890] sm:$0xff]
        %v4316 = vld [vmem:[%s597 + $0x1898] sm:$0xff]
        %v4317 = vld [vmem:[%s597 + $0x18a0] sm:$0xff]
        %v4318 = vld [vmem:[%s597 + $0x18a8] sm:$0xff]
        %v4319 = vld [vmem:[%s597 + $0x18b0] sm:$0xff]
        %v4320 = vld [vmem:[%s597 + $0x18b8] sm:$0xff]
        %v4321 = vld [vmem:[%s597 + $0x18c0] sm:$0xff]
        %v4322 = vld [vmem:[%s597 + $0x18c8] sm:$0xff]
        %v4323 = vld [vmem:[%s597 + $0x18d0] sm:$0xff]
        %v4324 = vld [vmem:[%s597 + $0x18d8] sm:$0xff]
        %v4325 = vld [vmem:[%s597 + $0x18e0] sm:$0xff]
        %v4326 = vld [vmem:[%s597 + $0x18e8] sm:$0xff]
        %v4327 = vld [vmem:[%s597 + $0x18f0] sm:$0xff]
        %v4328 = vld [vmem:[%s597 + $0x18f8] sm:$0xff]
        %v4329 = vld [vmem:[%s597 + $0x1900] sm:$0xff]
        %v4330 = vld [vmem:[%s597 + $0x1908] sm:$0xff]
        %v4331 = vld [vmem:[%s597 + $0x1910] sm:$0xff]
        %v4332 = vld [vmem:[%s597 + $0x1918] sm:$0xff]
        %v4333 = vld [vmem:[%s597 + $0x1920] sm:$0xff]
        %v4334 = vld [vmem:[%s597 + $0x1928] sm:$0xff]
        %v4335 = vld [vmem:[%s597 + $0x1930] sm:$0xff]
        %v4336 = vld [vmem:[%s597 + $0x1938] sm:$0xff]
        %v4337 = vld [vmem:[%s597 + $0x1940] sm:$0xff]
        %v4338 = vld [vmem:[%s597 + $0x1948] sm:$0xff]
        %v4339 = vld [vmem:[%s597 + $0x1950] sm:$0xff]
        %v4340 = vld [vmem:[%s597 + $0x1958] sm:$0xff]
        %v4341 = vld [vmem:[%s597 + $0x1960] sm:$0xff]
        %v4342 = vld [vmem:[%s597 + $0x1968] sm:$0xff]
        %v4343 = vld [vmem:[%s597 + $0x1970] sm:$0xff]
        %v4344 = vld [vmem:[%s597 + $0x1978] sm:$0xff]
        %v4345 = vld [vmem:[%s597 + $0x1980] sm:$0xff]
        %v4346 = vld [vmem:[%s597 + $0x1988] sm:$0xff]
        %v4347 = vld [vmem:[%s597 + $0x1990] sm:$0xff]
        %v4348 = vld [vmem:[%s597 + $0x1998] sm:$0xff]
        %v4349 = vld [vmem:[%s597 + $0x19a0] sm:$0xff]
        %v4350 = vld [vmem:[%s597 + $0x19a8] sm:$0xff]
        %v4351 = vld [vmem:[%s597 + $0x19b0] sm:$0xff]
        %v4352 = vld [vmem:[%s597 + $0x19b8] sm:$0xff]
        %v4353 = vld [vmem:[%s597 + $0x19c0] sm:$0xff]
        %v4354 = vld [vmem:[%s597 + $0x19c8] sm:$0xff]
        %v4355 = vld [vmem:[%s597 + $0x19d0] sm:$0xff]
        %v4356 = vld [vmem:[%s597 + $0x19d8] sm:$0xff]
        %v4357 = vld [vmem:[%s597 + $0x19e0] sm:$0xff]
        %v4358 = vld [vmem:[%s597 + $0x19e8] sm:$0xff]
        %v4359 = vld [vmem:[%s597 + $0x19f0] sm:$0xff]
        %v4360 = vld [vmem:[%s597 + $0x19f8] sm:$0xff]
        %v4361 = vld [vmem:[%s597 + $0x1a00] sm:$0xff]
        %v4362 = vld [vmem:[%s597 + $0x1a08] sm:$0xff]
        %v4363 = vld [vmem:[%s597 + $0x1a10] sm:$0xff]
        %v4364 = vld [vmem:[%s597 + $0x1a18] sm:$0xff]
        %v4365 = vld [vmem:[%s597 + $0x1a20] sm:$0xff]
        %v4366 = vld [vmem:[%s597 + $0x1a28] sm:$0xff]
        %v4367 = vld [vmem:[%s597 + $0x1a30] sm:$0xff]
        %v4368 = vld [vmem:[%s597 + $0x1a38] sm:$0xff]
        %v4369 = vld [vmem:[%s597 + $0x1a40] sm:$0xff]
        %v4370 = vld [vmem:[%s597 + $0x1a48] sm:$0xff]
        %v4371 = vld [vmem:[%s597 + $0x1a50] sm:$0xff]
        %v4372 = vld [vmem:[%s597 + $0x1a58] sm:$0xff]
        %v4373 = vld [vmem:[%s597 + $0x1a60] sm:$0xff]
        %v4374 = vld [vmem:[%s597 + $0x1a68] sm:$0xff]
        %v4375 = vld [vmem:[%s597 + $0x1a70] sm:$0xff]
        %v4376 = vld [vmem:[%s597 + $0x1a78] sm:$0xff]
        %v4377 = vld [vmem:[%s597 + $0x1a80] sm:$0xff]
        %v4378 = vld [vmem:[%s597 + $0x1a88] sm:$0xff]
        %v4379 = vld [vmem:[%s597 + $0x1a90] sm:$0xff]
        %v4380 = vld [vmem:[%s597 + $0x1a98] sm:$0xff]
        %v4381 = vld [vmem:[%s597 + $0x1aa0] sm:$0xff]
        %v4382 = vld [vmem:[%s597 + $0x1aa8] sm:$0xff]
        %v4383 = vld [vmem:[%s597 + $0x1ab0] sm:$0xff]
        %v4384 = vld [vmem:[%s597 + $0x1ab8] sm:$0xff]
        %v4385 = vld [vmem:[%s597 + $0x1ac0] sm:$0xff]
        %v4386 = vld [vmem:[%s597 + $0x1ac8] sm:$0xff]
        %v4387 = vld [vmem:[%s597 + $0x1ad0] sm:$0xff]
        %v4388 = vld [vmem:[%s597 + $0x1ad8] sm:$0xff]
        %v4389 = vld [vmem:[%s597 + $0x1ae0] sm:$0xff]
        %v4390 = vld [vmem:[%s597 + $0x1ae8] sm:$0xff]
        %v4391 = vld [vmem:[%s597 + $0x1af0] sm:$0xff]
        %v4392 = vld [vmem:[%s597 + $0x1af8] sm:$0xff]
        %v4393 = vld [vmem:[%s597 + $0x1b00] sm:$0xff]
        %v4394 = vld [vmem:[%s597 + $0x1b08] sm:$0xff]
        %v4395 = vld [vmem:[%s597 + $0x1b10] sm:$0xff]
        %v4396 = vld [vmem:[%s597 + $0x1b18] sm:$0xff]
        %v4397 = vld [vmem:[%s597 + $0x1b20] sm:$0xff]
        %v4398 = vld [vmem:[%s597 + $0x1b28] sm:$0xff]
        %v4399 = vld [vmem:[%s597 + $0x1b30] sm:$0xff]
        %v4400 = vld [vmem:[%s597 + $0x1b38] sm:$0xff]
        %v4401 = vld [vmem:[%s597 + $0x1b40] sm:$0xff]
        %v4402 = vld [vmem:[%s597 + $0x1b48] sm:$0xff]
        %v4403 = vld [vmem:[%s597 + $0x1b50] sm:$0xff]
        %v4404 = vld [vmem:[%s597 + $0x1b58] sm:$0xff]
        %v4405 = vld [vmem:[%s597 + $0x1b60] sm:$0xff]
        %v4406 = vld [vmem:[%s597 + $0x1b68] sm:$0xff]
        %v4407 = vld [vmem:[%s597 + $0x1b70] sm:$0xff]
        %v4408 = vld [vmem:[%s597 + $0x1b78] sm:$0xff]
        %v4409 = vld [vmem:[%s597 + $0x1b80] sm:$0xff]
        %v4410 = vld [vmem:[%s597 + $0x1b88] sm:$0xff]
        %v4411 = vld [vmem:[%s597 + $0x1b90] sm:$0xff]
        %v4412 = vld [vmem:[%s597 + $0x1b98] sm:$0xff]
        %v4413 = vld [vmem:[%s597 + $0x1ba0] sm:$0xff]
        %v4414 = vld [vmem:[%s597 + $0x1ba8] sm:$0xff]
        %v4415 = vld [vmem:[%s597 + $0x1bb0] sm:$0xff]
        %v4416 = vld [vmem:[%s597 + $0x1bb8] sm:$0xff]
        %v4417 = vld [vmem:[%s597 + $0x1bc0] sm:$0xff]
        %v4418 = vld [vmem:[%s597 + $0x1bc8] sm:$0xff]
        %v4419 = vld [vmem:[%s597 + $0x1bd0] sm:$0xff]
        %v4420 = vld [vmem:[%s597 + $0x1bd8] sm:$0xff]
        %v4421 = vld [vmem:[%s597 + $0x1be0] sm:$0xff]
        %v4422 = vld [vmem:[%s597 + $0x1be8] sm:$0xff]
        %v4423 = vld [vmem:[%s597 + $0x1bf0] sm:$0xff]
        %v4424 = vld [vmem:[%s597 + $0x1bf8] sm:$0xff]
        %v4427 = vcombine.high %v3527, %v3527
        %v4429 = vunpack.c.l.s4 1966171168
        %v4430 = vunpack.c.0.s8 %v4429
        %v4431 = vlaneseq
        %v4432 = vshrl.u32 %v4431, 7
        %v4433 = vsub.s32 %v4430, %v4432
        %v4434 = vrot.slane %v3527, %v4433
        %v4436 = vunpack.c.l.s4 1966171168
        %v4437 = vunpack.c.0.s8 %v4436
        %v4438 = vlaneseq
        %v4439 = vshrl.u32 %v4438, 7
        %v4440 = vsub.s32 %v4437, %v4439
        %v4441 = vrot.slane %v4427, %v4440
        %v4442 = vcombine.high %v4434, %v4434
        %v4443 = vcombine.high %v4441, %v4441
        %v4445 = vunpack.c.l.s4 1966171168
        %v4446 = vunpack.c.0.s8 %v4445
        %v4447 = vlaneseq
        %v4448 = vshrl.u32 %v4447, 7
        %v4449 = vsub.s32 %v4446, %v4448
        %v4450 = vrot.slane %v4434, %v4449
        %v4452 = vunpack.c.l.s4 1966171168
        %v4453 = vunpack.c.0.s8 %v4452
        %v4454 = vlaneseq
        %v4455 = vshrl.u32 %v4454, 7
        %v4456 = vsub.s32 %v4453, %v4455
        %v4457 = vrot.slane %v4441, %v4456
        %v4459 = vunpack.c.l.s4 1966171168
        %v4460 = vunpack.c.0.s8 %v4459
        %v4461 = vlaneseq
        %v4462 = vshrl.u32 %v4461, 7
        %v4463 = vsub.s32 %v4460, %v4462
        %v4464 = vrot.slane %v4442, %v4463
        %v4466 = vunpack.c.l.s4 1966171168
        %v4467 = vunpack.c.0.s8 %v4466
        %v4468 = vlaneseq
        %v4469 = vshrl.u32 %v4468, 7
        %v4470 = vsub.s32 %v4467, %v4469
        %v4471 = vrot.slane %v4443, %v4470
        %v4472 = vcombine.high %v4450, %v4450
        %v4473 = vcombine.high %v4457, %v4457
        %v4474 = vcombine.high %v4464, %v4464
        %v4475 = vcombine.high %v4471, %v4471
        %v4476 = vcombine.high %v3528, %v3528
        %v4478 = vunpack.c.l.s4 1966171168
        %v4479 = vunpack.c.0.s8 %v4478
        %v4480 = vlaneseq
        %v4481 = vshrl.u32 %v4480, 7
        %v4482 = vsub.s32 %v4479, %v4481
        %v4483 = vrot.slane %v3528, %v4482
        %v4485 = vunpack.c.l.s4 1966171168
        %v4486 = vunpack.c.0.s8 %v4485
        %v4487 = vlaneseq
        %v4488 = vshrl.u32 %v4487, 7
        %v4489 = vsub.s32 %v4486, %v4488
        %v4490 = vrot.slane %v4476, %v4489
        %v4491 = vcombine.high %v4483, %v4483
        %v4492 = vcombine.high %v4490, %v4490
        %v4494 = vunpack.c.l.s4 1966171168
        %v4495 = vunpack.c.0.s8 %v4494
        %v4496 = vlaneseq
        %v4497 = vshrl.u32 %v4496, 7
        %v4498 = vsub.s32 %v4495, %v4497
        %v4499 = vrot.slane %v4483, %v4498
        %v4501 = vunpack.c.l.s4 1966171168
        %v4502 = vunpack.c.0.s8 %v4501
        %v4503 = vlaneseq
        %v4504 = vshrl.u32 %v4503, 7
        %v4505 = vsub.s32 %v4502, %v4504
        %v4506 = vrot.slane %v4490, %v4505
        %v4508 = vunpack.c.l.s4 1966171168
        %v4509 = vunpack.c.0.s8 %v4508
        %v4510 = vlaneseq
        %v4511 = vshrl.u32 %v4510, 7
        %v4512 = vsub.s32 %v4509, %v4511
        %v4513 = vrot.slane %v4491, %v4512
        %v4515 = vunpack.c.l.s4 1966171168
        %v4516 = vunpack.c.0.s8 %v4515
        %v4517 = vlaneseq
        %v4518 = vshrl.u32 %v4517, 7
        %v4519 = vsub.s32 %v4516, %v4518
        %v4520 = vrot.slane %v4492, %v4519
        %v4521 = vcombine.high %v4499, %v4499
        %v4522 = vcombine.high %v4513, %v4513
        %v5433 = vunpack.c.l.b16 %v3529
        %v5434 = vunpack.c.h.b16 %v3529
        %v5435 = vunpack.c.l.b16 %v3530
        %v5436 = vunpack.c.h.b16 %v3530
        %v5437 = vunpack.c.l.b16 %v3531
        %v5438 = vunpack.c.h.b16 %v3531
        %v5439 = vunpack.c.l.b16 %v3532
        %v5440 = vunpack.c.h.b16 %v3532
        %v5441 = vunpack.c.l.b16 %v3533
        %v5442 = vunpack.c.h.b16 %v3533
        %v5443 = vunpack.c.l.b16 %v3534
        %v5444 = vunpack.c.h.b16 %v3534
        %v5445 = vunpack.c.l.b16 %v3535
        %v5446 = vunpack.c.h.b16 %v3535
        %v5447 = vunpack.c.l.b16 %v3536
        %v5448 = vunpack.c.h.b16 %v3536
        %v5449 = vunpack.c.l.b16 %v3537
        %v5450 = vunpack.c.h.b16 %v3537
        %v5451 = vunpack.c.l.b16 %v3538
        %v5452 = vunpack.c.h.b16 %v3538
        %v5453 = vunpack.c.l.b16 %v3539
        %v5454 = vunpack.c.h.b16 %v3539
        %v5455 = vunpack.c.l.b16 %v3540
        %v5456 = vunpack.c.h.b16 %v3540
        %v5457 = vunpack.c.l.b16 %v3541
        %v5458 = vunpack.c.h.b16 %v3541
        %v5459 = vunpack.c.l.b16 %v3542
        %v5460 = vunpack.c.h.b16 %v3542
        %v5461 = vunpack.c.l.b16 %v3543
        %v5462 = vunpack.c.h.b16 %v3543
        %v5463 = vunpack.c.l.b16 %v3544
        %v5464 = vunpack.c.h.b16 %v3544
        %v5465 = vunpack.c.l.b16 %v3545
        %v5466 = vunpack.c.h.b16 %v3545
        %v5467 = vunpack.c.l.b16 %v3546
        %v5468 = vunpack.c.h.b16 %v3546
        %v5469 = vunpack.c.l.b16 %v3547
        %v5470 = vunpack.c.h.b16 %v3547
        %v5471 = vunpack.c.l.b16 %v3548
        %v5472 = vunpack.c.h.b16 %v3548
        %v5473 = vunpack.c.l.b16 %v3549
        %v5474 = vunpack.c.h.b16 %v3549
        %v5475 = vunpack.c.l.b16 %v3550
        %v5476 = vunpack.c.h.b16 %v3550
        %v5477 = vunpack.c.l.b16 %v3551
        %v5478 = vunpack.c.h.b16 %v3551
        %v5479 = vunpack.c.l.b16 %v3552
        %v5480 = vunpack.c.h.b16 %v3552
        %v5481 = vunpack.c.l.b16 %v3553
        %v5482 = vunpack.c.h.b16 %v3553
        %v5483 = vunpack.c.l.b16 %v3554
        %v5484 = vunpack.c.h.b16 %v3554
        %v5485 = vunpack.c.l.b16 %v3555
        %v5486 = vunpack.c.h.b16 %v3555
        %v5487 = vunpack.c.l.b16 %v3556
        %v5488 = vunpack.c.h.b16 %v3556
        %v5489 = vunpack.c.l.b16 %v3557
        %v5490 = vunpack.c.h.b16 %v3557
        %v5491 = vunpack.c.l.b16 %v3558
        %v5492 = vunpack.c.h.b16 %v3558
        %v5493 = vunpack.c.l.b16 %v3559
        %v5494 = vunpack.c.h.b16 %v3559
        %v5495 = vunpack.c.l.b16 %v3560
        %v5496 = vunpack.c.h.b16 %v3560
        %v5497 = vunpack.c.l.b16 %v3561
        %v5498 = vunpack.c.h.b16 %v3561
        %v5499 = vunpack.c.l.b16 %v3562
        %v5500 = vunpack.c.h.b16 %v3562
        %v5501 = vunpack.c.l.b16 %v3563
        %v5502 = vunpack.c.h.b16 %v3563
        %v5503 = vunpack.c.l.b16 %v3564
        %v5504 = vunpack.c.h.b16 %v3564
        %v5505 = vunpack.c.l.b16 %v3565
        %v5506 = vunpack.c.h.b16 %v3565
        %v5507 = vunpack.c.l.b16 %v3566
        %v5508 = vunpack.c.h.b16 %v3566
        %v5509 = vunpack.c.l.b16 %v3567
        %v5510 = vunpack.c.h.b16 %v3567
        %v5511 = vunpack.c.l.b16 %v3568
        %v5512 = vunpack.c.h.b16 %v3568
        %v5513 = vunpack.c.l.b16 %v3569
        %v5514 = vunpack.c.h.b16 %v3569
        %v5515 = vunpack.c.l.b16 %v3570
        %v5516 = vunpack.c.h.b16 %v3570
        %v5517 = vunpack.c.l.b16 %v3571
        %v5518 = vunpack.c.h.b16 %v3571
        %v5519 = vunpack.c.l.b16 %v3572
        %v5520 = vunpack.c.h.b16 %v3572
        %v5521 = vunpack.c.l.b16 %v3573
        %v5522 = vunpack.c.h.b16 %v3573
        %v5523 = vunpack.c.l.b16 %v3574
        %v5524 = vunpack.c.h.b16 %v3574
        %v5525 = vunpack.c.l.b16 %v3575
        %v5526 = vunpack.c.h.b16 %v3575
        %v5527 = vunpack.c.l.b16 %v3576
        %v5528 = vunpack.c.h.b16 %v3576
        %v5529 = vunpack.c.l.b16 %v3577
        %v5530 = vunpack.c.h.b16 %v3577
        %v5531 = vunpack.c.l.b16 %v3578
        %v5532 = vunpack.c.h.b16 %v3578
        %v5533 = vunpack.c.l.b16 %v3579
        %v5534 = vunpack.c.h.b16 %v3579
        %v5535 = vunpack.c.l.b16 %v3580
        %v5536 = vunpack.c.h.b16 %v3580
        %v5537 = vunpack.c.l.b16 %v3581
        %v5538 = vunpack.c.h.b16 %v3581
        %v5539 = vunpack.c.l.b16 %v3582
        %v5540 = vunpack.c.h.b16 %v3582
        %v5541 = vunpack.c.l.b16 %v3583
        %v5542 = vunpack.c.h.b16 %v3583
        %v5543 = vunpack.c.l.b16 %v3584
        %v5544 = vunpack.c.h.b16 %v3584
        %v5545 = vunpack.c.l.b16 %v3585
        %v5546 = vunpack.c.h.b16 %v3585
        %v5547 = vunpack.c.l.b16 %v3586
        %v5548 = vunpack.c.h.b16 %v3586
        %v5549 = vunpack.c.l.b16 %v3587
        %v5550 = vunpack.c.h.b16 %v3587
        %v5551 = vunpack.c.l.b16 %v3588
        %v5552 = vunpack.c.h.b16 %v3588
        %v5553 = vunpack.c.l.b16 %v3589
        %v5554 = vunpack.c.h.b16 %v3589
        %v5555 = vunpack.c.l.b16 %v3590
        %v5556 = vunpack.c.h.b16 %v3590
        %v5557 = vunpack.c.l.b16 %v3591
        %v5558 = vunpack.c.h.b16 %v3591
        %v5559 = vunpack.c.l.b16 %v3592
        %v5560 = vunpack.c.h.b16 %v3592
        %v5561 = vunpack.c.l.b16 %v3593
        %v5562 = vunpack.c.h.b16 %v3593
        %v5563 = vunpack.c.l.b16 %v3594
        %v5564 = vunpack.c.h.b16 %v3594
        %v5565 = vunpack.c.l.b16 %v3595
        %v5566 = vunpack.c.h.b16 %v3595
        %v5567 = vunpack.c.l.b16 %v3596
        %v5568 = vunpack.c.h.b16 %v3596
        %v5569 = vunpack.c.l.b16 %v3597
        %v5570 = vunpack.c.h.b16 %v3597
        %v5571 = vunpack.c.l.b16 %v3598
        %v5572 = vunpack.c.h.b16 %v3598
        %v5573 = vunpack.c.l.b16 %v3599
        %v5574 = vunpack.c.h.b16 %v3599
        %v5575 = vunpack.c.l.b16 %v3600
        %v5576 = vunpack.c.h.b16 %v3600
        %v5577 = vunpack.c.l.b16 %v3601
        %v5578 = vunpack.c.h.b16 %v3601
        %v5579 = vunpack.c.l.b16 %v3602
        %v5580 = vunpack.c.h.b16 %v3602
        %v5581 = vunpack.c.l.b16 %v3603
        %v5582 = vunpack.c.h.b16 %v3603
        %v5583 = vunpack.c.l.b16 %v3604
        %v5584 = vunpack.c.h.b16 %v3604
        %v5585 = vunpack.c.l.b16 %v3605
        %v5586 = vunpack.c.h.b16 %v3605
        %v5587 = vunpack.c.l.b16 %v3606
        %v5588 = vunpack.c.h.b16 %v3606
        %v5589 = vunpack.c.l.b16 %v3607
        %v5590 = vunpack.c.h.b16 %v3607
        %v5591 = vunpack.c.l.b16 %v3608
        %v5592 = vunpack.c.h.b16 %v3608
        %v5593 = vunpack.c.l.b16 %v3609
        %v5594 = vunpack.c.h.b16 %v3609
        %v5595 = vunpack.c.l.b16 %v3610
        %v5596 = vunpack.c.h.b16 %v3610
        %v5597 = vunpack.c.l.b16 %v3611
        %v5598 = vunpack.c.h.b16 %v3611
        %v5599 = vunpack.c.l.b16 %v3612
        %v5600 = vunpack.c.h.b16 %v3612
        %v5601 = vunpack.c.l.b16 %v3613
        %v5602 = vunpack.c.h.b16 %v3613
        %v5603 = vunpack.c.l.b16 %v3614
        %v5604 = vunpack.c.h.b16 %v3614
        %v5605 = vunpack.c.l.b16 %v3615
        %v5606 = vunpack.c.h.b16 %v3615
        %v5607 = vunpack.c.l.b16 %v3616
        %v5608 = vunpack.c.h.b16 %v3616
        %v5609 = vunpack.c.l.b16 %v3617
        %v5610 = vunpack.c.h.b16 %v3617
        %v5611 = vunpack.c.l.b16 %v3618
        %v5612 = vunpack.c.h.b16 %v3618
        %v5613 = vunpack.c.l.b16 %v3619
        %v5614 = vunpack.c.h.b16 %v3619
        %v5615 = vunpack.c.l.b16 %v3620
        %v5616 = vunpack.c.h.b16 %v3620
        %v5617 = vunpack.c.l.b16 %v3621
        %v5618 = vunpack.c.h.b16 %v3621
        %v5619 = vunpack.c.l.b16 %v3622
        %v5620 = vunpack.c.h.b16 %v3622
        %v5621 = vunpack.c.l.b16 %v3623
        %v5622 = vunpack.c.h.b16 %v3623
        %v5623 = vunpack.c.l.b16 %v3624
        %v5624 = vunpack.c.h.b16 %v3624
        %v5625 = vunpack.c.l.b16 %v3625
        %v5626 = vunpack.c.h.b16 %v3625
        %v5627 = vunpack.c.l.b16 %v3626
        %v5628 = vunpack.c.h.b16 %v3626
        %v5629 = vunpack.c.l.b16 %v3627
        %v5630 = vunpack.c.h.b16 %v3627
        %v5631 = vunpack.c.l.b16 %v3628
        %v5632 = vunpack.c.h.b16 %v3628
        %v5633 = vunpack.c.l.b16 %v3629
        %v5634 = vunpack.c.h.b16 %v3629
        %v5635 = vunpack.c.l.b16 %v3630
        %v5636 = vunpack.c.h.b16 %v3630
        %v5637 = vunpack.c.l.b16 %v3631
        %v5638 = vunpack.c.h.b16 %v3631
        %v5639 = vunpack.c.l.b16 %v3632
        %v5640 = vunpack.c.h.b16 %v3632
        %v5641 = vunpack.c.l.b16 %v3633
        %v5642 = vunpack.c.h.b16 %v3633
        %v5643 = vunpack.c.l.b16 %v3634
        %v5644 = vunpack.c.h.b16 %v3634
        %v5645 = vunpack.c.l.b16 %v3635
        %v5646 = vunpack.c.h.b16 %v3635
        %v5647 = vunpack.c.l.b16 %v3636
        %v5648 = vunpack.c.h.b16 %v3636
        %v5649 = vunpack.c.l.b16 %v3637
        %v5650 = vunpack.c.h.b16 %v3637
        %v5651 = vunpack.c.l.b16 %v3638
        %v5652 = vunpack.c.h.b16 %v3638
        %v5653 = vunpack.c.l.b16 %v3639
        %v5654 = vunpack.c.h.b16 %v3639
        %v5655 = vunpack.c.l.b16 %v3640
        %v5656 = vunpack.c.h.b16 %v3640
        %v5657 = vunpack.c.l.b16 %v3641
        %v5658 = vunpack.c.h.b16 %v3641
        %v5659 = vunpack.c.l.b16 %v3642
        %v5660 = vunpack.c.h.b16 %v3642
        %v5661 = vunpack.c.l.b16 %v3643
        %v5662 = vunpack.c.h.b16 %v3643
        %v5663 = vunpack.c.l.b16 %v3644
        %v5664 = vunpack.c.h.b16 %v3644
        %v5665 = vunpack.c.l.b16 %v3645
        %v5666 = vunpack.c.h.b16 %v3645
        %v5667 = vunpack.c.l.b16 %v3646
        %v5668 = vunpack.c.h.b16 %v3646
        %v5669 = vunpack.c.l.b16 %v3647
        %v5670 = vunpack.c.h.b16 %v3647
        %v5671 = vunpack.c.l.b16 %v3648
        %v5672 = vunpack.c.h.b16 %v3648
        %v5673 = vunpack.c.l.b16 %v3649
        %v5674 = vunpack.c.h.b16 %v3649
        %v5675 = vunpack.c.l.b16 %v3650
        %v5676 = vunpack.c.h.b16 %v3650
        %v5677 = vunpack.c.l.b16 %v3651
        %v5678 = vunpack.c.h.b16 %v3651
        %v5679 = vunpack.c.l.b16 %v3652
        %v5680 = vunpack.c.h.b16 %v3652
        %v5681 = vunpack.c.l.b16 %v3653
        %v5682 = vunpack.c.h.b16 %v3653
        %v5683 = vunpack.c.l.b16 %v3654
        %v5684 = vunpack.c.h.b16 %v3654
        %v5685 = vunpack.c.l.b16 %v3655
        %v5686 = vunpack.c.h.b16 %v3655
        %v5687 = vunpack.c.l.b16 %v3656
        %v5688 = vunpack.c.h.b16 %v3656
        %v5689 = vunpack.c.l.b16 %v3657
        %v5690 = vunpack.c.h.b16 %v3657
        %v5691 = vunpack.c.l.b16 %v3658
        %v5692 = vunpack.c.h.b16 %v3658
        %v5693 = vunpack.c.l.b16 %v3659
        %v5694 = vunpack.c.h.b16 %v3659
        %v5695 = vunpack.c.l.b16 %v3660
        %v5696 = vunpack.c.h.b16 %v3660
        %v5697 = vunpack.c.l.b16 %v3661
        %v5698 = vunpack.c.h.b16 %v3661
        %v5699 = vunpack.c.l.b16 %v3662
        %v5700 = vunpack.c.h.b16 %v3662
        %v5701 = vunpack.c.l.b16 %v3663
        %v5702 = vunpack.c.h.b16 %v3663
        %v5703 = vunpack.c.l.b16 %v3664
        %v5704 = vunpack.c.h.b16 %v3664
        %v5705 = vunpack.c.l.b16 %v3665
        %v5706 = vunpack.c.h.b16 %v3665
        %v5707 = vunpack.c.l.b16 %v3666
        %v5708 = vunpack.c.h.b16 %v3666
        %v5709 = vunpack.c.l.b16 %v3667
        %v5710 = vunpack.c.h.b16 %v3667
        %v5711 = vunpack.c.l.b16 %v3668
        %v5712 = vunpack.c.h.b16 %v3668
        %v5713 = vunpack.c.l.b16 %v3669
        %v5714 = vunpack.c.h.b16 %v3669
        %v5715 = vunpack.c.l.b16 %v3670
        %v5716 = vunpack.c.h.b16 %v3670
        %v5717 = vunpack.c.l.b16 %v3671
        %v5718 = vunpack.c.h.b16 %v3671
        %v5719 = vunpack.c.l.b16 %v3672
        %v5720 = vunpack.c.h.b16 %v3672
        %v5721 = vunpack.c.l.b16 %v3673
        %v5722 = vunpack.c.h.b16 %v3673
        %v5723 = vunpack.c.l.b16 %v3674
        %v5724 = vunpack.c.h.b16 %v3674
        %v5725 = vunpack.c.l.b16 %v3675
        %v5726 = vunpack.c.h.b16 %v3675
        %v5727 = vunpack.c.l.b16 %v3676
        %v5728 = vunpack.c.h.b16 %v3676
        %v5729 = vunpack.c.l.b16 %v3677
        %v5730 = vunpack.c.h.b16 %v3677
        %v5731 = vunpack.c.l.b16 %v3678
        %v5732 = vunpack.c.h.b16 %v3678
        %v5733 = vunpack.c.l.b16 %v3679
        %v5734 = vunpack.c.h.b16 %v3679
        %v5735 = vunpack.c.l.b16 %v3680
        %v5736 = vunpack.c.h.b16 %v3680
        %v5737 = vunpack.c.l.b16 %v3681
        %v5738 = vunpack.c.h.b16 %v3681
        %v5739 = vunpack.c.l.b16 %v3682
        %v5740 = vunpack.c.h.b16 %v3682
        %v5741 = vunpack.c.l.b16 %v3683
        %v5742 = vunpack.c.h.b16 %v3683
        %v5743 = vunpack.c.l.b16 %v3684
        %v5744 = vunpack.c.h.b16 %v3684
        %v5745 = vunpack.c.l.b16 %v3685
        %v5746 = vunpack.c.h.b16 %v3685
        %v5747 = vunpack.c.l.b16 %v3686
        %v5748 = vunpack.c.h.b16 %v3686
        %v5749 = vunpack.c.l.b16 %v3687
        %v5750 = vunpack.c.h.b16 %v3687
        %v5751 = vunpack.c.l.b16 %v3688
        %v5752 = vunpack.c.h.b16 %v3688
        %v5753 = vunpack.c.l.b16 %v3689
        %v5754 = vunpack.c.h.b16 %v3689
        %v5755 = vunpack.c.l.b16 %v3690
        %v5756 = vunpack.c.h.b16 %v3690
        %v5757 = vunpack.c.l.b16 %v3691
        %v5758 = vunpack.c.h.b16 %v3691
        %v5759 = vunpack.c.l.b16 %v3692
        %v5760 = vunpack.c.h.b16 %v3692
        %v5761 = vunpack.c.l.b16 %v3693
        %v5762 = vunpack.c.h.b16 %v3693
        %v5763 = vunpack.c.l.b16 %v3694
        %v5764 = vunpack.c.h.b16 %v3694
        %v5765 = vunpack.c.l.b16 %v3695
        %v5766 = vunpack.c.h.b16 %v3695
        %v5767 = vunpack.c.l.b16 %v3696
        %v5768 = vunpack.c.h.b16 %v3696
        %v5769 = vunpack.c.l.b16 %v3697
        %v5770 = vunpack.c.h.b16 %v3697
        %v5771 = vunpack.c.l.b16 %v3698
        %v5772 = vunpack.c.h.b16 %v3698
        %v5773 = vunpack.c.l.b16 %v3699
        %v5774 = vunpack.c.h.b16 %v3699
        %v5775 = vunpack.c.l.b16 %v3700
        %v5776 = vunpack.c.h.b16 %v3700
        %v5777 = vunpack.c.l.b16 %v3701
        %v5778 = vunpack.c.h.b16 %v3701
        %v5779 = vunpack.c.l.b16 %v3702
        %v5780 = vunpack.c.h.b16 %v3702
        %v5781 = vunpack.c.l.b16 %v3703
        %v5782 = vunpack.c.h.b16 %v3703
        %v5783 = vunpack.c.l.b16 %v3704
        %v5784 = vunpack.c.h.b16 %v3704
        %v5785 = vunpack.c.l.b16 %v3705
        %v5786 = vunpack.c.h.b16 %v3705
        %v5787 = vunpack.c.l.b16 %v3706
        %v5788 = vunpack.c.h.b16 %v3706
        %v5789 = vunpack.c.l.b16 %v3707
        %v5790 = vunpack.c.h.b16 %v3707
        %v5791 = vunpack.c.l.b16 %v3708
        %v5792 = vunpack.c.h.b16 %v3708
        %v5793 = vunpack.c.l.b16 %v3709
        %v5794 = vunpack.c.h.b16 %v3709
        %v5795 = vunpack.c.l.b16 %v3710
        %v5796 = vunpack.c.h.b16 %v3710
        %v5797 = vunpack.c.l.b16 %v3711
        %v5798 = vunpack.c.h.b16 %v3711
        %v5799 = vunpack.c.l.b16 %v3712
        %v5800 = vunpack.c.h.b16 %v3712
        %v5801 = vunpack.c.l.b16 %v3713
        %v5802 = vunpack.c.h.b16 %v3713
        %v5803 = vunpack.c.l.b16 %v3714
        %v5804 = vunpack.c.h.b16 %v3714
        %v5805 = vunpack.c.l.b16 %v3715
        %v5806 = vunpack.c.h.b16 %v3715
        %v5807 = vunpack.c.l.b16 %v3716
        %v5808 = vunpack.c.h.b16 %v3716
        %v5809 = vunpack.c.l.b16 %v3717
        %v5810 = vunpack.c.h.b16 %v3717
        %v5811 = vunpack.c.l.b16 %v3718
        %v5812 = vunpack.c.h.b16 %v3718
        %v5813 = vunpack.c.l.b16 %v3719
        %v5814 = vunpack.c.h.b16 %v3719
        %v5815 = vunpack.c.l.b16 %v3720
        %v5816 = vunpack.c.h.b16 %v3720
        %v5817 = vunpack.c.l.b16 %v3721
        %v5818 = vunpack.c.h.b16 %v3721
        %v5819 = vunpack.c.l.b16 %v3722
        %v5820 = vunpack.c.h.b16 %v3722
        %v5821 = vunpack.c.l.b16 %v3723
        %v5822 = vunpack.c.h.b16 %v3723
        %v5823 = vunpack.c.l.b16 %v3724
        %v5824 = vunpack.c.h.b16 %v3724
        %v5825 = vunpack.c.l.b16 %v3725
        %v5826 = vunpack.c.h.b16 %v3725
        %v5827 = vunpack.c.l.b16 %v3726
        %v5828 = vunpack.c.h.b16 %v3726
        %v5829 = vunpack.c.l.b16 %v3727
        %v5830 = vunpack.c.h.b16 %v3727
        %v5831 = vunpack.c.l.b16 %v3728
        %v5832 = vunpack.c.h.b16 %v3728
        %v5833 = vunpack.c.l.b16 %v3729
        %v5834 = vunpack.c.h.b16 %v3729
        %v5835 = vunpack.c.l.b16 %v3730
        %v5836 = vunpack.c.h.b16 %v3730
        %v5837 = vunpack.c.l.b16 %v3731
        %v5838 = vunpack.c.h.b16 %v3731
        %v5839 = vunpack.c.l.b16 %v3732
        %v5840 = vunpack.c.h.b16 %v3732
        %v5841 = vunpack.c.l.b16 %v3733
        %v5842 = vunpack.c.h.b16 %v3733
        %v5843 = vunpack.c.l.b16 %v3734
        %v5844 = vunpack.c.h.b16 %v3734
        %v5845 = vunpack.c.l.b16 %v3735
        %v5846 = vunpack.c.h.b16 %v3735
        %v5847 = vunpack.c.l.b16 %v3736
        %v5848 = vunpack.c.h.b16 %v3736
        %v5849 = vunpack.c.l.b16 %v3737
        %v5850 = vunpack.c.h.b16 %v3737
        %v5851 = vunpack.c.l.b16 %v3738
        %v5852 = vunpack.c.h.b16 %v3738
        %v5853 = vunpack.c.l.b16 %v3739
        %v5854 = vunpack.c.h.b16 %v3739
        %v5855 = vunpack.c.l.b16 %v3740
        %v5856 = vunpack.c.h.b16 %v3740
        %v5857 = vunpack.c.l.b16 %v3741
        %v5858 = vunpack.c.h.b16 %v3741
        %v5859 = vunpack.c.l.b16 %v3742
        %v5860 = vunpack.c.h.b16 %v3742
        %v5861 = vunpack.c.l.b16 %v3743
        %v5862 = vunpack.c.h.b16 %v3743
        %v5863 = vunpack.c.l.b16 %v3744
        %v5864 = vunpack.c.h.b16 %v3744
        %v5865 = vunpack.c.l.b16 %v3745
        %v5866 = vunpack.c.h.b16 %v3745
        %v5867 = vunpack.c.l.b16 %v3746
        %v5868 = vunpack.c.h.b16 %v3746
        %v5869 = vunpack.c.l.b16 %v3747
        %v5870 = vunpack.c.h.b16 %v3747
        %v5871 = vunpack.c.l.b16 %v3748
        %v5872 = vunpack.c.h.b16 %v3748
        %v5873 = vunpack.c.l.b16 %v3749
        %v5874 = vunpack.c.h.b16 %v3749
        %v5875 = vunpack.c.l.b16 %v3750
        %v5876 = vunpack.c.h.b16 %v3750
        %v5877 = vunpack.c.l.b16 %v3751
        %v5878 = vunpack.c.h.b16 %v3751
        %v5879 = vunpack.c.l.b16 %v3752
        %v5880 = vunpack.c.h.b16 %v3752
        %v5881 = vunpack.c.l.b16 %v3753
        %v5882 = vunpack.c.h.b16 %v3753
        %v5883 = vunpack.c.l.b16 %v3754
        %v5884 = vunpack.c.h.b16 %v3754
        %v5885 = vunpack.c.l.b16 %v3755
        %v5886 = vunpack.c.h.b16 %v3755
        %v5887 = vunpack.c.l.b16 %v3756
        %v5888 = vunpack.c.h.b16 %v3756
        %v5889 = vunpack.c.l.b16 %v3757
        %v5890 = vunpack.c.h.b16 %v3757
        %v5891 = vunpack.c.l.b16 %v3758
        %v5892 = vunpack.c.h.b16 %v3758
        %v5893 = vunpack.c.l.b16 %v3759
        %v5894 = vunpack.c.h.b16 %v3759
        %v5895 = vunpack.c.l.b16 %v3760
        %v5896 = vunpack.c.h.b16 %v3760
        %v5897 = vunpack.c.l.b16 %v3761
        %v5898 = vunpack.c.h.b16 %v3761
        %v5899 = vunpack.c.l.b16 %v3762
        %v5900 = vunpack.c.h.b16 %v3762
        %v5901 = vunpack.c.l.b16 %v3763
        %v5902 = vunpack.c.h.b16 %v3763
        %v5903 = vunpack.c.l.b16 %v3764
        %v5904 = vunpack.c.h.b16 %v3764
        %v5905 = vunpack.c.l.b16 %v3765
        %v5906 = vunpack.c.h.b16 %v3765
        %v5907 = vunpack.c.l.b16 %v3766
        %v5908 = vunpack.c.h.b16 %v3766
        %v5909 = vunpack.c.l.b16 %v3767
        %v5910 = vunpack.c.h.b16 %v3767
        %v5911 = vunpack.c.l.b16 %v3768
        %v5912 = vunpack.c.h.b16 %v3768
        %v5913 = vunpack.c.l.b16 %v3769
        %v5914 = vunpack.c.h.b16 %v3769
        %v5915 = vunpack.c.l.b16 %v3770
        %v5916 = vunpack.c.h.b16 %v3770
        %v5917 = vunpack.c.l.b16 %v3771
        %v5918 = vunpack.c.h.b16 %v3771
        %v5919 = vunpack.c.l.b16 %v3772
        %v5920 = vunpack.c.h.b16 %v3772
        %v5921 = vunpack.c.l.b16 %v3773
        %v5922 = vunpack.c.h.b16 %v3773
        %v5923 = vunpack.c.l.b16 %v3774
        %v5924 = vunpack.c.h.b16 %v3774
        %v5925 = vunpack.c.l.b16 %v3775
        %v5926 = vunpack.c.h.b16 %v3775
        %v5927 = vunpack.c.l.b16 %v3776
        %v5928 = vunpack.c.h.b16 %v3776
        %v5929 = vunpack.c.l.b16 %v3777
        %v5930 = vunpack.c.h.b16 %v3777
        %v5931 = vunpack.c.l.b16 %v3778
        %v5932 = vunpack.c.h.b16 %v3778
        %v5933 = vunpack.c.l.b16 %v3779
        %v5934 = vunpack.c.h.b16 %v3779
        %v5935 = vunpack.c.l.b16 %v3780
        %v5936 = vunpack.c.h.b16 %v3780
        %v5937 = vunpack.c.l.b16 %v3781
        %v5938 = vunpack.c.h.b16 %v3781
        %v5939 = vunpack.c.l.b16 %v3782
        %v5940 = vunpack.c.h.b16 %v3782
        %v5941 = vunpack.c.l.b16 %v3783
        %v5942 = vunpack.c.h.b16 %v3783
        %v5943 = vunpack.c.l.b16 %v3784
        %v5944 = vunpack.c.h.b16 %v3784
        %v5945 = vunpack.c.l.b16 %v3785
        %v5946 = vunpack.c.h.b16 %v3785
        %v5947 = vunpack.c.l.b16 %v3786
        %v5948 = vunpack.c.h.b16 %v3786
        %v5949 = vunpack.c.l.b16 %v3787
        %v5950 = vunpack.c.h.b16 %v3787
        %v5951 = vunpack.c.l.b16 %v3788
        %v5952 = vunpack.c.h.b16 %v3788
        %v5953 = vunpack.c.l.b16 %v3789
        %v5954 = vunpack.c.h.b16 %v3789
        %v5955 = vunpack.c.l.b16 %v3790
        %v5956 = vunpack.c.h.b16 %v3790
        %v5957 = vunpack.c.l.b16 %v3791
        %v5958 = vunpack.c.h.b16 %v3791
        %v5959 = vunpack.c.l.b16 %v3792
        %v5960 = vunpack.c.h.b16 %v3792
        %v5961 = vunpack.c.l.b16 %v3793
        %v5962 = vunpack.c.h.b16 %v3793
        %v5963 = vunpack.c.l.b16 %v3794
        %v5964 = vunpack.c.h.b16 %v3794
        %v5965 = vunpack.c.l.b16 %v3795
        %v5966 = vunpack.c.h.b16 %v3795
        %v5967 = vunpack.c.l.b16 %v3796
        %v5968 = vunpack.c.h.b16 %v3796
        %v5969 = vunpack.c.l.b16 %v3797
        %v5970 = vunpack.c.h.b16 %v3797
        %v5971 = vunpack.c.l.b16 %v3798
        %v5972 = vunpack.c.h.b16 %v3798
        %v5973 = vunpack.c.l.b16 %v3799
        %v5974 = vunpack.c.h.b16 %v3799
        %v5975 = vunpack.c.l.b16 %v3800
        %v5976 = vunpack.c.h.b16 %v3800
        %v5977 = vunpack.c.l.b16 %v3801
        %v5978 = vunpack.c.h.b16 %v3801
        %v5979 = vunpack.c.l.b16 %v3802
        %v5980 = vunpack.c.h.b16 %v3802
        %v5981 = vunpack.c.l.b16 %v3803
        %v5982 = vunpack.c.h.b16 %v3803
        %v5983 = vunpack.c.l.b16 %v3804
        %v5984 = vunpack.c.h.b16 %v3804
        %v5985 = vunpack.c.l.b16 %v3805
        %v5986 = vunpack.c.h.b16 %v3805
        %v5987 = vunpack.c.l.b16 %v3806
        %v5988 = vunpack.c.h.b16 %v3806
        %v5989 = vunpack.c.l.b16 %v3807
        %v5990 = vunpack.c.h.b16 %v3807
        %v5991 = vunpack.c.l.b16 %v3808
        %v5992 = vunpack.c.h.b16 %v3808
        %v5993 = vunpack.c.l.b16 %v3809
        %v5994 = vunpack.c.h.b16 %v3809
        %v5995 = vunpack.c.l.b16 %v3810
        %v5996 = vunpack.c.h.b16 %v3810
        %v5997 = vunpack.c.l.b16 %v3811
        %v5998 = vunpack.c.h.b16 %v3811
        %v5999 = vunpack.c.l.b16 %v3812
        %v6000 = vunpack.c.h.b16 %v3812
        %v6001 = vunpack.c.l.b16 %v3813
        %v6002 = vunpack.c.h.b16 %v3813
        %v6003 = vunpack.c.l.b16 %v3814
        %v6004 = vunpack.c.h.b16 %v3814
        %v6005 = vunpack.c.l.b16 %v3815
        %v6006 = vunpack.c.h.b16 %v3815
        %v6007 = vunpack.c.l.b16 %v3816
        %v6008 = vunpack.c.h.b16 %v3816
        %v6009 = vunpack.c.l.b16 %v3817
        %v6010 = vunpack.c.h.b16 %v3817
        %v6011 = vunpack.c.l.b16 %v3818
        %v6012 = vunpack.c.h.b16 %v3818
        %v6013 = vunpack.c.l.b16 %v3819
        %v6014 = vunpack.c.h.b16 %v3819
        %v6015 = vunpack.c.l.b16 %v3820
        %v6016 = vunpack.c.h.b16 %v3820
        %v6017 = vunpack.c.l.b16 %v3821
        %v6018 = vunpack.c.h.b16 %v3821
        %v6019 = vunpack.c.l.b16 %v3822
        %v6020 = vunpack.c.h.b16 %v3822
        %v6021 = vunpack.c.l.b16 %v3823
        %v6022 = vunpack.c.h.b16 %v3823
        %v6023 = vunpack.c.l.b16 %v3824
        %v6024 = vunpack.c.h.b16 %v3824
        %v6025 = vunpack.c.l.b16 %v3825
        %v6026 = vunpack.c.h.b16 %v3825
        %v6027 = vunpack.c.l.b16 %v3826
        %v6028 = vunpack.c.h.b16 %v3826
        %v6029 = vunpack.c.l.b16 %v3827
        %v6030 = vunpack.c.h.b16 %v3827
        %v6031 = vunpack.c.l.b16 %v3828
        %v6032 = vunpack.c.h.b16 %v3828
        %v6033 = vunpack.c.l.b16 %v3829
        %v6034 = vunpack.c.h.b16 %v3829
        %v6035 = vunpack.c.l.b16 %v3830
        %v6036 = vunpack.c.h.b16 %v3830
        %v6037 = vunpack.c.l.b16 %v3831
        %v6038 = vunpack.c.h.b16 %v3831
        %v6039 = vunpack.c.l.b16 %v3832
        %v6040 = vunpack.c.h.b16 %v3832
        %v6041 = vunpack.c.l.b16 %v3833
        %v6042 = vunpack.c.h.b16 %v3833
        %v6043 = vunpack.c.l.b16 %v3834
        %v6044 = vunpack.c.h.b16 %v3834
        %v6045 = vunpack.c.l.b16 %v3835
        %v6046 = vunpack.c.h.b16 %v3835
        %v6047 = vunpack.c.l.b16 %v3836
        %v6048 = vunpack.c.h.b16 %v3836
        %v6049 = vunpack.c.l.b16 %v3837
        %v6050 = vunpack.c.h.b16 %v3837
        %v6051 = vunpack.c.l.b16 %v3838
        %v6052 = vunpack.c.h.b16 %v3838
        %v6053 = vunpack.c.l.b16 %v3839
        %v6054 = vunpack.c.h.b16 %v3839
        %v6055 = vunpack.c.l.b16 %v3840
        %v6056 = vunpack.c.h.b16 %v3840
        %v6057 = vunpack.c.l.b16 %v3841
        %v6058 = vunpack.c.h.b16 %v3841
        %v6059 = vunpack.c.l.b16 %v3842
        %v6060 = vunpack.c.h.b16 %v3842
        %v6061 = vunpack.c.l.b16 %v3843
        %v6062 = vunpack.c.h.b16 %v3843
        %v6063 = vunpack.c.l.b16 %v3844
        %v6064 = vunpack.c.h.b16 %v3844
        %v6065 = vunpack.c.l.b16 %v3845
        %v6066 = vunpack.c.h.b16 %v3845
        %v6067 = vunpack.c.l.b16 %v3846
        %v6068 = vunpack.c.h.b16 %v3846
        %v6069 = vunpack.c.l.b16 %v3847
        %v6070 = vunpack.c.h.b16 %v3847
        %v6071 = vunpack.c.l.b16 %v3848
        %v6072 = vunpack.c.h.b16 %v3848
        %v6073 = vunpack.c.l.b16 %v3849
        %v6074 = vunpack.c.h.b16 %v3849
        %v6075 = vunpack.c.l.b16 %v3850
        %v6076 = vunpack.c.h.b16 %v3850
        %v6077 = vunpack.c.l.b16 %v3851
        %v6078 = vunpack.c.h.b16 %v3851
        %v6079 = vunpack.c.l.b16 %v3852
        %v6080 = vunpack.c.h.b16 %v3852
        %v6081 = vunpack.c.l.b16 %v3853
        %v6082 = vunpack.c.h.b16 %v3853
        %v6083 = vunpack.c.l.b16 %v3854
        %v6084 = vunpack.c.h.b16 %v3854
        %v6085 = vunpack.c.l.b16 %v3855
        %v6086 = vunpack.c.h.b16 %v3855
        %v6087 = vunpack.c.l.b16 %v3856
        %v6088 = vunpack.c.h.b16 %v3856
        %v6089 = vunpack.c.l.b16 %v3857
        %v6090 = vunpack.c.h.b16 %v3857
        %v6091 = vunpack.c.l.b16 %v3858
        %v6092 = vunpack.c.h.b16 %v3858
        %v6093 = vunpack.c.l.b16 %v3859
        %v6094 = vunpack.c.h.b16 %v3859
        %v6095 = vunpack.c.l.b16 %v3860
        %v6096 = vunpack.c.h.b16 %v3860
        %v6097 = vunpack.c.l.b16 %v3861
        %v6098 = vunpack.c.h.b16 %v3861
        %v6099 = vunpack.c.l.b16 %v3862
        %v6100 = vunpack.c.h.b16 %v3862
        %v6101 = vunpack.c.l.b16 %v3863
        %v6102 = vunpack.c.h.b16 %v3863
        %v6103 = vunpack.c.l.b16 %v3864
        %v6104 = vunpack.c.h.b16 %v3864
        %v6105 = vunpack.c.l.b16 %v3865
        %v6106 = vunpack.c.h.b16 %v3865
        %v6107 = vunpack.c.l.b16 %v3866
        %v6108 = vunpack.c.h.b16 %v3866
        %v6109 = vunpack.c.l.b16 %v3867
        %v6110 = vunpack.c.h.b16 %v3867
        %v6111 = vunpack.c.l.b16 %v3868
        %v6112 = vunpack.c.h.b16 %v3868
        %v6113 = vunpack.c.l.b16 %v3869
        %v6114 = vunpack.c.h.b16 %v3869
        %v6115 = vunpack.c.l.b16 %v3870
        %v6116 = vunpack.c.h.b16 %v3870
        %v6117 = vunpack.c.l.b16 %v3871
        %v6118 = vunpack.c.h.b16 %v3871
        %v6119 = vunpack.c.l.b16 %v3872
        %v6120 = vunpack.c.h.b16 %v3872
        %v6121 = vunpack.c.l.b16 %v3873
        %v6122 = vunpack.c.h.b16 %v3873
        %v6123 = vunpack.c.l.b16 %v3874
        %v6124 = vunpack.c.h.b16 %v3874
        %v6125 = vunpack.c.l.b16 %v3875
        %v6126 = vunpack.c.h.b16 %v3875
        %v6127 = vunpack.c.l.b16 %v3876
        %v6128 = vunpack.c.h.b16 %v3876
        %v6129 = vunpack.c.l.b16 %v3877
        %v6130 = vunpack.c.h.b16 %v3877
        %v6131 = vunpack.c.l.b16 %v3878
        %v6132 = vunpack.c.h.b16 %v3878
        %v6133 = vunpack.c.l.b16 %v3879
        %v6134 = vunpack.c.h.b16 %v3879
        %v6135 = vunpack.c.l.b16 %v3880
        %v6136 = vunpack.c.h.b16 %v3880
        %v6137 = vunpack.c.l.b16 %v3881
        %v6138 = vunpack.c.h.b16 %v3881
        %v6139 = vunpack.c.l.b16 %v3882
        %v6140 = vunpack.c.h.b16 %v3882
        %v6141 = vunpack.c.l.b16 %v3883
        %v6142 = vunpack.c.h.b16 %v3883
        %v6143 = vunpack.c.l.b16 %v3884
        %v6144 = vunpack.c.h.b16 %v3884
        %v6145 = vunpack.c.l.b16 %v3885
        %v6146 = vunpack.c.h.b16 %v3885
        %v6147 = vunpack.c.l.b16 %v3886
        %v6148 = vunpack.c.h.b16 %v3886
        %v6149 = vunpack.c.l.b16 %v3887
        %v6150 = vunpack.c.h.b16 %v3887
        %v6151 = vunpack.c.l.b16 %v3888
        %v6152 = vunpack.c.h.b16 %v3888
        %v6153 = vunpack.c.l.b16 %v3889
        %v6154 = vunpack.c.h.b16 %v3889
        %v6155 = vunpack.c.l.b16 %v3890
        %v6156 = vunpack.c.h.b16 %v3890
        %v6157 = vunpack.c.l.b16 %v3891
        %v6158 = vunpack.c.h.b16 %v3891
        %v6159 = vunpack.c.l.b16 %v3892
        %v6160 = vunpack.c.h.b16 %v3892
        %v6161 = vunpack.c.l.b16 %v3893
        %v6162 = vunpack.c.h.b16 %v3893
        %v6163 = vunpack.c.l.b16 %v3894
        %v6164 = vunpack.c.h.b16 %v3894
        %v6165 = vunpack.c.l.b16 %v3895
        %v6166 = vunpack.c.h.b16 %v3895
        %v6167 = vunpack.c.l.b16 %v3896
        %v6168 = vunpack.c.h.b16 %v3896
        %v6169 = vunpack.c.l.b16 %v3897
        %v6170 = vunpack.c.h.b16 %v3897
        %v6171 = vunpack.c.l.b16 %v3898
        %v6172 = vunpack.c.h.b16 %v3898
        %v6173 = vunpack.c.l.b16 %v3899
        %v6174 = vunpack.c.h.b16 %v3899
        %v6175 = vunpack.c.l.b16 %v3900
        %v6176 = vunpack.c.h.b16 %v3900
        %v6177 = vunpack.c.l.b16 %v3901
        %v6178 = vunpack.c.h.b16 %v3901
        %v6179 = vunpack.c.l.b16 %v3902
        %v6180 = vunpack.c.h.b16 %v3902
        %v6181 = vunpack.c.l.b16 %v3903
        %v6182 = vunpack.c.h.b16 %v3903
        %v6183 = vunpack.c.l.b16 %v3904
        %v6184 = vunpack.c.h.b16 %v3904
        %v6185 = vunpack.c.l.b16 %v3905
        %v6186 = vunpack.c.h.b16 %v3905
        %v6187 = vunpack.c.l.b16 %v3906
        %v6188 = vunpack.c.h.b16 %v3906
        %v6189 = vunpack.c.l.b16 %v3907
        %v6190 = vunpack.c.h.b16 %v3907
        %v6191 = vunpack.c.l.b16 %v3908
        %v6192 = vunpack.c.h.b16 %v3908
        %v6193 = vunpack.c.l.b16 %v3909
        %v6194 = vunpack.c.h.b16 %v3909
        %v6195 = vunpack.c.l.b16 %v3910
        %v6196 = vunpack.c.h.b16 %v3910
        %v6197 = vunpack.c.l.b16 %v3911
        %v6198 = vunpack.c.h.b16 %v3911
        %v6199 = vunpack.c.l.b16 %v3912
        %v6200 = vunpack.c.h.b16 %v3912
        %v6201 = vunpack.c.l.b16 %v3913
        %v6202 = vunpack.c.h.b16 %v3913
        %v6203 = vunpack.c.l.b16 %v3914
        %v6204 = vunpack.c.h.b16 %v3914
        %v6205 = vunpack.c.l.b16 %v3915
        %v6206 = vunpack.c.h.b16 %v3915
        %v6207 = vunpack.c.l.b16 %v3916
        %v6208 = vunpack.c.h.b16 %v3916
        %v6209 = vunpack.c.l.b16 %v3917
        %v6210 = vunpack.c.h.b16 %v3917
        %v6211 = vunpack.c.l.b16 %v3918
        %v6212 = vunpack.c.h.b16 %v3918
        %v6213 = vunpack.c.l.b16 %v3919
        %v6214 = vunpack.c.h.b16 %v3919
        %v6215 = vunpack.c.l.b16 %v3920
        %v6216 = vunpack.c.h.b16 %v3920
        %v6217 = vunpack.c.l.b16 %v3921
        %v6218 = vunpack.c.h.b16 %v3921
        %v6219 = vunpack.c.l.b16 %v3922
        %v6220 = vunpack.c.h.b16 %v3922
        %v6221 = vunpack.c.l.b16 %v3923
        %v6222 = vunpack.c.h.b16 %v3923
        %v6223 = vunpack.c.l.b16 %v3924
        %v6224 = vunpack.c.h.b16 %v3924
        %v6225 = vunpack.c.l.b16 %v3925
        %v6226 = vunpack.c.h.b16 %v3925
        %v6227 = vunpack.c.l.b16 %v3926
        %v6228 = vunpack.c.h.b16 %v3926
        %v6229 = vunpack.c.l.b16 %v3927
        %v6230 = vunpack.c.h.b16 %v3927
        %v6231 = vunpack.c.l.b16 %v3928
        %v6232 = vunpack.c.h.b16 %v3928
        %v6233 = vunpack.c.l.b16 %v3929
        %v6234 = vunpack.c.h.b16 %v3929
        %v6235 = vunpack.c.l.b16 %v3930
        %v6236 = vunpack.c.h.b16 %v3930
        %v6237 = vunpack.c.l.b16 %v3931
        %v6238 = vunpack.c.h.b16 %v3931
        %v6239 = vunpack.c.l.b16 %v3932
        %v6240 = vunpack.c.h.b16 %v3932
        %v6241 = vunpack.c.l.b16 %v3933
        %v6242 = vunpack.c.h.b16 %v3933
        %v6243 = vunpack.c.l.b16 %v3934
        %v6244 = vunpack.c.h.b16 %v3934
        %v6245 = vunpack.c.l.b16 %v3935
        %v6246 = vunpack.c.h.b16 %v3935
        %v6247 = vunpack.c.l.b16 %v3936
        %v6248 = vunpack.c.h.b16 %v3936
        %v6249 = vunpack.c.l.b16 %v3937
        %v6250 = vunpack.c.h.b16 %v3937
        %v6251 = vunpack.c.l.b16 %v3938
        %v6252 = vunpack.c.h.b16 %v3938
        %v6253 = vunpack.c.l.b16 %v3939
        %v6254 = vunpack.c.h.b16 %v3939
        %v6255 = vunpack.c.l.b16 %v3940
        %v6256 = vunpack.c.h.b16 %v3940
        %v6257 = vunpack.c.l.b16 %v3941
        %v6258 = vunpack.c.h.b16 %v3941
        %v6259 = vunpack.c.l.b16 %v3942
        %v6260 = vunpack.c.h.b16 %v3942
        %v6261 = vunpack.c.l.b16 %v3943
        %v6262 = vunpack.c.h.b16 %v3943
        %v6263 = vunpack.c.l.b16 %v3944
        %v6264 = vunpack.c.h.b16 %v3944
        %v6265 = vunpack.c.l.b16 %v3945
        %v6266 = vunpack.c.h.b16 %v3945
        %v6267 = vunpack.c.l.b16 %v3946
        %v6268 = vunpack.c.h.b16 %v3946
        %v6269 = vunpack.c.l.b16 %v3947
        %v6270 = vunpack.c.h.b16 %v3947
        %v6271 = vunpack.c.l.b16 %v3948
        %v6272 = vunpack.c.h.b16 %v3948
        %v6273 = vunpack.c.l.b16 %v3949
        %v6274 = vunpack.c.h.b16 %v3949
        %v6275 = vunpack.c.l.b16 %v3950
        %v6276 = vunpack.c.h.b16 %v3950
        %v6277 = vunpack.c.l.b16 %v3951
        %v6278 = vunpack.c.h.b16 %v3951
        %v6279 = vunpack.c.l.b16 %v3952
        %v6280 = vunpack.c.h.b16 %v3952
        %v6281 = vunpack.c.l.b16 %v3953
        %v6282 = vunpack.c.h.b16 %v3953
        %v6283 = vunpack.c.l.b16 %v3954
        %v6284 = vunpack.c.h.b16 %v3954
        %v6285 = vunpack.c.l.b16 %v3955
        %v6286 = vunpack.c.h.b16 %v3955
        %v6287 = vunpack.c.l.b16 %v3956
        %v6288 = vunpack.c.h.b16 %v3956
        %v6289 = vunpack.c.l.b16 %v3957
        %v6290 = vunpack.c.h.b16 %v3957
        %v6291 = vunpack.c.l.b16 %v3958
        %v6292 = vunpack.c.h.b16 %v3958
        %v6293 = vunpack.c.l.b16 %v3959
        %v6294 = vunpack.c.h.b16 %v3959
        %v6295 = vunpack.c.l.b16 %v3960
        %v6296 = vunpack.c.h.b16 %v3960
        %v6297 = vunpack.c.l.b16 %v3961
        %v6298 = vunpack.c.h.b16 %v3961
        %v6299 = vunpack.c.l.b16 %v3962
        %v6300 = vunpack.c.h.b16 %v3962
        %v6301 = vunpack.c.l.b16 %v3963
        %v6302 = vunpack.c.h.b16 %v3963
        %v6303 = vunpack.c.l.b16 %v3964
        %v6304 = vunpack.c.h.b16 %v3964
        %v6305 = vunpack.c.l.b16 %v3965
        %v6306 = vunpack.c.h.b16 %v3965
        %v6307 = vunpack.c.l.b16 %v3966
        %v6308 = vunpack.c.h.b16 %v3966
        %v6309 = vunpack.c.l.b16 %v3967
        %v6310 = vunpack.c.h.b16 %v3967
        %v6311 = vunpack.c.l.b16 %v3968
        %v6312 = vunpack.c.h.b16 %v3968
        %v6313 = vunpack.c.l.b16 %v3969
        %v6314 = vunpack.c.h.b16 %v3969
        %v6315 = vunpack.c.l.b16 %v3970
        %v6316 = vunpack.c.h.b16 %v3970
        %v6317 = vunpack.c.l.b16 %v3971
        %v6318 = vunpack.c.h.b16 %v3971
        %v6319 = vunpack.c.l.b16 %v3972
        %v6320 = vunpack.c.h.b16 %v3972
        %v6321 = vunpack.c.l.b16 %v3973
        %v6322 = vunpack.c.h.b16 %v3973
        %v6323 = vunpack.c.l.b16 %v3974
        %v6324 = vunpack.c.h.b16 %v3974
        %v6325 = vunpack.c.l.b16 %v3975
        %v6326 = vunpack.c.h.b16 %v3975
        %v6327 = vunpack.c.l.b16 %v3976
        %v6328 = vunpack.c.h.b16 %v3976
        %v6329 = vunpack.c.l.b16 %v3977
        %v6330 = vunpack.c.h.b16 %v3977
        %v6331 = vunpack.c.l.b16 %v3978
        %v6332 = vunpack.c.h.b16 %v3978
        %v6333 = vunpack.c.l.b16 %v3979
        %v6334 = vunpack.c.h.b16 %v3979
        %v6335 = vunpack.c.l.b16 %v3980
        %v6336 = vunpack.c.h.b16 %v3980
        %v6337 = vunpack.c.l.b16 %v3981
        %v6338 = vunpack.c.h.b16 %v3981
        %v6339 = vunpack.c.l.b16 %v3982
        %v6340 = vunpack.c.h.b16 %v3982
        %v6341 = vunpack.c.l.b16 %v3983
        %v6342 = vunpack.c.h.b16 %v3983
        %v6343 = vunpack.c.l.b16 %v3984
        %v6344 = vunpack.c.h.b16 %v3984
        %v6345 = vunpack.c.l.b16 %v3985
        %v6346 = vunpack.c.h.b16 %v3985
        %v6347 = vunpack.c.l.b16 %v3986
        %v6348 = vunpack.c.h.b16 %v3986
        %v6349 = vunpack.c.l.b16 %v3987
        %v6350 = vunpack.c.h.b16 %v3987
        %v6351 = vunpack.c.l.b16 %v3988
        %v6352 = vunpack.c.h.b16 %v3988
        %v6353 = vunpack.c.l.b16 %v3989
        %v6354 = vunpack.c.h.b16 %v3989
        %v6355 = vunpack.c.l.b16 %v3990
        %v6356 = vunpack.c.h.b16 %v3990
        %v6357 = vunpack.c.l.b16 %v3991
        %v6358 = vunpack.c.h.b16 %v3991
        %v6359 = vunpack.c.l.b16 %v3992
        %v6360 = vunpack.c.h.b16 %v3992
        %v6361 = vunpack.c.l.b16 %v3993
        %v6362 = vunpack.c.h.b16 %v3993
        %v6363 = vunpack.c.l.b16 %v3994
        %v6364 = vunpack.c.h.b16 %v3994
        %v6365 = vunpack.c.l.b16 %v3995
        %v6366 = vunpack.c.h.b16 %v3995
        %v6367 = vunpack.c.l.b16 %v3996
        %v6368 = vunpack.c.h.b16 %v3996
        %v6369 = vunpack.c.l.b16 %v3997
        %v6370 = vunpack.c.h.b16 %v3997
        %v6371 = vunpack.c.l.b16 %v3998
        %v6372 = vunpack.c.h.b16 %v3998
        %v6373 = vunpack.c.l.b16 %v3999
        %v6374 = vunpack.c.h.b16 %v3999
        %v6375 = vunpack.c.l.b16 %v4000
        %v6376 = vunpack.c.h.b16 %v4000
        %v6377 = vunpack.c.l.b16 %v4001
        %v6378 = vunpack.c.h.b16 %v4001
        %v6379 = vunpack.c.l.b16 %v4002
        %v6380 = vunpack.c.h.b16 %v4002
        %v6381 = vunpack.c.l.b16 %v4003
        %v6382 = vunpack.c.h.b16 %v4003
        %v6383 = vunpack.c.l.b16 %v4004
        %v6384 = vunpack.c.h.b16 %v4004
        %v6385 = vunpack.c.l.b16 %v4005
        %v6386 = vunpack.c.h.b16 %v4005
        %v6387 = vunpack.c.l.b16 %v4006
        %v6388 = vunpack.c.h.b16 %v4006
        %v6389 = vunpack.c.l.b16 %v4007
        %v6390 = vunpack.c.h.b16 %v4007
        %v6391 = vunpack.c.l.b16 %v4008
        %v6392 = vunpack.c.h.b16 %v4008
        %v6393 = vunpack.c.l.b16 %v4009
        %v6394 = vunpack.c.h.b16 %v4009
        %v6395 = vunpack.c.l.b16 %v4010
        %v6396 = vunpack.c.h.b16 %v4010
        %v6397 = vunpack.c.l.b16 %v4011
        %v6398 = vunpack.c.h.b16 %v4011
        %v6399 = vunpack.c.l.b16 %v4012
        %v6400 = vunpack.c.h.b16 %v4012
        %v6401 = vunpack.c.l.b16 %v4013
        %v6402 = vunpack.c.h.b16 %v4013
        %v6403 = vunpack.c.l.b16 %v4014
        %v6404 = vunpack.c.h.b16 %v4014
        %v6405 = vunpack.c.l.b16 %v4015
        %v6406 = vunpack.c.h.b16 %v4015
        %v6407 = vunpack.c.l.b16 %v4016
        %v6408 = vunpack.c.h.b16 %v4016
        %v6409 = vunpack.c.l.b16 %v4017
        %v6410 = vunpack.c.h.b16 %v4017
        %v6411 = vunpack.c.l.b16 %v4018
        %v6412 = vunpack.c.h.b16 %v4018
        %v6413 = vunpack.c.l.b16 %v4019
        %v6414 = vunpack.c.h.b16 %v4019
        %v6415 = vunpack.c.l.b16 %v4020
        %v6416 = vunpack.c.h.b16 %v4020
        %v6417 = vunpack.c.l.b16 %v4021
        %v6418 = vunpack.c.h.b16 %v4021
        %v6419 = vunpack.c.l.b16 %v4022
        %v6420 = vunpack.c.h.b16 %v4022
        %v6421 = vunpack.c.l.b16 %v4023
        %v6422 = vunpack.c.h.b16 %v4023
        %v6423 = vunpack.c.l.b16 %v4024
        %v6424 = vunpack.c.h.b16 %v4024
        %v6425 = vunpack.c.l.b16 %v4025
        %v6426 = vunpack.c.h.b16 %v4025
        %v6427 = vunpack.c.l.b16 %v4026
        %v6428 = vunpack.c.h.b16 %v4026
        %v6429 = vunpack.c.l.b16 %v4027
        %v6430 = vunpack.c.h.b16 %v4027
        %v6431 = vunpack.c.l.b16 %v4028
        %v6432 = vunpack.c.h.b16 %v4028
        %v6433 = vunpack.c.l.b16 %v4029
        %v6434 = vunpack.c.h.b16 %v4029
        %v6435 = vunpack.c.l.b16 %v4030
        %v6436 = vunpack.c.h.b16 %v4030
        %v6437 = vunpack.c.l.b16 %v4031
        %v6438 = vunpack.c.h.b16 %v4031
        %v6439 = vunpack.c.l.b16 %v4032
        %v6440 = vunpack.c.h.b16 %v4032
        %v6441 = vunpack.c.l.b16 %v4033
        %v6442 = vunpack.c.h.b16 %v4033
        %v6443 = vunpack.c.l.b16 %v4034
        %v6444 = vunpack.c.h.b16 %v4034
        %v6445 = vunpack.c.l.b16 %v4035
        %v6446 = vunpack.c.h.b16 %v4035
        %v6447 = vunpack.c.l.b16 %v4036
        %v6448 = vunpack.c.h.b16 %v4036
        %v6449 = vunpack.c.l.b16 %v4037
        %v6450 = vunpack.c.h.b16 %v4037
        %v6451 = vunpack.c.l.b16 %v4038
        %v6452 = vunpack.c.h.b16 %v4038
        %v6453 = vunpack.c.l.b16 %v4039
        %v6454 = vunpack.c.h.b16 %v4039
        %v6455 = vunpack.c.l.b16 %v4040
        %v6456 = vunpack.c.h.b16 %v4040
        %v6457 = vunpack.c.l.b16 %v4041
        %v6458 = vunpack.c.h.b16 %v4041
        %v6459 = vunpack.c.l.b16 %v4042
        %v6460 = vunpack.c.h.b16 %v4042
        %v6461 = vunpack.c.l.b16 %v4043
        %v6462 = vunpack.c.h.b16 %v4043
        %v6463 = vunpack.c.l.b16 %v4044
        %v6464 = vunpack.c.h.b16 %v4044
        %v6465 = vunpack.c.l.b16 %v4045
        %v6466 = vunpack.c.h.b16 %v4045
        %v6467 = vunpack.c.l.b16 %v4046
        %v6468 = vunpack.c.h.b16 %v4046
        %v6469 = vunpack.c.l.b16 %v4047
        %v6470 = vunpack.c.h.b16 %v4047
        %v6471 = vunpack.c.l.b16 %v4048
        %v6472 = vunpack.c.h.b16 %v4048
        %v6473 = vunpack.c.l.b16 %v4049
        %v6474 = vunpack.c.h.b16 %v4049
        %v6475 = vunpack.c.l.b16 %v4050
        %v6476 = vunpack.c.h.b16 %v4050
        %v6477 = vunpack.c.l.b16 %v4051
        %v6478 = vunpack.c.h.b16 %v4051
        %v6479 = vunpack.c.l.b16 %v4052
        %v6480 = vunpack.c.h.b16 %v4052
        %v6481 = vunpack.c.l.b16 %v4053
        %v6482 = vunpack.c.h.b16 %v4053
        %v6483 = vunpack.c.l.b16 %v4054
        %v6484 = vunpack.c.h.b16 %v4054
        %v6485 = vunpack.c.l.b16 %v4055
        %v6486 = vunpack.c.h.b16 %v4055
        %v6487 = vunpack.c.l.b16 %v4056
        %v6488 = vunpack.c.h.b16 %v4056
        %v6489 = vunpack.c.l.b16 %v4057
        %v6490 = vunpack.c.h.b16 %v4057
        %v6491 = vunpack.c.l.b16 %v4058
        %v6492 = vunpack.c.h.b16 %v4058
        %v6493 = vunpack.c.l.b16 %v4059
        %v6494 = vunpack.c.h.b16 %v4059
        %v6495 = vunpack.c.l.b16 %v4060
        %v6496 = vunpack.c.h.b16 %v4060
        %v6497 = vunpack.c.l.b16 %v4061
        %v6498 = vunpack.c.h.b16 %v4061
        %v6499 = vunpack.c.l.b16 %v4062
        %v6500 = vunpack.c.h.b16 %v4062
        %v6501 = vunpack.c.l.b16 %v4063
        %v6502 = vunpack.c.h.b16 %v4063
        %v6503 = vunpack.c.l.b16 %v4064
        %v6504 = vunpack.c.h.b16 %v4064
        %v6505 = vunpack.c.l.b16 %v4065
        %v6506 = vunpack.c.h.b16 %v4065
        %v6507 = vunpack.c.l.b16 %v4066
        %v6508 = vunpack.c.h.b16 %v4066
        %v6509 = vunpack.c.l.b16 %v4067
        %v6510 = vunpack.c.h.b16 %v4067
        %v6511 = vunpack.c.l.b16 %v4068
        %v6512 = vunpack.c.h.b16 %v4068
        %v6513 = vunpack.c.l.b16 %v4069
        %v6514 = vunpack.c.h.b16 %v4069
        %v6515 = vunpack.c.l.b16 %v4070
        %v6516 = vunpack.c.h.b16 %v4070
        %v6517 = vunpack.c.l.b16 %v4071
        %v6518 = vunpack.c.h.b16 %v4071
        %v6519 = vunpack.c.l.b16 %v4072
        %v6520 = vunpack.c.h.b16 %v4072
        %v6521 = vunpack.c.l.b16 %v4073
        %v6522 = vunpack.c.h.b16 %v4073
        %v6523 = vunpack.c.l.b16 %v4074
        %v6524 = vunpack.c.h.b16 %v4074
        %v6525 = vunpack.c.l.b16 %v4075
        %v6526 = vunpack.c.h.b16 %v4075
        %v6527 = vunpack.c.l.b16 %v4076
        %v6528 = vunpack.c.h.b16 %v4076
        %v6529 = vunpack.c.l.b16 %v4077
        %v6530 = vunpack.c.h.b16 %v4077
        %v6531 = vunpack.c.l.b16 %v4078
        %v6532 = vunpack.c.h.b16 %v4078
        %v6533 = vunpack.c.l.b16 %v4079
        %v6534 = vunpack.c.h.b16 %v4079
        %v6535 = vunpack.c.l.b16 %v4080
        %v6536 = vunpack.c.h.b16 %v4080
        %v6537 = vunpack.c.l.b16 %v4081
        %v6538 = vunpack.c.h.b16 %v4081
        %v6539 = vunpack.c.l.b16 %v4082
        %v6540 = vunpack.c.h.b16 %v4082
        %v6541 = vunpack.c.l.b16 %v4083
        %v6542 = vunpack.c.h.b16 %v4083
        %v6543 = vunpack.c.l.b16 %v4084
        %v6544 = vunpack.c.h.b16 %v4084
        %v6545 = vunpack.c.l.b16 %v4085
        %v6546 = vunpack.c.h.b16 %v4085
        %v6547 = vunpack.c.l.b16 %v4086
        %v6548 = vunpack.c.h.b16 %v4086
        %v6549 = vunpack.c.l.b16 %v4087
        %v6550 = vunpack.c.h.b16 %v4087
        %v6551 = vunpack.c.l.b16 %v4088
        %v6552 = vunpack.c.h.b16 %v4088
        %v6553 = vunpack.c.l.b16 %v4089
        %v6554 = vunpack.c.h.b16 %v4089
        %v6555 = vunpack.c.l.b16 %v4090
        %v6556 = vunpack.c.h.b16 %v4090
        %v6557 = vunpack.c.l.b16 %v4091
        %v6558 = vunpack.c.h.b16 %v4091
        %v6559 = vunpack.c.l.b16 %v4092
        %v6560 = vunpack.c.h.b16 %v4092
        %v6561 = vunpack.c.l.b16 %v4093
        %v6562 = vunpack.c.h.b16 %v4093
        %v6563 = vunpack.c.l.b16 %v4094
        %v6564 = vunpack.c.h.b16 %v4094
        %v6565 = vunpack.c.l.b16 %v4095
        %v6566 = vunpack.c.h.b16 %v4095
        %v6567 = vunpack.c.l.b16 %v4096
        %v6568 = vunpack.c.h.b16 %v4096
        %v6569 = vunpack.c.l.b16 %v4097
        %v6570 = vunpack.c.h.b16 %v4097
        %v6571 = vunpack.c.l.b16 %v4098
        %v6572 = vunpack.c.h.b16 %v4098
        %v6573 = vunpack.c.l.b16 %v4099
        %v6574 = vunpack.c.h.b16 %v4099
        %v6575 = vunpack.c.l.b16 %v4100
        %v6576 = vunpack.c.h.b16 %v4100
        %v6577 = vunpack.c.l.b16 %v4101
        %v6578 = vunpack.c.h.b16 %v4101
        %v6579 = vunpack.c.l.b16 %v4102
        %v6580 = vunpack.c.h.b16 %v4102
        %v6581 = vunpack.c.l.b16 %v4103
        %v6582 = vunpack.c.h.b16 %v4103
        %v6583 = vunpack.c.l.b16 %v4104
        %v6584 = vunpack.c.h.b16 %v4104
        %v6585 = vunpack.c.l.b16 %v4105
        %v6586 = vunpack.c.h.b16 %v4105
        %v6587 = vunpack.c.l.b16 %v4106
        %v6588 = vunpack.c.h.b16 %v4106
        %v6589 = vunpack.c.l.b16 %v4107
        %v6590 = vunpack.c.h.b16 %v4107
        %v6591 = vunpack.c.l.b16 %v4108
        %v6592 = vunpack.c.h.b16 %v4108
        %v6593 = vunpack.c.l.b16 %v4109
        %v6594 = vunpack.c.h.b16 %v4109
        %v6595 = vunpack.c.l.b16 %v4110
        %v6596 = vunpack.c.h.b16 %v4110
        %v6597 = vunpack.c.l.b16 %v4111
        %v6598 = vunpack.c.h.b16 %v4111
        %v6599 = vunpack.c.l.b16 %v4112
        %v6600 = vunpack.c.h.b16 %v4112
        %v6601 = vunpack.c.l.b16 %v4113
        %v6602 = vunpack.c.h.b16 %v4113
        %v6603 = vunpack.c.l.b16 %v4114
        %v6604 = vunpack.c.h.b16 %v4114
        %v6605 = vunpack.c.l.b16 %v4115
        %v6606 = vunpack.c.h.b16 %v4115
        %v6607 = vunpack.c.l.b16 %v4116
        %v6608 = vunpack.c.h.b16 %v4116
        %v6609 = vunpack.c.l.b16 %v4117
        %v6610 = vunpack.c.h.b16 %v4117
        %v6611 = vunpack.c.l.b16 %v4118
        %v6612 = vunpack.c.h.b16 %v4118
        %v6613 = vunpack.c.l.b16 %v4119
        %v6614 = vunpack.c.h.b16 %v4119
        %v6615 = vunpack.c.l.b16 %v4120
        %v6616 = vunpack.c.h.b16 %v4120
        %v6617 = vunpack.c.l.b16 %v4121
        %v6618 = vunpack.c.h.b16 %v4121
        %v6619 = vunpack.c.l.b16 %v4122
        %v6620 = vunpack.c.h.b16 %v4122
        %v6621 = vunpack.c.l.b16 %v4123
        %v6622 = vunpack.c.h.b16 %v4123
        %v6623 = vunpack.c.l.b16 %v4124
        %v6624 = vunpack.c.h.b16 %v4124
        %v6625 = vunpack.c.l.b16 %v4125
        %v6626 = vunpack.c.h.b16 %v4125
        %v6627 = vunpack.c.l.b16 %v4126
        %v6628 = vunpack.c.h.b16 %v4126
        %v6629 = vunpack.c.l.b16 %v4127
        %v6630 = vunpack.c.h.b16 %v4127
        %v6631 = vunpack.c.l.b16 %v4128
        %v6632 = vunpack.c.h.b16 %v4128
        %v6633 = vunpack.c.l.b16 %v4129
        %v6634 = vunpack.c.h.b16 %v4129
        %v6635 = vunpack.c.l.b16 %v4130
        %v6636 = vunpack.c.h.b16 %v4130
        %v6637 = vunpack.c.l.b16 %v4131
        %v6638 = vunpack.c.h.b16 %v4131
        %v6639 = vunpack.c.l.b16 %v4132
        %v6640 = vunpack.c.h.b16 %v4132
        %v6641 = vunpack.c.l.b16 %v4133
        %v6642 = vunpack.c.h.b16 %v4133
        %v6643 = vunpack.c.l.b16 %v4134
        %v6644 = vunpack.c.h.b16 %v4134
        %v6645 = vunpack.c.l.b16 %v4135
        %v6646 = vunpack.c.h.b16 %v4135
        %v6647 = vunpack.c.l.b16 %v4136
        %v6648 = vunpack.c.h.b16 %v4136
        %v6649 = vunpack.c.l.b16 %v4137
        %v6650 = vunpack.c.h.b16 %v4137
        %v6651 = vunpack.c.l.b16 %v4138
        %v6652 = vunpack.c.h.b16 %v4138
        %v6653 = vunpack.c.l.b16 %v4139
        %v6654 = vunpack.c.h.b16 %v4139
        %v6655 = vunpack.c.l.b16 %v4140
        %v6656 = vunpack.c.h.b16 %v4140
        %v6657 = vunpack.c.l.b16 %v4141
        %v6658 = vunpack.c.h.b16 %v4141
        %v6659 = vunpack.c.l.b16 %v4142
        %v6660 = vunpack.c.h.b16 %v4142
        %v6661 = vunpack.c.l.b16 %v4143
        %v6662 = vunpack.c.h.b16 %v4143
        %v6663 = vunpack.c.l.b16 %v4144
        %v6664 = vunpack.c.h.b16 %v4144
        %v6665 = vunpack.c.l.b16 %v4145
        %v6666 = vunpack.c.h.b16 %v4145
        %v6667 = vunpack.c.l.b16 %v4146
        %v6668 = vunpack.c.h.b16 %v4146
        %v6669 = vunpack.c.l.b16 %v4147
        %v6670 = vunpack.c.h.b16 %v4147
        %v6671 = vunpack.c.l.b16 %v4148
        %v6672 = vunpack.c.h.b16 %v4148
        %v6673 = vunpack.c.l.b16 %v4149
        %v6674 = vunpack.c.h.b16 %v4149
        %v6675 = vunpack.c.l.b16 %v4150
        %v6676 = vunpack.c.h.b16 %v4150
        %v6677 = vunpack.c.l.b16 %v4151
        %v6678 = vunpack.c.h.b16 %v4151
        %v6679 = vunpack.c.l.b16 %v4152
        %v6680 = vunpack.c.h.b16 %v4152
        %v6681 = vunpack.c.l.b16 %v4153
        %v6682 = vunpack.c.h.b16 %v4153
        %v6683 = vunpack.c.l.b16 %v4154
        %v6684 = vunpack.c.h.b16 %v4154
        %v6685 = vunpack.c.l.b16 %v4155
        %v6686 = vunpack.c.h.b16 %v4155
        %v6687 = vunpack.c.l.b16 %v4156
        %v6688 = vunpack.c.h.b16 %v4156
        %v6689 = vunpack.c.l.b16 %v4157
        %v6690 = vunpack.c.h.b16 %v4157
        %v6691 = vunpack.c.l.b16 %v4158
        %v6692 = vunpack.c.h.b16 %v4158
        %v6693 = vunpack.c.l.b16 %v4159
        %v6694 = vunpack.c.h.b16 %v4159
        %v6695 = vunpack.c.l.b16 %v4160
        %v6696 = vunpack.c.h.b16 %v4160
        %v6697 = vunpack.c.l.b16 %v4161
        %v6698 = vunpack.c.h.b16 %v4161
        %v6699 = vunpack.c.l.b16 %v4162
        %v6700 = vunpack.c.h.b16 %v4162
        %v6701 = vunpack.c.l.b16 %v4163
        %v6702 = vunpack.c.h.b16 %v4163
        %v6703 = vunpack.c.l.b16 %v4164
        %v6704 = vunpack.c.h.b16 %v4164
        %v6705 = vunpack.c.l.b16 %v4165
        %v6706 = vunpack.c.h.b16 %v4165
        %v6707 = vunpack.c.l.b16 %v4166
        %v6708 = vunpack.c.h.b16 %v4166
        %v6709 = vunpack.c.l.b16 %v4167
        %v6710 = vunpack.c.h.b16 %v4167
        %v6711 = vunpack.c.l.b16 %v4168
        %v6712 = vunpack.c.h.b16 %v4168
        %v6713 = vunpack.c.l.b16 %v4169
        %v6714 = vunpack.c.h.b16 %v4169
        %v6715 = vunpack.c.l.b16 %v4170
        %v6716 = vunpack.c.h.b16 %v4170
        %v6717 = vunpack.c.l.b16 %v4171
        %v6718 = vunpack.c.h.b16 %v4171
        %v6719 = vunpack.c.l.b16 %v4172
        %v6720 = vunpack.c.h.b16 %v4172
        %v6721 = vunpack.c.l.b16 %v4173
        %v6722 = vunpack.c.h.b16 %v4173
        %v6723 = vunpack.c.l.b16 %v4174
        %v6724 = vunpack.c.h.b16 %v4174
        %v6725 = vunpack.c.l.b16 %v4175
        %v6726 = vunpack.c.h.b16 %v4175
        %v6727 = vunpack.c.l.b16 %v4176
        %v6728 = vunpack.c.h.b16 %v4176
        %v6729 = vunpack.c.l.b16 %v4177
        %v6730 = vunpack.c.h.b16 %v4177
        %v6731 = vunpack.c.l.b16 %v4178
        %v6732 = vunpack.c.h.b16 %v4178
        %v6733 = vunpack.c.l.b16 %v4179
        %v6734 = vunpack.c.h.b16 %v4179
        %v6735 = vunpack.c.l.b16 %v4180
        %v6736 = vunpack.c.h.b16 %v4180
        %v6737 = vunpack.c.l.b16 %v4181
        %v6738 = vunpack.c.h.b16 %v4181
        %v6739 = vunpack.c.l.b16 %v4182
        %v6740 = vunpack.c.h.b16 %v4182
        %v6741 = vunpack.c.l.b16 %v4183
        %v6742 = vunpack.c.h.b16 %v4183
        %v6743 = vunpack.c.l.b16 %v4184
        %v6744 = vunpack.c.h.b16 %v4184
        %v6745 = vunpack.c.l.b16 %v4185
        %v6746 = vunpack.c.h.b16 %v4185
        %v6747 = vunpack.c.l.b16 %v4186
        %v6748 = vunpack.c.h.b16 %v4186
        %v6749 = vunpack.c.l.b16 %v4187
        %v6750 = vunpack.c.h.b16 %v4187
        %v6751 = vunpack.c.l.b16 %v4188
        %v6752 = vunpack.c.h.b16 %v4188
        %v6753 = vunpack.c.l.b16 %v4189
        %v6754 = vunpack.c.h.b16 %v4189
        %v6755 = vunpack.c.l.b16 %v4190
        %v6756 = vunpack.c.h.b16 %v4190
        %v6757 = vunpack.c.l.b16 %v4191
        %v6758 = vunpack.c.h.b16 %v4191
        %v6759 = vunpack.c.l.b16 %v4192
        %v6760 = vunpack.c.h.b16 %v4192
        %v6761 = vunpack.c.l.b16 %v4193
        %v6762 = vunpack.c.h.b16 %v4193
        %v6763 = vunpack.c.l.b16 %v4194
        %v6764 = vunpack.c.h.b16 %v4194
        %v6765 = vunpack.c.l.b16 %v4195
        %v6766 = vunpack.c.h.b16 %v4195
        %v6767 = vunpack.c.l.b16 %v4196
        %v6768 = vunpack.c.h.b16 %v4196
        %v6769 = vunpack.c.l.b16 %v4197
        %v6770 = vunpack.c.h.b16 %v4197
        %v6771 = vunpack.c.l.b16 %v4198
        %v6772 = vunpack.c.h.b16 %v4198
        %v6773 = vunpack.c.l.b16 %v4199
        %v6774 = vunpack.c.h.b16 %v4199
        %v6775 = vunpack.c.l.b16 %v4200
        %v6776 = vunpack.c.h.b16 %v4200
        %v6777 = vunpack.c.l.b16 %v4201
        %v6778 = vunpack.c.h.b16 %v4201
        %v6779 = vunpack.c.l.b16 %v4202
        %v6780 = vunpack.c.h.b16 %v4202
        %v6781 = vunpack.c.l.b16 %v4203
        %v6782 = vunpack.c.h.b16 %v4203
        %v6783 = vunpack.c.l.b16 %v4204
        %v6784 = vunpack.c.h.b16 %v4204
        %v6785 = vunpack.c.l.b16 %v4205
        %v6786 = vunpack.c.h.b16 %v4205
        %v6787 = vunpack.c.l.b16 %v4206
        %v6788 = vunpack.c.h.b16 %v4206
        %v6789 = vunpack.c.l.b16 %v4207
        %v6790 = vunpack.c.h.b16 %v4207
        %v6791 = vunpack.c.l.b16 %v4208
        %v6792 = vunpack.c.h.b16 %v4208
        %v6793 = vunpack.c.l.b16 %v4209
        %v6794 = vunpack.c.h.b16 %v4209
        %v6795 = vunpack.c.l.b16 %v4210
        %v6796 = vunpack.c.h.b16 %v4210
        %v6797 = vunpack.c.l.b16 %v4211
        %v6798 = vunpack.c.h.b16 %v4211
        %v6799 = vunpack.c.l.b16 %v4212
        %v6800 = vunpack.c.h.b16 %v4212
        %v6801 = vunpack.c.l.b16 %v4213
        %v6802 = vunpack.c.h.b16 %v4213
        %v6803 = vunpack.c.l.b16 %v4214
        %v6804 = vunpack.c.h.b16 %v4214
        %v6805 = vunpack.c.l.b16 %v4215
        %v6806 = vunpack.c.h.b16 %v4215
        %v6807 = vunpack.c.l.b16 %v4216
        %v6808 = vunpack.c.h.b16 %v4216
        %v6809 = vunpack.c.l.b16 %v4217
        %v6810 = vunpack.c.h.b16 %v4217
        %v6811 = vunpack.c.l.b16 %v4218
        %v6812 = vunpack.c.h.b16 %v4218
        %v6813 = vunpack.c.l.b16 %v4219
        %v6814 = vunpack.c.h.b16 %v4219
        %v6815 = vunpack.c.l.b16 %v4220
        %v6816 = vunpack.c.h.b16 %v4220
        %v6817 = vunpack.c.l.b16 %v4221
        %v6818 = vunpack.c.h.b16 %v4221
        %v6819 = vunpack.c.l.b16 %v4222
        %v6820 = vunpack.c.h.b16 %v4222
        %v6821 = vunpack.c.l.b16 %v4223
        %v6822 = vunpack.c.h.b16 %v4223
        %v6823 = vunpack.c.l.b16 %v4224
        %v6824 = vunpack.c.h.b16 %v4224
        %v6825 = vunpack.c.l.b16 %v4225
        %v6826 = vunpack.c.h.b16 %v4225
        %v6827 = vunpack.c.l.b16 %v4226
        %v6828 = vunpack.c.h.b16 %v4226
        %v6829 = vunpack.c.l.b16 %v4227
        %v6830 = vunpack.c.h.b16 %v4227
        %v6831 = vunpack.c.l.b16 %v4228
        %v6832 = vunpack.c.h.b16 %v4228
        %v6833 = vunpack.c.l.b16 %v4229
        %v6834 = vunpack.c.h.b16 %v4229
        %v6835 = vunpack.c.l.b16 %v4230
        %v6836 = vunpack.c.h.b16 %v4230
        %v6837 = vunpack.c.l.b16 %v4231
        %v6838 = vunpack.c.h.b16 %v4231
        %v6839 = vunpack.c.l.b16 %v4232
        %v6840 = vunpack.c.h.b16 %v4232
        %v6841 = vunpack.c.l.b16 %v4233
        %v6842 = vunpack.c.h.b16 %v4233
        %v6843 = vunpack.c.l.b16 %v4234
        %v6844 = vunpack.c.h.b16 %v4234
        %v6845 = vunpack.c.l.b16 %v4235
        %v6846 = vunpack.c.h.b16 %v4235
        %v6847 = vunpack.c.l.b16 %v4236
        %v6848 = vunpack.c.h.b16 %v4236
        %v6849 = vunpack.c.l.b16 %v4237
        %v6850 = vunpack.c.h.b16 %v4237
        %v6851 = vunpack.c.l.b16 %v4238
        %v6852 = vunpack.c.h.b16 %v4238
        %v6853 = vunpack.c.l.b16 %v4239
        %v6854 = vunpack.c.h.b16 %v4239
        %v6855 = vunpack.c.l.b16 %v4240
        %v6856 = vunpack.c.h.b16 %v4240
        %v6857 = vunpack.c.l.b16 %v4241
        %v6858 = vunpack.c.h.b16 %v4241
        %v6859 = vunpack.c.l.b16 %v4242
        %v6860 = vunpack.c.h.b16 %v4242
        %v6861 = vunpack.c.l.b16 %v4243
        %v6862 = vunpack.c.h.b16 %v4243
        %v6863 = vunpack.c.l.b16 %v4244
        %v6864 = vunpack.c.h.b16 %v4244
        %v6865 = vunpack.c.l.b16 %v4245
        %v6866 = vunpack.c.h.b16 %v4245
        %v6867 = vunpack.c.l.b16 %v4246
        %v6868 = vunpack.c.h.b16 %v4246
        %v6869 = vunpack.c.l.b16 %v4247
        %v6870 = vunpack.c.h.b16 %v4247
        %v6871 = vunpack.c.l.b16 %v4248
        %v6872 = vunpack.c.h.b16 %v4248
        %v6873 = vunpack.c.l.b16 %v4249
        %v6874 = vunpack.c.h.b16 %v4249
        %v6875 = vunpack.c.l.b16 %v4250
        %v6876 = vunpack.c.h.b16 %v4250
        %v6877 = vunpack.c.l.b16 %v4251
        %v6878 = vunpack.c.h.b16 %v4251
        %v6879 = vunpack.c.l.b16 %v4252
        %v6880 = vunpack.c.h.b16 %v4252
        %v6881 = vunpack.c.l.b16 %v4253
        %v6882 = vunpack.c.h.b16 %v4253
        %v6883 = vunpack.c.l.b16 %v4254
        %v6884 = vunpack.c.h.b16 %v4254
        %v6885 = vunpack.c.l.b16 %v4255
        %v6886 = vunpack.c.h.b16 %v4255
        %v6887 = vunpack.c.l.b16 %v4256
        %v6888 = vunpack.c.h.b16 %v4256
        %v6889 = vunpack.c.l.b16 %v4257
        %v6890 = vunpack.c.h.b16 %v4257
        %v6891 = vunpack.c.l.b16 %v4258
        %v6892 = vunpack.c.h.b16 %v4258
        %v6893 = vunpack.c.l.b16 %v4259
        %v6894 = vunpack.c.h.b16 %v4259
        %v6895 = vunpack.c.l.b16 %v4260
        %v6896 = vunpack.c.h.b16 %v4260
        %v6897 = vunpack.c.l.b16 %v4261
        %v6898 = vunpack.c.h.b16 %v4261
        %v6899 = vunpack.c.l.b16 %v4262
        %v6900 = vunpack.c.h.b16 %v4262
        %v6901 = vunpack.c.l.b16 %v4263
        %v6902 = vunpack.c.h.b16 %v4263
        %v6903 = vunpack.c.l.b16 %v4264
        %v6904 = vunpack.c.h.b16 %v4264
        %v6905 = vunpack.c.l.b16 %v4265
        %v6906 = vunpack.c.h.b16 %v4265
        %v6907 = vunpack.c.l.b16 %v4266
        %v6908 = vunpack.c.h.b16 %v4266
        %v6909 = vunpack.c.l.b16 %v4267
        %v6910 = vunpack.c.h.b16 %v4267
        %v6911 = vunpack.c.l.b16 %v4268
        %v6912 = vunpack.c.h.b16 %v4268
        %v6913 = vunpack.c.l.b16 %v4269
        %v6914 = vunpack.c.h.b16 %v4269
        %v6915 = vunpack.c.l.b16 %v4270
        %v6916 = vunpack.c.h.b16 %v4270
        %v6917 = vunpack.c.l.b16 %v4271
        %v6918 = vunpack.c.h.b16 %v4271
        %v6919 = vunpack.c.l.b16 %v4272
        %v6920 = vunpack.c.h.b16 %v4272
        %v6921 = vunpack.c.l.b16 %v4273
        %v6922 = vunpack.c.h.b16 %v4273
        %v6923 = vunpack.c.l.b16 %v4274
        %v6924 = vunpack.c.h.b16 %v4274
        %v6925 = vunpack.c.l.b16 %v4275
        %v6926 = vunpack.c.h.b16 %v4275
        %v6927 = vunpack.c.l.b16 %v4276
        %v6928 = vunpack.c.h.b16 %v4276
        %v6929 = vunpack.c.l.b16 %v4277
        %v6930 = vunpack.c.h.b16 %v4277
        %v6931 = vunpack.c.l.b16 %v4278
        %v6932 = vunpack.c.h.b16 %v4278
        %v6933 = vunpack.c.l.b16 %v4279
        %v6934 = vunpack.c.h.b16 %v4279
        %v6935 = vunpack.c.l.b16 %v4280
        %v6936 = vunpack.c.h.b16 %v4280
        %v6937 = vunpack.c.l.b16 %v4281
        %v6938 = vunpack.c.h.b16 %v4281
        %v6939 = vunpack.c.l.b16 %v4282
        %v6940 = vunpack.c.h.b16 %v4282
        %v6941 = vunpack.c.l.b16 %v4283
        %v6942 = vunpack.c.h.b16 %v4283
        %v6943 = vunpack.c.l.b16 %v4284
        %v6944 = vunpack.c.h.b16 %v4284
        %v6945 = vunpack.c.l.b16 %v4285
        %v6946 = vunpack.c.h.b16 %v4285
        %v6947 = vunpack.c.l.b16 %v4286
        %v6948 = vunpack.c.h.b16 %v4286
        %v6949 = vunpack.c.l.b16 %v4287
        %v6950 = vunpack.c.h.b16 %v4287
        %v6951 = vunpack.c.l.b16 %v4288
        %v6952 = vunpack.c.h.b16 %v4288
        %v6953 = vunpack.c.l.b16 %v4289
        %v6954 = vunpack.c.h.b16 %v4289
        %v6955 = vunpack.c.l.b16 %v4290
        %v6956 = vunpack.c.h.b16 %v4290
        %v6957 = vunpack.c.l.b16 %v4291
        %v6958 = vunpack.c.h.b16 %v4291
        %v6959 = vunpack.c.l.b16 %v4292
        %v6960 = vunpack.c.h.b16 %v4292
        %v6961 = vunpack.c.l.b16 %v4293
        %v6962 = vunpack.c.h.b16 %v4293
        %v6963 = vunpack.c.l.b16 %v4294
        %v6964 = vunpack.c.h.b16 %v4294
        %v6965 = vunpack.c.l.b16 %v4295
        %v6966 = vunpack.c.h.b16 %v4295
        %v6967 = vunpack.c.l.b16 %v4296
        %v6968 = vunpack.c.h.b16 %v4296
        %v6969 = vunpack.c.l.b16 %v4297
        %v6970 = vunpack.c.h.b16 %v4297
        %v6971 = vunpack.c.l.b16 %v4298
        %v6972 = vunpack.c.h.b16 %v4298
        %v6973 = vunpack.c.l.b16 %v4299
        %v6974 = vunpack.c.h.b16 %v4299
        %v6975 = vunpack.c.l.b16 %v4300
        %v6976 = vunpack.c.h.b16 %v4300
        %v6977 = vunpack.c.l.b16 %v4301
        %v6978 = vunpack.c.h.b16 %v4301
        %v6979 = vunpack.c.l.b16 %v4302
        %v6980 = vunpack.c.h.b16 %v4302
        %v6981 = vunpack.c.l.b16 %v4303
        %v6982 = vunpack.c.h.b16 %v4303
        %v6983 = vunpack.c.l.b16 %v4304
        %v6984 = vunpack.c.h.b16 %v4304
        %v6985 = vunpack.c.l.b16 %v4305
        %v6986 = vunpack.c.h.b16 %v4305
        %v6987 = vunpack.c.l.b16 %v4306
        %v6988 = vunpack.c.h.b16 %v4306
        %v6989 = vunpack.c.l.b16 %v4307
        %v6990 = vunpack.c.h.b16 %v4307
        %v6991 = vunpack.c.l.b16 %v4308
        %v6992 = vunpack.c.h.b16 %v4308
        %v6993 = vunpack.c.l.b16 %v4309
        %v6994 = vunpack.c.h.b16 %v4309
        %v6995 = vunpack.c.l.b16 %v4310
        %v6996 = vunpack.c.h.b16 %v4310
        %v6997 = vunpack.c.l.b16 %v4311
        %v6998 = vunpack.c.h.b16 %v4311
        %v6999 = vunpack.c.l.b16 %v4312
        %v7000 = vunpack.c.h.b16 %v4312
        %v7001 = vunpack.c.l.b16 %v4313
        %v7002 = vunpack.c.h.b16 %v4313
        %v7003 = vunpack.c.l.b16 %v4314
        %v7004 = vunpack.c.h.b16 %v4314
        %v7005 = vunpack.c.l.b16 %v4315
        %v7006 = vunpack.c.h.b16 %v4315
        %v7007 = vunpack.c.l.b16 %v4316
        %v7008 = vunpack.c.h.b16 %v4316
        %v7009 = vunpack.c.l.b16 %v4317
        %v7010 = vunpack.c.h.b16 %v4317
        %v7011 = vunpack.c.l.b16 %v4318
        %v7012 = vunpack.c.h.b16 %v4318
        %v7013 = vunpack.c.l.b16 %v4319
        %v7014 = vunpack.c.h.b16 %v4319
        %v7015 = vunpack.c.l.b16 %v4320
        %v7016 = vunpack.c.h.b16 %v4320
        %v7017 = vunpack.c.l.b16 %v4321
        %v7018 = vunpack.c.h.b16 %v4321
        %v7019 = vunpack.c.l.b16 %v4322
        %v7020 = vunpack.c.h.b16 %v4322
        %v7021 = vunpack.c.l.b16 %v4323
        %v7022 = vunpack.c.h.b16 %v4323
        %v7023 = vunpack.c.l.b16 %v4324
        %v7024 = vunpack.c.h.b16 %v4324
        %v7025 = vunpack.c.l.b16 %v4325
        %v7026 = vunpack.c.h.b16 %v4325
        %v7027 = vunpack.c.l.b16 %v4326
        %v7028 = vunpack.c.h.b16 %v4326
        %v7029 = vunpack.c.l.b16 %v4327
        %v7030 = vunpack.c.h.b16 %v4327
        %v7031 = vunpack.c.l.b16 %v4328
        %v7032 = vunpack.c.h.b16 %v4328
        %v7033 = vunpack.c.l.b16 %v4329
        %v7034 = vunpack.c.h.b16 %v4329
        %v7035 = vunpack.c.l.b16 %v4330
        %v7036 = vunpack.c.h.b16 %v4330
        %v7037 = vunpack.c.l.b16 %v4331
        %v7038 = vunpack.c.h.b16 %v4331
        %v7039 = vunpack.c.l.b16 %v4332
        %v7040 = vunpack.c.h.b16 %v4332
        %v7041 = vunpack.c.l.b16 %v4333
        %v7042 = vunpack.c.h.b16 %v4333
        %v7043 = vunpack.c.l.b16 %v4334
        %v7044 = vunpack.c.h.b16 %v4334
        %v7045 = vunpack.c.l.b16 %v4335
        %v7046 = vunpack.c.h.b16 %v4335
        %v7047 = vunpack.c.l.b16 %v4336
        %v7048 = vunpack.c.h.b16 %v4336
        %v7049 = vunpack.c.l.b16 %v4337
        %v7050 = vunpack.c.h.b16 %v4337
        %v7051 = vunpack.c.l.b16 %v4338
        %v7052 = vunpack.c.h.b16 %v4338
        %v7053 = vunpack.c.l.b16 %v4339
        %v7054 = vunpack.c.h.b16 %v4339
        %v7055 = vunpack.c.l.b16 %v4340
        %v7056 = vunpack.c.h.b16 %v4340
        %v7057 = vunpack.c.l.b16 %v4341
        %v7058 = vunpack.c.h.b16 %v4341
        %v7059 = vunpack.c.l.b16 %v4342
        %v7060 = vunpack.c.h.b16 %v4342
        %v7061 = vunpack.c.l.b16 %v4343
        %v7062 = vunpack.c.h.b16 %v4343
        %v7063 = vunpack.c.l.b16 %v4344
        %v7064 = vunpack.c.h.b16 %v4344
        %v7065 = vunpack.c.l.b16 %v4345
        %v7066 = vunpack.c.h.b16 %v4345
        %v7067 = vunpack.c.l.b16 %v4346
        %v7068 = vunpack.c.h.b16 %v4346
        %v7069 = vunpack.c.l.b16 %v4347
        %v7070 = vunpack.c.h.b16 %v4347
        %v7071 = vunpack.c.l.b16 %v4348
        %v7072 = vunpack.c.h.b16 %v4348
        %v7073 = vunpack.c.l.b16 %v4349
        %v7074 = vunpack.c.h.b16 %v4349
        %v7075 = vunpack.c.l.b16 %v4350
        %v7076 = vunpack.c.h.b16 %v4350
        %v7077 = vunpack.c.l.b16 %v4351
        %v7078 = vunpack.c.h.b16 %v4351
        %v7079 = vunpack.c.l.b16 %v4352
        %v7080 = vunpack.c.h.b16 %v4352
        %v7081 = vunpack.c.l.b16 %v4353
        %v7082 = vunpack.c.h.b16 %v4353
        %v7083 = vunpack.c.l.b16 %v4354
        %v7084 = vunpack.c.h.b16 %v4354
        %v7085 = vunpack.c.l.b16 %v4355
        %v7086 = vunpack.c.h.b16 %v4355
        %v7087 = vunpack.c.l.b16 %v4356
        %v7088 = vunpack.c.h.b16 %v4356
        %v7089 = vunpack.c.l.b16 %v4357
        %v7090 = vunpack.c.h.b16 %v4357
        %v7091 = vunpack.c.l.b16 %v4358
        %v7092 = vunpack.c.h.b16 %v4358
        %v7093 = vunpack.c.l.b16 %v4359
        %v7094 = vunpack.c.h.b16 %v4359
        %v7095 = vunpack.c.l.b16 %v4360
        %v7096 = vunpack.c.h.b16 %v4360
        %v7097 = vunpack.c.l.b16 %v4361
        %v7098 = vunpack.c.h.b16 %v4361
        %v7099 = vunpack.c.l.b16 %v4362
        %v7100 = vunpack.c.h.b16 %v4362
        %v7101 = vunpack.c.l.b16 %v4363
        %v7102 = vunpack.c.h.b16 %v4363
        %v7103 = vunpack.c.l.b16 %v4364
        %v7104 = vunpack.c.h.b16 %v4364
        %v7105 = vunpack.c.l.b16 %v4365
        %v7106 = vunpack.c.h.b16 %v4365
        %v7107 = vunpack.c.l.b16 %v4366
        %v7108 = vunpack.c.h.b16 %v4366
        %v7109 = vunpack.c.l.b16 %v4367
        %v7110 = vunpack.c.h.b16 %v4367
        %v7111 = vunpack.c.l.b16 %v4368
        %v7112 = vunpack.c.h.b16 %v4368
        %v7113 = vunpack.c.l.b16 %v4369
        %v7114 = vunpack.c.h.b16 %v4369
        %v7115 = vunpack.c.l.b16 %v4370
        %v7116 = vunpack.c.h.b16 %v4370
        %v7117 = vunpack.c.l.b16 %v4371
        %v7118 = vunpack.c.h.b16 %v4371
        %v7119 = vunpack.c.l.b16 %v4372
        %v7120 = vunpack.c.h.b16 %v4372
        %v7121 = vunpack.c.l.b16 %v4373
        %v7122 = vunpack.c.h.b16 %v4373
        %v7123 = vunpack.c.l.b16 %v4374
        %v7124 = vunpack.c.h.b16 %v4374
        %v7125 = vunpack.c.l.b16 %v4375
        %v7126 = vunpack.c.h.b16 %v4375
        %v7127 = vunpack.c.l.b16 %v4376
        %v7128 = vunpack.c.h.b16 %v4376
        %v7129 = vunpack.c.l.b16 %v4377
        %v7130 = vunpack.c.h.b16 %v4377
        %v7131 = vunpack.c.l.b16 %v4378
        %v7132 = vunpack.c.h.b16 %v4378
        %v7133 = vunpack.c.l.b16 %v4379
        %v7134 = vunpack.c.h.b16 %v4379
        %v7135 = vunpack.c.l.b16 %v4380
        %v7136 = vunpack.c.h.b16 %v4380
        %v7137 = vunpack.c.l.b16 %v4381
        %v7138 = vunpack.c.h.b16 %v4381
        %v7139 = vunpack.c.l.b16 %v4382
        %v7140 = vunpack.c.h.b16 %v4382
        %v7141 = vunpack.c.l.b16 %v4383
        %v7142 = vunpack.c.h.b16 %v4383
        %v7143 = vunpack.c.l.b16 %v4384
        %v7144 = vunpack.c.h.b16 %v4384
        %v7145 = vunpack.c.l.b16 %v4385
        %v7146 = vunpack.c.h.b16 %v4385
        %v7147 = vunpack.c.l.b16 %v4386
        %v7148 = vunpack.c.h.b16 %v4386
        %v7149 = vunpack.c.l.b16 %v4387
        %v7150 = vunpack.c.h.b16 %v4387
        %v7151 = vunpack.c.l.b16 %v4388
        %v7152 = vunpack.c.h.b16 %v4388
        %v7153 = vunpack.c.l.b16 %v4389
        %v7154 = vunpack.c.h.b16 %v4389
        %v7155 = vunpack.c.l.b16 %v4390
        %v7156 = vunpack.c.h.b16 %v4390
        %v7157 = vunpack.c.l.b16 %v4391
        %v7158 = vunpack.c.h.b16 %v4391
        %v7159 = vunpack.c.l.b16 %v4392
        %v7160 = vunpack.c.h.b16 %v4392
        %v7161 = vunpack.c.l.b16 %v4393
        %v7162 = vunpack.c.h.b16 %v4393
        %v7163 = vunpack.c.l.b16 %v4394
        %v7164 = vunpack.c.h.b16 %v4394
        %v7165 = vunpack.c.l.b16 %v4395
        %v7166 = vunpack.c.h.b16 %v4395
        %v7167 = vunpack.c.l.b16 %v4396
        %v7168 = vunpack.c.h.b16 %v4396
        %v7169 = vunpack.c.l.b16 %v4397
        %v7170 = vunpack.c.h.b16 %v4397
        %v7171 = vunpack.c.l.b16 %v4398
        %v7172 = vunpack.c.h.b16 %v4398
        %v7173 = vunpack.c.l.b16 %v4399
        %v7174 = vunpack.c.h.b16 %v4399
        %v7175 = vunpack.c.l.b16 %v4400
        %v7176 = vunpack.c.h.b16 %v4400
        %v7177 = vunpack.c.l.b16 %v4401
        %v7178 = vunpack.c.h.b16 %v4401
        %v7179 = vunpack.c.l.b16 %v4402
        %v7180 = vunpack.c.h.b16 %v4402
        %v7181 = vunpack.c.l.b16 %v4403
        %v7182 = vunpack.c.h.b16 %v4403
        %v7183 = vunpack.c.l.b16 %v4404
        %v7184 = vunpack.c.h.b16 %v4404
        %v7185 = vunpack.c.l.b16 %v4405
        %v7186 = vunpack.c.h.b16 %v4405
        %v7187 = vunpack.c.l.b16 %v4406
        %v7188 = vunpack.c.h.b16 %v4406
        %v7189 = vunpack.c.l.b16 %v4407
        %v7190 = vunpack.c.h.b16 %v4407
        %v7191 = vunpack.c.l.b16 %v4408
        %v7192 = vunpack.c.h.b16 %v4408
        %v7193 = vunpack.c.l.b16 %v4409
        %v7194 = vunpack.c.h.b16 %v4409
        %v7195 = vunpack.c.l.b16 %v4410
        %v7196 = vunpack.c.h.b16 %v4410
        %v7197 = vunpack.c.l.b16 %v4411
        %v7198 = vunpack.c.h.b16 %v4411
        %v7199 = vunpack.c.l.b16 %v4412
        %v7200 = vunpack.c.h.b16 %v4412
        %v7201 = vunpack.c.l.b16 %v4413
        %v7202 = vunpack.c.h.b16 %v4413
        %v7203 = vunpack.c.l.b16 %v4414
        %v7204 = vunpack.c.h.b16 %v4414
        %v7205 = vunpack.c.l.b16 %v4415
        %v7206 = vunpack.c.h.b16 %v4415
        %v7207 = vunpack.c.l.b16 %v4416
        %v7208 = vunpack.c.h.b16 %v4416
        %v7209 = vunpack.c.l.b16 %v4417
        %v7210 = vunpack.c.h.b16 %v4417
        %v7211 = vunpack.c.l.b16 %v4418
        %v7212 = vunpack.c.h.b16 %v4418
        %v7213 = vunpack.c.l.b16 %v4419
        %v7214 = vunpack.c.h.b16 %v4419
        %v7215 = vunpack.c.l.b16 %v4420
        %v7216 = vunpack.c.h.b16 %v4420
        %v7217 = vunpack.c.l.b16 %v4421
        %v7218 = vunpack.c.h.b16 %v4421
        %v7219 = vunpack.c.l.b16 %v4422
        %v7220 = vunpack.c.h.b16 %v4422
        %v7221 = vunpack.c.l.b16 %v4423
        %v7222 = vunpack.c.h.b16 %v4423
        %v7223 = vunpack.c.l.b16 %v4424
        %v7224 = vunpack.c.h.b16 %v4424
        %v7225 = vpack.c.b16 %v5441, %v5433
        %v7226 = vpack.c.b16 %v5442, %v5434
        %v7227 = vpack.c.b16 %v5443, %v5435
        %v7228 = vpack.c.b16 %v5444, %v5436
        %v7229 = vpack.c.b16 %v5445, %v5437
        %v7230 = vpack.c.b16 %v5446, %v5438
        %v7231 = vpack.c.b16 %v5447, %v5439
        %v7232 = vpack.c.b16 %v5448, %v5440
        %v7233 = vpack.c.b16 %v5457, %v5449
        %v7234 = vpack.c.b16 %v5458, %v5450
        %v7235 = vpack.c.b16 %v5459, %v5451
        %v7236 = vpack.c.b16 %v5460, %v5452
        %v7237 = vpack.c.b16 %v5461, %v5453
        %v7238 = vpack.c.b16 %v5462, %v5454
        %v7239 = vpack.c.b16 %v5463, %v5455
        %v7240 = vpack.c.b16 %v5464, %v5456
        %v7241 = vpack.c.b16 %v5473, %v5465
        %v7242 = vpack.c.b16 %v5474, %v5466
        %v7243 = vpack.c.b16 %v5475, %v5467
        %v7244 = vpack.c.b16 %v5476, %v5468
        %v7245 = vpack.c.b16 %v5477, %v5469
        %v7246 = vpack.c.b16 %v5478, %v5470
        %v7247 = vpack.c.b16 %v5479, %v5471
        %v7248 = vpack.c.b16 %v5480, %v5472
        %v7249 = vpack.c.b16 %v5489, %v5481
        %v7250 = vpack.c.b16 %v5490, %v5482
        %v7251 = vpack.c.b16 %v5491, %v5483
        %v7252 = vpack.c.b16 %v5492, %v5484
        %v7253 = vpack.c.b16 %v5493, %v5485
        %v7254 = vpack.c.b16 %v5494, %v5486
        %v7255 = vpack.c.b16 %v5495, %v5487
        %v7256 = vpack.c.b16 %v5496, %v5488
        %v7257 = vpack.c.b16 %v5505, %v5497
        %v7258 = vpack.c.b16 %v5506, %v5498
        %v7259 = vpack.c.b16 %v5507, %v5499
        %v7260 = vpack.c.b16 %v5508, %v5500
        %v7261 = vpack.c.b16 %v5509, %v5501
        %v7262 = vpack.c.b16 %v5510, %v5502
        %v7263 = vpack.c.b16 %v5511, %v5503
        %v7264 = vpack.c.b16 %v5512, %v5504
        %v7265 = vpack.c.b16 %v5521, %v5513
        %v7266 = vpack.c.b16 %v5522, %v5514
        %v7267 = vpack.c.b16 %v5523, %v5515
        %v7268 = vpack.c.b16 %v5524, %v5516
        %v7269 = vpack.c.b16 %v5525, %v5517
        %v7270 = vpack.c.b16 %v5526, %v5518
        %v7271 = vpack.c.b16 %v5527, %v5519
        %v7272 = vpack.c.b16 %v5528, %v5520
        %v7273 = vpack.c.b16 %v5537, %v5529
        %v7274 = vpack.c.b16 %v5538, %v5530
        %v7275 = vpack.c.b16 %v5539, %v5531
        %v7276 = vpack.c.b16 %v5540, %v5532
        %v7277 = vpack.c.b16 %v5541, %v5533
        %v7278 = vpack.c.b16 %v5542, %v5534
        %v7279 = vpack.c.b16 %v5543, %v5535
        %v7280 = vpack.c.b16 %v5544, %v5536
        %v7281 = vpack.c.b16 %v5553, %v5545
        %v7282 = vpack.c.b16 %v5554, %v5546
        %v7283 = vpack.c.b16 %v5555, %v5547
        %v7284 = vpack.c.b16 %v5556, %v5548
        %v7285 = vpack.c.b16 %v5557, %v5549
        %v7286 = vpack.c.b16 %v5558, %v5550
        %v7287 = vpack.c.b16 %v5559, %v5551
        %v7288 = vpack.c.b16 %v5560, %v5552
        %v7289 = vpack.c.b16 %v5569, %v5561
        %v7290 = vpack.c.b16 %v5570, %v5562
        %v7291 = vpack.c.b16 %v5571, %v5563
        %v7292 = vpack.c.b16 %v5572, %v5564
        %v7293 = vpack.c.b16 %v5573, %v5565
        %v7294 = vpack.c.b16 %v5574, %v5566
        %v7295 = vpack.c.b16 %v5575, %v5567
        %v7296 = vpack.c.b16 %v5576, %v5568
        %v7297 = vpack.c.b16 %v5585, %v5577
        %v7298 = vpack.c.b16 %v5586, %v5578
        %v7299 = vpack.c.b16 %v5587, %v5579
        %v7300 = vpack.c.b16 %v5588, %v5580
        %v7301 = vpack.c.b16 %v5589, %v5581
        %v7302 = vpack.c.b16 %v5590, %v5582
        %v7303 = vpack.c.b16 %v5591, %v5583
        %v7304 = vpack.c.b16 %v5592, %v5584
        %v7305 = vpack.c.b16 %v5601, %v5593
        %v7306 = vpack.c.b16 %v5602, %v5594
        %v7307 = vpack.c.b16 %v5603, %v5595
        %v7308 = vpack.c.b16 %v5604, %v5596
        %v7309 = vpack.c.b16 %v5605, %v5597
        %v7310 = vpack.c.b16 %v5606, %v5598
        %v7311 = vpack.c.b16 %v5607, %v5599
        %v7312 = vpack.c.b16 %v5608, %v5600
        %v7313 = vpack.c.b16 %v5617, %v5609
        %v7314 = vpack.c.b16 %v5618, %v5610
        %v7315 = vpack.c.b16 %v5619, %v5611
        %v7316 = vpack.c.b16 %v5620, %v5612
        %v7317 = vpack.c.b16 %v5621, %v5613
        %v7318 = vpack.c.b16 %v5622, %v5614
        %v7319 = vpack.c.b16 %v5623, %v5615
        %v7320 = vpack.c.b16 %v5624, %v5616
        %v7321 = vpack.c.b16 %v5633, %v5625
        %v7322 = vpack.c.b16 %v5634, %v5626
        %v7323 = vpack.c.b16 %v5635, %v5627
        %v7324 = vpack.c.b16 %v5636, %v5628
        %v7325 = vpack.c.b16 %v5637, %v5629
        %v7326 = vpack.c.b16 %v5638, %v5630
        %v7327 = vpack.c.b16 %v5639, %v5631
        %v7328 = vpack.c.b16 %v5640, %v5632
        %v7329 = vpack.c.b16 %v5649, %v5641
        %v7330 = vpack.c.b16 %v5650, %v5642
        %v7331 = vpack.c.b16 %v5651, %v5643
        %v7332 = vpack.c.b16 %v5652, %v5644
        %v7333 = vpack.c.b16 %v5653, %v5645
        %v7334 = vpack.c.b16 %v5654, %v5646
        %v7335 = vpack.c.b16 %v5655, %v5647
        %v7336 = vpack.c.b16 %v5656, %v5648
        %v7337 = vpack.c.b16 %v5665, %v5657
        %v7338 = vpack.c.b16 %v5666, %v5658
        %v7339 = vpack.c.b16 %v5667, %v5659
        %v7340 = vpack.c.b16 %v5668, %v5660
        %v7341 = vpack.c.b16 %v5669, %v5661
        %v7342 = vpack.c.b16 %v5670, %v5662
        %v7343 = vpack.c.b16 %v5671, %v5663
        %v7344 = vpack.c.b16 %v5672, %v5664
        %v7345 = vpack.c.b16 %v5681, %v5673
        %v7346 = vpack.c.b16 %v5682, %v5674
        %v7347 = vpack.c.b16 %v5683, %v5675
        %v7348 = vpack.c.b16 %v5684, %v5676
        %v7349 = vpack.c.b16 %v5685, %v5677
        %v7350 = vpack.c.b16 %v5686, %v5678
        %v7351 = vpack.c.b16 %v5687, %v5679
        %v7352 = vpack.c.b16 %v5688, %v5680
        %v7353 = vpack.c.b16 %v5697, %v5689
        %v7354 = vpack.c.b16 %v5698, %v5690
        %v7355 = vpack.c.b16 %v5699, %v5691
        %v7356 = vpack.c.b16 %v5700, %v5692
        %v7357 = vpack.c.b16 %v5701, %v5693
        %v7358 = vpack.c.b16 %v5702, %v5694
        %v7359 = vpack.c.b16 %v5703, %v5695
        %v7360 = vpack.c.b16 %v5704, %v5696
        %v7361 = vpack.c.b16 %v5713, %v5705
        %v7362 = vpack.c.b16 %v5714, %v5706
        %v7363 = vpack.c.b16 %v5715, %v5707
        %v7364 = vpack.c.b16 %v5716, %v5708
        %v7365 = vpack.c.b16 %v5717, %v5709
        %v7366 = vpack.c.b16 %v5718, %v5710
        %v7367 = vpack.c.b16 %v5719, %v5711
        %v7368 = vpack.c.b16 %v5720, %v5712
        %v7369 = vpack.c.b16 %v5729, %v5721
        %v7370 = vpack.c.b16 %v5730, %v5722
        %v7371 = vpack.c.b16 %v5731, %v5723
        %v7372 = vpack.c.b16 %v5732, %v5724
        %v7373 = vpack.c.b16 %v5733, %v5725
        %v7374 = vpack.c.b16 %v5734, %v5726
        %v7375 = vpack.c.b16 %v5735, %v5727
        %v7376 = vpack.c.b16 %v5736, %v5728
        %v7377 = vpack.c.b16 %v5745, %v5737
        %v7378 = vpack.c.b16 %v5746, %v5738
        %v7379 = vpack.c.b16 %v5747, %v5739
        %v7380 = vpack.c.b16 %v5748, %v5740
        %v7381 = vpack.c.b16 %v5749, %v5741
        %v7382 = vpack.c.b16 %v5750, %v5742
        %v7383 = vpack.c.b16 %v5751, %v5743
        %v7384 = vpack.c.b16 %v5752, %v5744
        %v7385 = vpack.c.b16 %v5761, %v5753
        %v7386 = vpack.c.b16 %v5762, %v5754
        %v7387 = vpack.c.b16 %v5763, %v5755
        %v7388 = vpack.c.b16 %v5764, %v5756
        %v7389 = vpack.c.b16 %v5765, %v5757
        %v7390 = vpack.c.b16 %v5766, %v5758
        %v7391 = vpack.c.b16 %v5767, %v5759
        %v7392 = vpack.c.b16 %v5768, %v5760
        %v7393 = vpack.c.b16 %v5777, %v5769
        %v7394 = vpack.c.b16 %v5778, %v5770
        %v7395 = vpack.c.b16 %v5779, %v5771
        %v7396 = vpack.c.b16 %v5780, %v5772
        %v7397 = vpack.c.b16 %v5781, %v5773
        %v7398 = vpack.c.b16 %v5782, %v5774
        %v7399 = vpack.c.b16 %v5783, %v5775
        %v7400 = vpack.c.b16 %v5784, %v5776
        %v7401 = vpack.c.b16 %v5793, %v5785
        %v7402 = vpack.c.b16 %v5794, %v5786
        %v7403 = vpack.c.b16 %v5795, %v5787
        %v7404 = vpack.c.b16 %v5796, %v5788
        %v7405 = vpack.c.b16 %v5797, %v5789
        %v7406 = vpack.c.b16 %v5798, %v5790
        %v7407 = vpack.c.b16 %v5799, %v5791
        %v7408 = vpack.c.b16 %v5800, %v5792
        %v7409 = vpack.c.b16 %v5809, %v5801
        %v7410 = vpack.c.b16 %v5810, %v5802
        %v7411 = vpack.c.b16 %v5811, %v5803
        %v7412 = vpack.c.b16 %v5812, %v5804
        %v7413 = vpack.c.b16 %v5813, %v5805
        %v7414 = vpack.c.b16 %v5814, %v5806
        %v7415 = vpack.c.b16 %v5815, %v5807
        %v7416 = vpack.c.b16 %v5816, %v5808
        %v7417 = vpack.c.b16 %v5825, %v5817
        %v7418 = vpack.c.b16 %v5826, %v5818
        %v7419 = vpack.c.b16 %v5827, %v5819
        %v7420 = vpack.c.b16 %v5828, %v5820
        %v7421 = vpack.c.b16 %v5829, %v5821
        %v7422 = vpack.c.b16 %v5830, %v5822
        %v7423 = vpack.c.b16 %v5831, %v5823
        %v7424 = vpack.c.b16 %v5832, %v5824
        %v7425 = vpack.c.b16 %v5841, %v5833
        %v7426 = vpack.c.b16 %v5842, %v5834
        %v7427 = vpack.c.b16 %v5843, %v5835
        %v7428 = vpack.c.b16 %v5844, %v5836
        %v7429 = vpack.c.b16 %v5845, %v5837
        %v7430 = vpack.c.b16 %v5846, %v5838
        %v7431 = vpack.c.b16 %v5847, %v5839
        %v7432 = vpack.c.b16 %v5848, %v5840
        %v7433 = vpack.c.b16 %v5857, %v5849
        %v7434 = vpack.c.b16 %v5858, %v5850
        %v7435 = vpack.c.b16 %v5859, %v5851
        %v7436 = vpack.c.b16 %v5860, %v5852
        %v7437 = vpack.c.b16 %v5861, %v5853
        %v7438 = vpack.c.b16 %v5862, %v5854
        %v7439 = vpack.c.b16 %v5863, %v5855
        %v7440 = vpack.c.b16 %v5864, %v5856
        %v7441 = vpack.c.b16 %v5873, %v5865
        %v7442 = vpack.c.b16 %v5874, %v5866
        %v7443 = vpack.c.b16 %v5875, %v5867
        %v7444 = vpack.c.b16 %v5876, %v5868
        %v7445 = vpack.c.b16 %v5877, %v5869
        %v7446 = vpack.c.b16 %v5878, %v5870
        %v7447 = vpack.c.b16 %v5879, %v5871
        %v7448 = vpack.c.b16 %v5880, %v5872
        %v7449 = vpack.c.b16 %v5889, %v5881
        %v7450 = vpack.c.b16 %v5890, %v5882
        %v7451 = vpack.c.b16 %v5891, %v5883
        %v7452 = vpack.c.b16 %v5892, %v5884
        %v7453 = vpack.c.b16 %v5893, %v5885
        %v7454 = vpack.c.b16 %v5894, %v5886
        %v7455 = vpack.c.b16 %v5895, %v5887
        %v7456 = vpack.c.b16 %v5896, %v5888
        %v7457 = vpack.c.b16 %v5905, %v5897
        %v7458 = vpack.c.b16 %v5906, %v5898
        %v7459 = vpack.c.b16 %v5907, %v5899
        %v7460 = vpack.c.b16 %v5908, %v5900
        %v7461 = vpack.c.b16 %v5909, %v5901
        %v7462 = vpack.c.b16 %v5910, %v5902
        %v7463 = vpack.c.b16 %v5911, %v5903
        %v7464 = vpack.c.b16 %v5912, %v5904
        %v7465 = vpack.c.b16 %v5921, %v5913
        %v7466 = vpack.c.b16 %v5922, %v5914
        %v7467 = vpack.c.b16 %v5923, %v5915
        %v7468 = vpack.c.b16 %v5924, %v5916
        %v7469 = vpack.c.b16 %v5925, %v5917
        %v7470 = vpack.c.b16 %v5926, %v5918
        %v7471 = vpack.c.b16 %v5927, %v5919
        %v7472 = vpack.c.b16 %v5928, %v5920
        %v7473 = vpack.c.b16 %v5937, %v5929
        %v7474 = vpack.c.b16 %v5938, %v5930
        %v7475 = vpack.c.b16 %v5939, %v5931
        %v7476 = vpack.c.b16 %v5940, %v5932
        %v7477 = vpack.c.b16 %v5941, %v5933
        %v7478 = vpack.c.b16 %v5942, %v5934
        %v7479 = vpack.c.b16 %v5943, %v5935
        %v7480 = vpack.c.b16 %v5944, %v5936
        %v7481 = vpack.c.b16 %v5953, %v5945
        %v7482 = vpack.c.b16 %v5954, %v5946
        %v7483 = vpack.c.b16 %v5955, %v5947
        %v7484 = vpack.c.b16 %v5956, %v5948
        %v7485 = vpack.c.b16 %v5957, %v5949
        %v7486 = vpack.c.b16 %v5958, %v5950
        %v7487 = vpack.c.b16 %v5959, %v5951
        %v7488 = vpack.c.b16 %v5960, %v5952
        %v7489 = vpack.c.b16 %v5969, %v5961
        %v7490 = vpack.c.b16 %v5970, %v5962
        %v7491 = vpack.c.b16 %v5971, %v5963
        %v7492 = vpack.c.b16 %v5972, %v5964
        %v7493 = vpack.c.b16 %v5973, %v5965
        %v7494 = vpack.c.b16 %v5974, %v5966
        %v7495 = vpack.c.b16 %v5975, %v5967
        %v7496 = vpack.c.b16 %v5976, %v5968
        %v7497 = vpack.c.b16 %v5985, %v5977
        %v7498 = vpack.c.b16 %v5986, %v5978
        %v7499 = vpack.c.b16 %v5987, %v5979
        %v7500 = vpack.c.b16 %v5988, %v5980
        %v7501 = vpack.c.b16 %v5989, %v5981
        %v7502 = vpack.c.b16 %v5990, %v5982
        %v7503 = vpack.c.b16 %v5991, %v5983
        %v7504 = vpack.c.b16 %v5992, %v5984
        %v7505 = vpack.c.b16 %v6001, %v5993
        %v7506 = vpack.c.b16 %v6002, %v5994
        %v7507 = vpack.c.b16 %v6003, %v5995
        %v7508 = vpack.c.b16 %v6004, %v5996
        %v7509 = vpack.c.b16 %v6005, %v5997
        %v7510 = vpack.c.b16 %v6006, %v5998
        %v7511 = vpack.c.b16 %v6007, %v5999
        %v7512 = vpack.c.b16 %v6008, %v6000
        %v7513 = vpack.c.b16 %v6017, %v6009
        %v7514 = vpack.c.b16 %v6018, %v6010
        %v7515 = vpack.c.b16 %v6019, %v6011
        %v7516 = vpack.c.b16 %v6020, %v6012
        %v7517 = vpack.c.b16 %v6021, %v6013
        %v7518 = vpack.c.b16 %v6022, %v6014
        %v7519 = vpack.c.b16 %v6023, %v6015
        %v7520 = vpack.c.b16 %v6024, %v6016
        %v7521 = vpack.c.b16 %v6033, %v6025
        %v7522 = vpack.c.b16 %v6034, %v6026
        %v7523 = vpack.c.b16 %v6035, %v6027
        %v7524 = vpack.c.b16 %v6036, %v6028
        %v7525 = vpack.c.b16 %v6037, %v6029
        %v7526 = vpack.c.b16 %v6038, %v6030
        %v7527 = vpack.c.b16 %v6039, %v6031
        %v7528 = vpack.c.b16 %v6040, %v6032
        %v7529 = vpack.c.b16 %v6049, %v6041
        %v7530 = vpack.c.b16 %v6050, %v6042
        %v7531 = vpack.c.b16 %v6051, %v6043
        %v7532 = vpack.c.b16 %v6052, %v6044
        %v7533 = vpack.c.b16 %v6053, %v6045
        %v7534 = vpack.c.b16 %v6054, %v6046
        %v7535 = vpack.c.b16 %v6055, %v6047
        %v7536 = vpack.c.b16 %v6056, %v6048
        %v7537 = vpack.c.b16 %v6065, %v6057
        %v7538 = vpack.c.b16 %v6066, %v6058
        %v7539 = vpack.c.b16 %v6067, %v6059
        %v7540 = vpack.c.b16 %v6068, %v6060
        %v7541 = vpack.c.b16 %v6069, %v6061
        %v7542 = vpack.c.b16 %v6070, %v6062
        %v7543 = vpack.c.b16 %v6071, %v6063
        %v7544 = vpack.c.b16 %v6072, %v6064
        %v7545 = vpack.c.b16 %v6081, %v6073
        %v7546 = vpack.c.b16 %v6082, %v6074
        %v7547 = vpack.c.b16 %v6083, %v6075
        %v7548 = vpack.c.b16 %v6084, %v6076
        %v7549 = vpack.c.b16 %v6085, %v6077
        %v7550 = vpack.c.b16 %v6086, %v6078
        %v7551 = vpack.c.b16 %v6087, %v6079
        %v7552 = vpack.c.b16 %v6088, %v6080
        %v7553 = vpack.c.b16 %v6097, %v6089
        %v7554 = vpack.c.b16 %v6098, %v6090
        %v7555 = vpack.c.b16 %v6099, %v6091
        %v7556 = vpack.c.b16 %v6100, %v6092
        %v7557 = vpack.c.b16 %v6101, %v6093
        %v7558 = vpack.c.b16 %v6102, %v6094
        %v7559 = vpack.c.b16 %v6103, %v6095
        %v7560 = vpack.c.b16 %v6104, %v6096
        %v7561 = vpack.c.b16 %v6113, %v6105
        %v7562 = vpack.c.b16 %v6114, %v6106
        %v7563 = vpack.c.b16 %v6115, %v6107
        %v7564 = vpack.c.b16 %v6116, %v6108
        %v7565 = vpack.c.b16 %v6117, %v6109
        %v7566 = vpack.c.b16 %v6118, %v6110
        %v7567 = vpack.c.b16 %v6119, %v6111
        %v7568 = vpack.c.b16 %v6120, %v6112
        %v7569 = vpack.c.b16 %v6129, %v6121
        %v7570 = vpack.c.b16 %v6130, %v6122
        %v7571 = vpack.c.b16 %v6131, %v6123
        %v7572 = vpack.c.b16 %v6132, %v6124
        %v7573 = vpack.c.b16 %v6133, %v6125
        %v7574 = vpack.c.b16 %v6134, %v6126
        %v7575 = vpack.c.b16 %v6135, %v6127
        %v7576 = vpack.c.b16 %v6136, %v6128
        %v7577 = vpack.c.b16 %v6145, %v6137
        %v7578 = vpack.c.b16 %v6146, %v6138
        %v7579 = vpack.c.b16 %v6147, %v6139
        %v7580 = vpack.c.b16 %v6148, %v6140
        %v7581 = vpack.c.b16 %v6149, %v6141
        %v7582 = vpack.c.b16 %v6150, %v6142
        %v7583 = vpack.c.b16 %v6151, %v6143
        %v7584 = vpack.c.b16 %v6152, %v6144
        %v7585 = vpack.c.b16 %v6161, %v6153
        %v7586 = vpack.c.b16 %v6162, %v6154
        %v7587 = vpack.c.b16 %v6163, %v6155
        %v7588 = vpack.c.b16 %v6164, %v6156
        %v7589 = vpack.c.b16 %v6165, %v6157
        %v7590 = vpack.c.b16 %v6166, %v6158
        %v7591 = vpack.c.b16 %v6167, %v6159
        %v7592 = vpack.c.b16 %v6168, %v6160
        %v7593 = vpack.c.b16 %v6177, %v6169
        %v7594 = vpack.c.b16 %v6178, %v6170
        %v7595 = vpack.c.b16 %v6179, %v6171
        %v7596 = vpack.c.b16 %v6180, %v6172
        %v7597 = vpack.c.b16 %v6181, %v6173
        %v7598 = vpack.c.b16 %v6182, %v6174
        %v7599 = vpack.c.b16 %v6183, %v6175
        %v7600 = vpack.c.b16 %v6184, %v6176
        %v7601 = vpack.c.b16 %v6193, %v6185
        %v7602 = vpack.c.b16 %v6194, %v6186
        %v7603 = vpack.c.b16 %v6195, %v6187
        %v7604 = vpack.c.b16 %v6196, %v6188
        %v7605 = vpack.c.b16 %v6197, %v6189
        %v7606 = vpack.c.b16 %v6198, %v6190
        %v7607 = vpack.c.b16 %v6199, %v6191
        %v7608 = vpack.c.b16 %v6200, %v6192
        %v7609 = vpack.c.b16 %v6209, %v6201
        %v7610 = vpack.c.b16 %v6210, %v6202
        %v7611 = vpack.c.b16 %v6211, %v6203
        %v7612 = vpack.c.b16 %v6212, %v6204
        %v7613 = vpack.c.b16 %v6213, %v6205
        %v7614 = vpack.c.b16 %v6214, %v6206
        %v7615 = vpack.c.b16 %v6215, %v6207
        %v7616 = vpack.c.b16 %v6216, %v6208
        %v7617 = vpack.c.b16 %v6225, %v6217
        %v7618 = vpack.c.b16 %v6226, %v6218
        %v7619 = vpack.c.b16 %v6227, %v6219
        %v7620 = vpack.c.b16 %v6228, %v6220
        %v7621 = vpack.c.b16 %v6229, %v6221
        %v7622 = vpack.c.b16 %v6230, %v6222
        %v7623 = vpack.c.b16 %v6231, %v6223
        %v7624 = vpack.c.b16 %v6232, %v6224
        %v7625 = vpack.c.b16 %v6241, %v6233
        %v7626 = vpack.c.b16 %v6242, %v6234
        %v7627 = vpack.c.b16 %v6243, %v6235
        %v7628 = vpack.c.b16 %v6244, %v6236
        %v7629 = vpack.c.b16 %v6245, %v6237
        %v7630 = vpack.c.b16 %v6246, %v6238
        %v7631 = vpack.c.b16 %v6247, %v6239
        %v7632 = vpack.c.b16 %v6248, %v6240
        %v7633 = vpack.c.b16 %v6257, %v6249
        %v7634 = vpack.c.b16 %v6258, %v6250
        %v7635 = vpack.c.b16 %v6259, %v6251
        %v7636 = vpack.c.b16 %v6260, %v6252
        %v7637 = vpack.c.b16 %v6261, %v6253
        %v7638 = vpack.c.b16 %v6262, %v6254
        %v7639 = vpack.c.b16 %v6263, %v6255
        %v7640 = vpack.c.b16 %v6264, %v6256
        %v7641 = vpack.c.b16 %v6273, %v6265
        %v7642 = vpack.c.b16 %v6274, %v6266
        %v7643 = vpack.c.b16 %v6275, %v6267
        %v7644 = vpack.c.b16 %v6276, %v6268
        %v7645 = vpack.c.b16 %v6277, %v6269
        %v7646 = vpack.c.b16 %v6278, %v6270
        %v7647 = vpack.c.b16 %v6279, %v6271
        %v7648 = vpack.c.b16 %v6280, %v6272
        %v7649 = vpack.c.b16 %v6289, %v6281
        %v7650 = vpack.c.b16 %v6290, %v6282
        %v7651 = vpack.c.b16 %v6291, %v6283
        %v7652 = vpack.c.b16 %v6292, %v6284
        %v7653 = vpack.c.b16 %v6293, %v6285
        %v7654 = vpack.c.b16 %v6294, %v6286
        %v7655 = vpack.c.b16 %v6295, %v6287
        %v7656 = vpack.c.b16 %v6296, %v6288
        %v7657 = vpack.c.b16 %v6305, %v6297
        %v7658 = vpack.c.b16 %v6306, %v6298
        %v7659 = vpack.c.b16 %v6307, %v6299
        %v7660 = vpack.c.b16 %v6308, %v6300
        %v7661 = vpack.c.b16 %v6309, %v6301
        %v7662 = vpack.c.b16 %v6310, %v6302
        %v7663 = vpack.c.b16 %v6311, %v6303
        %v7664 = vpack.c.b16 %v6312, %v6304
        %v7665 = vpack.c.b16 %v6321, %v6313
        %v7666 = vpack.c.b16 %v6322, %v6314
        %v7667 = vpack.c.b16 %v6323, %v6315
        %v7668 = vpack.c.b16 %v6324, %v6316
        %v7669 = vpack.c.b16 %v6325, %v6317
        %v7670 = vpack.c.b16 %v6326, %v6318
        %v7671 = vpack.c.b16 %v6327, %v6319
        %v7672 = vpack.c.b16 %v6328, %v6320
        %v7673 = vpack.c.b16 %v6337, %v6329
        %v7674 = vpack.c.b16 %v6338, %v6330
        %v7675 = vpack.c.b16 %v6339, %v6331
        %v7676 = vpack.c.b16 %v6340, %v6332
        %v7677 = vpack.c.b16 %v6341, %v6333
        %v7678 = vpack.c.b16 %v6342, %v6334
        %v7679 = vpack.c.b16 %v6343, %v6335
        %v7680 = vpack.c.b16 %v6344, %v6336
        %v7681 = vpack.c.b16 %v6353, %v6345
        %v7682 = vpack.c.b16 %v6354, %v6346
        %v7683 = vpack.c.b16 %v6355, %v6347
        %v7684 = vpack.c.b16 %v6356, %v6348
        %v7685 = vpack.c.b16 %v6357, %v6349
        %v7686 = vpack.c.b16 %v6358, %v6350
        %v7687 = vpack.c.b16 %v6359, %v6351
        %v7688 = vpack.c.b16 %v6360, %v6352
        %v7689 = vpack.c.b16 %v6369, %v6361
        %v7690 = vpack.c.b16 %v6370, %v6362
        %v7691 = vpack.c.b16 %v6371, %v6363
        %v7692 = vpack.c.b16 %v6372, %v6364
        %v7693 = vpack.c.b16 %v6373, %v6365
        %v7694 = vpack.c.b16 %v6374, %v6366
        %v7695 = vpack.c.b16 %v6375, %v6367
        %v7696 = vpack.c.b16 %v6376, %v6368
        %v7697 = vpack.c.b16 %v6385, %v6377
        %v7698 = vpack.c.b16 %v6386, %v6378
        %v7699 = vpack.c.b16 %v6387, %v6379
        %v7700 = vpack.c.b16 %v6388, %v6380
        %v7701 = vpack.c.b16 %v6389, %v6381
        %v7702 = vpack.c.b16 %v6390, %v6382
        %v7703 = vpack.c.b16 %v6391, %v6383
        %v7704 = vpack.c.b16 %v6392, %v6384
        %v7705 = vpack.c.b16 %v6401, %v6393
        %v7706 = vpack.c.b16 %v6402, %v6394
        %v7707 = vpack.c.b16 %v6403, %v6395
        %v7708 = vpack.c.b16 %v6404, %v6396
        %v7709 = vpack.c.b16 %v6405, %v6397
        %v7710 = vpack.c.b16 %v6406, %v6398
        %v7711 = vpack.c.b16 %v6407, %v6399
        %v7712 = vpack.c.b16 %v6408, %v6400
        %v7713 = vpack.c.b16 %v6417, %v6409
        %v7714 = vpack.c.b16 %v6418, %v6410
        %v7715 = vpack.c.b16 %v6419, %v6411
        %v7716 = vpack.c.b16 %v6420, %v6412
        %v7717 = vpack.c.b16 %v6421, %v6413
        %v7718 = vpack.c.b16 %v6422, %v6414
        %v7719 = vpack.c.b16 %v6423, %v6415
        %v7720 = vpack.c.b16 %v6424, %v6416
        %v7721 = vpack.c.b16 %v6433, %v6425
        %v7722 = vpack.c.b16 %v6434, %v6426
        %v7723 = vpack.c.b16 %v6435, %v6427
        %v7724 = vpack.c.b16 %v6436, %v6428
        %v7725 = vpack.c.b16 %v6437, %v6429
        %v7726 = vpack.c.b16 %v6438, %v6430
        %v7727 = vpack.c.b16 %v6439, %v6431
        %v7728 = vpack.c.b16 %v6440, %v6432
        %v7729 = vpack.c.b16 %v6449, %v6441
        %v7730 = vpack.c.b16 %v6450, %v6442
        %v7731 = vpack.c.b16 %v6451, %v6443
        %v7732 = vpack.c.b16 %v6452, %v6444
        %v7733 = vpack.c.b16 %v6453, %v6445
        %v7734 = vpack.c.b16 %v6454, %v6446
        %v7735 = vpack.c.b16 %v6455, %v6447
        %v7736 = vpack.c.b16 %v6456, %v6448
        %v7737 = vpack.c.b16 %v6465, %v6457
        %v7738 = vpack.c.b16 %v6466, %v6458
        %v7739 = vpack.c.b16 %v6467, %v6459
        %v7740 = vpack.c.b16 %v6468, %v6460
        %v7741 = vpack.c.b16 %v6469, %v6461
        %v7742 = vpack.c.b16 %v6470, %v6462
        %v7743 = vpack.c.b16 %v6471, %v6463
        %v7744 = vpack.c.b16 %v6472, %v6464
        %v7745 = vpack.c.b16 %v6481, %v6473
        %v7746 = vpack.c.b16 %v6482, %v6474
        %v7747 = vpack.c.b16 %v6483, %v6475
        %v7748 = vpack.c.b16 %v6484, %v6476
        %v7749 = vpack.c.b16 %v6485, %v6477
        %v7750 = vpack.c.b16 %v6486, %v6478
        %v7751 = vpack.c.b16 %v6487, %v6479
        %v7752 = vpack.c.b16 %v6488, %v6480
        %v7753 = vpack.c.b16 %v6497, %v6489
        %v7754 = vpack.c.b16 %v6498, %v6490
        %v7755 = vpack.c.b16 %v6499, %v6491
        %v7756 = vpack.c.b16 %v6500, %v6492
        %v7757 = vpack.c.b16 %v6501, %v6493
        %v7758 = vpack.c.b16 %v6502, %v6494
        %v7759 = vpack.c.b16 %v6503, %v6495
        %v7760 = vpack.c.b16 %v6504, %v6496
        %v7761 = vpack.c.b16 %v6513, %v6505
        %v7762 = vpack.c.b16 %v6514, %v6506
        %v7763 = vpack.c.b16 %v6515, %v6507
        %v7764 = vpack.c.b16 %v6516, %v6508
        %v7765 = vpack.c.b16 %v6517, %v6509
        %v7766 = vpack.c.b16 %v6518, %v6510
        %v7767 = vpack.c.b16 %v6519, %v6511
        %v7768 = vpack.c.b16 %v6520, %v6512
        %v7769 = vpack.c.b16 %v6529, %v6521
        %v7770 = vpack.c.b16 %v6530, %v6522
        %v7771 = vpack.c.b16 %v6531, %v6523
        %v7772 = vpack.c.b16 %v6532, %v6524
        %v7773 = vpack.c.b16 %v6533, %v6525
        %v7774 = vpack.c.b16 %v6534, %v6526
        %v7775 = vpack.c.b16 %v6535, %v6527
        %v7776 = vpack.c.b16 %v6536, %v6528
        %v7777 = vpack.c.b16 %v6545, %v6537
        %v7778 = vpack.c.b16 %v6546, %v6538
        %v7779 = vpack.c.b16 %v6547, %v6539
        %v7780 = vpack.c.b16 %v6548, %v6540
        %v7781 = vpack.c.b16 %v6549, %v6541
        %v7782 = vpack.c.b16 %v6550, %v6542
        %v7783 = vpack.c.b16 %v6551, %v6543
        %v7784 = vpack.c.b16 %v6552, %v6544
        %v7785 = vpack.c.b16 %v6561, %v6553
        %v7786 = vpack.c.b16 %v6562, %v6554
        %v7787 = vpack.c.b16 %v6563, %v6555
        %v7788 = vpack.c.b16 %v6564, %v6556
        %v7789 = vpack.c.b16 %v6565, %v6557
        %v7790 = vpack.c.b16 %v6566, %v6558
        %v7791 = vpack.c.b16 %v6567, %v6559
        %v7792 = vpack.c.b16 %v6568, %v6560
        %v7793 = vpack.c.b16 %v6577, %v6569
        %v7794 = vpack.c.b16 %v6578, %v6570
        %v7795 = vpack.c.b16 %v6579, %v6571
        %v7796 = vpack.c.b16 %v6580, %v6572
        %v7797 = vpack.c.b16 %v6581, %v6573
        %v7798 = vpack.c.b16 %v6582, %v6574
        %v7799 = vpack.c.b16 %v6583, %v6575
        %v7800 = vpack.c.b16 %v6584, %v6576
        %v7801 = vpack.c.b16 %v6593, %v6585
        %v7802 = vpack.c.b16 %v6594, %v6586
        %v7803 = vpack.c.b16 %v6595, %v6587
        %v7804 = vpack.c.b16 %v6596, %v6588
        %v7805 = vpack.c.b16 %v6597, %v6589
        %v7806 = vpack.c.b16 %v6598, %v6590
        %v7807 = vpack.c.b16 %v6599, %v6591
        %v7808 = vpack.c.b16 %v6600, %v6592
        %v7809 = vpack.c.b16 %v6609, %v6601
        %v7810 = vpack.c.b16 %v6610, %v6602
        %v7811 = vpack.c.b16 %v6611, %v6603
        %v7812 = vpack.c.b16 %v6612, %v6604
        %v7813 = vpack.c.b16 %v6613, %v6605
        %v7814 = vpack.c.b16 %v6614, %v6606
        %v7815 = vpack.c.b16 %v6615, %v6607
        %v7816 = vpack.c.b16 %v6616, %v6608
        %v7817 = vpack.c.b16 %v6625, %v6617
        %v7818 = vpack.c.b16 %v6626, %v6618
        %v7819 = vpack.c.b16 %v6627, %v6619
        %v7820 = vpack.c.b16 %v6628, %v6620
        %v7821 = vpack.c.b16 %v6629, %v6621
        %v7822 = vpack.c.b16 %v6630, %v6622
        %v7823 = vpack.c.b16 %v6631, %v6623
        %v7824 = vpack.c.b16 %v6632, %v6624
        %v7825 = vpack.c.b16 %v6641, %v6633
        %v7826 = vpack.c.b16 %v6642, %v6634
        %v7827 = vpack.c.b16 %v6643, %v6635
        %v7828 = vpack.c.b16 %v6644, %v6636
        %v7829 = vpack.c.b16 %v6645, %v6637
        %v7830 = vpack.c.b16 %v6646, %v6638
        %v7831 = vpack.c.b16 %v6647, %v6639
        %v7832 = vpack.c.b16 %v6648, %v6640
        %v7833 = vpack.c.b16 %v6657, %v6649
        %v7834 = vpack.c.b16 %v6658, %v6650
        %v7835 = vpack.c.b16 %v6659, %v6651
        %v7836 = vpack.c.b16 %v6660, %v6652
        %v7837 = vpack.c.b16 %v6661, %v6653
        %v7838 = vpack.c.b16 %v6662, %v6654
        %v7839 = vpack.c.b16 %v6663, %v6655
        %v7840 = vpack.c.b16 %v6664, %v6656
        %v7841 = vpack.c.b16 %v6673, %v6665
        %v7842 = vpack.c.b16 %v6674, %v6666
        %v7843 = vpack.c.b16 %v6675, %v6667
        %v7844 = vpack.c.b16 %v6676, %v6668
        %v7845 = vpack.c.b16 %v6677, %v6669
        %v7846 = vpack.c.b16 %v6678, %v6670
        %v7847 = vpack.c.b16 %v6679, %v6671
        %v7848 = vpack.c.b16 %v6680, %v6672
        %v7849 = vpack.c.b16 %v6689, %v6681
        %v7850 = vpack.c.b16 %v6690, %v6682
        %v7851 = vpack.c.b16 %v6691, %v6683
        %v7852 = vpack.c.b16 %v6692, %v6684
        %v7853 = vpack.c.b16 %v6693, %v6685
        %v7854 = vpack.c.b16 %v6694, %v6686
        %v7855 = vpack.c.b16 %v6695, %v6687
        %v7856 = vpack.c.b16 %v6696, %v6688
        %v7857 = vpack.c.b16 %v6705, %v6697
        %v7858 = vpack.c.b16 %v6706, %v6698
        %v7859 = vpack.c.b16 %v6707, %v6699
        %v7860 = vpack.c.b16 %v6708, %v6700
        %v7861 = vpack.c.b16 %v6709, %v6701
        %v7862 = vpack.c.b16 %v6710, %v6702
        %v7863 = vpack.c.b16 %v6711, %v6703
        %v7864 = vpack.c.b16 %v6712, %v6704
        %v7865 = vpack.c.b16 %v6721, %v6713
        %v7866 = vpack.c.b16 %v6722, %v6714
        %v7867 = vpack.c.b16 %v6723, %v6715
        %v7868 = vpack.c.b16 %v6724, %v6716
        %v7869 = vpack.c.b16 %v6725, %v6717
        %v7870 = vpack.c.b16 %v6726, %v6718
        %v7871 = vpack.c.b16 %v6727, %v6719
        %v7872 = vpack.c.b16 %v6728, %v6720
        %v7873 = vpack.c.b16 %v6737, %v6729
        %v7874 = vpack.c.b16 %v6738, %v6730
        %v7875 = vpack.c.b16 %v6739, %v6731
        %v7876 = vpack.c.b16 %v6740, %v6732
        %v7877 = vpack.c.b16 %v6741, %v6733
        %v7878 = vpack.c.b16 %v6742, %v6734
        %v7879 = vpack.c.b16 %v6743, %v6735
        %v7880 = vpack.c.b16 %v6744, %v6736
        %v7881 = vpack.c.b16 %v6753, %v6745
        %v7882 = vpack.c.b16 %v6754, %v6746
        %v7883 = vpack.c.b16 %v6755, %v6747
        %v7884 = vpack.c.b16 %v6756, %v6748
        %v7885 = vpack.c.b16 %v6757, %v6749
        %v7886 = vpack.c.b16 %v6758, %v6750
        %v7887 = vpack.c.b16 %v6759, %v6751
        %v7888 = vpack.c.b16 %v6760, %v6752
        %v7889 = vpack.c.b16 %v6769, %v6761
        %v7890 = vpack.c.b16 %v6770, %v6762
        %v7891 = vpack.c.b16 %v6771, %v6763
        %v7892 = vpack.c.b16 %v6772, %v6764
        %v7893 = vpack.c.b16 %v6773, %v6765
        %v7894 = vpack.c.b16 %v6774, %v6766
        %v7895 = vpack.c.b16 %v6775, %v6767
        %v7896 = vpack.c.b16 %v6776, %v6768
        %v7897 = vpack.c.b16 %v6785, %v6777
        %v7898 = vpack.c.b16 %v6786, %v6778
        %v7899 = vpack.c.b16 %v6787, %v6779
        %v7900 = vpack.c.b16 %v6788, %v6780
        %v7901 = vpack.c.b16 %v6789, %v6781
        %v7902 = vpack.c.b16 %v6790, %v6782
        %v7903 = vpack.c.b16 %v6791, %v6783
        %v7904 = vpack.c.b16 %v6792, %v6784
        %v7905 = vpack.c.b16 %v6801, %v6793
        %v7906 = vpack.c.b16 %v6802, %v6794
        %v7907 = vpack.c.b16 %v6803, %v6795
        %v7908 = vpack.c.b16 %v6804, %v6796
        %v7909 = vpack.c.b16 %v6805, %v6797
        %v7910 = vpack.c.b16 %v6806, %v6798
        %v7911 = vpack.c.b16 %v6807, %v6799
        %v7912 = vpack.c.b16 %v6808, %v6800
        %v7913 = vpack.c.b16 %v6817, %v6809
        %v7914 = vpack.c.b16 %v6818, %v6810
        %v7915 = vpack.c.b16 %v6819, %v6811
        %v7916 = vpack.c.b16 %v6820, %v6812
        %v7917 = vpack.c.b16 %v6821, %v6813
        %v7918 = vpack.c.b16 %v6822, %v6814
        %v7919 = vpack.c.b16 %v6823, %v6815
        %v7920 = vpack.c.b16 %v6824, %v6816
        %v7921 = vpack.c.b16 %v6833, %v6825
        %v7922 = vpack.c.b16 %v6834, %v6826
        %v7923 = vpack.c.b16 %v6835, %v6827
        %v7924 = vpack.c.b16 %v6836, %v6828
        %v7925 = vpack.c.b16 %v6837, %v6829
        %v7926 = vpack.c.b16 %v6838, %v6830
        %v7927 = vpack.c.b16 %v6839, %v6831
        %v7928 = vpack.c.b16 %v6840, %v6832
        %v7929 = vpack.c.b16 %v6849, %v6841
        %v7930 = vpack.c.b16 %v6850, %v6842
        %v7931 = vpack.c.b16 %v6851, %v6843
        %v7932 = vpack.c.b16 %v6852, %v6844
        %v7933 = vpack.c.b16 %v6853, %v6845
        %v7934 = vpack.c.b16 %v6854, %v6846
        %v7935 = vpack.c.b16 %v6855, %v6847
        %v7936 = vpack.c.b16 %v6856, %v6848
        %v7937 = vpack.c.b16 %v6865, %v6857
        %v7938 = vpack.c.b16 %v6866, %v6858
        %v7939 = vpack.c.b16 %v6867, %v6859
        %v7940 = vpack.c.b16 %v6868, %v6860
        %v7941 = vpack.c.b16 %v6869, %v6861
        %v7942 = vpack.c.b16 %v6870, %v6862
        %v7943 = vpack.c.b16 %v6871, %v6863
        %v7944 = vpack.c.b16 %v6872, %v6864
        %v7945 = vpack.c.b16 %v6881, %v6873
        %v7946 = vpack.c.b16 %v6882, %v6874
        %v7947 = vpack.c.b16 %v6883, %v6875
        %v7948 = vpack.c.b16 %v6884, %v6876
        %v7949 = vpack.c.b16 %v6885, %v6877
        %v7950 = vpack.c.b16 %v6886, %v6878
        %v7951 = vpack.c.b16 %v6887, %v6879
        %v7952 = vpack.c.b16 %v6888, %v6880
        %v7953 = vpack.c.b16 %v6897, %v6889
        %v7954 = vpack.c.b16 %v6898, %v6890
        %v7955 = vpack.c.b16 %v6899, %v6891
        %v7956 = vpack.c.b16 %v6900, %v6892
        %v7957 = vpack.c.b16 %v6901, %v6893
        %v7958 = vpack.c.b16 %v6902, %v6894
        %v7959 = vpack.c.b16 %v6903, %v6895
        %v7960 = vpack.c.b16 %v6904, %v6896
        %v7961 = vpack.c.b16 %v6913, %v6905
        %v7962 = vpack.c.b16 %v6914, %v6906
        %v7963 = vpack.c.b16 %v6915, %v6907
        %v7964 = vpack.c.b16 %v6916, %v6908
        %v7965 = vpack.c.b16 %v6917, %v6909
        %v7966 = vpack.c.b16 %v6918, %v6910
        %v7967 = vpack.c.b16 %v6919, %v6911
        %v7968 = vpack.c.b16 %v6920, %v6912
        %v7969 = vpack.c.b16 %v6929, %v6921
        %v7970 = vpack.c.b16 %v6930, %v6922
        %v7971 = vpack.c.b16 %v6931, %v6923
        %v7972 = vpack.c.b16 %v6932, %v6924
        %v7973 = vpack.c.b16 %v6933, %v6925
        %v7974 = vpack.c.b16 %v6934, %v6926
        %v7975 = vpack.c.b16 %v6935, %v6927
        %v7976 = vpack.c.b16 %v6936, %v6928
        %v7977 = vpack.c.b16 %v6945, %v6937
        %v7978 = vpack.c.b16 %v6946, %v6938
        %v7979 = vpack.c.b16 %v6947, %v6939
        %v7980 = vpack.c.b16 %v6948, %v6940
        %v7981 = vpack.c.b16 %v6949, %v6941
        %v7982 = vpack.c.b16 %v6950, %v6942
        %v7983 = vpack.c.b16 %v6951, %v6943
        %v7984 = vpack.c.b16 %v6952, %v6944
        %v7985 = vpack.c.b16 %v6961, %v6953
        %v7986 = vpack.c.b16 %v6962, %v6954
        %v7987 = vpack.c.b16 %v6963, %v6955
        %v7988 = vpack.c.b16 %v6964, %v6956
        %v7989 = vpack.c.b16 %v6965, %v6957
        %v7990 = vpack.c.b16 %v6966, %v6958
        %v7991 = vpack.c.b16 %v6967, %v6959
        %v7992 = vpack.c.b16 %v6968, %v6960
        %v7993 = vpack.c.b16 %v6977, %v6969
        %v7994 = vpack.c.b16 %v6978, %v6970
        %v7995 = vpack.c.b16 %v6979, %v6971
        %v7996 = vpack.c.b16 %v6980, %v6972
        %v7997 = vpack.c.b16 %v6981, %v6973
        %v7998 = vpack.c.b16 %v6982, %v6974
        %v7999 = vpack.c.b16 %v6983, %v6975
        %v8000 = vpack.c.b16 %v6984, %v6976
        %v8001 = vpack.c.b16 %v6993, %v6985
        %v8002 = vpack.c.b16 %v6994, %v6986
        %v8003 = vpack.c.b16 %v6995, %v6987
        %v8004 = vpack.c.b16 %v6996, %v6988
        %v8005 = vpack.c.b16 %v6997, %v6989
        %v8006 = vpack.c.b16 %v6998, %v6990
        %v8007 = vpack.c.b16 %v6999, %v6991
        %v8008 = vpack.c.b16 %v7000, %v6992
        %v8009 = vpack.c.b16 %v7009, %v7001
        %v8010 = vpack.c.b16 %v7010, %v7002
        %v8011 = vpack.c.b16 %v7011, %v7003
        %v8012 = vpack.c.b16 %v7012, %v7004
        %v8013 = vpack.c.b16 %v7013, %v7005
        %v8014 = vpack.c.b16 %v7014, %v7006
        %v8015 = vpack.c.b16 %v7015, %v7007
        %v8016 = vpack.c.b16 %v7016, %v7008
        %v8017 = vpack.c.b16 %v7025, %v7017
        %v8018 = vpack.c.b16 %v7026, %v7018
        %v8019 = vpack.c.b16 %v7027, %v7019
        %v8020 = vpack.c.b16 %v7028, %v7020
        %v8021 = vpack.c.b16 %v7029, %v7021
        %v8022 = vpack.c.b16 %v7030, %v7022
        %v8023 = vpack.c.b16 %v7031, %v7023
        %v8024 = vpack.c.b16 %v7032, %v7024
        %v8025 = vpack.c.b16 %v7041, %v7033
        %v8026 = vpack.c.b16 %v7042, %v7034
        %v8027 = vpack.c.b16 %v7043, %v7035
        %v8028 = vpack.c.b16 %v7044, %v7036
        %v8029 = vpack.c.b16 %v7045, %v7037
        %v8030 = vpack.c.b16 %v7046, %v7038
        %v8031 = vpack.c.b16 %v7047, %v7039
        %v8032 = vpack.c.b16 %v7048, %v7040
        %v8033 = vpack.c.b16 %v7057, %v7049
        %v8034 = vpack.c.b16 %v7058, %v7050
        %v8035 = vpack.c.b16 %v7059, %v7051
        %v8036 = vpack.c.b16 %v7060, %v7052
        %v8037 = vpack.c.b16 %v7061, %v7053
        %v8038 = vpack.c.b16 %v7062, %v7054
        %v8039 = vpack.c.b16 %v7063, %v7055
        %v8040 = vpack.c.b16 %v7064, %v7056
        %v8041 = vpack.c.b16 %v7073, %v7065
        %v8042 = vpack.c.b16 %v7074, %v7066
        %v8043 = vpack.c.b16 %v7075, %v7067
        %v8044 = vpack.c.b16 %v7076, %v7068
        %v8045 = vpack.c.b16 %v7077, %v7069
        %v8046 = vpack.c.b16 %v7078, %v7070
        %v8047 = vpack.c.b16 %v7079, %v7071
        %v8048 = vpack.c.b16 %v7080, %v7072
        %v8049 = vpack.c.b16 %v7089, %v7081
        %v8050 = vpack.c.b16 %v7090, %v7082
        %v8051 = vpack.c.b16 %v7091, %v7083
        %v8052 = vpack.c.b16 %v7092, %v7084
        %v8053 = vpack.c.b16 %v7093, %v7085
        %v8054 = vpack.c.b16 %v7094, %v7086
        %v8055 = vpack.c.b16 %v7095, %v7087
        %v8056 = vpack.c.b16 %v7096, %v7088
        %v8057 = vpack.c.b16 %v7105, %v7097
        %v8058 = vpack.c.b16 %v7106, %v7098
        %v8059 = vpack.c.b16 %v7107, %v7099
        %v8060 = vpack.c.b16 %v7108, %v7100
        %v8061 = vpack.c.b16 %v7109, %v7101
        %v8062 = vpack.c.b16 %v7110, %v7102
        %v8063 = vpack.c.b16 %v7111, %v7103
        %v8064 = vpack.c.b16 %v7112, %v7104
        %v8065 = vpack.c.b16 %v7121, %v7113
        %v8066 = vpack.c.b16 %v7122, %v7114
        %v8067 = vpack.c.b16 %v7123, %v7115
        %v8068 = vpack.c.b16 %v7124, %v7116
        %v8069 = vpack.c.b16 %v7125, %v7117
        %v8070 = vpack.c.b16 %v7126, %v7118
        %v8071 = vpack.c.b16 %v7127, %v7119
        %v8072 = vpack.c.b16 %v7128, %v7120
        %v8073 = vpack.c.b16 %v7137, %v7129
        %v8074 = vpack.c.b16 %v7138, %v7130
        %v8075 = vpack.c.b16 %v7139, %v7131
        %v8076 = vpack.c.b16 %v7140, %v7132
        %v8077 = vpack.c.b16 %v7141, %v7133
        %v8078 = vpack.c.b16 %v7142, %v7134
        %v8079 = vpack.c.b16 %v7143, %v7135
        %v8080 = vpack.c.b16 %v7144, %v7136
        %v8081 = vpack.c.b16 %v7153, %v7145
        %v8082 = vpack.c.b16 %v7154, %v7146
        %v8083 = vpack.c.b16 %v7155, %v7147
        %v8084 = vpack.c.b16 %v7156, %v7148
        %v8085 = vpack.c.b16 %v7157, %v7149
        %v8086 = vpack.c.b16 %v7158, %v7150
        %v8087 = vpack.c.b16 %v7159, %v7151
        %v8088 = vpack.c.b16 %v7160, %v7152
        %v8089 = vpack.c.b16 %v7169, %v7161
        %v8090 = vpack.c.b16 %v7170, %v7162
        %v8091 = vpack.c.b16 %v7171, %v7163
        %v8092 = vpack.c.b16 %v7172, %v7164
        %v8093 = vpack.c.b16 %v7173, %v7165
        %v8094 = vpack.c.b16 %v7174, %v7166
        %v8095 = vpack.c.b16 %v7175, %v7167
        %v8096 = vpack.c.b16 %v7176, %v7168
        %v8097 = vpack.c.b16 %v7185, %v7177
        %v8098 = vpack.c.b16 %v7186, %v7178
        %v8099 = vpack.c.b16 %v7187, %v7179
        %v8100 = vpack.c.b16 %v7188, %v7180
        %v8101 = vpack.c.b16 %v7189, %v7181
        %v8102 = vpack.c.b16 %v7190, %v7182
        %v8103 = vpack.c.b16 %v7191, %v7183
        %v8104 = vpack.c.b16 %v7192, %v7184
        %v8105 = vpack.c.b16 %v7201, %v7193
        %v8106 = vpack.c.b16 %v7202, %v7194
        %v8107 = vpack.c.b16 %v7203, %v7195
        %v8108 = vpack.c.b16 %v7204, %v7196
        %v8109 = vpack.c.b16 %v7205, %v7197
        %v8110 = vpack.c.b16 %v7206, %v7198
        %v8111 = vpack.c.b16 %v7207, %v7199
        %v8112 = vpack.c.b16 %v7208, %v7200
        %v8113 = vpack.c.b16 %v7217, %v7209
        %v8114 = vpack.c.b16 %v7218, %v7210
        %v8115 = vpack.c.b16 %v7219, %v7211
        %v8116 = vpack.c.b16 %v7220, %v7212
        %v8117 = vpack.c.b16 %v7221, %v7213
        %v8118 = vpack.c.b16 %v7222, %v7214
        %v8119 = vpack.c.b16 %v7223, %v7215
        %v8120 = vpack.c.b16 %v7224, %v7216
        %9017 = vmatprep.subr.bf16.mxu0 %v7282
        %9018 = vmatpush1.bf16.msra.mxu0 %v7281
        %9019 = vmatprep.subr.bf16.mxu0 %v7274
        %9020 = vmatpush1.bf16.msra.mxu0 %v7273
        %9021 = vmatprep.subr.bf16.mxu0 %v7266
        %9022 = vmatpush1.bf16.msra.mxu0 %v7265
        %9023 = vmatprep.subr.bf16.mxu0 %v7258
        %9024 = vmatpush1.bf16.msra.mxu0 %v7257
        %9025 = vmatprep.subr.bf16.mxu0 %v7250
        %9026 = vmatpush1.bf16.msra.mxu0 %v7249
        %9027 = vmatprep.subr.bf16.mxu0 %v7242
        %9028 = vmatpush1.bf16.msra.mxu0 %v7241
        %9029 = vmatprep.subr.bf16.mxu0 %v7234
        %9030 = vmatpush1.bf16.msra.mxu0 %v7233
        %9031 = vmatprep.subr.bf16.mxu0 %v7226
        %9032 = vmatpush1.bf16.msra.mxu0 %v7225
        %9033 = vmatprep.subr.bf16.mxu0 %v7346
        %9034 = vmatpush2.bf16.msra.mxu0 %v7345
        %9035 = vmatprep.subr.bf16.mxu0 %v7338
        %9036 = vmatpush2.bf16.msra.mxu0 %v7337
        %9037 = vmatprep.subr.bf16.mxu0 %v7330
        %9038 = vmatpush2.bf16.msra.mxu0 %v7329
        %9039 = vmatprep.subr.bf16.mxu0 %v7322
        %9040 = vmatpush2.bf16.msra.mxu0 %v7321
        %9041 = vmatprep.subr.bf16.mxu0 %v7314
        %9042 = vmatpush2.bf16.msra.mxu0 %v7313
        %9043 = vmatprep.subr.bf16.mxu0 %v7306
        %9044 = vmatpush2.bf16.msra.mxu0 %v7305
        %9045 = vmatprep.subr.bf16.mxu0 %v7298
        %9046 = vmatpush2.bf16.msra.mxu0 %v7297
        %9047 = vmatprep.subr.bf16.mxu0 %v7290
        %9048 = vmatpush2.bf16.msra.mxu0 %v7289
        %9049 = vmatprep.mubr.bf16.mxu0 %v4464
        %9050 = vmatmul.mubr.bf16.gmra.mxu0 %v4450
        %v9051 = vpop.f32.mrf.mxu0
        %v9052 = vadd.f32 0.0, %v9051
        %v9053 = vpop.f32.mrf.mxu0
        %v9054 = vadd.f32 0.0, %v9053
        %v9055 = vpop.f32.mrf.mxu0
        %v9056 = vpop.f32.mrf.mxu0
        %9057 = vdwg.mxu0
        %9058 = vmatprep.subr.bf16.mxu0 %v7410
        %9059 = vmatpush1.bf16.msra.mxu0 %v7409
        %9060 = vmatprep.subr.bf16.mxu0 %v7402
        %9061 = vmatpush1.bf16.msra.mxu0 %v7401
        %9062 = vmatprep.subr.bf16.mxu0 %v7394
        %9063 = vmatpush1.bf16.msra.mxu0 %v7393
        %9064 = vmatprep.subr.bf16.mxu0 %v7386
        %9065 = vmatpush1.bf16.msra.mxu0 %v7385
        %9066 = vmatprep.subr.bf16.mxu0 %v7378
        %9067 = vmatpush1.bf16.msra.mxu0 %v7377
        %9068 = vmatprep.subr.bf16.mxu0 %v7370
        %9069 = vmatpush1.bf16.msra.mxu0 %v7369
        %9070 = vmatprep.subr.bf16.mxu0 %v7362
        %9071 = vmatpush1.bf16.msra.mxu0 %v7361
        %9072 = vmatprep.subr.bf16.mxu0 %v7354
        %9073 = vmatpush1.bf16.msra.mxu0 %v7353
        %9074 = vmatprep.subr.bf16.mxu0 %v7474
        %9075 = vmatpush2.bf16.msra.mxu0 %v7473
        %9076 = vmatprep.subr.bf16.mxu0 %v7466
        %9077 = vmatpush2.bf16.msra.mxu0 %v7465
        %9078 = vmatprep.subr.bf16.mxu0 %v7458
        %9079 = vmatpush2.bf16.msra.mxu0 %v7457
        %9080 = vmatprep.subr.bf16.mxu0 %v7450
        %9081 = vmatpush2.bf16.msra.mxu0 %v7449
        %9082 = vmatprep.subr.bf16.mxu0 %v7442
        %9083 = vmatpush2.bf16.msra.mxu0 %v7441
        %9084 = vmatprep.subr.bf16.mxu0 %v7434
        %9085 = vmatpush2.bf16.msra.mxu0 %v7433
        %9086 = vmatprep.subr.bf16.mxu0 %v7426
        %9087 = vmatpush2.bf16.msra.mxu0 %v7425
        %9088 = vmatprep.subr.bf16.mxu0 %v7418
        %9089 = vmatpush2.bf16.msra.mxu0 %v7417
        %9090 = vmatprep.mubr.bf16.mxu0 %v4474
        %9091 = vmatmul.mubr.bf16.gmra.mxu0 %v4472
        %v9092 = vpop.f32.mrf.mxu0
        %v9093 = vadd.f32 %v9052, %v9092
        %v9094 = vpop.f32.mrf.mxu0
        %v9095 = vadd.f32 %v9054, %v9094
        %v9096 = vpop.f32.mrf.mxu0
        %v9097 = vpop.f32.mrf.mxu0
        %9098 = vdwg.mxu0
        %9099 = vmatprep.subr.bf16.mxu0 %v7538
        %9100 = vmatpush1.bf16.msra.mxu0 %v7537
        %9101 = vmatprep.subr.bf16.mxu0 %v7530
        %9102 = vmatpush1.bf16.msra.mxu0 %v7529
        %9103 = vmatprep.subr.bf16.mxu0 %v7522
        %9104 = vmatpush1.bf16.msra.mxu0 %v7521
        %9105 = vmatprep.subr.bf16.mxu0 %v7514
        %9106 = vmatpush1.bf16.msra.mxu0 %v7513
        %9107 = vmatprep.subr.bf16.mxu0 %v7506
        %9108 = vmatpush1.bf16.msra.mxu0 %v7505
        %9109 = vmatprep.subr.bf16.mxu0 %v7498
        %9110 = vmatpush1.bf16.msra.mxu0 %v7497
        %9111 = vmatprep.subr.bf16.mxu0 %v7490
        %9112 = vmatpush1.bf16.msra.mxu0 %v7489
        %9113 = vmatprep.subr.bf16.mxu0 %v7482
        %9114 = vmatpush1.bf16.msra.mxu0 %v7481
        %9115 = vmatprep.subr.bf16.mxu0 %v7602
        %9116 = vmatpush2.bf16.msra.mxu0 %v7601
        %9117 = vmatprep.subr.bf16.mxu0 %v7594
        %9118 = vmatpush2.bf16.msra.mxu0 %v7593
        %9119 = vmatprep.subr.bf16.mxu0 %v7586
        %9120 = vmatpush2.bf16.msra.mxu0 %v7585
        %9121 = vmatprep.subr.bf16.mxu0 %v7578
        %9122 = vmatpush2.bf16.msra.mxu0 %v7577
        %9123 = vmatprep.subr.bf16.mxu0 %v7570
        %9124 = vmatpush2.bf16.msra.mxu0 %v7569
        %9125 = vmatprep.subr.bf16.mxu0 %v7562
        %9126 = vmatpush2.bf16.msra.mxu0 %v7561
        %9127 = vmatprep.subr.bf16.mxu0 %v7554
        %9128 = vmatpush2.bf16.msra.mxu0 %v7553
        %9129 = vmatprep.subr.bf16.mxu0 %v7546
        %9130 = vmatpush2.bf16.msra.mxu0 %v7545
        %9131 = vmatprep.mubr.bf16.mxu0 %v4471
        %9132 = vmatmul.mubr.bf16.gmra.mxu0 %v4457
        %v9133 = vpop.f32.mrf.mxu0
        %v9134 = vadd.f32 %v9093, %v9133
        %v9135 = vpop.f32.mrf.mxu0
        %v9136 = vadd.f32 %v9095, %v9135
        %v9137 = vpop.f32.mrf.mxu0
        %v9138 = vpop.f32.mrf.mxu0
        %9139 = vdwg.mxu0
        %9140 = vmatprep.subr.bf16.mxu0 %v7666
        %9141 = vmatpush1.bf16.msra.mxu0 %v7665
        %9142 = vmatprep.subr.bf16.mxu0 %v7658
        %9143 = vmatpush1.bf16.msra.mxu0 %v7657
        %9144 = vmatprep.subr.bf16.mxu0 %v7650
        %9145 = vmatpush1.bf16.msra.mxu0 %v7649
        %9146 = vmatprep.subr.bf16.mxu0 %v7642
        %9147 = vmatpush1.bf16.msra.mxu0 %v7641
        %9148 = vmatprep.subr.bf16.mxu0 %v7634
        %9149 = vmatpush1.bf16.msra.mxu0 %v7633
        %9150 = vmatprep.subr.bf16.mxu0 %v7626
        %9151 = vmatpush1.bf16.msra.mxu0 %v7625
        %9152 = vmatprep.subr.bf16.mxu0 %v7618
        %9153 = vmatpush1.bf16.msra.mxu0 %v7617
        %9154 = vmatprep.subr.bf16.mxu0 %v7610
        %9155 = vmatpush1.bf16.msra.mxu0 %v7609
        %9156 = vmatprep.subr.bf16.mxu0 %v7730
        %9157 = vmatpush2.bf16.msra.mxu0 %v7729
        %9158 = vmatprep.subr.bf16.mxu0 %v7722
        %9159 = vmatpush2.bf16.msra.mxu0 %v7721
        %9160 = vmatprep.subr.bf16.mxu0 %v7714
        %9161 = vmatpush2.bf16.msra.mxu0 %v7713
        %9162 = vmatprep.subr.bf16.mxu0 %v7706
        %9163 = vmatpush2.bf16.msra.mxu0 %v7705
        %9164 = vmatprep.subr.bf16.mxu0 %v7698
        %9165 = vmatpush2.bf16.msra.mxu0 %v7697
        %9166 = vmatprep.subr.bf16.mxu0 %v7690
        %9167 = vmatpush2.bf16.msra.mxu0 %v7689
        %9168 = vmatprep.subr.bf16.mxu0 %v7682
        %9169 = vmatpush2.bf16.msra.mxu0 %v7681
        %9170 = vmatprep.subr.bf16.mxu0 %v7674
        %9171 = vmatpush2.bf16.msra.mxu0 %v7673
        %9172 = vmatprep.mubr.bf16.mxu0 %v4475
        %9173 = vmatmul.mubr.bf16.gmra.mxu0 %v4473
        %v9174 = vpop.f32.mrf.mxu0
        %v9175 = vadd.f32 %v9134, %v9174
        %v9176 = vpop.f32.mrf.mxu0
        %v9177 = vadd.f32 %v9136, %v9176
        %v9178 = vpop.f32.mrf.mxu0
        %v9179 = vpop.f32.mrf.mxu0
        %9180 = vdwg.mxu0
        %9181 = vmatprep.subr.bf16.mxu0 %v7794
        %9182 = vmatpush1.bf16.msra.mxu0 %v7793
        %9183 = vmatprep.subr.bf16.mxu0 %v7786
        %9184 = vmatpush1.bf16.msra.mxu0 %v7785
        %9185 = vmatprep.subr.bf16.mxu0 %v7778
        %9186 = vmatpush1.bf16.msra.mxu0 %v7777
        %9187 = vmatprep.subr.bf16.mxu0 %v7770
        %9188 = vmatpush1.bf16.msra.mxu0 %v7769
        %9189 = vmatprep.subr.bf16.mxu0 %v7762
        %9190 = vmatpush1.bf16.msra.mxu0 %v7761
        %9191 = vmatprep.subr.bf16.mxu0 %v7754
        %9192 = vmatpush1.bf16.msra.mxu0 %v7753
        %9193 = vmatprep.subr.bf16.mxu0 %v7746
        %9194 = vmatpush1.bf16.msra.mxu0 %v7745
        %9195 = vmatprep.subr.bf16.mxu0 %v7738
        %9196 = vmatpush1.bf16.msra.mxu0 %v7737
        %9197 = vmatprep.subr.bf16.mxu0 %v7858
        %9198 = vmatpush2.bf16.msra.mxu0 %v7857
        %9199 = vmatprep.subr.bf16.mxu0 %v7850
        %9200 = vmatpush2.bf16.msra.mxu0 %v7849
        %9201 = vmatprep.subr.bf16.mxu0 %v7842
        %9202 = vmatpush2.bf16.msra.mxu0 %v7841
        %9203 = vmatprep.subr.bf16.mxu0 %v7834
        %9204 = vmatpush2.bf16.msra.mxu0 %v7833
        %9205 = vmatprep.subr.bf16.mxu0 %v7826
        %9206 = vmatpush2.bf16.msra.mxu0 %v7825
        %9207 = vmatprep.subr.bf16.mxu0 %v7818
        %9208 = vmatpush2.bf16.msra.mxu0 %v7817
        %9209 = vmatprep.subr.bf16.mxu0 %v7810
        %9210 = vmatpush2.bf16.msra.mxu0 %v7809
        %9211 = vmatprep.subr.bf16.mxu0 %v7802
        %9212 = vmatpush2.bf16.msra.mxu0 %v7801
        %9213 = vmatprep.mubr.bf16.mxu0 %v4513
        %9214 = vmatmul.mubr.bf16.gmra.mxu0 %v4499
        %v9215 = vpop.f32.mrf.mxu0
        %v9216 = vadd.f32 %v9175, %v9215
        %v9217 = vpop.f32.mrf.mxu0
        %v9218 = vadd.f32 %v9177, %v9217
        %v9219 = vpop.f32.mrf.mxu0
        %v9220 = vpop.f32.mrf.mxu0
        %9221 = vdwg.mxu0
        %9222 = vmatprep.subr.bf16.mxu0 %v7922
        %9223 = vmatpush1.bf16.msra.mxu0 %v7921
        %9224 = vmatprep.subr.bf16.mxu0 %v7914
        %9225 = vmatpush1.bf16.msra.mxu0 %v7913
        %9226 = vmatprep.subr.bf16.mxu0 %v7906
        %9227 = vmatpush1.bf16.msra.mxu0 %v7905
        %9228 = vmatprep.subr.bf16.mxu0 %v7898
        %9229 = vmatpush1.bf16.msra.mxu0 %v7897
        %9230 = vmatprep.subr.bf16.mxu0 %v7890
        %9231 = vmatpush1.bf16.msra.mxu0 %v7889
        %9232 = vmatprep.subr.bf16.mxu0 %v7882
        %9233 = vmatpush1.bf16.msra.mxu0 %v7881
        %9234 = vmatprep.subr.bf16.mxu0 %v7874
        %9235 = vmatpush1.bf16.msra.mxu0 %v7873
        %9236 = vmatprep.subr.bf16.mxu0 %v7866
        %9237 = vmatpush1.bf16.msra.mxu0 %v7865
        %9238 = vmatprep.subr.bf16.mxu0 %v7986
        %9239 = vmatpush2.bf16.msra.mxu0 %v7985
        %9240 = vmatprep.subr.bf16.mxu0 %v7978
        %9241 = vmatpush2.bf16.msra.mxu0 %v7977
        %9242 = vmatprep.subr.bf16.mxu0 %v7970
        %9243 = vmatpush2.bf16.msra.mxu0 %v7969
        %9244 = vmatprep.subr.bf16.mxu0 %v7962
        %9245 = vmatpush2.bf16.msra.mxu0 %v7961
        %9246 = vmatprep.subr.bf16.mxu0 %v7954
        %9247 = vmatpush2.bf16.msra.mxu0 %v7953
        %9248 = vmatprep.subr.bf16.mxu0 %v7946
        %9249 = vmatpush2.bf16.msra.mxu0 %v7945
        %9250 = vmatprep.subr.bf16.mxu0 %v7938
        %9251 = vmatpush2.bf16.msra.mxu0 %v7937
        %9252 = vmatprep.subr.bf16.mxu0 %v7930
        %9253 = vmatpush2.bf16.msra.mxu0 %v7929
        %9254 = vmatprep.mubr.bf16.mxu0 %v4522
        %9255 = vmatmul.mubr.bf16.gmra.mxu0 %v4521
        %v9256 = vpop.f32.mrf.mxu0
        %v9257 = vadd.f32 %v9216, %v9256
        %v9258 = vpop.f32.mrf.mxu0
        %v9259 = vadd.f32 %v9218, %v9258
        %v9260 = vpop.f32.mrf.mxu0
        %v9261 = vpop.f32.mrf.mxu0
        %9262 = vdwg.mxu0
        %9263 = vmatprep.subr.bf16.mxu0 %v8050
        %9264 = vmatpush1.bf16.msra.mxu0 %v8049
        %9265 = vmatprep.subr.bf16.mxu0 %v8042
        %9266 = vmatpush1.bf16.msra.mxu0 %v8041
        %9267 = vmatprep.subr.bf16.mxu0 %v8034
        %9268 = vmatpush1.bf16.msra.mxu0 %v8033
        %9269 = vmatprep.subr.bf16.mxu0 %v8026
        %9270 = vmatpush1.bf16.msra.mxu0 %v8025
        %9271 = vmatprep.subr.bf16.mxu0 %v8018
        %9272 = vmatpush1.bf16.msra.mxu0 %v8017
        %9273 = vmatprep.subr.bf16.mxu0 %v8010
        %9274 = vmatpush1.bf16.msra.mxu0 %v8009
        %9275 = vmatprep.subr.bf16.mxu0 %v8002
        %9276 = vmatpush1.bf16.msra.mxu0 %v8001
        %9277 = vmatprep.subr.bf16.mxu0 %v7994
        %9278 = vmatpush1.bf16.msra.mxu0 %v7993
        %9279 = vmatprep.subr.bf16.mxu0 %v8114
        %9280 = vmatpush2.bf16.msra.mxu0 %v8113
        %9281 = vmatprep.subr.bf16.mxu0 %v8106
        %9282 = vmatpush2.bf16.msra.mxu0 %v8105
        %9283 = vmatprep.subr.bf16.mxu0 %v8098
        %9284 = vmatpush2.bf16.msra.mxu0 %v8097
        %9285 = vmatprep.subr.bf16.mxu0 %v8090
        %9286 = vmatpush2.bf16.msra.mxu0 %v8089
        %9287 = vmatprep.subr.bf16.mxu0 %v8082
        %9288 = vmatpush2.bf16.msra.mxu0 %v8081
        %9289 = vmatprep.subr.bf16.mxu0 %v8074
        %9290 = vmatpush2.bf16.msra.mxu0 %v8073
        %9291 = vmatprep.subr.bf16.mxu0 %v8066
        %9292 = vmatpush2.bf16.msra.mxu0 %v8065
        %9293 = vmatprep.subr.bf16.mxu0 %v8058
        %9294 = vmatpush2.bf16.msra.mxu0 %v8057
        %9295 = vmatprep.mubr.bf16.mxu0 %v4520
        %9296 = vmatmul.mubr.bf16.gmra.mxu0 %v4506
        %v9297 = vpop.f32.mrf.mxu0
        %v9298 = vadd.f32 %v9257, %v9297
        %v9299 = vpop.f32.mrf.mxu0
        %v9300 = vadd.f32 %v9259, %v9299
        %v9301 = vpop.f32.mrf.mxu0
        %v9302 = vpop.f32.mrf.mxu0
        %9303 = vdwg.mxu0
        %9304 = vmatprep.subr.bf16.mxu0 %v7284
        %9305 = vmatpush1.bf16.msra.mxu0 %v7283
        %9306 = vmatprep.subr.bf16.mxu0 %v7276
        %9307 = vmatpush1.bf16.msra.mxu0 %v7275
        %9308 = vmatprep.subr.bf16.mxu0 %v7268
        %9309 = vmatpush1.bf16.msra.mxu0 %v7267
        %9310 = vmatprep.subr.bf16.mxu0 %v7260
        %9311 = vmatpush1.bf16.msra.mxu0 %v7259
        %9312 = vmatprep.subr.bf16.mxu0 %v7252
        %9313 = vmatpush1.bf16.msra.mxu0 %v7251
        %9314 = vmatprep.subr.bf16.mxu0 %v7244
        %9315 = vmatpush1.bf16.msra.mxu0 %v7243
        %9316 = vmatprep.subr.bf16.mxu0 %v7236
        %9317 = vmatpush1.bf16.msra.mxu0 %v7235
        %9318 = vmatprep.subr.bf16.mxu0 %v7228
        %9319 = vmatpush1.bf16.msra.mxu0 %v7227
        %9320 = vmatprep.subr.bf16.mxu0 %v7348
        %9321 = vmatpush2.bf16.msra.mxu0 %v7347
        %9322 = vmatprep.subr.bf16.mxu0 %v7340
        %9323 = vmatpush2.bf16.msra.mxu0 %v7339
        %9324 = vmatprep.subr.bf16.mxu0 %v7332
        %9325 = vmatpush2.bf16.msra.mxu0 %v7331
        %9326 = vmatprep.subr.bf16.mxu0 %v7324
        %9327 = vmatpush2.bf16.msra.mxu0 %v7323
        %9328 = vmatprep.subr.bf16.mxu0 %v7316
        %9329 = vmatpush2.bf16.msra.mxu0 %v7315
        %9330 = vmatprep.subr.bf16.mxu0 %v7308
        %9331 = vmatpush2.bf16.msra.mxu0 %v7307
        %9332 = vmatprep.subr.bf16.mxu0 %v7300
        %9333 = vmatpush2.bf16.msra.mxu0 %v7299
        %9334 = vmatprep.subr.bf16.mxu0 %v7292
        %9335 = vmatpush2.bf16.msra.mxu0 %v7291
        %9336 = vmatprep.mubr.bf16.mxu0 %v4464
        %9337 = vmatmul.mubr.bf16.gmra.mxu0 %v4450
        %v9338 = vpop.f32.mrf.mxu0
        %v9339 = vadd.f32 0.0, %v9338
        %v9340 = vpop.f32.mrf.mxu0
        %v9341 = vadd.f32 0.0, %v9340
        %v9342 = vpop.f32.mrf.mxu0
        %v9343 = vpop.f32.mrf.mxu0
        %9344 = vdwg.mxu0
        %9345 = vmatprep.subr.bf16.mxu0 %v7412
        %9346 = vmatpush1.bf16.msra.mxu0 %v7411
        %9347 = vmatprep.subr.bf16.mxu0 %v7404
        %9348 = vmatpush1.bf16.msra.mxu0 %v7403
        %9349 = vmatprep.subr.bf16.mxu0 %v7396
        %9350 = vmatpush1.bf16.msra.mxu0 %v7395
        %9351 = vmatprep.subr.bf16.mxu0 %v7388
        %9352 = vmatpush1.bf16.msra.mxu0 %v7387
        %9353 = vmatprep.subr.bf16.mxu0 %v7380
        %9354 = vmatpush1.bf16.msra.mxu0 %v7379
        %9355 = vmatprep.subr.bf16.mxu0 %v7372
        %9356 = vmatpush1.bf16.msra.mxu0 %v7371
        %9357 = vmatprep.subr.bf16.mxu0 %v7364
        %9358 = vmatpush1.bf16.msra.mxu0 %v7363
        %9359 = vmatprep.subr.bf16.mxu0 %v7356
        %9360 = vmatpush1.bf16.msra.mxu0 %v7355
        %9361 = vmatprep.subr.bf16.mxu0 %v7476
        %9362 = vmatpush2.bf16.msra.mxu0 %v7475
        %9363 = vmatprep.subr.bf16.mxu0 %v7468
        %9364 = vmatpush2.bf16.msra.mxu0 %v7467
        %9365 = vmatprep.subr.bf16.mxu0 %v7460
        %9366 = vmatpush2.bf16.msra.mxu0 %v7459
        %9367 = vmatprep.subr.bf16.mxu0 %v7452
        %9368 = vmatpush2.bf16.msra.mxu0 %v7451
        %9369 = vmatprep.subr.bf16.mxu0 %v7444
        %9370 = vmatpush2.bf16.msra.mxu0 %v7443
        %9371 = vmatprep.subr.bf16.mxu0 %v7436
        %9372 = vmatpush2.bf16.msra.mxu0 %v7435
        %9373 = vmatprep.subr.bf16.mxu0 %v7428
        %9374 = vmatpush2.bf16.msra.mxu0 %v7427
        %9375 = vmatprep.subr.bf16.mxu0 %v7420
        %9376 = vmatpush2.bf16.msra.mxu0 %v7419
        %9377 = vmatprep.mubr.bf16.mxu0 %v4474
        %9378 = vmatmul.mubr.bf16.gmra.mxu0 %v4472
        %v9379 = vpop.f32.mrf.mxu0
        %v9380 = vadd.f32 %v9339, %v9379
        %v9381 = vpop.f32.mrf.mxu0
        %v9382 = vadd.f32 %v9341, %v9381
        %v9383 = vpop.f32.mrf.mxu0
        %v9384 = vpop.f32.mrf.mxu0
        %9385 = vdwg.mxu0
        %9386 = vmatprep.subr.bf16.mxu0 %v7540
        %9387 = vmatpush1.bf16.msra.mxu0 %v7539
        %9388 = vmatprep.subr.bf16.mxu0 %v7532
        %9389 = vmatpush1.bf16.msra.mxu0 %v7531
        %9390 = vmatprep.subr.bf16.mxu0 %v7524
        %9391 = vmatpush1.bf16.msra.mxu0 %v7523
        %9392 = vmatprep.subr.bf16.mxu0 %v7516
        %9393 = vmatpush1.bf16.msra.mxu0 %v7515
        %9394 = vmatprep.subr.bf16.mxu0 %v7508
        %9395 = vmatpush1.bf16.msra.mxu0 %v7507
        %9396 = vmatprep.subr.bf16.mxu0 %v7500
        %9397 = vmatpush1.bf16.msra.mxu0 %v7499
        %9398 = vmatprep.subr.bf16.mxu0 %v7492
        %9399 = vmatpush1.bf16.msra.mxu0 %v7491
        %9400 = vmatprep.subr.bf16.mxu0 %v7484
        %9401 = vmatpush1.bf16.msra.mxu0 %v7483
        %9402 = vmatprep.subr.bf16.mxu0 %v7604
        %9403 = vmatpush2.bf16.msra.mxu0 %v7603
        %9404 = vmatprep.subr.bf16.mxu0 %v7596
        %9405 = vmatpush2.bf16.msra.mxu0 %v7595
        %9406 = vmatprep.subr.bf16.mxu0 %v7588
        %9407 = vmatpush2.bf16.msra.mxu0 %v7587
        %9408 = vmatprep.subr.bf16.mxu0 %v7580
        %9409 = vmatpush2.bf16.msra.mxu0 %v7579
        %9410 = vmatprep.subr.bf16.mxu0 %v7572
        %9411 = vmatpush2.bf16.msra.mxu0 %v7571
        %9412 = vmatprep.subr.bf16.mxu0 %v7564
        %9413 = vmatpush2.bf16.msra.mxu0 %v7563
        %9414 = vmatprep.subr.bf16.mxu0 %v7556
        %9415 = vmatpush2.bf16.msra.mxu0 %v7555
        %9416 = vmatprep.subr.bf16.mxu0 %v7548
        %9417 = vmatpush2.bf16.msra.mxu0 %v7547
        %9418 = vmatprep.mubr.bf16.mxu0 %v4471
        %9419 = vmatmul.mubr.bf16.gmra.mxu0 %v4457
        %v9420 = vpop.f32.mrf.mxu0
        %v9421 = vadd.f32 %v9380, %v9420
        %v9422 = vpop.f32.mrf.mxu0
        %v9423 = vadd.f32 %v9382, %v9422
        %v9424 = vpop.f32.mrf.mxu0
        %v9425 = vpop.f32.mrf.mxu0
        %9426 = vdwg.mxu0
        %9427 = vmatprep.subr.bf16.mxu0 %v7668
        %9428 = vmatpush1.bf16.msra.mxu0 %v7667
        %9429 = vmatprep.subr.bf16.mxu0 %v7660
        %9430 = vmatpush1.bf16.msra.mxu0 %v7659
        %9431 = vmatprep.subr.bf16.mxu0 %v7652
        %9432 = vmatpush1.bf16.msra.mxu0 %v7651
        %9433 = vmatprep.subr.bf16.mxu0 %v7644
        %9434 = vmatpush1.bf16.msra.mxu0 %v7643
        %9435 = vmatprep.subr.bf16.mxu0 %v7636
        %9436 = vmatpush1.bf16.msra.mxu0 %v7635
        %9437 = vmatprep.subr.bf16.mxu0 %v7628
        %9438 = vmatpush1.bf16.msra.mxu0 %v7627
        %9439 = vmatprep.subr.bf16.mxu0 %v7620
        %9440 = vmatpush1.bf16.msra.mxu0 %v7619
        %9441 = vmatprep.subr.bf16.mxu0 %v7612
        %9442 = vmatpush1.bf16.msra.mxu0 %v7611
        %9443 = vmatprep.subr.bf16.mxu0 %v7732
        %9444 = vmatpush2.bf16.msra.mxu0 %v7731
        %9445 = vmatprep.subr.bf16.mxu0 %v7724
        %9446 = vmatpush2.bf16.msra.mxu0 %v7723
        %9447 = vmatprep.subr.bf16.mxu0 %v7716
        %9448 = vmatpush2.bf16.msra.mxu0 %v7715
        %9449 = vmatprep.subr.bf16.mxu0 %v7708
        %9450 = vmatpush2.bf16.msra.mxu0 %v7707
        %9451 = vmatprep.subr.bf16.mxu0 %v7700
        %9452 = vmatpush2.bf16.msra.mxu0 %v7699
        %9453 = vmatprep.subr.bf16.mxu0 %v7692
        %9454 = vmatpush2.bf16.msra.mxu0 %v7691
        %9455 = vmatprep.subr.bf16.mxu0 %v7684
        %9456 = vmatpush2.bf16.msra.mxu0 %v7683
        %9457 = vmatprep.subr.bf16.mxu0 %v7676
        %9458 = vmatpush2.bf16.msra.mxu0 %v7675
        %9459 = vmatprep.mubr.bf16.mxu0 %v4475
        %9460 = vmatmul.mubr.bf16.gmra.mxu0 %v4473
        %v9461 = vpop.f32.mrf.mxu0
        %v9462 = vadd.f32 %v9421, %v9461
        %v9463 = vpop.f32.mrf.mxu0
        %v9464 = vadd.f32 %v9423, %v9463
        %v9465 = vpop.f32.mrf.mxu0
        %v9466 = vpop.f32.mrf.mxu0
        %9467 = vdwg.mxu0
        %9468 = vmatprep.subr.bf16.mxu0 %v7796
        %9469 = vmatpush1.bf16.msra.mxu0 %v7795
        %9470 = vmatprep.subr.bf16.mxu0 %v7788
        %9471 = vmatpush1.bf16.msra.mxu0 %v7787
        %9472 = vmatprep.subr.bf16.mxu0 %v7780
        %9473 = vmatpush1.bf16.msra.mxu0 %v7779
        %9474 = vmatprep.subr.bf16.mxu0 %v7772
        %9475 = vmatpush1.bf16.msra.mxu0 %v7771
        %9476 = vmatprep.subr.bf16.mxu0 %v7764
        %9477 = vmatpush1.bf16.msra.mxu0 %v7763
        %9478 = vmatprep.subr.bf16.mxu0 %v7756
        %9479 = vmatpush1.bf16.msra.mxu0 %v7755
        %9480 = vmatprep.subr.bf16.mxu0 %v7748
        %9481 = vmatpush1.bf16.msra.mxu0 %v7747
        %9482 = vmatprep.subr.bf16.mxu0 %v7740
        %9483 = vmatpush1.bf16.msra.mxu0 %v7739
        %9484 = vmatprep.subr.bf16.mxu0 %v7860
        %9485 = vmatpush2.bf16.msra.mxu0 %v7859
        %9486 = vmatprep.subr.bf16.mxu0 %v7852
        %9487 = vmatpush2.bf16.msra.mxu0 %v7851
        %9488 = vmatprep.subr.bf16.mxu0 %v7844
        %9489 = vmatpush2.bf16.msra.mxu0 %v7843
        %9490 = vmatprep.subr.bf16.mxu0 %v7836
        %9491 = vmatpush2.bf16.msra.mxu0 %v7835
        %9492 = vmatprep.subr.bf16.mxu0 %v7828
        %9493 = vmatpush2.bf16.msra.mxu0 %v7827
        %9494 = vmatprep.subr.bf16.mxu0 %v7820
        %9495 = vmatpush2.bf16.msra.mxu0 %v7819
        %9496 = vmatprep.subr.bf16.mxu0 %v7812
        %9497 = vmatpush2.bf16.msra.mxu0 %v7811
        %9498 = vmatprep.subr.bf16.mxu0 %v7804
        %9499 = vmatpush2.bf16.msra.mxu0 %v7803
        %9500 = vmatprep.mubr.bf16.mxu0 %v4513
        %9501 = vmatmul.mubr.bf16.gmra.mxu0 %v4499
        %v9502 = vpop.f32.mrf.mxu0
        %v9503 = vadd.f32 %v9462, %v9502
        %v9504 = vpop.f32.mrf.mxu0
        %v9505 = vadd.f32 %v9464, %v9504
        %v9506 = vpop.f32.mrf.mxu0
        %v9507 = vpop.f32.mrf.mxu0
        %9508 = vdwg.mxu0
        %9509 = vmatprep.subr.bf16.mxu0 %v7924
        %9510 = vmatpush1.bf16.msra.mxu0 %v7923
        %9511 = vmatprep.subr.bf16.mxu0 %v7916
        %9512 = vmatpush1.bf16.msra.mxu0 %v7915
        %9513 = vmatprep.subr.bf16.mxu0 %v7908
        %9514 = vmatpush1.bf16.msra.mxu0 %v7907
        %9515 = vmatprep.subr.bf16.mxu0 %v7900
        %9516 = vmatpush1.bf16.msra.mxu0 %v7899
        %9517 = vmatprep.subr.bf16.mxu0 %v7892
        %9518 = vmatpush1.bf16.msra.mxu0 %v7891
        %9519 = vmatprep.subr.bf16.mxu0 %v7884
        %9520 = vmatpush1.bf16.msra.mxu0 %v7883
        %9521 = vmatprep.subr.bf16.mxu0 %v7876
        %9522 = vmatpush1.bf16.msra.mxu0 %v7875
        %9523 = vmatprep.subr.bf16.mxu0 %v7868
        %9524 = vmatpush1.bf16.msra.mxu0 %v7867
        %9525 = vmatprep.subr.bf16.mxu0 %v7988
        %9526 = vmatpush2.bf16.msra.mxu0 %v7987
        %9527 = vmatprep.subr.bf16.mxu0 %v7980
        %9528 = vmatpush2.bf16.msra.mxu0 %v7979
        %9529 = vmatprep.subr.bf16.mxu0 %v7972
        %9530 = vmatpush2.bf16.msra.mxu0 %v7971
        %9531 = vmatprep.subr.bf16.mxu0 %v7964
        %9532 = vmatpush2.bf16.msra.mxu0 %v7963
        %9533 = vmatprep.subr.bf16.mxu0 %v7956
        %9534 = vmatpush2.bf16.msra.mxu0 %v7955
        %9535 = vmatprep.subr.bf16.mxu0 %v7948
        %9536 = vmatpush2.bf16.msra.mxu0 %v7947
        %9537 = vmatprep.subr.bf16.mxu0 %v7940
        %9538 = vmatpush2.bf16.msra.mxu0 %v7939
        %9539 = vmatprep.subr.bf16.mxu0 %v7932
        %9540 = vmatpush2.bf16.msra.mxu0 %v7931
        %9541 = vmatprep.mubr.bf16.mxu0 %v4522
        %9542 = vmatmul.mubr.bf16.gmra.mxu0 %v4521
        %v9543 = vpop.f32.mrf.mxu0
        %v9544 = vadd.f32 %v9503, %v9543
        %v9545 = vpop.f32.mrf.mxu0
        %v9546 = vadd.f32 %v9505, %v9545
        %v9547 = vpop.f32.mrf.mxu0
        %v9548 = vpop.f32.mrf.mxu0
        %9549 = vdwg.mxu0
        %9550 = vmatprep.subr.bf16.mxu0 %v8052
        %9551 = vmatpush1.bf16.msra.mxu0 %v8051
        %9552 = vmatprep.subr.bf16.mxu0 %v8044
        %9553 = vmatpush1.bf16.msra.mxu0 %v8043
        %9554 = vmatprep.subr.bf16.mxu0 %v8036
        %9555 = vmatpush1.bf16.msra.mxu0 %v8035
        %9556 = vmatprep.subr.bf16.mxu0 %v8028
        %9557 = vmatpush1.bf16.msra.mxu0 %v8027
        %9558 = vmatprep.subr.bf16.mxu0 %v8020
        %9559 = vmatpush1.bf16.msra.mxu0 %v8019
        %9560 = vmatprep.subr.bf16.mxu0 %v8012
        %9561 = vmatpush1.bf16.msra.mxu0 %v8011
        %9562 = vmatprep.subr.bf16.mxu0 %v8004
        %9563 = vmatpush1.bf16.msra.mxu0 %v8003
        %9564 = vmatprep.subr.bf16.mxu0 %v7996
        %9565 = vmatpush1.bf16.msra.mxu0 %v7995
        %9566 = vmatprep.subr.bf16.mxu0 %v8116
        %9567 = vmatpush2.bf16.msra.mxu0 %v8115
        %9568 = vmatprep.subr.bf16.mxu0 %v8108
        %9569 = vmatpush2.bf16.msra.mxu0 %v8107
        %9570 = vmatprep.subr.bf16.mxu0 %v8100
        %9571 = vmatpush2.bf16.msra.mxu0 %v8099
        %9572 = vmatprep.subr.bf16.mxu0 %v8092
        %9573 = vmatpush2.bf16.msra.mxu0 %v8091
        %9574 = vmatprep.subr.bf16.mxu0 %v8084
        %9575 = vmatpush2.bf16.msra.mxu0 %v8083
        %9576 = vmatprep.subr.bf16.mxu0 %v8076
        %9577 = vmatpush2.bf16.msra.mxu0 %v8075
        %9578 = vmatprep.subr.bf16.mxu0 %v8068
        %9579 = vmatpush2.bf16.msra.mxu0 %v8067
        %9580 = vmatprep.subr.bf16.mxu0 %v8060
        %9581 = vmatpush2.bf16.msra.mxu0 %v8059
        %9582 = vmatprep.mubr.bf16.mxu0 %v4520
        %9583 = vmatmul.mubr.bf16.gmra.mxu0 %v4506
        %v9584 = vpop.f32.mrf.mxu0
        %v9585 = vadd.f32 %v9544, %v9584
        %v9586 = vpop.f32.mrf.mxu0
        %v9587 = vadd.f32 %v9546, %v9586
        %v9588 = vpop.f32.mrf.mxu0
        %v9589 = vpop.f32.mrf.mxu0
        %9590 = vdwg.mxu0
        %9591 = vmatprep.subr.bf16.mxu0 %v7286
        %9592 = vmatpush1.bf16.msra.mxu0 %v7285
        %9593 = vmatprep.subr.bf16.mxu0 %v7278
        %9594 = vmatpush1.bf16.msra.mxu0 %v7277
        %9595 = vmatprep.subr.bf16.mxu0 %v7270
        %9596 = vmatpush1.bf16.msra.mxu0 %v7269
        %9597 = vmatprep.subr.bf16.mxu0 %v7262
        %9598 = vmatpush1.bf16.msra.mxu0 %v7261
        %9599 = vmatprep.subr.bf16.mxu0 %v7254
        %9600 = vmatpush1.bf16.msra.mxu0 %v7253
        %9601 = vmatprep.subr.bf16.mxu0 %v7246
        %9602 = vmatpush1.bf16.msra.mxu0 %v7245
        %9603 = vmatprep.subr.bf16.mxu0 %v7238
        %9604 = vmatpush1.bf16.msra.mxu0 %v7237
        %9605 = vmatprep.subr.bf16.mxu0 %v7230
        %9606 = vmatpush1.bf16.msra.mxu0 %v7229
        %9607 = vmatprep.subr.bf16.mxu0 %v7350
        %9608 = vmatpush2.bf16.msra.mxu0 %v7349
        %9609 = vmatprep.subr.bf16.mxu0 %v7342
        %9610 = vmatpush2.bf16.msra.mxu0 %v7341
        %9611 = vmatprep.subr.bf16.mxu0 %v7334
        %9612 = vmatpush2.bf16.msra.mxu0 %v7333
        %9613 = vmatprep.subr.bf16.mxu0 %v7326
        %9614 = vmatpush2.bf16.msra.mxu0 %v7325
        %9615 = vmatprep.subr.bf16.mxu0 %v7318
        %9616 = vmatpush2.bf16.msra.mxu0 %v7317
        %9617 = vmatprep.subr.bf16.mxu0 %v7310
        %9618 = vmatpush2.bf16.msra.mxu0 %v7309
        %9619 = vmatprep.subr.bf16.mxu0 %v7302
        %9620 = vmatpush2.bf16.msra.mxu0 %v7301
        %9621 = vmatprep.subr.bf16.mxu0 %v7294
        %9622 = vmatpush2.bf16.msra.mxu0 %v7293
        %9623 = vmatprep.mubr.bf16.mxu0 %v4464
        %9624 = vmatmul.mubr.bf16.gmra.mxu0 %v4450
        %v9625 = vpop.f32.mrf.mxu0
        %v9626 = vadd.f32 0.0, %v9625
        %v9627 = vpop.f32.mrf.mxu0
        %v9628 = vadd.f32 0.0, %v9627
        %v9629 = vpop.f32.mrf.mxu0
        %v9630 = vpop.f32.mrf.mxu0
        %9631 = vdwg.mxu0
        %9632 = vmatprep.subr.bf16.mxu0 %v7414
        %9633 = vmatpush1.bf16.msra.mxu0 %v7413
        %9634 = vmatprep.subr.bf16.mxu0 %v7406
        %9635 = vmatpush1.bf16.msra.mxu0 %v7405
        %9636 = vmatprep.subr.bf16.mxu0 %v7398
        %9637 = vmatpush1.bf16.msra.mxu0 %v7397
        %9638 = vmatprep.subr.bf16.mxu0 %v7390
        %9639 = vmatpush1.bf16.msra.mxu0 %v7389
        %9640 = vmatprep.subr.bf16.mxu0 %v7382
        %9641 = vmatpush1.bf16.msra.mxu0 %v7381
        %9642 = vmatprep.subr.bf16.mxu0 %v7374
        %9643 = vmatpush1.bf16.msra.mxu0 %v7373
        %9644 = vmatprep.subr.bf16.mxu0 %v7366
        %9645 = vmatpush1.bf16.msra.mxu0 %v7365
        %9646 = vmatprep.subr.bf16.mxu0 %v7358
        %9647 = vmatpush1.bf16.msra.mxu0 %v7357
        %9648 = vmatprep.subr.bf16.mxu0 %v7478
        %9649 = vmatpush2.bf16.msra.mxu0 %v7477
        %9650 = vmatprep.subr.bf16.mxu0 %v7470
        %9651 = vmatpush2.bf16.msra.mxu0 %v7469
        %9652 = vmatprep.subr.bf16.mxu0 %v7462
        %9653 = vmatpush2.bf16.msra.mxu0 %v7461
        %9654 = vmatprep.subr.bf16.mxu0 %v7454
        %9655 = vmatpush2.bf16.msra.mxu0 %v7453
        %9656 = vmatprep.subr.bf16.mxu0 %v7446
        %9657 = vmatpush2.bf16.msra.mxu0 %v7445
        %9658 = vmatprep.subr.bf16.mxu0 %v7438
        %9659 = vmatpush2.bf16.msra.mxu0 %v7437
        %9660 = vmatprep.subr.bf16.mxu0 %v7430
        %9661 = vmatpush2.bf16.msra.mxu0 %v7429
        %9662 = vmatprep.subr.bf16.mxu0 %v7422
        %9663 = vmatpush2.bf16.msra.mxu0 %v7421
        %9664 = vmatprep.mubr.bf16.mxu0 %v4474
        %9665 = vmatmul.mubr.bf16.gmra.mxu0 %v4472
        %v9666 = vpop.f32.mrf.mxu0
        %v9667 = vadd.f32 %v9626, %v9666
        %v9668 = vpop.f32.mrf.mxu0
        %v9669 = vadd.f32 %v9628, %v9668
        %v9670 = vpop.f32.mrf.mxu0
        %v9671 = vpop.f32.mrf.mxu0
        %9672 = vdwg.mxu0
        %9673 = vmatprep.subr.bf16.mxu0 %v7542
        %9674 = vmatpush1.bf16.msra.mxu0 %v7541
        %9675 = vmatprep.subr.bf16.mxu0 %v7534
        %9676 = vmatpush1.bf16.msra.mxu0 %v7533
        %9677 = vmatprep.subr.bf16.mxu0 %v7526
        %9678 = vmatpush1.bf16.msra.mxu0 %v7525
        %9679 = vmatprep.subr.bf16.mxu0 %v7518
        %9680 = vmatpush1.bf16.msra.mxu0 %v7517
        %9681 = vmatprep.subr.bf16.mxu0 %v7510
        %9682 = vmatpush1.bf16.msra.mxu0 %v7509
        %9683 = vmatprep.subr.bf16.mxu0 %v7502
        %9684 = vmatpush1.bf16.msra.mxu0 %v7501
        %9685 = vmatprep.subr.bf16.mxu0 %v7494
        %9686 = vmatpush1.bf16.msra.mxu0 %v7493
        %9687 = vmatprep.subr.bf16.mxu0 %v7486
        %9688 = vmatpush1.bf16.msra.mxu0 %v7485
        %9689 = vmatprep.subr.bf16.mxu0 %v7606
        %9690 = vmatpush2.bf16.msra.mxu0 %v7605
        %9691 = vmatprep.subr.bf16.mxu0 %v7598
        %9692 = vmatpush2.bf16.msra.mxu0 %v7597
        %9693 = vmatprep.subr.bf16.mxu0 %v7590
        %9694 = vmatpush2.bf16.msra.mxu0 %v7589
        %9695 = vmatprep.subr.bf16.mxu0 %v7582
        %9696 = vmatpush2.bf16.msra.mxu0 %v7581
        %9697 = vmatprep.subr.bf16.mxu0 %v7574
        %9698 = vmatpush2.bf16.msra.mxu0 %v7573
        %9699 = vmatprep.subr.bf16.mxu0 %v7566
        %9700 = vmatpush2.bf16.msra.mxu0 %v7565
        %9701 = vmatprep.subr.bf16.mxu0 %v7558
        %9702 = vmatpush2.bf16.msra.mxu0 %v7557
        %9703 = vmatprep.subr.bf16.mxu0 %v7550
        %9704 = vmatpush2.bf16.msra.mxu0 %v7549
        %9705 = vmatprep.mubr.bf16.mxu0 %v4471
        %9706 = vmatmul.mubr.bf16.gmra.mxu0 %v4457
        %v9707 = vpop.f32.mrf.mxu0
        %v9708 = vadd.f32 %v9667, %v9707
        %v9709 = vpop.f32.mrf.mxu0
        %v9710 = vadd.f32 %v9669, %v9709
        %v9711 = vpop.f32.mrf.mxu0
        %v9712 = vpop.f32.mrf.mxu0
        %9713 = vdwg.mxu0
        %9714 = vmatprep.subr.bf16.mxu0 %v7670
        %9715 = vmatpush1.bf16.msra.mxu0 %v7669
        %9716 = vmatprep.subr.bf16.mxu0 %v7662
        %9717 = vmatpush1.bf16.msra.mxu0 %v7661
        %9718 = vmatprep.subr.bf16.mxu0 %v7654
        %9719 = vmatpush1.bf16.msra.mxu0 %v7653
        %9720 = vmatprep.subr.bf16.mxu0 %v7646
        %9721 = vmatpush1.bf16.msra.mxu0 %v7645
        %9722 = vmatprep.subr.bf16.mxu0 %v7638
        %9723 = vmatpush1.bf16.msra.mxu0 %v7637
        %9724 = vmatprep.subr.bf16.mxu0 %v7630
        %9725 = vmatpush1.bf16.msra.mxu0 %v7629
        %9726 = vmatprep.subr.bf16.mxu0 %v7622
        %9727 = vmatpush1.bf16.msra.mxu0 %v7621
        %9728 = vmatprep.subr.bf16.mxu0 %v7614
        %9729 = vmatpush1.bf16.msra.mxu0 %v7613
        %9730 = vmatprep.subr.bf16.mxu0 %v7734
        %9731 = vmatpush2.bf16.msra.mxu0 %v7733
        %9732 = vmatprep.subr.bf16.mxu0 %v7726
        %9733 = vmatpush2.bf16.msra.mxu0 %v7725
        %9734 = vmatprep.subr.bf16.mxu0 %v7718
        %9735 = vmatpush2.bf16.msra.mxu0 %v7717
        %9736 = vmatprep.subr.bf16.mxu0 %v7710
        %9737 = vmatpush2.bf16.msra.mxu0 %v7709
        %9738 = vmatprep.subr.bf16.mxu0 %v7702
        %9739 = vmatpush2.bf16.msra.mxu0 %v7701
        %9740 = vmatprep.subr.bf16.mxu0 %v7694
        %9741 = vmatpush2.bf16.msra.mxu0 %v7693
        %9742 = vmatprep.subr.bf16.mxu0 %v7686
        %9743 = vmatpush2.bf16.msra.mxu0 %v7685
        %9744 = vmatprep.subr.bf16.mxu0 %v7678
        %9745 = vmatpush2.bf16.msra.mxu0 %v7677
        %9746 = vmatprep.mubr.bf16.mxu0 %v4475
        %9747 = vmatmul.mubr.bf16.gmra.mxu0 %v4473
        %v9748 = vpop.f32.mrf.mxu0
        %v9749 = vadd.f32 %v9708, %v9748
        %v9750 = vpop.f32.mrf.mxu0
        %v9751 = vadd.f32 %v9710, %v9750
        %v9752 = vpop.f32.mrf.mxu0
        %v9753 = vpop.f32.mrf.mxu0
        %9754 = vdwg.mxu0
        %9755 = vmatprep.subr.bf16.mxu0 %v7798
        %9756 = vmatpush1.bf16.msra.mxu0 %v7797
        %9757 = vmatprep.subr.bf16.mxu0 %v7790
        %9758 = vmatpush1.bf16.msra.mxu0 %v7789
        %9759 = vmatprep.subr.bf16.mxu0 %v7782
        %9760 = vmatpush1.bf16.msra.mxu0 %v7781
        %9761 = vmatprep.subr.bf16.mxu0 %v7774
        %9762 = vmatpush1.bf16.msra.mxu0 %v7773
        %9763 = vmatprep.subr.bf16.mxu0 %v7766
        %9764 = vmatpush1.bf16.msra.mxu0 %v7765
        %9765 = vmatprep.subr.bf16.mxu0 %v7758
        %9766 = vmatpush1.bf16.msra.mxu0 %v7757
        %9767 = vmatprep.subr.bf16.mxu0 %v7750
        %9768 = vmatpush1.bf16.msra.mxu0 %v7749
        %9769 = vmatprep.subr.bf16.mxu0 %v7742
        %9770 = vmatpush1.bf16.msra.mxu0 %v7741
        %9771 = vmatprep.subr.bf16.mxu0 %v7862
        %9772 = vmatpush2.bf16.msra.mxu0 %v7861
        %9773 = vmatprep.subr.bf16.mxu0 %v7854
        %9774 = vmatpush2.bf16.msra.mxu0 %v7853
        %9775 = vmatprep.subr.bf16.mxu0 %v7846
        %9776 = vmatpush2.bf16.msra.mxu0 %v7845
        %9777 = vmatprep.subr.bf16.mxu0 %v7838
        %9778 = vmatpush2.bf16.msra.mxu0 %v7837
        %9779 = vmatprep.subr.bf16.mxu0 %v7830
        %9780 = vmatpush2.bf16.msra.mxu0 %v7829
        %9781 = vmatprep.subr.bf16.mxu0 %v7822
        %9782 = vmatpush2.bf16.msra.mxu0 %v7821
        %9783 = vmatprep.subr.bf16.mxu0 %v7814
        %9784 = vmatpush2.bf16.msra.mxu0 %v7813
        %9785 = vmatprep.subr.bf16.mxu0 %v7806
        %9786 = vmatpush2.bf16.msra.mxu0 %v7805
        %9787 = vmatprep.mubr.bf16.mxu0 %v4513
        %9788 = vmatmul.mubr.bf16.gmra.mxu0 %v4499
        %v9789 = vpop.f32.mrf.mxu0
        %v9790 = vadd.f32 %v9749, %v9789
        %v9791 = vpop.f32.mrf.mxu0
        %v9792 = vadd.f32 %v9751, %v9791
        %v9793 = vpop.f32.mrf.mxu0
        %v9794 = vpop.f32.mrf.mxu0
        %9795 = vdwg.mxu0
        %9796 = vmatprep.subr.bf16.mxu0 %v7926
        %9797 = vmatpush1.bf16.msra.mxu0 %v7925
        %9798 = vmatprep.subr.bf16.mxu0 %v7918
        %9799 = vmatpush1.bf16.msra.mxu0 %v7917
        %9800 = vmatprep.subr.bf16.mxu0 %v7910
        %9801 = vmatpush1.bf16.msra.mxu0 %v7909
        %9802 = vmatprep.subr.bf16.mxu0 %v7902
        %9803 = vmatpush1.bf16.msra.mxu0 %v7901
        %9804 = vmatprep.subr.bf16.mxu0 %v7894
        %9805 = vmatpush1.bf16.msra.mxu0 %v7893
        %9806 = vmatprep.subr.bf16.mxu0 %v7886
        %9807 = vmatpush1.bf16.msra.mxu0 %v7885
        %9808 = vmatprep.subr.bf16.mxu0 %v7878
        %9809 = vmatpush1.bf16.msra.mxu0 %v7877
        %9810 = vmatprep.subr.bf16.mxu0 %v7870
        %9811 = vmatpush1.bf16.msra.mxu0 %v7869
        %9812 = vmatprep.subr.bf16.mxu0 %v7990
        %9813 = vmatpush2.bf16.msra.mxu0 %v7989
        %9814 = vmatprep.subr.bf16.mxu0 %v7982
        %9815 = vmatpush2.bf16.msra.mxu0 %v7981
        %9816 = vmatprep.subr.bf16.mxu0 %v7974
        %9817 = vmatpush2.bf16.msra.mxu0 %v7973
        %9818 = vmatprep.subr.bf16.mxu0 %v7966
        %9819 = vmatpush2.bf16.msra.mxu0 %v7965
        %9820 = vmatprep.subr.bf16.mxu0 %v7958
        %9821 = vmatpush2.bf16.msra.mxu0 %v7957
        %9822 = vmatprep.subr.bf16.mxu0 %v7950
        %9823 = vmatpush2.bf16.msra.mxu0 %v7949
        %9824 = vmatprep.subr.bf16.mxu0 %v7942
        %9825 = vmatpush2.bf16.msra.mxu0 %v7941
        %9826 = vmatprep.subr.bf16.mxu0 %v7934
        %9827 = vmatpush2.bf16.msra.mxu0 %v7933
        %9828 = vmatprep.mubr.bf16.mxu0 %v4522
        %9829 = vmatmul.mubr.bf16.gmra.mxu0 %v4521
        %v9830 = vpop.f32.mrf.mxu0
        %v9831 = vadd.f32 %v9790, %v9830
        %v9832 = vpop.f32.mrf.mxu0
        %v9833 = vadd.f32 %v9792, %v9832
        %v9834 = vpop.f32.mrf.mxu0
        %v9835 = vpop.f32.mrf.mxu0
        %9836 = vdwg.mxu0
        %9837 = vmatprep.subr.bf16.mxu0 %v8054
        %9838 = vmatpush1.bf16.msra.mxu0 %v8053
        %9839 = vmatprep.subr.bf16.mxu0 %v8046
        %9840 = vmatpush1.bf16.msra.mxu0 %v8045
        %9841 = vmatprep.subr.bf16.mxu0 %v8038
        %9842 = vmatpush1.bf16.msra.mxu0 %v8037
        %9843 = vmatprep.subr.bf16.mxu0 %v8030
        %9844 = vmatpush1.bf16.msra.mxu0 %v8029
        %9845 = vmatprep.subr.bf16.mxu0 %v8022
        %9846 = vmatpush1.bf16.msra.mxu0 %v8021
        %9847 = vmatprep.subr.bf16.mxu0 %v8014
        %9848 = vmatpush1.bf16.msra.mxu0 %v8013
        %9849 = vmatprep.subr.bf16.mxu0 %v8006
        %9850 = vmatpush1.bf16.msra.mxu0 %v8005
        %9851 = vmatprep.subr.bf16.mxu0 %v7998
        %9852 = vmatpush1.bf16.msra.mxu0 %v7997
        %9853 = vmatprep.subr.bf16.mxu0 %v8118
        %9854 = vmatpush2.bf16.msra.mxu0 %v8117
        %9855 = vmatprep.subr.bf16.mxu0 %v8110
        %9856 = vmatpush2.bf16.msra.mxu0 %v8109
        %9857 = vmatprep.subr.bf16.mxu0 %v8102
        %9858 = vmatpush2.bf16.msra.mxu0 %v8101
        %9859 = vmatprep.subr.bf16.mxu0 %v8094
        %9860 = vmatpush2.bf16.msra.mxu0 %v8093
        %9861 = vmatprep.subr.bf16.mxu0 %v8086
        %9862 = vmatpush2.bf16.msra.mxu0 %v8085
        %9863 = vmatprep.subr.bf16.mxu0 %v8078
        %9864 = vmatpush2.bf16.msra.mxu0 %v8077
        %9865 = vmatprep.subr.bf16.mxu0 %v8070
        %9866 = vmatpush2.bf16.msra.mxu0 %v8069
        %9867 = vmatprep.subr.bf16.mxu0 %v8062
        %9868 = vmatpush2.bf16.msra.mxu0 %v8061
        %9869 = vmatprep.mubr.bf16.mxu0 %v4520
        %9870 = vmatmul.mubr.bf16.gmra.mxu0 %v4506
        %v9871 = vpop.f32.mrf.mxu0
        %v9872 = vadd.f32 %v9831, %v9871
        %v9873 = vpop.f32.mrf.mxu0
        %v9874 = vadd.f32 %v9833, %v9873
        %v9875 = vpop.f32.mrf.mxu0
        %v9876 = vpop.f32.mrf.mxu0
        %9877 = vdwg.mxu0
        %9878 = vmatprep.subr.bf16.mxu0 %v7288
        %9879 = vmatpush1.bf16.msra.mxu0 %v7287
        %9880 = vmatprep.subr.bf16.mxu0 %v7280
        %9881 = vmatpush1.bf16.msra.mxu0 %v7279
        %9882 = vmatprep.subr.bf16.mxu0 %v7272
        %9883 = vmatpush1.bf16.msra.mxu0 %v7271
        %9884 = vmatprep.subr.bf16.mxu0 %v7264
        %9885 = vmatpush1.bf16.msra.mxu0 %v7263
        %9886 = vmatprep.subr.bf16.mxu0 %v7256
        %9887 = vmatpush1.bf16.msra.mxu0 %v7255
        %9888 = vmatprep.subr.bf16.mxu0 %v7248
        %9889 = vmatpush1.bf16.msra.mxu0 %v7247
        %9890 = vmatprep.subr.bf16.mxu0 %v7240
        %9891 = vmatpush1.bf16.msra.mxu0 %v7239
        %9892 = vmatprep.subr.bf16.mxu0 %v7232
        %9893 = vmatpush1.bf16.msra.mxu0 %v7231
        %9894 = vmatprep.subr.bf16.mxu0 %v7352
        %9895 = vmatpush2.bf16.msra.mxu0 %v7351
        %9896 = vmatprep.subr.bf16.mxu0 %v7344
        %9897 = vmatpush2.bf16.msra.mxu0 %v7343
        %9898 = vmatprep.subr.bf16.mxu0 %v7336
        %9899 = vmatpush2.bf16.msra.mxu0 %v7335
        %9900 = vmatprep.subr.bf16.mxu0 %v7328
        %9901 = vmatpush2.bf16.msra.mxu0 %v7327
        %9902 = vmatprep.subr.bf16.mxu0 %v7320
        %9903 = vmatpush2.bf16.msra.mxu0 %v7319
        %9904 = vmatprep.subr.bf16.mxu0 %v7312
        %9905 = vmatpush2.bf16.msra.mxu0 %v7311
        %9906 = vmatprep.subr.bf16.mxu0 %v7304
        %9907 = vmatpush2.bf16.msra.mxu0 %v7303
        %9908 = vmatprep.subr.bf16.mxu0 %v7296
        %9909 = vmatpush2.bf16.msra.mxu0 %v7295
        %9910 = vmatprep.mubr.bf16.mxu0 %v4464
        %9911 = vmatmul.mubr.bf16.gmra.mxu0 %v4450
        %v9912 = vpop.f32.mrf.mxu0
        %v9913 = vadd.f32 0.0, %v9912
        %v9914 = vpop.f32.mrf.mxu0
        %v9915 = vadd.f32 0.0, %v9914
        %v9916 = vpop.f32.mrf.mxu0
        %v9917 = vpop.f32.mrf.mxu0
        %9918 = vdwg.mxu0
        %9919 = vmatprep.subr.bf16.mxu0 %v7416
        %9920 = vmatpush1.bf16.msra.mxu0 %v7415
        %9921 = vmatprep.subr.bf16.mxu0 %v7408
        %9922 = vmatpush1.bf16.msra.mxu0 %v7407
        %9923 = vmatprep.subr.bf16.mxu0 %v7400
        %9924 = vmatpush1.bf16.msra.mxu0 %v7399
        %9925 = vmatprep.subr.bf16.mxu0 %v7392
        %9926 = vmatpush1.bf16.msra.mxu0 %v7391
        %9927 = vmatprep.subr.bf16.mxu0 %v7384
        %9928 = vmatpush1.bf16.msra.mxu0 %v7383
        %9929 = vmatprep.subr.bf16.mxu0 %v7376
        %9930 = vmatpush1.bf16.msra.mxu0 %v7375
        %9931 = vmatprep.subr.bf16.mxu0 %v7368
        %9932 = vmatpush1.bf16.msra.mxu0 %v7367
        %9933 = vmatprep.subr.bf16.mxu0 %v7360
        %9934 = vmatpush1.bf16.msra.mxu0 %v7359
        %9935 = vmatprep.subr.bf16.mxu0 %v7480
        %9936 = vmatpush2.bf16.msra.mxu0 %v7479
        %9937 = vmatprep.subr.bf16.mxu0 %v7472
        %9938 = vmatpush2.bf16.msra.mxu0 %v7471
        %9939 = vmatprep.subr.bf16.mxu0 %v7464
        %9940 = vmatpush2.bf16.msra.mxu0 %v7463
        %9941 = vmatprep.subr.bf16.mxu0 %v7456
        %9942 = vmatpush2.bf16.msra.mxu0 %v7455
        %9943 = vmatprep.subr.bf16.mxu0 %v7448
        %9944 = vmatpush2.bf16.msra.mxu0 %v7447
        %9945 = vmatprep.subr.bf16.mxu0 %v7440
        %9946 = vmatpush2.bf16.msra.mxu0 %v7439
        %9947 = vmatprep.subr.bf16.mxu0 %v7432
        %9948 = vmatpush2.bf16.msra.mxu0 %v7431
        %9949 = vmatprep.subr.bf16.mxu0 %v7424
        %9950 = vmatpush2.bf16.msra.mxu0 %v7423
        %9951 = vmatprep.mubr.bf16.mxu0 %v4474
        %9952 = vmatmul.mubr.bf16.gmra.mxu0 %v4472
        %v9953 = vpop.f32.mrf.mxu0
        %v9954 = vadd.f32 %v9913, %v9953
        %v9955 = vpop.f32.mrf.mxu0
        %v9956 = vadd.f32 %v9915, %v9955
        %v9957 = vpop.f32.mrf.mxu0
        %v9958 = vpop.f32.mrf.mxu0
        %9959 = vdwg.mxu0
        %9960 = vmatprep.subr.bf16.mxu0 %v7544
        %9961 = vmatpush1.bf16.msra.mxu0 %v7543
        %9962 = vmatprep.subr.bf16.mxu0 %v7536
        %9963 = vmatpush1.bf16.msra.mxu0 %v7535
        %9964 = vmatprep.subr.bf16.mxu0 %v7528
        %9965 = vmatpush1.bf16.msra.mxu0 %v7527
        %9966 = vmatprep.subr.bf16.mxu0 %v7520
        %9967 = vmatpush1.bf16.msra.mxu0 %v7519
        %9968 = vmatprep.subr.bf16.mxu0 %v7512
        %9969 = vmatpush1.bf16.msra.mxu0 %v7511
        %9970 = vmatprep.subr.bf16.mxu0 %v7504
        %9971 = vmatpush1.bf16.msra.mxu0 %v7503
        %9972 = vmatprep.subr.bf16.mxu0 %v7496
        %9973 = vmatpush1.bf16.msra.mxu0 %v7495
        %9974 = vmatprep.subr.bf16.mxu0 %v7488
        %9975 = vmatpush1.bf16.msra.mxu0 %v7487
        %9976 = vmatprep.subr.bf16.mxu0 %v7608
        %9977 = vmatpush2.bf16.msra.mxu0 %v7607
        %9978 = vmatprep.subr.bf16.mxu0 %v7600
        %9979 = vmatpush2.bf16.msra.mxu0 %v7599
        %9980 = vmatprep.subr.bf16.mxu0 %v7592
        %9981 = vmatpush2.bf16.msra.mxu0 %v7591
        %9982 = vmatprep.subr.bf16.mxu0 %v7584
        %9983 = vmatpush2.bf16.msra.mxu0 %v7583
        %9984 = vmatprep.subr.bf16.mxu0 %v7576
        %9985 = vmatpush2.bf16.msra.mxu0 %v7575
        %9986 = vmatprep.subr.bf16.mxu0 %v7568
        %9987 = vmatpush2.bf16.msra.mxu0 %v7567
        %9988 = vmatprep.subr.bf16.mxu0 %v7560
        %9989 = vmatpush2.bf16.msra.mxu0 %v7559
        %9990 = vmatprep.subr.bf16.mxu0 %v7552
        %9991 = vmatpush2.bf16.msra.mxu0 %v7551
        %9992 = vmatprep.mubr.bf16.mxu0 %v4471
        %9993 = vmatmul.mubr.bf16.gmra.mxu0 %v4457
        %v9994 = vpop.f32.mrf.mxu0
        %v9995 = vadd.f32 %v9954, %v9994
        %v9996 = vpop.f32.mrf.mxu0
        %v9997 = vadd.f32 %v9956, %v9996
        %v9998 = vpop.f32.mrf.mxu0
        %v9999 = vpop.f32.mrf.mxu0
        %10000 = vdwg.mxu0
        %10001 = vmatprep.subr.bf16.mxu0 %v7672
        %10002 = vmatpush1.bf16.msra.mxu0 %v7671
        %10003 = vmatprep.subr.bf16.mxu0 %v7664
        %10004 = vmatpush1.bf16.msra.mxu0 %v7663
        %10005 = vmatprep.subr.bf16.mxu0 %v7656
        %10006 = vmatpush1.bf16.msra.mxu0 %v7655
        %10007 = vmatprep.subr.bf16.mxu0 %v7648
        %10008 = vmatpush1.bf16.msra.mxu0 %v7647
        %10009 = vmatprep.subr.bf16.mxu0 %v7640
        %10010 = vmatpush1.bf16.msra.mxu0 %v7639
        %10011 = vmatprep.subr.bf16.mxu0 %v7632
        %10012 = vmatpush1.bf16.msra.mxu0 %v7631
        %10013 = vmatprep.subr.bf16.mxu0 %v7624
        %10014 = vmatpush1.bf16.msra.mxu0 %v7623
        %10015 = vmatprep.subr.bf16.mxu0 %v7616
        %10016 = vmatpush1.bf16.msra.mxu0 %v7615
        %10017 = vmatprep.subr.bf16.mxu0 %v7736
        %10018 = vmatpush2.bf16.msra.mxu0 %v7735
        %10019 = vmatprep.subr.bf16.mxu0 %v7728
        %10020 = vmatpush2.bf16.msra.mxu0 %v7727
        %10021 = vmatprep.subr.bf16.mxu0 %v7720
        %10022 = vmatpush2.bf16.msra.mxu0 %v7719
        %10023 = vmatprep.subr.bf16.mxu0 %v7712
        %10024 = vmatpush2.bf16.msra.mxu0 %v7711
        %10025 = vmatprep.subr.bf16.mxu0 %v7704
        %10026 = vmatpush2.bf16.msra.mxu0 %v7703
        %10027 = vmatprep.subr.bf16.mxu0 %v7696
        %10028 = vmatpush2.bf16.msra.mxu0 %v7695
        %10029 = vmatprep.subr.bf16.mxu0 %v7688
        %10030 = vmatpush2.bf16.msra.mxu0 %v7687
        %10031 = vmatprep.subr.bf16.mxu0 %v7680
        %10032 = vmatpush2.bf16.msra.mxu0 %v7679
        %10033 = vmatprep.mubr.bf16.mxu0 %v4475
        %10034 = vmatmul.mubr.bf16.gmra.mxu0 %v4473
        %v10035 = vpop.f32.mrf.mxu0
        %v10036 = vadd.f32 %v9995, %v10035
        %v10037 = vpop.f32.mrf.mxu0
        %v10038 = vadd.f32 %v9997, %v10037
        %v10039 = vpop.f32.mrf.mxu0
        %v10040 = vpop.f32.mrf.mxu0
        %10041 = vdwg.mxu0
        %10042 = vmatprep.subr.bf16.mxu0 %v7800
        %10043 = vmatpush1.bf16.msra.mxu0 %v7799
        %10044 = vmatprep.subr.bf16.mxu0 %v7792
        %10045 = vmatpush1.bf16.msra.mxu0 %v7791
        %10046 = vmatprep.subr.bf16.mxu0 %v7784
        %10047 = vmatpush1.bf16.msra.mxu0 %v7783
        %10048 = vmatprep.subr.bf16.mxu0 %v7776
        %10049 = vmatpush1.bf16.msra.mxu0 %v7775
        %10050 = vmatprep.subr.bf16.mxu0 %v7768
        %10051 = vmatpush1.bf16.msra.mxu0 %v7767
        %10052 = vmatprep.subr.bf16.mxu0 %v7760
        %10053 = vmatpush1.bf16.msra.mxu0 %v7759
        %10054 = vmatprep.subr.bf16.mxu0 %v7752
        %10055 = vmatpush1.bf16.msra.mxu0 %v7751
        %10056 = vmatprep.subr.bf16.mxu0 %v7744
        %10057 = vmatpush1.bf16.msra.mxu0 %v7743
        %10058 = vmatprep.subr.bf16.mxu0 %v7864
        %10059 = vmatpush2.bf16.msra.mxu0 %v7863
        %10060 = vmatprep.subr.bf16.mxu0 %v7856
        %10061 = vmatpush2.bf16.msra.mxu0 %v7855
        %10062 = vmatprep.subr.bf16.mxu0 %v7848
        %10063 = vmatpush2.bf16.msra.mxu0 %v7847
        %10064 = vmatprep.subr.bf16.mxu0 %v7840
        %10065 = vmatpush2.bf16.msra.mxu0 %v7839
        %10066 = vmatprep.subr.bf16.mxu0 %v7832
        %10067 = vmatpush2.bf16.msra.mxu0 %v7831
        %10068 = vmatprep.subr.bf16.mxu0 %v7824
        %10069 = vmatpush2.bf16.msra.mxu0 %v7823
        %10070 = vmatprep.subr.bf16.mxu0 %v7816
        %10071 = vmatpush2.bf16.msra.mxu0 %v7815
        %10072 = vmatprep.subr.bf16.mxu0 %v7808
        %10073 = vmatpush2.bf16.msra.mxu0 %v7807
        %10074 = vmatprep.mubr.bf16.mxu0 %v4513
        %10075 = vmatmul.mubr.bf16.gmra.mxu0 %v4499
        %v10076 = vpop.f32.mrf.mxu0
        %v10077 = vadd.f32 %v10036, %v10076
        %v10078 = vpop.f32.mrf.mxu0
        %v10079 = vadd.f32 %v10038, %v10078
        %v10080 = vpop.f32.mrf.mxu0
        %v10081 = vpop.f32.mrf.mxu0
        %10082 = vdwg.mxu0
        %10083 = vmatprep.subr.bf16.mxu0 %v7928
        %10084 = vmatpush1.bf16.msra.mxu0 %v7927
        %10085 = vmatprep.subr.bf16.mxu0 %v7920
        %10086 = vmatpush1.bf16.msra.mxu0 %v7919
        %10087 = vmatprep.subr.bf16.mxu0 %v7912
        %10088 = vmatpush1.bf16.msra.mxu0 %v7911
        %10089 = vmatprep.subr.bf16.mxu0 %v7904
        %10090 = vmatpush1.bf16.msra.mxu0 %v7903
        %10091 = vmatprep.subr.bf16.mxu0 %v7896
        %10092 = vmatpush1.bf16.msra.mxu0 %v7895
        %10093 = vmatprep.subr.bf16.mxu0 %v7888
        %10094 = vmatpush1.bf16.msra.mxu0 %v7887
        %10095 = vmatprep.subr.bf16.mxu0 %v7880
        %10096 = vmatpush1.bf16.msra.mxu0 %v7879
        %10097 = vmatprep.subr.bf16.mxu0 %v7872
        %10098 = vmatpush1.bf16.msra.mxu0 %v7871
        %10099 = vmatprep.subr.bf16.mxu0 %v7992
        %10100 = vmatpush2.bf16.msra.mxu0 %v7991
        %10101 = vmatprep.subr.bf16.mxu0 %v7984
        %10102 = vmatpush2.bf16.msra.mxu0 %v7983
        %10103 = vmatprep.subr.bf16.mxu0 %v7976
        %10104 = vmatpush2.bf16.msra.mxu0 %v7975
        %10105 = vmatprep.subr.bf16.mxu0 %v7968
        %10106 = vmatpush2.bf16.msra.mxu0 %v7967
        %10107 = vmatprep.subr.bf16.mxu0 %v7960
        %10108 = vmatpush2.bf16.msra.mxu0 %v7959
        %10109 = vmatprep.subr.bf16.mxu0 %v7952
        %10110 = vmatpush2.bf16.msra.mxu0 %v7951
        %10111 = vmatprep.subr.bf16.mxu0 %v7944
        %10112 = vmatpush2.bf16.msra.mxu0 %v7943
        %10113 = vmatprep.subr.bf16.mxu0 %v7936
        %10114 = vmatpush2.bf16.msra.mxu0 %v7935
        %10115 = vmatprep.mubr.bf16.mxu0 %v4522
        %10116 = vmatmul.mubr.bf16.gmra.mxu0 %v4521
        %v10117 = vpop.f32.mrf.mxu0
        %v10118 = vadd.f32 %v10077, %v10117
        %v10119 = vpop.f32.mrf.mxu0
        %v10120 = vadd.f32 %v10079, %v10119
        %v10121 = vpop.f32.mrf.mxu0
        %v10122 = vpop.f32.mrf.mxu0
        %10123 = vdwg.mxu0
        %10124 = vmatprep.subr.bf16.mxu0 %v8056
        %10125 = vmatpush1.bf16.msra.mxu0 %v8055
        %10126 = vmatprep.subr.bf16.mxu0 %v8048
        %10127 = vmatpush1.bf16.msra.mxu0 %v8047
        %10128 = vmatprep.subr.bf16.mxu0 %v8040
        %10129 = vmatpush1.bf16.msra.mxu0 %v8039
        %10130 = vmatprep.subr.bf16.mxu0 %v8032
        %10131 = vmatpush1.bf16.msra.mxu0 %v8031
        %10132 = vmatprep.subr.bf16.mxu0 %v8024
        %10133 = vmatpush1.bf16.msra.mxu0 %v8023
        %10134 = vmatprep.subr.bf16.mxu0 %v8016
        %10135 = vmatpush1.bf16.msra.mxu0 %v8015
        %10136 = vmatprep.subr.bf16.mxu0 %v8008
        %10137 = vmatpush1.bf16.msra.mxu0 %v8007
        %10138 = vmatprep.subr.bf16.mxu0 %v8000
        %10139 = vmatpush1.bf16.msra.mxu0 %v7999
        %10140 = vmatprep.subr.bf16.mxu0 %v8120
        %10141 = vmatpush2.bf16.msra.mxu0 %v8119
        %10142 = vmatprep.subr.bf16.mxu0 %v8112
        %10143 = vmatpush2.bf16.msra.mxu0 %v8111
        %10144 = vmatprep.subr.bf16.mxu0 %v8104
        %10145 = vmatpush2.bf16.msra.mxu0 %v8103
        %10146 = vmatprep.subr.bf16.mxu0 %v8096
        %10147 = vmatpush2.bf16.msra.mxu0 %v8095
        %10148 = vmatprep.subr.bf16.mxu0 %v8088
        %10149 = vmatpush2.bf16.msra.mxu0 %v8087
        %10150 = vmatprep.subr.bf16.mxu0 %v8080
        %10151 = vmatpush2.bf16.msra.mxu0 %v8079
        %10152 = vmatprep.subr.bf16.mxu0 %v8072
        %10153 = vmatpush2.bf16.msra.mxu0 %v8071
        %10154 = vmatprep.subr.bf16.mxu0 %v8064
        %10155 = vmatpush2.bf16.msra.mxu0 %v8063
        %10156 = vmatprep.mubr.bf16.mxu0 %v4520
        %10157 = vmatmul.mubr.bf16.gmra.mxu0 %v4506
        %v10158 = vpop.f32.mrf.mxu0
        %v10159 = vadd.f32 %v10118, %v10158
        %v10160 = vpop.f32.mrf.mxu0
        %v10161 = vadd.f32 %v10120, %v10160
        %v10162 = vpop.f32.mrf.mxu0
        %v10163 = vpop.f32.mrf.mxu0
        %10164 = vdwg.mxu0
        %v10173 = vcombine.low %v9298, %v9300
        %v10174 = vcombine.low %v9585, %v9587
        %v10176 = vunpack.c.l.s4 1983009808
        %v10177 = vunpack.c.0.s8 %v10176
        %v10178 = vlaneseq
        %v10179 = vshrl.u32 %v10178, 7
        %v10180 = vsub.s32 %v10177, %v10179
        %v10181 = vrot.slane %v10173, %v10180
        %v10183 = vunpack.c.l.s4 1983009808
        %v10184 = vunpack.c.0.s8 %v10183
        %v10185 = vlaneseq
        %v10186 = vshrl.u32 %v10185, 7
        %v10187 = vsub.s32 %v10184, %v10186
        %v10188 = vrot.slane %v10174, %v10187
        %v10189 = vcombine.low %v10181, %v10188
        %v10190 = vcombine.low %v9872, %v9874
        %v10191 = vcombine.low %v10159, %v10161
        %v10193 = vunpack.c.l.s4 1983009808
        %v10194 = vunpack.c.0.s8 %v10193
        %v10195 = vlaneseq
        %v10196 = vshrl.u32 %v10195, 7
        %v10197 = vsub.s32 %v10194, %v10196
        %v10198 = vrot.slane %v10190, %v10197
        %v10200 = vunpack.c.l.s4 1983009808
        %v10201 = vunpack.c.0.s8 %v10200
        %v10202 = vlaneseq
        %v10203 = vshrl.u32 %v10202, 7
        %v10204 = vsub.s32 %v10201, %v10203
        %v10205 = vrot.slane %v10191, %v10204
        %v10206 = vcombine.low %v10198, %v10205
        %v10209 = vadd.f32 %v3523, %v10189
        %v10210 = vadd.f32 %v3524, %v10206
        %10211 = vst [vmem:[#allocation2] sm:$0xff] %v10209
        %10212 = vst [vmem:[#allocation2 + $0x8] sm:$0xff] %v10210
        %p10213 = scmp.eq.s32.totalorder %s37, 1
        // Predicated region
        $region125: #{critic_forward.1} parent=75 // pred_check
          %p10214 = pneg %p10213
        $region126: #{critic_forward.1} parent=75 // pred_check_branch
          %10216 = sbr.rel (%p10214) target = $region128
        $region127: #{critic_forward.1} parent=75 // pred_region
          %v10217 = vld [vmem:[#allocation2] sm:$0xff]
          %v10218 = vld [vmem:[#allocation2 + $0x8] sm:$0xff]
          %v10219 = vmul.f32 %v10217, 0.5
          %v10220 = vtanh.pop %v10219
          %v10221 = vadd.f32 %v10220, 1.0
          %v10222 = vmul.f32 %v10221, 0.5
          %v10224 = vrot.slane %v10217, 4
          %v10226 = vmul.f32 %v10224, 0.5
          %v10227 = vtanh.pop %v10226
          %v10228 = vadd.f32 %v10227, 1.0
          %v10229 = vmul.f32 %v10228, 0.5
          %v10230 = vtanh.pop %v10218
          %v10232 = vrot.slane %v10218, 4
          %v10234 = vmul.f32 %v10232, 0.5
          %v10235 = vtanh.pop %v10234
          %v10236 = vadd.f32 %v10235, 1.0
          %v10237 = vmul.f32 %v10236, 0.5
          %v10238 = vld [vmem:[#allocation20] sm:$0xf]
          %v10239 = vmul.f32 %v10229, %v10238
          %v10240 = vmul.f32 %v10222, %v10230
          %v10241 = vadd.f32 %v10239, %v10240
          %v10242 = vtanh.pop %v10241
          %v10243 = vmul.f32 %v10237, %v10242
          %v10244 = vld [vmem:[%s12] sm:$0xff]
          %v10245 = vld [vmem:[%s12 + $0x8] sm:$0xff]
          %v10246 = vld [vmem:[%s12 + $0x10] sm:$0xff]
          %v10247 = vld [vmem:[%s12 + $0x18] sm:$0xff]
          %v10248 = vld [vmem:[%s12 + $0x20] sm:$0xff]
          %v10249 = vld [vmem:[%s12 + $0x28] sm:$0xff]
          %v10250 = vld [vmem:[%s12 + $0x30] sm:$0xff]
          %v10251 = vld [vmem:[%s12 + $0x38] sm:$0xff]
          %v10252 = vld [vmem:[%s12 + $0x40] sm:$0xff]
          %v10253 = vld [vmem:[%s12 + $0x48] sm:$0xff]
          %v10254 = vld [vmem:[%s12 + $0x50] sm:$0xff]
          %v10255 = vld [vmem:[%s12 + $0x58] sm:$0xff]
          %v10256 = vld [vmem:[%s12 + $0x60] sm:$0xff]
          %v10257 = vld [vmem:[%s12 + $0x68] sm:$0xff]
          %v10258 = vld [vmem:[%s12 + $0x70] sm:$0xff]
          %v10259 = vld [vmem:[%s12 + $0x78] sm:$0xff]
          %v10260 = vld [vmem:[%s12 + $0x80] sm:$0xff]
          %v10261 = vld [vmem:[%s12 + $0x88] sm:$0xff]
          %v10262 = vld [vmem:[%s12 + $0x90] sm:$0xff]
          %v10263 = vld [vmem:[%s12 + $0x98] sm:$0xff]
          %v10264 = vld [vmem:[%s12 + $0xa0] sm:$0xff]
          %v10265 = vld [vmem:[%s12 + $0xa8] sm:$0xff]
          %v10266 = vld [vmem:[%s12 + $0xb0] sm:$0xff]
          %v10267 = vld [vmem:[%s12 + $0xb8] sm:$0xff]
          %v10268 = vld [vmem:[%s12 + $0xc0] sm:$0xff]
          %v10269 = vld [vmem:[%s12 + $0xc8] sm:$0xff]
          %v10270 = vld [vmem:[%s12 + $0xd0] sm:$0xff]
          %v10271 = vld [vmem:[%s12 + $0xd8] sm:$0xff]
          %v10272 = vld [vmem:[%s12 + $0xe0] sm:$0xff]
          %v10273 = vld [vmem:[%s12 + $0xe8] sm:$0xff]
          %v10274 = vld [vmem:[%s12 + $0xf0] sm:$0xff]
          %v10275 = vld [vmem:[%s12 + $0xf8] sm:$0xff]
          %v10276 = vld [vmem:[#allocation4] sm:$0x1]
          %v10278 = vlaneseq
          %v10279 = vshrl.u32 %v10278, 7
          %v10280 = vsub.s32 0, %v10279
          %v10281 = vrot.slane %v10276, %v10280
          %v10285 = vunpack.c.l.s4 1983009808
          %v10286 = vunpack.c.0.s8 %v10285
          %v10287 = vlaneseq
          %v10288 = vshrl.u32 %v10287, 7
          %v10289 = vsub.s32 %v10286, %v10288
          %v10290 = vrot.slane %v10243, %v10289
          %v10291 = vcombine.high %v10290, %v10290
          %10294 = vmatprep.subr.mxu0 0.0
          %10295 = vmatpush1.msra.mxu0 %v10259
          %10296 = vmatprep.subr.mxu0 0.0
          %10297 = vmatpush1.msra.mxu0 %v10258
          %10298 = vmatprep.subr.mxu0 0.0
          %10299 = vmatpush1.msra.mxu0 %v10257
          %10300 = vmatprep.subr.mxu0 0.0
          %10301 = vmatpush1.msra.mxu0 %v10256
          %10302 = vmatprep.subr.mxu0 0.0
          %10303 = vmatpush1.msra.mxu0 %v10255
          %10304 = vmatprep.subr.mxu0 0.0
          %10305 = vmatpush1.msra.mxu0 %v10254
          %10306 = vmatprep.subr.mxu0 0.0
          %10307 = vmatpush1.msra.mxu0 %v10253
          %10308 = vmatprep.subr.mxu0 0.0
          %10309 = vmatpush1.msra.mxu0 %v10252
          %10310 = vmatprep.subr.mxu0 0.0
          %10311 = vmatpush1.msra.mxu0 %v10251
          %10312 = vmatprep.subr.mxu0 0.0
          %10313 = vmatpush1.msra.mxu0 %v10250
          %10314 = vmatprep.subr.mxu0 0.0
          %10315 = vmatpush1.msra.mxu0 %v10249
          %10316 = vmatprep.subr.mxu0 0.0
          %10317 = vmatpush1.msra.mxu0 %v10248
          %10318 = vmatprep.subr.mxu0 0.0
          %10319 = vmatpush1.msra.mxu0 %v10247
          %10320 = vmatprep.subr.mxu0 0.0
          %10321 = vmatpush1.msra.mxu0 %v10246
          %10322 = vmatprep.subr.mxu0 0.0
          %10323 = vmatpush1.msra.mxu0 %v10245
          %10324 = vmatprep.subr.mxu0 0.0
          %10325 = vmatpush1.msra.mxu0 %v10244
          %10326 = vmatprep.subr.mxu0 0.0
          %10327 = vmatpush2.msra.mxu0 %v10275
          %10328 = vmatprep.subr.mxu0 0.0
          %10329 = vmatpush2.msra.mxu0 %v10274
          %10330 = vmatprep.subr.mxu0 0.0
          %10331 = vmatpush2.msra.mxu0 %v10273
          %10332 = vmatprep.subr.mxu0 0.0
          %10333 = vmatpush2.msra.mxu0 %v10272
          %10334 = vmatprep.subr.mxu0 0.0
          %10335 = vmatpush2.msra.mxu0 %v10271
          %10336 = vmatprep.subr.mxu0 0.0
          %10337 = vmatpush2.msra.mxu0 %v10270
          %10338 = vmatprep.subr.mxu0 0.0
          %10339 = vmatpush2.msra.mxu0 %v10269
          %10340 = vmatprep.subr.mxu0 0.0
          %10341 = vmatpush2.msra.mxu0 %v10268
          %10342 = vmatprep.subr.mxu0 0.0
          %10343 = vmatpush2.msra.mxu0 %v10267
          %10344 = vmatprep.subr.mxu0 0.0
          %10345 = vmatpush2.msra.mxu0 %v10266
          %10346 = vmatprep.subr.mxu0 0.0
          %10347 = vmatpush2.msra.mxu0 %v10265
          %10348 = vmatprep.subr.mxu0 0.0
          %10349 = vmatpush2.msra.mxu0 %v10264
          %10350 = vmatprep.subr.mxu0 0.0
          %10351 = vmatpush2.msra.mxu0 %v10263
          %10352 = vmatprep.subr.mxu0 0.0
          %10353 = vmatpush2.msra.mxu0 %v10262
          %10354 = vmatprep.subr.mxu0 0.0
          %10355 = vmatpush2.msra.mxu0 %v10261
          %10356 = vmatprep.subr.mxu0 0.0
          %10357 = vmatpush2.msra.mxu0 %v10260
          %10358 = vmatprep.mubr.f32.mxu0 %v10291
          %10359 = vmatmul.mubr.f32.gmra.mxu0 %v10290
          %v10360 = vpop.f32.mrf.mxu0
          %v10361 = vadd.f32 %v10281, %v10360
          %v10362 = vpop.f32.mrf.mxu0
          %10363 = vdwg.mxu0
          %vm10364 = vcmask 1024
          %10365 = vst.msk [vmem:[%s14] sm:$0x3] %vm10364, %v10361
          %10366 = vst [vmem:[#allocation22] sm:$0xf] %v10243
          %10367 = vst [vmem:[#allocation23] sm:$0xf] %v10241
        $region128: #{critic_forward.1} parent=75 // pred_fallthru
          _
        // Predicated region
        $region129: #{critic_forward.1} parent=75 // pred_check
          %p10368 = pneg %p349
        $region130: #{critic_forward.1} parent=75 // pred_check_branch
          %10370 = sbr.rel (%p10368) target = $region132
        $region131: #{critic_forward.1} parent=75 // pred_region
          _
        $region132: #{critic_forward.1} parent=75 // pred_fallthru
          _
        // Predicated region
        $region133: #{critic_forward.1} parent=75 // pred_check
          %p10371 = pneg %p370
        $region134: #{critic_forward.1} parent=75 // pred_check_branch
          %10373 = sbr.rel (%p10371) target = $region136
        $region135: #{critic_forward.1} parent=75 // pred_region
          %s10375 = ssub.s32 64, 64
          %10376 = vsyncadd [#allocation7], %s10375
          %s10378 = sshll.u32 [#allocation22], 4
          %s10379 = int_to_ptr.vmem [resolvable:$true] %s10378
          %10381 = dma.vmem_to_hbm [thread:$0]  %s10379, 64, %s15, [#allocation7]
        $region136: #{critic_forward.1} parent=75 // pred_fallthru
          _
        // Predicated region
        $region137: #{critic_forward.1} parent=75 // pred_check
          %p10382 = pneg %p391
        $region138: #{critic_forward.1} parent=75 // pred_check_branch
          %10384 = sbr.rel (%p10382) target = $region140
        $region139: #{critic_forward.1} parent=75 // pred_region
          %s10386 = ssub.s32 64, 64
          %10387 = vsyncadd [#allocation24], %s10386
          %s10389 = sshll.u32 [#allocation23], 4
          %s10390 = int_to_ptr.vmem [resolvable:$true] %s10389
          %10392 = dma.vmem_to_hbm [thread:$0]  %s10390, 64, %s16, [#allocation24]
        $region140: #{critic_forward.1} parent=75 // pred_fallthru
          _
        // Predicated region
        $region141: #{critic_forward.1} parent=75 // pred_check
          %p10393 = pneg %p349
        $region142: #{critic_forward.1} parent=75 // pred_check_branch
          %10395 = sbr.rel (%p10393) target = $region144
        $region143: #{critic_forward.1} parent=75 // pred_region
          _
        $region144: #{critic_forward.1} parent=75 // pred_fallthru
          _
        // Predicated region
        $region145: #{critic_forward.1} parent=75 // pred_check
          %p10396 = pneg %p370
        $region146: #{critic_forward.1} parent=75 // pred_check_branch
          %10398 = sbr.rel (%p10396) target = $region148
        $region147: #{critic_forward.1} parent=75 // pred_region
          %10399 = dma.done [#allocation7], 64
        $region148: #{critic_forward.1} parent=75 // pred_fallthru
          _
        // Predicated region
        $region149: #{critic_forward.1} parent=75 // pred_check
          %p10400 = pneg %p391
        $region150: #{critic_forward.1} parent=75 // pred_check_branch
          %10402 = sbr.rel (%p10400) target = $region152
        $region151: #{critic_forward.1} parent=75 // pred_region
          %10403 = dma.done [#allocation24], 64
        $region152: #{critic_forward.1} parent=75 // pred_fallthru
          _
      $region76: #{critic_forward.1} parent=5 // pred_fallthru
        _
      %p10404 = scmp.le.s32.totalorder 2, %s32
      // Predicated region
      $region153: #{critic_forward.1} parent=5 // pred_check
        %p10405 = pneg %p10404
      $region154: #{critic_forward.1} parent=5 // pred_check_branch
        %10407 = sbr.rel (%p10405) target = $region156
      $region155: #{critic_forward.1} parent=5 // pred_region
        %s10408 = ssub.s32 %s32, 2
      $region156: #{critic_forward.1} parent=5 // pred_fallthru
        _
    $region6: #{critic_forward.1} parent=1 // loop_footer
      %s36 = sadd.s32 1, %s32
    $region7: #{critic_forward.1} parent=1 // loop_footer_branch
      %31 = sbr.rel target = $region3
    $region8: #{critic_forward.1} parent=1 // loop_exit
      _
    %10409 = vsyncpa [#allocation6], 1
    %s10410 = scalar_lea.sflag [#allocation6], 1
    %10411 = vsyncpa %s10410, 1
    %10412 = vsyncpa [#allocation9], 1
    %10413 = vsyncpa [#allocation12], 1
    %10414 = vsyncpa [#allocation15], 1
    %10415 = vsyncpa [#allocation21], 1
    %10416 = vsyncpa [#allocation7], 1
    %s10417 = scalar_lea.sflag [#allocation7], 1
    %10418 = vsyncpa %s10417, 1
    %10419 = vsyncpa [#allocation24], 1

</llo_original>
